<compile_context>
chip_gen: v7x
topology: tpu7x:2x2x1
jax: 0.10.0
libtpu: 0.0.40
codegen_flags: <defaults>
</compile_context>

<pallas_src>
import functools

import jax
import jax.numpy as jnp
from jax.experimental import pallas as pl
from jax.experimental.pallas import tpu as pltpu


# ----------------------------------------------------------------------------
# Generation-aware VMEM limit (v7x has only 64 MiB VMEM per TensorCore).
# ----------------------------------------------------------------------------
def _vmem_limit_bytes():
    cap = 64 * 1024 * 1024          # conservative default = v7x physical VMEM
    try:
        cap = int(pltpu.get_tpu_info().vmem_capacity_bytes)
    except Exception:
        pass
    return min((cap * 3) // 4, 96 * 1024 * 1024)


_VMEM_LIMIT = _vmem_limit_bytes()


def _compiler_params(grid_rank=1):
    return pltpu.CompilerParams(
        dimension_semantics=("parallel",) * grid_rank,
        vmem_limit_bytes=_VMEM_LIMIT,
    )


# ----------------------------------------------------------------------------
# TimeEmbedding: Linear(320->1280) -> SiLU -> Linear(1280->1280)
# grid=(2,) over linear_2 columns (tn=640): one tile per TensorCore on v7x,
# linear_1 + SiLU recomputed per tile (trivial).  bf16 MXU operands, f32 acc.
# ----------------------------------------------------------------------------
def _time_embedding_kernel(t_ref, w1_ref, b1_ref, w2_ref, b2_ref, o_ref):
    t = t_ref[...].astype(jnp.bfloat16)                                   # (1, K)
    h = jnp.dot(t, w1_ref[...], preferred_element_type=jnp.float32)
    h = h + b1_ref[...]
    h = h * jax.nn.sigmoid(h)                                             # SiLU (f32)
    o = jnp.dot(h.astype(jnp.bfloat16), w2_ref[...],
                preferred_element_type=jnp.float32)
    o_ref[...] = (o + b2_ref[...]).astype(o_ref.dtype)


def time_embedding(time, params):
    w1, b1, w2, b2 = params             # w1: (320, 1280), w2: (1280, 1280) (in, out)
    M, K = time.shape
    N1 = w1.shape[1]
    N2 = w2.shape[1]
    # Two column tiles (one per v7x TensorCore); whole w2 otherwise.
    tn = N2 // 2 if (N2 % 2 == 0 and (N2 // 2) % 128 == 0) else N2
    grid = (N2 // tn,)
    return pl.pallas_call(
        _time_embedding_kernel,
        out_shape=jax.ShapeDtypeStruct((M, N2), jnp.float32),
        grid=grid,
        in_specs=[
            pl.BlockSpec((M, K), lambda j: (0, 0)),
            pl.BlockSpec((K, N1), lambda j: (0, 0)),     # resident across tiles
            pl.BlockSpec((1, N1), lambda j: (0, 0)),
            pl.BlockSpec((N1, tn), lambda j: (0, j)),    # streamed column tiles
            pl.BlockSpec((1, tn), lambda j: (0, j)),
        ],
        out_specs=pl.BlockSpec((M, tn), lambda j: (0, j)),
        compiler_params=_compiler_params(1),
    )(time, w1.astype(jnp.bfloat16), b1.reshape(1, N1),
      w2.astype(jnp.bfloat16), b2.reshape(1, N2))


# ----------------------------------------------------------------------------
# Shared helpers for the 3x3 padded convs (flattened (C, H*W) layout).
# Tap order k = (dh+1)*3 + (dw+1) matches torch weight index (kh, kw).
# ----------------------------------------------------------------------------
def _conv_tap_masks(H, W):
    """(9, 1, H*W) f32 validity masks for the 9 taps of a padded 3x3 conv."""
    hw = jnp.arange(H * W, dtype=jnp.int32)
    hh = hw // W
    ww = hw % W
    masks = []
    for dh in (-1, 0, 1):
        for dw in (-1, 0, 1):
            valid = ((hh + dh >= 0) & (hh + dh < H) &
                     (ww + dw >= 0) & (ww + dw < W))
            masks.append(valid.astype(jnp.float32))
    return jnp.stack(masks).reshape(9, 1, H * W)


# ----------------------------------------------------------------------------
# Input conv: Conv2d(Cin, Cout, 3, padding=1) with small Cin.
# The 9 masked-rolled (Cin_p, HW) taps are packed into one (9*Cin_p, HW) VMEM
# scratch (roll/mask on the tiny input, cast once), then a single K=9*Cin_p
# matmul produces the (Cout_tile, HW) output — one MXU push instead of nine.
# Grid = (B, Cout_tiles), both "parallel" (keeps both v7x TCs busy at B=1).
# ----------------------------------------------------------------------------
def _conv3x3_kernel(x_ref, w_ref, b_ref, m_ref, o_ref, stk_ref, *, W, cin_p):
    x = x_ref[0]                                             # (Cin_p, HW) f32
    HW = x.shape[1]
    k = 0
    for dh in (-1, 0, 1):
        for dw in (-1, 0, 1):
            s = dh * W + dw
            yk = x if s == 0 else pltpu.roll(x, shift=(-s) % HW, axis=1)
            stk_ref[k * cin_p:(k + 1) * cin_p, :] = yk * m_ref[k]
            k += 1
    stk = stk_ref[...].astype(jnp.bfloat16)                  # single cast (9*Cin_p, HW)
    acc = jnp.dot(w_ref[...], stk, preferred_element_type=jnp.float32)
    o_ref[0] = (acc + b_ref[...]).astype(o_ref.dtype)


def conv2d_3x3(x_nchw, weight, bias, out_dtype=jnp.bfloat16):
    """PyTorch-semantics Conv2d(Cin, Cout, 3, stride=1, padding=1)."""
    B, Cin, H, W = x_nchw.shape
    Cout = weight.shape[0]
    HW = H * W
    cin_p = max(8, ((Cin + 7) // 8) * 8)                     # sublane-aligned Cin
    x = x_nchw.reshape(B, Cin, HW).astype(jnp.float32)
    if cin_p != Cin:
        x = jnp.pad(x, ((0, 0), (0, cin_p - Cin), (0, 0)))
    # Stacked weight (Cout, 9*Cin_p): column index = k*Cin_p + ci.
    w9 = jnp.transpose(weight, (0, 2, 3, 1)).reshape(Cout, 9, Cin)
    w9 = jnp.pad(w9, ((0, 0), (0, 0), (0, cin_p - Cin)))
    w2d = w9.reshape(Cout, 9 * cin_p).astype(jnp.bfloat16)
    tco = 160 if (Cout % 160 == 0 and Cout > 160) else Cout  # second parallel axis
    grid = (B, Cout // tco)
    out = pl.pallas_call(
        functools.partial(_conv3x3_kernel, W=W, cin_p=cin_p),
        out_shape=jax.ShapeDtypeStruct((B, Cout, HW), out_dtype),
        grid=grid,
        in_specs=[
            pl.BlockSpec((1, cin_p, HW), lambda b, j: (b, 0, 0)),
            pl.BlockSpec((tco, 9 * cin_p), lambda b, j: (j, 0)),
            pl.BlockSpec((tco, 1), lambda b, j: (j, 0)),
            pl.BlockSpec((9, 1, HW), lambda b, j: (0, 0, 0)),
        ],
        out_specs=pl.BlockSpec((1, tco, HW), lambda b, j: (b, j, 0)),
        scratch_shapes=[pltpu.VMEM((9 * cin_p, HW), jnp.float32)],
        compiler_params=_compiler_params(2),
    )(x, w2d, bias.reshape(Cout, 1).astype(jnp.float32), _conv_tap_masks(H, W))
    return out.reshape(B, Cout, H, W)


# ----------------------------------------------------------------------------
# Fused final layer: GroupNorm(32, C) -> SiLU -> Conv2d(C, Cout, 3, padding=1)
#   * GN stats: channel sum / sum-of-squares (VPU reductions), then TWO
#     independent (C,C)@(C,1) matmuls against the group-membership matrix P
#     broadcast group mean / mean-square per channel; normalize folded into
#     one FMA (y = x*scale + shift).
#   * Conv: ONE matmul  Wstk(9*Cout_p, C) @ y(C, HW)  in bf16, then per tap
#     roll/mask the tiny (Cout_p=8, HW) result slab and accumulate
#     (mask applied per tap BEFORE accumulation — wraparound columns zeroed).
# ----------------------------------------------------------------------------
def _gn_silu_conv3x3_kernel(x_ref, gamma_ref, beta_ref, p_ref, w_ref, b_ref,
                            m_ref, o_ref, *, W, cout, cout_p, inv_group_elems):
    x = x_ref[0].astype(jnp.float32)                         # (C, HW)
    HW = x.shape[1]
    ch_sum = jnp.sum(x, axis=1, keepdims=True)               # (C, 1)
    ch_sq = jnp.sum(x * x, axis=1, keepdims=True)            # (C, 1)
    mean = jnp.dot(p_ref[...], ch_sum,
                   preferred_element_type=jnp.float32) * inv_group_elems   # (C, 1)
    msq = jnp.dot(p_ref[...], ch_sq,
                  preferred_element_type=jnp.float32) * inv_group_elems    # (C, 1)
    var = msq - mean * mean
    inv = jax.lax.rsqrt(var + 1e-5)                          # torch GroupNorm eps
    scale = inv * gamma_ref[...]                             # (C, 1)
    shift = beta_ref[...] - mean * scale                     # (C, 1)
    y = x * scale + shift
    y = y * jax.nn.sigmoid(y)                                # fused SiLU (f32)

    # Single MXU call for all 9 taps; roll/mask the tiny result slabs.
    z = jnp.dot(w_ref[...], y.astype(jnp.bfloat16),
                preferred_element_type=jnp.float32)          # (9*cout_p, HW)
    acc = jnp.zeros((cout_p, HW), jnp.float32)
    k = 0
    for dh in (-1, 0, 1):
        for dw in (-1, 0, 1):
            s = dh * W + dw
            zk = z[k * cout_p:(k + 1) * cout_p, :]           # (cout_p, HW)
            if s != 0:
                zk = pltpu.roll(zk, shift=(-s) % HW, axis=1)
            acc = acc + zk * m_ref[k]
            k += 1
    o_ref[0] = (acc[:cout, :] + b_ref[...]).astype(o_ref.dtype)


def unet_output_layer(x_nchw, gamma, beta, weight, bias, num_groups=32):
    """Fused GroupNorm(32, C) -> SiLU -> Conv2d(C, Cout, 3, padding=1)."""
    B, C, H, W = x_nchw.shape
    Cout = weight.shape[0]
    HW = H * W
    G = num_groups
    Cg = C // G
    cout_p = max(8, ((Cout + 7) // 8) * 8)                   # sublane-aligned Cout
    x = x_nchw.reshape(B, C, HW)
    # Group-membership matrix (C, C): P[c1, c2] = 1 iff same GN group (exact f32).
    gid = jnp.arange(C, dtype=jnp.int32) // Cg
    P = (gid[:, None] == gid[None, :]).astype(jnp.float32)
    # Stacked conv weight (9*Cout_p, C): row index = k*Cout_p + co.
    w9 = jnp.transpose(weight, (2, 3, 0, 1)).reshape(9, Cout, C)
    w9 = jnp.pad(w9, ((0, 0), (0, cout_p - Cout), (0, 0)))
    wstk = w9.reshape(9 * cout_p, C).astype(jnp.bfloat16)
    # TODO(synk): add H*W halo tiling (second parallel axis) for 64x64 latents on v7x.
    out = pl.pallas_call(
        functools.partial(_gn_silu_conv3x3_kernel, W=W, cout=Cout, cout_p=cout_p,
                          inv_group_elems=1.0 / float(Cg * HW)),
        out_shape=jax.ShapeDtypeStruct((B, Cout, HW), jnp.float32),
        grid=(B,),
        in_specs=[
            pl.BlockSpec((1, C, HW), lambda b: (b, 0, 0)),
            pl.BlockSpec((C, 1), lambda b: (0, 0)),
            pl.BlockSpec((C, 1), lambda b: (0, 0)),
            pl.BlockSpec((C, C), lambda b: (0, 0)),
            pl.BlockSpec((9 * cout_p, C), lambda b: (0, 0)),
            pl.BlockSpec((Cout, 1), lambda b: (0, 0)),
            pl.BlockSpec((9, 1, HW), lambda b: (0, 0, 0)),
        ],
        out_specs=pl.BlockSpec((1, Cout, HW), lambda b: (b, 0, 0)),
        compiler_params=_compiler_params(1),
    )(x, gamma.reshape(C, 1), beta.reshape(C, 1), P, wstk,
      bias.reshape(Cout, 1).astype(jnp.float32), _conv_tap_masks(H, W))
    return out.reshape(B, Cout, H, W)


# ----------------------------------------------------------------------------
# Parameters (deterministic, torch-like uniform(-1/sqrt(fan_in), 1/sqrt(fan_in)))
# ----------------------------------------------------------------------------
def init_params(key):
    ks = jax.random.split(key, 8)

    def u(k, shape, fan_in):
        bound = 1.0 / float(fan_in) ** 0.5
        return jax.random.uniform(k, shape, jnp.float32, -bound, bound)

    n_embd = 320
    return {
        "time_embedding": (
            u(ks[0], (n_embd, 4 * n_embd), n_embd),           # linear_1 weight^T
            u(ks[1], (4 * n_embd,), n_embd),                  # linear_1 bias
            u(ks[2], (4 * n_embd, 4 * n_embd), 4 * n_embd),   # linear_2 weight^T
            u(ks[3], (4 * n_embd,), 4 * n_embd),              # linear_2 bias
        ),
        # UNET encoders[0]: Conv2d(4, 320, 3, padding=1)
        "unet_conv_in_w": u(ks[4], (320, 4, 3, 3), 4 * 9),
        "unet_conv_in_b": u(ks[5], (320,), 4 * 9),
        # final = UNET_OutputLayer(320): GroupNorm(32, 320) + SiLU + Conv2d(320, 4, 3, p=1)
        "final_gn_gamma": jnp.ones((320,), jnp.float32),
        "final_gn_beta": jnp.zeros((320,), jnp.float32),
        "final_conv_w": u(ks[6], (4, 320, 3, 3), 320 * 9),
        "final_conv_b": u(ks[7], (4,), 320 * 9),
    }


# ----------------------------------------------------------------------------
# Diffusion.forward
# ----------------------------------------------------------------------------
def diffusion_forward(params, latent, context, time):
    # time = self.time_embedding(time)        -> (1, 1280)
    t_emb = time_embedding(time, params["time_embedding"])

    # output = self.unet(latent, context, time)
    # encoders[0] = SwitchSequential(Conv2d(4, 320, kernel_size=3, padding=1))
    # (bf16 activation handed between kernels; stats recomputed in f32 downstream)
    x = conv2d_3x3(latent, params["unet_conv_in_w"], params["unet_conv_in_b"],
                   out_dtype=jnp.bfloat16)
    # TODO(synk): remaining UNET encoder / bottleneck / decoder blocks
    # (UNET_ResidualBlock, UNET_AttentionBlock, Upsample) are undefined in the
    # provided source; `context` and `t_emb` would be consumed there.
    _ = context

    # output = self.final(output)  (UNET_OutputLayer(320), fused GN+SiLU+conv)
    out = unet_output_layer(x, params["final_gn_gamma"], params["final_gn_beta"],
                            params["final_conv_w"], params["final_conv_b"],
                            num_groups=32)
    return out, t_emb


if __name__ == "__main__":
    key = jax.random.PRNGKey(0)
    k_lat, k_ctx, k_time, k_par = jax.random.split(key, 4)

    latent = jax.random.normal(k_lat, (2, 4, 16, 16), jnp.float32)   # NCHW
    context = jax.random.normal(k_ctx, (2, 8, 768), jnp.float32)     # unused (see TODO)
    time = jax.random.normal(k_time, (1, 320), jnp.float32)

    params = init_params(k_par)

    out, t_emb = jax.jit(diffusion_forward)(params, latent, context, time)
    jax.block_until_ready((out, t_emb))

    assert out.shape == (2, 4, 16, 16), out.shape
    assert t_emb.shape == (1, 1280), t_emb.shape
    assert bool(jnp.isfinite(out).all()) and bool(jnp.isfinite(t_emb).all())
    print("KERNEL_OK")
</pallas_src>

<mosaic_0001>
module attributes {stable_mosaic.version = 11 : i64} {
  func.func @_conv3x3_kernel(%arg0: i32, %arg1: i32, %arg2: memref<1x8x256xf32, #tpu.memory_space<vmem>>, %arg3: memref<160x72xbf16, #tpu.memory_space<vmem>>, %arg4: memref<160x1xf32, #tpu.memory_space<vmem>>, %arg5: memref<9x1x256xf32, #tpu.memory_space<vmem>>, %arg6: memref<1x160x256xbf16, #tpu.memory_space<vmem>>, %arg7: memref<72x256xf32, #tpu.memory_space<vmem>>) attributes {dimension_semantics = [#tpu.dimension_semantics<parallel>, #tpu.dimension_semantics<parallel>], iteration_bounds = array<i64: 2, 2>, scalar_prefetch = 0 : i64, scratch_operands = 1 : i64, tpu.core_type = #tpu.core_type<tc>, window_params = [{transform_indices = @transform_0, window_bounds = array<i64: 1, 8, 256>}, {transform_indices = @transform_1, window_bounds = array<i64: 160, 72>}, {transform_indices = @transform_2, window_bounds = array<i64: 160, 1>}, {pipeline_mode = #tpu.pipeline_mode<synchronous>, transform_indices = @transform_3, window_bounds = array<i64: 9, 1, 256>}, {transform_indices = @transform_4, window_bounds = array<i64: 1, 160, 256>}]} {
    %c0 = arith.constant 0 : index
    %c0_0 = arith.constant 0 : index
    %c0_1 = arith.constant 0 : index
    %0 = vector.load %arg2[%c0, %c0_0, %c0_1] : memref<1x8x256xf32, #tpu.memory_space<vmem>>, vector<1x8x256xf32>
    %1 = vector.shape_cast %0 : vector<1x8x256xf32> to vector<8x256xf32>
    %c17_i32 = arith.constant 17 : i32
    %2 = tpu.dynamic_rotate %1 by %c17_i32 dim 1 : vector<8x256xf32>, i32 -> vector<8x256xf32>
    %c0_2 = arith.constant 0 : index
    %c0_3 = arith.constant 0 : index
    %c0_4 = arith.constant 0 : index
    %3 = vector.load %arg5[%c0_2, %c0_3, %c0_4] : memref<9x1x256xf32, #tpu.memory_space<vmem>>, vector<1x1x256xf32>
    %4 = vector.shape_cast %3 : vector<1x1x256xf32> to vector<1x256xf32>
    %5 = vector.broadcast %4 : vector<1x256xf32> to vector<8x256xf32>
    %6 = arith.mulf %2, %5 : vector<8x256xf32>
    %c0_5 = arith.constant 0 : index
    %c0_6 = arith.constant 0 : index
    %7 = vector.load %arg7[%c0_5, %c0_6] : memref<72x256xf32, #tpu.memory_space<vmem>>, vector<8x256xf32>
    tpu.vector_store %arg7[%c0_5, %c0_6], %6 {strides = array<i32>} : memref<72x256xf32, #tpu.memory_space<vmem>>, vector<8x256xf32>,
    %c16_i32 = arith.constant 16 : i32
    %8 = tpu.dynamic_rotate %1 by %c16_i32 dim 1 : vector<8x256xf32>, i32 -> vector<8x256xf32>
    %c1 = arith.constant 1 : index
    %c0_7 = arith.constant 0 : index
    %c0_8 = arith.constant 0 : index
    %9 = vector.load %arg5[%c1, %c0_7, %c0_8] : memref<9x1x256xf32, #tpu.memory_space<vmem>>, vector<1x1x256xf32>
    %10 = vector.shape_cast %9 : vector<1x1x256xf32> to vector<1x256xf32>
    %11 = vector.broadcast %10 : vector<1x256xf32> to vector<8x256xf32>
    %12 = arith.mulf %8, %11 : vector<8x256xf32>
    %c8 = arith.constant 8 : index
    %c0_9 = arith.constant 0 : index
    %13 = vector.load %arg7[%c8, %c0_9] : memref<72x256xf32, #tpu.memory_space<vmem>>, vector<8x256xf32>
    tpu.vector_store %arg7[%c8, %c0_9], %12 {strides = array<i32>} : memref<72x256xf32, #tpu.memory_space<vmem>>, vector<8x256xf32>,
    %c15_i32 = arith.constant 15 : i32
    %14 = tpu.dynamic_rotate %1 by %c15_i32 dim 1 : vector<8x256xf32>, i32 -> vector<8x256xf32>
    %c2 = arith.constant 2 : index
    %c0_10 = arith.constant 0 : index
    %c0_11 = arith.constant 0 : index
    %15 = vector.load %arg5[%c2, %c0_10, %c0_11] : memref<9x1x256xf32, #tpu.memory_space<vmem>>, vector<1x1x256xf32>
    %16 = vector.shape_cast %15 : vector<1x1x256xf32> to vector<1x256xf32>
    %17 = vector.broadcast %16 : vector<1x256xf32> to vector<8x256xf32>
    %18 = arith.mulf %14, %17 : vector<8x256xf32>
    %c16 = arith.constant 16 : index
    %c0_12 = arith.constant 0 : index
    %19 = vector.load %arg7[%c16, %c0_12] : memref<72x256xf32, #tpu.memory_space<vmem>>, vector<8x256xf32>
    tpu.vector_store %arg7[%c16, %c0_12], %18 {strides = array<i32>} : memref<72x256xf32, #tpu.memory_space<vmem>>, vector<8x256xf32>,
    %c1_i32 = arith.constant 1 : i32
    %20 = tpu.dynamic_rotate %1 by %c1_i32 dim 1 : vector<8x256xf32>, i32 -> vector<8x256xf32>
    %c3 = arith.constant 3 : index
    %c0_13 = arith.constant 0 : index
    %c0_14 = arith.constant 0 : index
    %21 = vector.load %arg5[%c3, %c0_13, %c0_14] : memref<9x1x256xf32, #tpu.memory_space<vmem>>, vector<1x1x256xf32>
    %22 = vector.shape_cast %21 : vector<1x1x256xf32> to vector<1x256xf32>
    %23 = vector.broadcast %22 : vector<1x256xf32> to vector<8x256xf32>
    %24 = arith.mulf %20, %23 : vector<8x256xf32>
    %c24 = arith.constant 24 : index
    %c0_15 = arith.constant 0 : index
    %25 = vector.load %arg7[%c24, %c0_15] : memref<72x256xf32, #tpu.memory_space<vmem>>, vector<8x256xf32>
    tpu.vector_store %arg7[%c24, %c0_15], %24 {strides = array<i32>} : memref<72x256xf32, #tpu.memory_space<vmem>>, vector<8x256xf32>,
    %c4 = arith.constant 4 : index
    %c0_16 = arith.constant 0 : index
    %c0_17 = arith.constant 0 : index
    %26 = vector.load %arg5[%c4, %c0_16, %c0_17] : memref<9x1x256xf32, #tpu.memory_space<vmem>>, vector<1x1x256xf32>
    %27 = vector.shape_cast %26 : vector<1x1x256xf32> to vector<1x256xf32>
    %28 = vector.broadcast %27 : vector<1x256xf32> to vector<8x256xf32>
    %29 = arith.mulf %1, %28 : vector<8x256xf32>
    %c32 = arith.constant 32 : index
    %c0_18 = arith.constant 0 : index
    %30 = vector.load %arg7[%c32, %c0_18] : memref<72x256xf32, #tpu.memory_space<vmem>>, vector<8x256xf32>
    tpu.vector_store %arg7[%c32, %c0_18], %29 {strides = array<i32>} : memref<72x256xf32, #tpu.memory_space<vmem>>, vector<8x256xf32>,
    %c255_i32 = arith.constant 255 : i32
    %31 = tpu.dynamic_rotate %1 by %c255_i32 dim 1 : vector<8x256xf32>, i32 -> vector<8x256xf32>
    %c5 = arith.constant 5 : index
    %c0_19 = arith.constant 0 : index
    %c0_20 = arith.constant 0 : index
    %32 = vector.load %arg5[%c5, %c0_19, %c0_20] : memref<9x1x256xf32, #tpu.memory_space<vmem>>, vector<1x1x256xf32>
    %33 = vector.shape_cast %32 : vector<1x1x256xf32> to vector<1x256xf32>
    %34 = vector.broadcast %33 : vector<1x256xf32> to vector<8x256xf32>
    %35 = arith.mulf %31, %34 : vector<8x256xf32>
    %c40 = arith.constant 40 : index
    %c0_21 = arith.constant 0 : index
    %36 = vector.load %arg7[%c40, %c0_21] : memref<72x256xf32, #tpu.memory_space<vmem>>, vector<8x256xf32>
    tpu.vector_store %arg7[%c40, %c0_21], %35 {strides = array<i32>} : memref<72x256xf32, #tpu.memory_space<vmem>>, vector<8x256xf32>,
    %c241_i32 = arith.constant 241 : i32
    %37 = tpu.dynamic_rotate %1 by %c241_i32 dim 1 : vector<8x256xf32>, i32 -> vector<8x256xf32>
    %c6 = arith.constant 6 : index
    %c0_22 = arith.constant 0 : index
    %c0_23 = arith.constant 0 : index
    %38 = vector.load %arg5[%c6, %c0_22, %c0_23] : memref<9x1x256xf32, #tpu.memory_space<vmem>>, vector<1x1x256xf32>
    %39 = vector.shape_cast %38 : vector<1x1x256xf32> to vector<1x256xf32>
    %40 = vector.broadcast %39 : vector<1x256xf32> to vector<8x256xf32>
    %41 = arith.mulf %37, %40 : vector<8x256xf32>
    %c48 = arith.constant 48 : index
    %c0_24 = arith.constant 0 : index
    %42 = vector.load %arg7[%c48, %c0_24] : memref<72x256xf32, #tpu.memory_space<vmem>>, vector<8x256xf32>
    tpu.vector_store %arg7[%c48, %c0_24], %41 {strides = array<i32>} : memref<72x256xf32, #tpu.memory_space<vmem>>, vector<8x256xf32>,
    %c240_i32 = arith.constant 240 : i32
    %43 = tpu.dynamic_rotate %1 by %c240_i32 dim 1 : vector<8x256xf32>, i32 -> vector<8x256xf32>
    %c7 = arith.constant 7 : index
    %c0_25 = arith.constant 0 : index
    %c0_26 = arith.constant 0 : index
    %44 = vector.load %arg5[%c7, %c0_25, %c0_26] : memref<9x1x256xf32, #tpu.memory_space<vmem>>, vector<1x1x256xf32>
    %45 = vector.shape_cast %44 : vector<1x1x256xf32> to vector<1x256xf32>
    %46 = vector.broadcast %45 : vector<1x256xf32> to vector<8x256xf32>
    %47 = arith.mulf %43, %46 : vector<8x256xf32>
    %c56 = arith.constant 56 : index
    %c0_27 = arith.constant 0 : index
    %48 = vector.load %arg7[%c56, %c0_27] : memref<72x256xf32, #tpu.memory_space<vmem>>, vector<8x256xf32>
    tpu.vector_store %arg7[%c56, %c0_27], %47 {strides = array<i32>} : memref<72x256xf32, #tpu.memory_space<vmem>>, vector<8x256xf32>,
    %c239_i32 = arith.constant 239 : i32
    %49 = tpu.dynamic_rotate %1 by %c239_i32 dim 1 : vector<8x256xf32>, i32 -> vector<8x256xf32>
    %c8_28 = arith.constant 8 : index
    %c0_29 = arith.constant 0 : index
    %c0_30 = arith.constant 0 : index
    %50 = vector.load %arg5[%c8_28, %c0_29, %c0_30] : memref<9x1x256xf32, #tpu.memory_space<vmem>>, vector<1x1x256xf32>
    %51 = vector.shape_cast %50 : vector<1x1x256xf32> to vector<1x256xf32>
    %52 = vector.broadcast %51 : vector<1x256xf32> to vector<8x256xf32>
    %53 = arith.mulf %49, %52 : vector<8x256xf32>
    %c64 = arith.constant 64 : index
    %c0_31 = arith.constant 0 : index
    %54 = vector.load %arg7[%c64, %c0_31] : memref<72x256xf32, #tpu.memory_space<vmem>>, vector<8x256xf32>
    tpu.vector_store %arg7[%c64, %c0_31], %53 {strides = array<i32>} : memref<72x256xf32, #tpu.memory_space<vmem>>, vector<8x256xf32>,
    %c0_32 = arith.constant 0 : index
    %c0_33 = arith.constant 0 : index
    %55 = vector.load %arg7[%c0_32, %c0_33] : memref<72x256xf32, #tpu.memory_space<vmem>>, vector<72x256xf32>
    %56 = arith.truncf %55 : vector<72x256xf32> to vector<72x256xbf16>
    %c0_34 = arith.constant 0 : index
    %c0_35 = arith.constant 0 : index
    %57 = vector.load %arg3[%c0_34, %c0_35] : memref<160x72xbf16, #tpu.memory_space<vmem>>, vector<160x72xbf16>
    %cst = arith.constant dense<0.000000e+00> : vector<160x256xf32>
    %58 = tpu.matmul %57, %56, %cst {dimension_numbers = #tpu.dot_dimension_numbers<[1], [0], [0], [1], [0, 0, 1, 1], [], []>} : vector<160x72xbf16>, vector<72x256xbf16>, vector<160x256xf32> -> vector<160x256xf32>
    %c0_36 = arith.constant 0 : index
    %c0_37 = arith.constant 0 : index
    %59 = vector.load %arg4[%c0_36, %c0_37] : memref<160x1xf32, #tpu.memory_space<vmem>>, vector<160x1xf32>
    %60 = vector.broadcast %59 : vector<160x1xf32> to vector<160x256xf32>
    %61 = arith.addf %58, %60 : vector<160x256xf32>
    %62 = arith.truncf %61 : vector<160x256xf32> to vector<160x256xbf16>
    %c0_38 = arith.constant 0 : index
    %c0_39 = arith.constant 0 : index
    %c0_40 = arith.constant 0 : index
    %63 = vector.load %arg6[%c0_38, %c0_39, %c0_40] : memref<1x160x256xbf16, #tpu.memory_space<vmem>>, vector<1x160x256xbf16>
    %64 = vector.shape_cast %63 : vector<1x160x256xbf16> to vector<160x256xbf16>
    %65 = vector.shape_cast %62 : vector<160x256xbf16> to vector<1x160x256xbf16>
    tpu.vector_store %arg6[%c0_38, %c0_39, %c0_40], %65 {strides = array<i32>} : memref<1x160x256xbf16, #tpu.memory_space<vmem>>, vector<1x160x256xbf16>,
    return
  }
  func.func @transform_0(%arg0: i32, %arg1: i32) -> (i32, i32, i32) {
    %c0_i32 = arith.constant 0 : i32
    %c0_i32_0 = arith.constant 0 : i32
    %c0_i32_1 = arith.constant 0 : i32
    return %arg0, %c0_i32, %c0_i32_0 : i32, i32, i32
  }
  func.func @transform_1(%arg0: i32, %arg1: i32) -> (i32, i32) {
    %c0_i32 = arith.constant 0 : i32
    %c0_i32_0 = arith.constant 0 : i32
    return %arg1, %c0_i32 : i32, i32
  }
  func.func @transform_2(%arg0: i32, %arg1: i32) -> (i32, i32) {
    %c0_i32 = arith.constant 0 : i32
    %c0_i32_0 = arith.constant 0 : i32
    return %arg1, %c0_i32 : i32, i32
  }
  func.func @transform_3(%arg0: i32, %arg1: i32) -> (i32, i32, i32) {
    %c0_i32 = arith.constant 0 : i32
    %c0_i32_0 = arith.constant 0 : i32
    %c0_i32_1 = arith.constant 0 : i32
    %c0_i32_2 = arith.constant 0 : i32
    return %c0_i32, %c0_i32_0, %c0_i32_1 : i32, i32, i32
  }
  func.func @transform_4(%arg0: i32, %arg1: i32) -> (i32, i32, i32) {
    %c0_i32 = arith.constant 0 : i32
    %c0_i32_0 = arith.constant 0 : i32
    return %arg0, %arg1, %c0_i32 : i32, i32, i32
  }
}

module attributes {stable_mosaic.version = 11 : i64} {
  func.func @_gn_silu_conv3x3_kernel(%arg0: i32, %arg1: memref<1x320x256xbf16, #tpu.memory_space<vmem>>, %arg2: memref<320x1xf32, #tpu.memory_space<vmem>>, %arg3: memref<320x1xf32, #tpu.memory_space<vmem>>, %arg4: memref<320x320xf32, #tpu.memory_space<vmem>>, %arg5: memref<72x320xbf16, #tpu.memory_space<vmem>>, %arg6: memref<4x1xf32, #tpu.memory_space<vmem>>, %arg7: memref<9x1x256xf32, #tpu.memory_space<vmem>>, %arg8: memref<1x4x256xf32, #tpu.memory_space<vmem>>) attributes {dimension_semantics = [#tpu.dimension_semantics<parallel>], iteration_bounds = array<i64: 2>, scalar_prefetch = 0 : i64, scratch_operands = 0 : i64, tpu.core_type = #tpu.core_type<tc>, window_params = [{transform_indices = @transform_0, window_bounds = array<i64: 1, 320, 256>}, {pipeline_mode = #tpu.pipeline_mode<synchronous>, transform_indices = @transform_1, window_bounds = array<i64: 320, 1>}, {pipeline_mode = #tpu.pipeline_mode<synchronous>, transform_indices = @transform_2, window_bounds = array<i64: 320, 1>}, {pipeline_mode = #tpu.pipeline_mode<synchronous>, transform_indices = @transform_3, window_bounds = array<i64: 320, 320>}, {pipeline_mode = #tpu.pipeline_mode<synchronous>, transform_indices = @transform_4, window_bounds = array<i64: 72, 320>}, {pipeline_mode = #tpu.pipeline_mode<synchronous>, transform_indices = @transform_5, window_bounds = array<i64: 4, 1>}, {pipeline_mode = #tpu.pipeline_mode<synchronous>, transform_indices = @transform_6, window_bounds = array<i64: 9, 1, 256>}, {transform_indices = @transform_7, window_bounds = array<i64: 1, 4, 256>}]} {
    %c0 = arith.constant 0 : index
    %c0_0 = arith.constant 0 : index
    %c0_1 = arith.constant 0 : index
    %0 = vector.load %arg1[%c0, %c0_0, %c0_1] : memref<1x320x256xbf16, #tpu.memory_space<vmem>>, vector<1x320x256xbf16>
    %1 = vector.shape_cast %0 : vector<1x320x256xbf16> to vector<320x256xbf16>
    %2 = arith.extf %1 : vector<320x256xbf16> to vector<320x256xf32>
    %cst = arith.constant dense<0.000000e+00> : vector<320xf32>
    %3 = vector.multi_reduction <add>, %2, %cst [1] : vector<320x256xf32> to vector<320xf32>
    %4 = vector.shape_cast %3 : vector<320xf32> to vector<320x1xf32>
    %5 = arith.mulf %2, %2 : vector<320x256xf32>
    %cst_2 = arith.constant dense<0.000000e+00> : vector<320xf32>
    %6 = vector.multi_reduction <add>, %5, %cst_2 [1] : vector<320x256xf32> to vector<320xf32>
    %7 = vector.shape_cast %6 : vector<320xf32> to vector<320x1xf32>
    %c0_3 = arith.constant 0 : index
    %c0_4 = arith.constant 0 : index
    %8 = vector.load %arg4[%c0_3, %c0_4] : memref<320x320xf32, #tpu.memory_space<vmem>>, vector<320x320xf32>
    %cst_5 = arith.constant dense<0.000000e+00> : vector<320x1xf32>
    %9 = tpu.matmul %8, %4, %cst_5 {dimension_numbers = #tpu.dot_dimension_numbers<[1], [0], [0], [1], [0, 0, 1, 1], [], []>} : vector<320x320xf32>, vector<320x1xf32>, vector<320x1xf32> -> vector<320x1xf32>
    %cst_6 = arith.constant 3.906250e-04 : f32
    %10 = vector.broadcast %cst_6 : f32 to vector<320x1xf32>
    %11 = arith.mulf %9, %10 : vector<320x1xf32>
    %c0_7 = arith.constant 0 : index
    %c0_8 = arith.constant 0 : index
    %12 = vector.load %arg4[%c0_7, %c0_8] : memref<320x320xf32, #tpu.memory_space<vmem>>, vector<320x320xf32>
    %cst_9 = arith.constant dense<0.000000e+00> : vector<320x1xf32>
    %13 = tpu.matmul %12, %7, %cst_9 {dimension_numbers = #tpu.dot_dimension_numbers<[1], [0], [0], [1], [0, 0, 1, 1], [], []>} : vector<320x320xf32>, vector<320x1xf32>, vector<320x1xf32> -> vector<320x1xf32>
    %cst_10 = arith.constant 3.906250e-04 : f32
    %14 = vector.broadcast %cst_10 : f32 to vector<320x1xf32>
    %15 = arith.mulf %13, %14 : vector<320x1xf32>
    %16 = arith.mulf %11, %11 : vector<320x1xf32>
    %17 = arith.subf %15, %16 : vector<320x1xf32>
    %cst_11 = arith.constant 9.99999974E-6 : f32
    %18 = vector.broadcast %cst_11 : f32 to vector<320x1xf32>
    %19 = arith.addf %17, %18 : vector<320x1xf32>
    %20 = math.rsqrt %19 : vector<320x1xf32>
    %c0_12 = arith.constant 0 : index
    %c0_13 = arith.constant 0 : index
    %21 = vector.load %arg2[%c0_12, %c0_13] : memref<320x1xf32, #tpu.memory_space<vmem>>, vector<320x1xf32>
    %22 = arith.mulf %20, %21 : vector<320x1xf32>
    %c0_14 = arith.constant 0 : index
    %c0_15 = arith.constant 0 : index
    %23 = vector.load %arg3[%c0_14, %c0_15] : memref<320x1xf32, #tpu.memory_space<vmem>>, vector<320x1xf32>
    %24 = arith.mulf %11, %22 : vector<320x1xf32>
    %25 = arith.subf %23, %24 : vector<320x1xf32>
    %26 = vector.broadcast %22 : vector<320x1xf32> to vector<320x256xf32>
    %27 = arith.mulf %2, %26 : vector<320x256xf32>
    %28 = vector.broadcast %25 : vector<320x1xf32> to vector<320x256xf32>
    %29 = arith.addf %27, %28 : vector<320x256xf32>
    %30 = arith.negf %29 : vector<320x256xf32>
    %31 = math.exp %30 : vector<320x256xf32>
    %cst_16 = arith.constant 1.000000e+00 : f32
    %32 = vector.broadcast %cst_16 : f32 to vector<320x256xf32>
    %33 = arith.addf %32, %31 : vector<320x256xf32>
    %34 = arith.divf %32, %33 : vector<320x256xf32>
    %35 = arith.mulf %29, %34 : vector<320x256xf32>
    %c0_17 = arith.constant 0 : index
    %c0_18 = arith.constant 0 : index
    %36 = vector.load %arg5[%c0_17, %c0_18] : memref<72x320xbf16, #tpu.memory_space<vmem>>, vector<72x320xbf16>
    %37 = arith.truncf %35 : vector<320x256xf32> to vector<320x256xbf16>
    %cst_19 = arith.constant dense<0.000000e+00> : vector<72x256xf32>
    %38 = tpu.matmul %36, %37, %cst_19 {dimension_numbers = #tpu.dot_dimension_numbers<[1], [0], [0], [1], [0, 0, 1, 1], [], []>} : vector<72x320xbf16>, vector<320x256xbf16>, vector<72x256xf32> -> vector<72x256xf32>
    %cst_20 = arith.constant 0.000000e+00 : f32
    %39 = vector.broadcast %cst_20 : f32 to vector<8x256xf32>
    %40 = vector.extract_strided_slice %38 {offsets = [0, 0], sizes = [8, 256], strides = [1, 1]} : vector<72x256xf32> to vector<8x256xf32>
    %c17_i32 = arith.constant 17 : i32
    %41 = tpu.dynamic_rotate %40 by %c17_i32 dim 1 : vector<8x256xf32>, i32 -> vector<8x256xf32>
    %c0_21 = arith.constant 0 : index
    %c0_22 = arith.constant 0 : index
    %c0_23 = arith.constant 0 : index
    %42 = vector.load %arg7[%c0_21, %c0_22, %c0_23] : memref<9x1x256xf32, #tpu.memory_space<vmem>>, vector<1x1x256xf32>
    %43 = vector.shape_cast %42 : vector<1x1x256xf32> to vector<1x256xf32>
    %44 = vector.broadcast %43 : vector<1x256xf32> to vector<8x256xf32>
    %45 = arith.mulf %41, %44 : vector<8x256xf32>
    %46 = arith.addf %39, %45 : vector<8x256xf32>
    %47 = vector.extract_strided_slice %38 {offsets = [8, 0], sizes = [8, 256], strides = [1, 1]} : vector<72x256xf32> to vector<8x256xf32>
    %c16_i32 = arith.constant 16 : i32
    %48 = tpu.dynamic_rotate %47 by %c16_i32 dim 1 : vector<8x256xf32>, i32 -> vector<8x256xf32>
    %c1 = arith.constant 1 : index
    %c0_24 = arith.constant 0 : index
    %c0_25 = arith.constant 0 : index
    %49 = vector.load %arg7[%c1, %c0_24, %c0_25] : memref<9x1x256xf32, #tpu.memory_space<vmem>>, vector<1x1x256xf32>
    %50 = vector.shape_cast %49 : vector<1x1x256xf32> to vector<1x256xf32>
    %51 = vector.broadcast %50 : vector<1x256xf32> to vector<8x256xf32>
    %52 = arith.mulf %48, %51 : vector<8x256xf32>
    %53 = arith.addf %46, %52 : vector<8x256xf32>
    %54 = vector.extract_strided_slice %38 {offsets = [16, 0], sizes = [8, 256], strides = [1, 1]} : vector<72x256xf32> to vector<8x256xf32>
    %c15_i32 = arith.constant 15 : i32
    %55 = tpu.dynamic_rotate %54 by %c15_i32 dim 1 : vector<8x256xf32>, i32 -> vector<8x256xf32>
    %c2 = arith.constant 2 : index
    %c0_26 = arith.constant 0 : index
    %c0_27 = arith.constant 0 : index
    %56 = vector.load %arg7[%c2, %c0_26, %c0_27] : memref<9x1x256xf32, #tpu.memory_space<vmem>>, vector<1x1x256xf32>
    %57 = vector.shape_cast %56 : vector<1x1x256xf32> to vector<1x256xf32>
    %58 = vector.broadcast %57 : vector<1x256xf32> to vector<8x256xf32>
    %59 = arith.mulf %55, %58 : vector<8x256xf32>
    %60 = arith.addf %53, %59 : vector<8x256xf32>
    %61 = vector.extract_strided_slice %38 {offsets = [24, 0], sizes = [8, 256], strides = [1, 1]} : vector<72x256xf32> to vector<8x256xf32>
    %c1_i32 = arith.constant 1 : i32
    %62 = tpu.dynamic_rotate %61 by %c1_i32 dim 1 : vector<8x256xf32>, i32 -> vector<8x256xf32>
    %c3 = arith.constant 3 : index
    %c0_28 = arith.constant 0 : index
    %c0_29 = arith.constant 0 : index
    %63 = vector.load %arg7[%c3, %c0_28, %c0_29] : memref<9x1x256xf32, #tpu.memory_space<vmem>>, vector<1x1x256xf32>
    %64 = vector.shape_cast %63 : vector<1x1x256xf32> to vector<1x256xf32>
    %65 = vector.broadcast %64 : vector<1x256xf32> to vector<8x256xf32>
    %66 = arith.mulf %62, %65 : vector<8x256xf32>
    %67 = arith.addf %60, %66 : vector<8x256xf32>
    %68 = vector.extract_strided_slice %38 {offsets = [32, 0], sizes = [8, 256], strides = [1, 1]} : vector<72x256xf32> to vector<8x256xf32>
    %c4 = arith.constant 4 : index
    %c0_30 = arith.constant 0 : index
    %c0_31 = arith.constant 0 : index
    %69 = vector.load %arg7[%c4, %c0_30, %c0_31] : memref<9x1x256xf32, #tpu.memory_space<vmem>>, vector<1x1x256xf32>
    %70 = vector.shape_cast %69 : vector<1x1x256xf32> to vector<1x256xf32>
    %71 = vector.broadcast %70 : vector<1x256xf32> to vector<8x256xf32>
    %72 = arith.mulf %68, %71 : vector<8x256xf32>
    %73 = arith.addf %67, %72 : vector<8x256xf32>
    %74 = vector.extract_strided_slice %38 {offsets = [40, 0], sizes = [8, 256], strides = [1, 1]} : vector<72x256xf32> to vector<8x256xf32>
    %c255_i32 = arith.constant 255 : i32
    %75 = tpu.dynamic_rotate %74 by %c255_i32 dim 1 : vector<8x256xf32>, i32 -> vector<8x256xf32>
    %c5 = arith.constant 5 : index
    %c0_32 = arith.constant 0 : index
    %c0_33 = arith.constant 0 : index
    %76 = vector.load %arg7[%c5, %c0_32, %c0_33] : memref<9x1x256xf32, #tpu.memory_space<vmem>>, vector<1x1x256xf32>
    %77 = vector.shape_cast %76 : vector<1x1x256xf32> to vector<1x256xf32>
    %78 = vector.broadcast %77 : vector<1x256xf32> to vector<8x256xf32>
    %79 = arith.mulf %75, %78 : vector<8x256xf32>
    %80 = arith.addf %73, %79 : vector<8x256xf32>
    %81 = vector.extract_strided_slice %38 {offsets = [48, 0], sizes = [8, 256], strides = [1, 1]} : vector<72x256xf32> to vector<8x256xf32>
    %c241_i32 = arith.constant 241 : i32
    %82 = tpu.dynamic_rotate %81 by %c241_i32 dim 1 : vector<8x256xf32>, i32 -> vector<8x256xf32>
    %c6 = arith.constant 6 : index
    %c0_34 = arith.constant 0 : index
    %c0_35 = arith.constant 0 : index
    %83 = vector.load %arg7[%c6, %c0_34, %c0_35] : memref<9x1x256xf32, #tpu.memory_space<vmem>>, vector<1x1x256xf32>
    %84 = vector.shape_cast %83 : vector<1x1x256xf32> to vector<1x256xf32>
    %85 = vector.broadcast %84 : vector<1x256xf32> to vector<8x256xf32>
    %86 = arith.mulf %82, %85 : vector<8x256xf32>
    %87 = arith.addf %80, %86 : vector<8x256xf32>
    %88 = vector.extract_strided_slice %38 {offsets = [56, 0], sizes = [8, 256], strides = [1, 1]} : vector<72x256xf32> to vector<8x256xf32>
    %c240_i32 = arith.constant 240 : i32
    %89 = tpu.dynamic_rotate %88 by %c240_i32 dim 1 : vector<8x256xf32>, i32 -> vector<8x256xf32>
    %c7 = arith.constant 7 : index
    %c0_36 = arith.constant 0 : index
    %c0_37 = arith.constant 0 : index
    %90 = vector.load %arg7[%c7, %c0_36, %c0_37] : memref<9x1x256xf32, #tpu.memory_space<vmem>>, vector<1x1x256xf32>
    %91 = vector.shape_cast %90 : vector<1x1x256xf32> to vector<1x256xf32>
    %92 = vector.broadcast %91 : vector<1x256xf32> to vector<8x256xf32>
    %93 = arith.mulf %89, %92 : vector<8x256xf32>
    %94 = arith.addf %87, %93 : vector<8x256xf32>
    %95 = vector.extract_strided_slice %38 {offsets = [64, 0], sizes = [8, 256], strides = [1, 1]} : vector<72x256xf32> to vector<8x256xf32>
    %c239_i32 = arith.constant 239 : i32
    %96 = tpu.dynamic_rotate %95 by %c239_i32 dim 1 : vector<8x256xf32>, i32 -> vector<8x256xf32>
    %c8 = arith.constant 8 : index
    %c0_38 = arith.constant 0 : index
    %c0_39 = arith.constant 0 : index
    %97 = vector.load %arg7[%c8, %c0_38, %c0_39] : memref<9x1x256xf32, #tpu.memory_space<vmem>>, vector<1x1x256xf32>
    %98 = vector.shape_cast %97 : vector<1x1x256xf32> to vector<1x256xf32>
    %99 = vector.broadcast %98 : vector<1x256xf32> to vector<8x256xf32>
    %100 = arith.mulf %96, %99 : vector<8x256xf32>
    %101 = arith.addf %94, %100 : vector<8x256xf32>
    %102 = vector.extract_strided_slice %101 {offsets = [0, 0], sizes = [4, 256], strides = [1, 1]} : vector<8x256xf32> to vector<4x256xf32>
    %c0_40 = arith.constant 0 : index
    %c0_41 = arith.constant 0 : index
    %103 = vector.load %arg6[%c0_40, %c0_41] : memref<4x1xf32, #tpu.memory_space<vmem>>, vector<4x1xf32>
    %104 = vector.broadcast %103 : vector<4x1xf32> to vector<4x256xf32>
    %105 = arith.addf %102, %104 : vector<4x256xf32>
    %c0_42 = arith.constant 0 : index
    %c0_43 = arith.constant 0 : index
    %c0_44 = arith.constant 0 : index
    %106 = vector.load %arg8[%c0_42, %c0_43, %c0_44] : memref<1x4x256xf32, #tpu.memory_space<vmem>>, vector<1x4x256xf32>
    %107 = vector.shape_cast %106 : vector<1x4x256xf32> to vector<4x256xf32>
    %108 = vector.shape_cast %105 : vector<4x256xf32> to vector<1x4x256xf32>
    tpu.vector_store %arg8[%c0_42, %c0_43, %c0_44], %108 {strides = array<i32>} : memref<1x4x256xf32, #tpu.memory_space<vmem>>, vector<1x4x256xf32>,
    return
  }
  func.func @transform_0(%arg0: i32) -> (i32, i32, i32) {
    %c0_i32 = arith.constant 0 : i32
    %c0_i32_0 = arith.constant 0 : i32
    %c0_i32_1 = arith.constant 0 : i32
    return %arg0, %c0_i32, %c0_i32_0 : i32, i32, i32
  }
  func.func @transform_1(%arg0: i32) -> (i32, i32) {
    %c0_i32 = arith.constant 0 : i32
    %c0_i32_0 = arith.constant 0 : i32
    %c0_i32_1 = arith.constant 0 : i32
    return %c0_i32, %c0_i32_0 : i32, i32
  }
  func.func @transform_2(%arg0: i32) -> (i32, i32) {
    %c0_i32 = arith.constant 0 : i32
    %c0_i32_0 = arith.constant 0 : i32
    %c0_i32_1 = arith.constant 0 : i32
    return %c0_i32, %c0_i32_0 : i32, i32
  }
  func.func @transform_3(%arg0: i32) -> (i32, i32) {
    %c0_i32 = arith.constant 0 : i32
    %c0_i32_0 = arith.constant 0 : i32
    %c0_i32_1 = arith.constant 0 : i32
    return %c0_i32, %c0_i32_0 : i32, i32
  }
  func.func @transform_4(%arg0: i32) -> (i32, i32) {
    %c0_i32 = arith.constant 0 : i32
    %c0_i32_0 = arith.constant 0 : i32
    %c0_i32_1 = arith.constant 0 : i32
    return %c0_i32, %c0_i32_0 : i32, i32
  }
  func.func @transform_5(%arg0: i32) -> (i32, i32) {
    %c0_i32 = arith.constant 0 : i32
    %c0_i32_0 = arith.constant 0 : i32
    %c0_i32_1 = arith.constant 0 : i32
    return %c0_i32, %c0_i32_0 : i32, i32
  }
  func.func @transform_6(%arg0: i32) -> (i32, i32, i32) {
    %c0_i32 = arith.constant 0 : i32
    %c0_i32_0 = arith.constant 0 : i32
    %c0_i32_1 = arith.constant 0 : i32
    %c0_i32_2 = arith.constant 0 : i32
    return %c0_i32, %c0_i32_0, %c0_i32_1 : i32, i32, i32
  }
  func.func @transform_7(%arg0: i32) -> (i32, i32, i32) {
    %c0_i32 = arith.constant 0 : i32
    %c0_i32_0 = arith.constant 0 : i32
    %c0_i32_1 = arith.constant 0 : i32
    return %arg0, %c0_i32, %c0_i32_0 : i32, i32, i32
  }
}

module attributes {stable_mosaic.version = 11 : i64} {
  func.func @_time_embedding_kernel(%arg0: i32, %arg1: memref<1x320xf32, #tpu.memory_space<vmem>>, %arg2: memref<320x1280xbf16, #tpu.memory_space<vmem>>, %arg3: memref<1x1280xf32, #tpu.memory_space<vmem>>, %arg4: memref<1280x640xbf16, #tpu.memory_space<vmem>>, %arg5: memref<1x640xf32, #tpu.memory_space<vmem>>, %arg6: memref<1x640xf32, #tpu.memory_space<vmem>>) attributes {dimension_semantics = [#tpu.dimension_semantics<parallel>], iteration_bounds = array<i64: 2>, scalar_prefetch = 0 : i64, scratch_operands = 0 : i64, tpu.core_type = #tpu.core_type<tc>, window_params = [{pipeline_mode = #tpu.pipeline_mode<synchronous>, transform_indices = @transform_0, window_bounds = array<i64: 1, 320>}, {pipeline_mode = #tpu.pipeline_mode<synchronous>, transform_indices = @transform_1, window_bounds = array<i64: 320, 1280>}, {pipeline_mode = #tpu.pipeline_mode<synchronous>, transform_indices = @transform_2, window_bounds = array<i64: 1, 1280>}, {transform_indices = @transform_3, window_bounds = array<i64: 1280, 640>}, {transform_indices = @transform_4, window_bounds = array<i64: 1, 640>}, {transform_indices = @transform_5, window_bounds = array<i64: 1, 640>}]} {
    %c0 = arith.constant 0 : index
    %c0_0 = arith.constant 0 : index
    %0 = vector.load %arg1[%c0, %c0_0] : memref<1x320xf32, #tpu.memory_space<vmem>>, vector<1x320xf32>
    %1 = arith.truncf %0 : vector<1x320xf32> to vector<1x320xbf16>
    %c0_1 = arith.constant 0 : index
    %c0_2 = arith.constant 0 : index
    %2 = vector.load %arg2[%c0_1, %c0_2] : memref<320x1280xbf16, #tpu.memory_space<vmem>>, vector<320x1280xbf16>
    %cst = arith.constant dense<0.000000e+00> : vector<1x1280xf32>
    %3 = tpu.matmul %1, %2, %cst {dimension_numbers = #tpu.dot_dimension_numbers<[1], [0], [0], [1], [0, 0, 1, 1], [], []>} : vector<1x320xbf16>, vector<320x1280xbf16>, vector<1x1280xf32> -> vector<1x1280xf32>
    %c0_3 = arith.constant 0 : index
    %c0_4 = arith.constant 0 : index
    %4 = vector.load %arg3[%c0_3, %c0_4] : memref<1x1280xf32, #tpu.memory_space<vmem>>, vector<1x1280xf32>
    %5 = arith.addf %3, %4 : vector<1x1280xf32>
    %6 = arith.negf %5 : vector<1x1280xf32>
    %7 = math.exp %6 : vector<1x1280xf32>
    %cst_5 = arith.constant 1.000000e+00 : f32
    %8 = vector.broadcast %cst_5 : f32 to vector<1x1280xf32>
    %9 = arith.addf %8, %7 : vector<1x1280xf32>
    %10 = arith.divf %8, %9 : vector<1x1280xf32>
    %11 = arith.mulf %5, %10 : vector<1x1280xf32>
    %12 = arith.truncf %11 : vector<1x1280xf32> to vector<1x1280xbf16>
    %c0_6 = arith.constant 0 : index
    %c0_7 = arith.constant 0 : index
    %13 = vector.load %arg4[%c0_6, %c0_7] : memref<1280x640xbf16, #tpu.memory_space<vmem>>, vector<1280x640xbf16>
    %cst_8 = arith.constant dense<0.000000e+00> : vector<1x640xf32>
    %14 = tpu.matmul %12, %13, %cst_8 {dimension_numbers = #tpu.dot_dimension_numbers<[1], [0], [0], [1], [0, 0, 1, 1], [], []>} : vector<1x1280xbf16>, vector<1280x640xbf16>, vector<1x640xf32> -> vector<1x640xf32>
    %c0_9 = arith.constant 0 : index
    %c0_10 = arith.constant 0 : index
    %15 = vector.load %arg5[%c0_9, %c0_10] : memref<1x640xf32, #tpu.memory_space<vmem>>, vector<1x640xf32>
    %16 = arith.addf %14, %15 : vector<1x640xf32>
    %c0_11 = arith.constant 0 : index
    %c0_12 = arith.constant 0 : index
    %17 = vector.load %arg6[%c0_11, %c0_12] : memref<1x640xf32, #tpu.memory_space<vmem>>, vector<1x640xf32>
    tpu.vector_store %arg6[%c0_11, %c0_12], %16 {strides = array<i32>} : memref<1x640xf32, #tpu.memory_space<vmem>>, vector<1x640xf32>,
    return
  }
  func.func @transform_0(%arg0: i32) -> (i32, i32) {
    %c0_i32 = arith.constant 0 : i32
    %c0_i32_0 = arith.constant 0 : i32
    %c0_i32_1 = arith.constant 0 : i32
    return %c0_i32, %c0_i32_0 : i32, i32
  }
  func.func @transform_1(%arg0: i32) -> (i32, i32) {
    %c0_i32 = arith.constant 0 : i32
    %c0_i32_0 = arith.constant 0 : i32
    %c0_i32_1 = arith.constant 0 : i32
    return %c0_i32, %c0_i32_0 : i32, i32
  }
  func.func @transform_2(%arg0: i32) -> (i32, i32) {
    %c0_i32 = arith.constant 0 : i32
    %c0_i32_0 = arith.constant 0 : i32
    %c0_i32_1 = arith.constant 0 : i32
    return %c0_i32, %c0_i32_0 : i32, i32
  }
  func.func @transform_3(%arg0: i32) -> (i32, i32) {
    %c0_i32 = arith.constant 0 : i32
    %c0_i32_0 = arith.constant 0 : i32
    return %c0_i32, %arg0 : i32, i32
  }
  func.func @transform_4(%arg0: i32) -> (i32, i32) {
    %c0_i32 = arith.constant 0 : i32
    %c0_i32_0 = arith.constant 0 : i32
    return %c0_i32, %arg0 : i32, i32
  }
  func.func @transform_5(%arg0: i32) -> (i32, i32) {
    %c0_i32 = arith.constant 0 : i32
    %c0_i32_0 = arith.constant 0 : i32
    return %c0_i32, %arg0 : i32, i32
  }
}

</mosaic_0001>

<llo_original>
// kernel: diffusion_forward.4
$region0: #{diffusion_forward.4}
  #allocation0 [shape = 'u32[]', space=smem, size = 0x4, offset = 0x4, fixed_abs, tag = 'smem constant byte address 0x4 - core index']
  #allocation1 [shape = 'u32[144,128]{1,0:T(1,128)}', space=vmem, size = 0x12000, scoped, tag = 'internal scratch']
  #allocation2 [shape = 'f32[72,256]{1,0:T(8,128)}', space=vmem, size = 0x12000, scoped, tag = 'scratch operand']
  %s0 = inlined_call_operand.vmem [shape: f32[2,8,256], index: 0, kind: input, shape index: {}]
  %s1 = inlined_call_operand.vmem [shape: bf16[320,72], index: 1, kind: input, shape index: {}]
  %s2 = inlined_call_operand.vmem [shape: f32[320,1], index: 2, kind: input, shape index: {}]
  %s3 = inlined_call_operand.vmem [shape: f32[9,1,256], index: 3, kind: input, shape index: {}]
  %s4 = inlined_call_operand.vmem [shape: bf16[2,320,256], index: 4, kind: output, shape index: {}]
  %s5 = sld [smem:[#allocation0]]
  $region49: #{diffusion_forward.4} parent=0
    _
  %s7 = ssub.s32 1, %s5
  %s8 = scalar_select 0, %s7, %s5
  loop: start=0, step=1, limit=6
  $region2: #{diffusion_forward.4} parent=0 // loop_pre_header
    _
  $region3: #{diffusion_forward.4} parent=0 // loop_header
    %s10 = sphi 0, %s14
    %p11 = scmp.ge.s32.totalorder %s10, 6
    %s17 = sphi 0, %s29
    %s18 = sphi 0, %s25
    %s19 = sphi 0, %s17
    %s20 = sphi 0, %s18
    %s21 = sphi 0, %s19
    %s22 = sphi 0, %s20
    %s32 = sphi 0, %s34
    %s35 = sphi 0, %s32
    %s36 = sphi 0, %s35
    %s52 = sphi 0, %s36
    %s58 = sphi 0, %s60
    %s61 = sphi 0, %s58
    %s62 = sphi 0, %s61
    %s78 = sphi 0, %s62
    %s84 = sphi 0, %s86
    %s87 = sphi 0, %s84
    %s88 = sphi 0, %s87
    %s104 = sphi 0, %s88
    %s108 = sphi 0, %s108
    %s110 = sphi 0, %s108
    %s111 = sphi 0, %s110
    %s125 = sphi 0, %s111
    %s133 = sphi 0, %s135
    %s136 = sphi 0, %s133
    %s137 = sphi 0, %s136
    %s153 = sphi 0, %s137
  $region4: #{diffusion_forward.4} parent=0 // loop_header_branch
    %13 = sbr.rel (%p11) target = $region8
  $region5: #{diffusion_forward.4} parent=0 // loop_body
    %s15 = ssub.s32 %s10, 1
    %s16 = ssub.s32 %s10, 2
    %s23 = sadd.s32 1, %s18
    %p24 = scmp.ge.s32.totalorder %s23, 2
    %s25 = scalar_select %p24, 0, %s23
    %s26 = sadd.s32 1, %s17
    %s27 = scalar_select %p24, %s26, %s17
    %p28 = scmp.ge.s32.totalorder %s27, 2
    %s29 = scalar_select %p28, 0, %s27
    %s30 = ssub.s32 %s17, %s29
    %p31 = scmp.eq.s32.totalorder %s30, 0
    %s33 = sadd.s32 %s32, 1
    %s34 = scalar_select %p31, %s32, %s33
    %p37 = pneg %p31
    %p38 = scmp.eq.s32.totalorder %s10, 3
    %p39 = por %p37, %p38
    %p40 = scmp.ne.s32.totalorder %s32, %s35
    %p41 = scmp.eq.s32.totalorder %s10, 0
    %p42 = por %p40, %p41
    %p43 = scmp.ne.s32.totalorder %s32, %s35
    %p44 = scmp.eq.s32.totalorder %s15, 3
    %p45 = por %p43, %p44
    %p46 = scmp.ne.s32.totalorder %s35, %s36
    %p47 = scmp.eq.s32.totalorder %s15, 0
    %p48 = por %p46, %p47
    %p49 = scmp.ne.s32.totalorder %s35, %s36
    %p50 = scmp.eq.s32.totalorder %s16, 3
    %p51 = por %p49, %p50
    %p53 = scmp.ne.s32.totalorder %s36, %s52
    %p54 = scmp.eq.s32.totalorder %s16, 0
    %p55 = por %p53, %p54
    %s56 = ssub.s32 %s18, %s25
    %p57 = scmp.eq.s32.totalorder %s56, 0
    %s59 = sadd.s32 %s58, 1
    %s60 = scalar_select %p57, %s58, %s59
    %p63 = pneg %p57
    %p64 = scmp.eq.s32.totalorder %s10, 3
    %p65 = por %p63, %p64
    %p66 = scmp.ne.s32.totalorder %s58, %s61
    %p67 = scmp.eq.s32.totalorder %s10, 0
    %p68 = por %p66, %p67
    %p69 = scmp.ne.s32.totalorder %s58, %s61
    %p70 = scmp.eq.s32.totalorder %s15, 3
    %p71 = por %p69, %p70
    %p72 = scmp.ne.s32.totalorder %s61, %s62
    %p73 = scmp.eq.s32.totalorder %s15, 0
    %p74 = por %p72, %p73
    %p75 = scmp.ne.s32.totalorder %s61, %s62
    %p76 = scmp.eq.s32.totalorder %s16, 3
    %p77 = por %p75, %p76
    %p79 = scmp.ne.s32.totalorder %s62, %s78
    %p80 = scmp.eq.s32.totalorder %s16, 0
    %p81 = por %p79, %p80
    %s82 = ssub.s32 %s18, %s25
    %p83 = scmp.eq.s32.totalorder %s82, 0
    %s85 = sadd.s32 %s84, 1
    %s86 = scalar_select %p83, %s84, %s85
    %p89 = pneg %p83
    %p90 = scmp.eq.s32.totalorder %s10, 3
    %p91 = por %p89, %p90
    %p92 = scmp.ne.s32.totalorder %s84, %s87
    %p93 = scmp.eq.s32.totalorder %s10, 0
    %p94 = por %p92, %p93
    %p95 = scmp.ne.s32.totalorder %s84, %s87
    %p96 = scmp.eq.s32.totalorder %s15, 3
    %p97 = por %p95, %p96
    %p98 = scmp.ne.s32.totalorder %s87, %s88
    %p99 = scmp.eq.s32.totalorder %s15, 0
    %p100 = por %p98, %p99
    %p101 = scmp.ne.s32.totalorder %s87, %s88
    %p102 = scmp.eq.s32.totalorder %s16, 3
    %p103 = por %p101, %p102
    %p105 = scmp.ne.s32.totalorder %s88, %s104
    %p106 = scmp.eq.s32.totalorder %s16, 0
    %p107 = por %p105, %p106
    %s109 = sadd.s32 %s108, 1
    %p112 = scmp.eq.s32.totalorder %s10, 3
    %p113 = scmp.ne.s32.totalorder %s108, %s110
    %p114 = scmp.eq.s32.totalorder %s10, 0
    %p115 = por %p113, %p114
    %p116 = scmp.ne.s32.totalorder %s108, %s110
    %p117 = scmp.eq.s32.totalorder %s15, 3
    %p118 = por %p116, %p117
    %p119 = scmp.ne.s32.totalorder %s110, %s111
    %p120 = scmp.eq.s32.totalorder %s15, 0
    %p121 = por %p119, %p120
    %p122 = scmp.ne.s32.totalorder %s110, %s111
    %p123 = scmp.eq.s32.totalorder %s16, 3
    %p124 = por %p122, %p123
    %p126 = scmp.ne.s32.totalorder %s111, %s125
    %p127 = scmp.eq.s32.totalorder %s16, 0
    %p128 = por %p126, %p127
    %s129 = ssub.s32 %s17, %s29
    %s130 = ssub.s32 %s18, %s25
    %s131 = sor.u32 %s129, %s130
    %p132 = scmp.eq.s32.totalorder %s131, 0
    %s134 = sadd.s32 %s133, 1
    %s135 = scalar_select %p132, %s133, %s134
    %p138 = pneg %p132
    %p139 = scmp.eq.s32.totalorder %s10, 3
    %p140 = por %p138, %p139
    %p141 = scmp.ne.s32.totalorder %s133, %s136
    %p142 = scmp.eq.s32.totalorder %s10, 0
    %p143 = por %p141, %p142
    %p144 = scmp.ne.s32.totalorder %s133, %s136
    %p145 = scmp.eq.s32.totalorder %s15, 3
    %p146 = por %p144, %p145
    %p147 = scmp.ne.s32.totalorder %s136, %s137
    %p148 = scmp.eq.s32.totalorder %s15, 0
    %p149 = por %p147, %p148
    %p150 = scmp.ne.s32.totalorder %s136, %s137
    %p151 = scmp.eq.s32.totalorder %s16, 3
    %p152 = por %p150, %p151
    %p154 = scmp.ne.s32.totalorder %s137, %s153
    %p155 = scmp.eq.s32.totalorder %s16, 0
    %p156 = por %p154, %p155
    %p157 = scmp.le.s32.totalorder 1, %s10
    %p158 = scmp.lt.s32.totalorder %s10, 5
    %p159 = pnand %p157, %p158
    %p160 = pneg %p159
    // Predicated region
    $region9: #{diffusion_forward.4} parent=5 // pred_check
      _
    $region10: #{diffusion_forward.4} parent=5 // pred_check_branch
      %162 = sbr.rel (%p159) target = $region12
    $region11: #{diffusion_forward.4} parent=5 // pred_region
      %s163 = ssub.s32 %s10, 1
      // Predicated region
      $region13: #{diffusion_forward.4} parent=11 // pred_check
        %p164 = pneg %p121
      $region14: #{diffusion_forward.4} parent=11 // pred_check_branch
        %166 = sbr.rel (%p164) target = $region16
      $region15: #{diffusion_forward.4} parent=11 // pred_region
        _
      $region16: #{diffusion_forward.4} parent=11 // pred_fallthru
        _
    $region12: #{diffusion_forward.4} parent=5 // pred_fallthru
      _
    %p167 = scmp.lt.s32.totalorder %s10, 4
    // Predicated region
    $region17: #{diffusion_forward.4} parent=5 // pred_check
      %p168 = pneg %p167
    $region18: #{diffusion_forward.4} parent=5 // pred_check_branch
      %170 = sbr.rel (%p168) target = $region20
    $region19: #{diffusion_forward.4} parent=5 // pred_region
      // Predicated region
      $region21: #{diffusion_forward.4} parent=19 // pred_check
        %p171 = pneg %p42
      $region22: #{diffusion_forward.4} parent=19 // pred_check_branch
        %173 = sbr.rel (%p171) target = $region24
      $region23: #{diffusion_forward.4} parent=19 // pred_region
        %p174 = scmp.lt.s32.totalorder %s17, 1
        %s175 = scalar_select %p174, %s17, 1
        %s176 = smul.addr %s175, 2
        %s177 = smul.addr %s176, 8
        %s178 = scalar_lea.vmem %s0, %s177
      $region24: #{diffusion_forward.4} parent=19 // pred_fallthru
        _
      // Predicated region
      $region25: #{diffusion_forward.4} parent=19 // pred_check
        %p179 = pneg %p68
      $region26: #{diffusion_forward.4} parent=19 // pred_check_branch
        %181 = sbr.rel (%p179) target = $region28
      $region27: #{diffusion_forward.4} parent=19 // pred_region
        %s182 = smul.u32 20, %s18
        %p183 = scmp.lt.s32.totalorder %s182, 39
        %s184 = scalar_select %p183, %s182, 39
        %s185 = smul.addr %s184, 4
        %s186 = scalar_lea.vmem %s1, %s185
        %s187 = smul.u32 20, %s18
      $region28: #{diffusion_forward.4} parent=19 // pred_fallthru
        _
      // Predicated region
      $region29: #{diffusion_forward.4} parent=19 // pred_check
        %p188 = pneg %p94
      $region30: #{diffusion_forward.4} parent=19 // pred_check_branch
        %190 = sbr.rel (%p188) target = $region32
      $region31: #{diffusion_forward.4} parent=19 // pred_region
        %s191 = smul.u32 20, %s18
        %p192 = scmp.lt.s32.totalorder %s191, 39
        %s193 = scalar_select %p192, %s191, 39
        %s194 = smul.addr %s193, 8
        %s195 = scalar_lea.vmem %s2, %s194
        %s196 = smul.u32 20, %s18
      $region32: #{diffusion_forward.4} parent=19 // pred_fallthru
        _
    $region20: #{diffusion_forward.4} parent=5 // pred_fallthru
      _
    %p197 = scmp.le.s32.totalorder 1, %s10
    %p198 = scmp.lt.s32.totalorder %s10, 5
    %p199 = pnand %p197, %p198
    %p200 = pneg %p199
    // Predicated region
    $region33: #{diffusion_forward.4} parent=5 // pred_check
      _
    $region34: #{diffusion_forward.4} parent=5 // pred_check_branch
      %202 = sbr.rel (%p199) target = $region36
    $region35: #{diffusion_forward.4} parent=5 // pred_region
      %s203 = ssub.s32 %s10, 1
      %p204 = scmp.lt.s32.totalorder %s19, 1
      %s205 = scalar_select %p204, %s19, 1
      %s206 = smul.addr %s205, 2
      %s207 = smul.addr %s206, 8
      %s208 = scalar_lea.vmem %s0, %s207
      %p209 = pneg %p48
      %p210 = pneg %p45
      %s211 = smul.u32 20, %s20
      %p212 = scmp.lt.s32.totalorder %s211, 39
      %s213 = scalar_select %p212, %s211, 39
      %s214 = smul.addr %s213, 4
      %s215 = scalar_lea.vmem %s1, %s214
      %p216 = pneg %p74
      %p217 = pneg %p71
      %s218 = smul.u32 20, %s20
      %p219 = scmp.lt.s32.totalorder %s218, 39
      %s220 = scalar_select %p219, %s218, 39
      %s221 = smul.addr %s220, 8
      %s222 = scalar_lea.vmem %s2, %s221
      %p223 = pneg %p100
      %p224 = pneg %p97
      %p225 = pneg %p121
      %p226 = pneg %p118
      %p227 = pneg %p149
      %p228 = pneg %p146
      %s229 = smul.u32 20, %s20
      %p230 = scmp.lt.s32.totalorder %s19, 1
      %s231 = scalar_select %p230, %s19, 1
      %p232 = scmp.lt.s32.totalorder %s229, 39
      %s233 = scalar_select %p232, %s229, 39
      %s234 = smul.addr %s233, 2
      %s235 = smul.addr %s231, 80
      %s236 = sadd.s32 %s234, %s235
      %s237 = smul.addr %s236, 4
      %s238 = scalar_lea.vmem %s4, %s237
      %p239 = scmp.lt.s32.totalorder %s19, 1
      %s240 = scalar_select %p239, %s19, 1
      %s241 = smul.addr %s240, 2
      %s242 = smul.addr %s241, 8
      %s243 = scalar_lea.vmem %s0, %s242
      %s244 = smul.u32 20, %s20
      %p245 = scmp.lt.s32.totalorder %s244, 39
      %s246 = scalar_select %p245, %s244, 39
      %s247 = smul.addr %s246, 4
      %s248 = scalar_lea.vmem %s1, %s247
      %s249 = smul.u32 20, %s20
      %s250 = smul.u32 20, %s20
      %p251 = scmp.lt.s32.totalorder %s250, 39
      %s252 = scalar_select %p251, %s250, 39
      %s253 = smul.addr %s252, 8
      %s254 = scalar_lea.vmem %s2, %s253
      %s255 = smul.u32 20, %s20
      %s256 = smul.u32 20, %s20
      %p257 = scmp.lt.s32.totalorder %s19, 1
      %s258 = scalar_select %p257, %s19, 1
      %p259 = scmp.lt.s32.totalorder %s256, 39
      %s260 = scalar_select %p259, %s256, 39
      %s261 = smul.addr %s260, 2
      %s262 = smul.addr %s258, 80
      %s263 = sadd.s32 %s261, %s262
      %s264 = smul.addr %s263, 4
      %s265 = scalar_lea.vmem %s4, %s264
      %s266 = smul.u32 20, %s20
      %v268 = vld [vmem:[%s243] sm:$0xff]
      %v269 = vld [vmem:[%s243 + $0x8] sm:$0xff]
      %270 = vrot.lane.b32.xlu0 %v268, 17
      %v271 = vpop.permute.xlu0 %270
      %272 = vrot.lane.b32.xlu0 %v269, 17
      %v273 = vpop.permute.xlu0 %272
      %v274 = vlaneseq
      %v275 = vand.u32 %v274, 127
      %vm276 = vcmp.lt.s32.totalorder %v275, 17
      %v277 = vsel %vm276, %v271, %v273
      %v278 = vsel %vm276, %v273, %v271
      %v279 = vld [vmem:[%s3] sm:$0x3]
      %v281 = vlaneseq
      %v282 = vshrl.u32 %v281, 7
      %v283 = vsub.s32 0, %v282
      %v284 = vrot.slane %v279, %v283
      %v285 = vlaneseq
      %v286 = vshrl.u32 %v285, 7
      %v287 = vsub.s32 1, %v286
      %v288 = vrot.slane %v279, %v287
      %v291 = vmul.f32 %v278, %v284
      %v292 = vmul.f32 %v277, %v288
      %293 = vst [vmem:[#allocation2] sm:$0xff] %v291
      %294 = vst [vmem:[#allocation2 + $0x8] sm:$0xff] %v292
      %295 = vrot.lane.b32.xlu0 %v268, 16
      %v296 = vpop.permute.xlu0 %295
      %297 = vrot.lane.b32.xlu0 %v269, 16
      %v298 = vpop.permute.xlu0 %297
      %vm299 = vcmp.lt.s32.totalorder %v275, 16
      %v300 = vsel %vm299, %v296, %v298
      %v301 = vsel %vm299, %v298, %v296
      %s302 = scalar_lea.vmem %s3, 2
      %v303 = vld [vmem:[%s302] sm:$0x3]
      %v305 = vlaneseq
      %v306 = vshrl.u32 %v305, 7
      %v307 = vsub.s32 0, %v306
      %v308 = vrot.slane %v303, %v307
      %v309 = vlaneseq
      %v310 = vshrl.u32 %v309, 7
      %v311 = vsub.s32 1, %v310
      %v312 = vrot.slane %v303, %v311
      %v315 = vmul.f32 %v301, %v308
      %v316 = vmul.f32 %v300, %v312
      %317 = vst [vmem:[#allocation2 + $0x10] sm:$0xff] %v315
      %318 = vst [vmem:[#allocation2 + $0x18] sm:$0xff] %v316
      %319 = vrot.lane.b32.xlu0 %v268, 15
      %v320 = vpop.permute.xlu0 %319
      %321 = vrot.lane.b32.xlu0 %v269, 15
      %v322 = vpop.permute.xlu0 %321
      %vm323 = vcmp.lt.s32.totalorder %v275, 15
      %v324 = vsel %vm323, %v320, %v322
      %v325 = vsel %vm323, %v322, %v320
      %s326 = scalar_lea.vmem %s3, 4
      %v327 = vld [vmem:[%s326] sm:$0x3]
      %v329 = vlaneseq
      %v330 = vshrl.u32 %v329, 7
      %v331 = vsub.s32 0, %v330
      %v332 = vrot.slane %v327, %v331
      %v333 = vlaneseq
      %v334 = vshrl.u32 %v333, 7
      %v335 = vsub.s32 1, %v334
      %v336 = vrot.slane %v327, %v335
      %v339 = vmul.f32 %v325, %v332
      %v340 = vmul.f32 %v324, %v336
      %341 = vst [vmem:[#allocation2 + $0x20] sm:$0xff] %v339
      %342 = vst [vmem:[#allocation2 + $0x28] sm:$0xff] %v340
      %343 = vrot.lane.b32.xlu0 %v268, 1
      %v344 = vpop.permute.xlu0 %343
      %345 = vrot.lane.b32.xlu0 %v269, 1
      %v346 = vpop.permute.xlu0 %345
      %vm347 = vcmp.lt.s32.totalorder %v275, 1
      %v348 = vsel %vm347, %v344, %v346
      %v349 = vsel %vm347, %v346, %v344
      %s350 = scalar_lea.vmem %s3, 6
      %v351 = vld [vmem:[%s350] sm:$0x3]
      %v353 = vlaneseq
      %v354 = vshrl.u32 %v353, 7
      %v355 = vsub.s32 0, %v354
      %v356 = vrot.slane %v351, %v355
      %v357 = vlaneseq
      %v358 = vshrl.u32 %v357, 7
      %v359 = vsub.s32 1, %v358
      %v360 = vrot.slane %v351, %v359
      %v363 = vmul.f32 %v349, %v356
      %v364 = vmul.f32 %v348, %v360
      %365 = vst [vmem:[#allocation2 + $0x30] sm:$0xff] %v363
      %366 = vst [vmem:[#allocation2 + $0x38] sm:$0xff] %v364
      %s367 = scalar_lea.vmem %s3, 8
      %v368 = vld [vmem:[%s367] sm:$0x3]
      %v370 = vlaneseq
      %v371 = vshrl.u32 %v370, 7
      %v372 = vsub.s32 0, %v371
      %v373 = vrot.slane %v368, %v372
      %v374 = vlaneseq
      %v375 = vshrl.u32 %v374, 7
      %v376 = vsub.s32 1, %v375
      %v377 = vrot.slane %v368, %v376
      %v380 = vmul.f32 %v268, %v373
      %v381 = vmul.f32 %v269, %v377
      %382 = vst [vmem:[#allocation2 + $0x40] sm:$0xff] %v380
      %383 = vst [vmem:[#allocation2 + $0x48] sm:$0xff] %v381
      %384 = vrot.lane.b32.xlu0 %v268, 127
      %v385 = vpop.permute.xlu0 %384
      %386 = vrot.lane.b32.xlu0 %v269, 127
      %v387 = vpop.permute.xlu0 %386
      %vm388 = vcmp.lt.s32.totalorder %v275, 127
      %v389 = vsel %vm388, %v385, %v387
      %v390 = vsel %vm388, %v387, %v385
      %s391 = scalar_lea.vmem %s3, 10
      %v392 = vld [vmem:[%s391] sm:$0x3]
      %v394 = vlaneseq
      %v395 = vshrl.u32 %v394, 7
      %v396 = vsub.s32 0, %v395
      %v397 = vrot.slane %v392, %v396
      %v398 = vlaneseq
      %v399 = vshrl.u32 %v398, 7
      %v400 = vsub.s32 1, %v399
      %v401 = vrot.slane %v392, %v400
      %v404 = vmul.f32 %v389, %v397
      %v405 = vmul.f32 %v390, %v401
      %406 = vst [vmem:[#allocation2 + $0x50] sm:$0xff] %v404
      %407 = vst [vmem:[#allocation2 + $0x58] sm:$0xff] %v405
      %408 = vrot.lane.b32.xlu0 %v268, 113
      %v409 = vpop.permute.xlu0 %408
      %410 = vrot.lane.b32.xlu0 %v269, 113
      %v411 = vpop.permute.xlu0 %410
      %vm412 = vcmp.lt.s32.totalorder %v275, 113
      %v413 = vsel %vm412, %v409, %v411
      %v414 = vsel %vm412, %v411, %v409
      %s415 = scalar_lea.vmem %s3, 12
      %v416 = vld [vmem:[%s415] sm:$0x3]
      %v418 = vlaneseq
      %v419 = vshrl.u32 %v418, 7
      %v420 = vsub.s32 0, %v419
      %v421 = vrot.slane %v416, %v420
      %v422 = vlaneseq
      %v423 = vshrl.u32 %v422, 7
      %v424 = vsub.s32 1, %v423
      %v425 = vrot.slane %v416, %v424
      %v428 = vmul.f32 %v413, %v421
      %v429 = vmul.f32 %v414, %v425
      %430 = vst [vmem:[#allocation2 + $0x60] sm:$0xff] %v428
      %431 = vst [vmem:[#allocation2 + $0x68] sm:$0xff] %v429
      %432 = vrot.lane.b32.xlu0 %v268, 112
      %v433 = vpop.permute.xlu0 %432
      %434 = vrot.lane.b32.xlu0 %v269, 112
      %v435 = vpop.permute.xlu0 %434
      %vm436 = vcmp.lt.s32.totalorder %v275, 112
      %v437 = vsel %vm436, %v433, %v435
      %v438 = vsel %vm436, %v435, %v433
      %s439 = scalar_lea.vmem %s3, 14
      %v440 = vld [vmem:[%s439] sm:$0x3]
      %v442 = vlaneseq
      %v443 = vshrl.u32 %v442, 7
      %v444 = vsub.s32 0, %v443
      %v445 = vrot.slane %v440, %v444
      %v446 = vlaneseq
      %v447 = vshrl.u32 %v446, 7
      %v448 = vsub.s32 1, %v447
      %v449 = vrot.slane %v440, %v448
      %v452 = vmul.f32 %v437, %v445
      %v453 = vmul.f32 %v438, %v449
      %454 = vst [vmem:[#allocation2 + $0x70] sm:$0xff] %v452
      %455 = vst [vmem:[#allocation2 + $0x78] sm:$0xff] %v453
      %456 = vrot.lane.b32.xlu0 %v268, 111
      %v457 = vpop.permute.xlu0 %456
      %458 = vrot.lane.b32.xlu0 %v269, 111
      %v459 = vpop.permute.xlu0 %458
      %vm460 = vcmp.lt.s32.totalorder %v275, 111
      %v461 = vsel %vm460, %v457, %v459
      %v462 = vsel %vm460, %v459, %v457
      %s463 = scalar_lea.vmem %s3, 16
      %v464 = vld [vmem:[%s463] sm:$0x3]
      %v466 = vlaneseq
      %v467 = vshrl.u32 %v466, 7
      %v468 = vsub.s32 0, %v467
      %v469 = vrot.slane %v464, %v468
      %v470 = vlaneseq
      %v471 = vshrl.u32 %v470, 7
      %v472 = vsub.s32 1, %v471
      %v473 = vrot.slane %v464, %v472
      %v476 = vmul.f32 %v461, %v469
      %v477 = vmul.f32 %v462, %v473
      %478 = vst [vmem:[#allocation2 + $0x80] sm:$0xff] %v476
      %479 = vst [vmem:[#allocation2 + $0x88] sm:$0xff] %v477
      %v480 = vld [vmem:[#allocation2] sm:$0xff]
      %v481 = vld [vmem:[#allocation2 + $0x8] sm:$0xff]
      %v482 = vld [vmem:[#allocation2 + $0x10] sm:$0xff]
      %v483 = vld [vmem:[#allocation2 + $0x18] sm:$0xff]
      %v484 = vld [vmem:[#allocation2 + $0x20] sm:$0xff]
      %v485 = vld [vmem:[#allocation2 + $0x28] sm:$0xff]
      %v486 = vld [vmem:[#allocation2 + $0x30] sm:$0xff]
      %v487 = vld [vmem:[#allocation2 + $0x38] sm:$0xff]
      %v488 = vld [vmem:[#allocation2 + $0x40] sm:$0xff]
      %v489 = vld [vmem:[#allocation2 + $0x48] sm:$0xff]
      %v490 = vld [vmem:[#allocation2 + $0x50] sm:$0xff]
      %v491 = vld [vmem:[#allocation2 + $0x58] sm:$0xff]
      %v492 = vld [vmem:[#allocation2 + $0x60] sm:$0xff]
      %v493 = vld [vmem:[#allocation2 + $0x68] sm:$0xff]
      %v494 = vld [vmem:[#allocation2 + $0x70] sm:$0xff]
      %v495 = vld [vmem:[#allocation2 + $0x78] sm:$0xff]
      %v496 = vld [vmem:[#allocation2 + $0x80] sm:$0xff]
      %v497 = vld [vmem:[#allocation2 + $0x88] sm:$0xff]
      %v498 = vpack.c.bf16 %v482, %v480
      %v499 = vpack.c.bf16 %v483, %v481
      %v500 = vpack.c.bf16 %v486, %v484
      %v501 = vpack.c.bf16 %v487, %v485
      %v502 = vpack.c.bf16 %v490, %v488
      %v503 = vpack.c.bf16 %v491, %v489
      %v504 = vpack.c.bf16 %v494, %v492
      %v505 = vpack.c.bf16 %v495, %v493
      %v506 = vpack.c.bf16 %v496, %v496
      %v507 = vpack.c.bf16 %v497, %v497
      %v508 = vld [vmem:[%s248] sm:$0xf]
      %v509 = vld [vmem:[%s248 + $0x4] sm:$0xf]
      %v510 = vld [vmem:[%s248 + $0x8] sm:$0xf]
      %v511 = vld [vmem:[%s248 + $0xc] sm:$0xf]
      %v512 = vld [vmem:[%s248 + $0x10] sm:$0xf]
      %v513 = vld [vmem:[%s248 + $0x14] sm:$0xf]
      %v514 = vld [vmem:[%s248 + $0x18] sm:$0xf]
      %v515 = vld [vmem:[%s248 + $0x1c] sm:$0xf]
      %v516 = vld [vmem:[%s248 + $0x20] sm:$0xf]
      %v517 = vld [vmem:[%s248 + $0x24] sm:$0xf]
      %v518 = vld [vmem:[%s248 + $0x28] sm:$0xf]
      %v519 = vld [vmem:[%s248 + $0x2c] sm:$0xf]
      %v520 = vld [vmem:[%s248 + $0x30] sm:$0xf]
      %v521 = vld [vmem:[%s248 + $0x34] sm:$0xf]
      %v522 = vld [vmem:[%s248 + $0x38] sm:$0xf]
      %v523 = vld [vmem:[%s248 + $0x3c] sm:$0xf]
      %v524 = vld [vmem:[%s248 + $0x40] sm:$0xf]
      %v525 = vld [vmem:[%s248 + $0x44] sm:$0xf]
      %v526 = vld [vmem:[%s248 + $0x48] sm:$0xf]
      %v527 = vld [vmem:[%s248 + $0x4c] sm:$0xf]
      %v528 = vld [vmem:[%s254] sm:$0xff]
      %v529 = vld [vmem:[%s254 + $0x8] sm:$0xff]
      %v530 = vld [vmem:[%s254 + $0x10] sm:$0xff]
      %v531 = vld [vmem:[%s254 + $0x18] sm:$0xff]
      %v532 = vld [vmem:[%s254 + $0x20] sm:$0xff]
      %v533 = vld [vmem:[%s254 + $0x28] sm:$0xff]
      %v534 = vld [vmem:[%s254 + $0x30] sm:$0xff]
      %v535 = vld [vmem:[%s254 + $0x38] sm:$0xff]
      %v536 = vld [vmem:[%s254 + $0x40] sm:$0xff]
      %v537 = vld [vmem:[%s254 + $0x48] sm:$0xff]
      %v538 = vld [vmem:[%s254 + $0x50] sm:$0xff]
      %v539 = vld [vmem:[%s254 + $0x58] sm:$0xff]
      %v540 = vld [vmem:[%s254 + $0x60] sm:$0xff]
      %v541 = vld [vmem:[%s254 + $0x68] sm:$0xff]
      %v542 = vld [vmem:[%s254 + $0x70] sm:$0xff]
      %v543 = vld [vmem:[%s254 + $0x78] sm:$0xff]
      %v544 = vld [vmem:[%s254 + $0x80] sm:$0xff]
      %v545 = vld [vmem:[%s254 + $0x88] sm:$0xff]
      %v546 = vld [vmem:[%s254 + $0x90] sm:$0xff]
      %v547 = vld [vmem:[%s254 + $0x98] sm:$0xff]
      %549 = vset.pattern.permute.xlu0 0
      %550 = vperm.xlu0 %549, %v528
      %v551 = vpop.permute.xlu0 %550
      %554 = vset.pattern.permute.xlu0 0
      %555 = vperm.xlu0 %554, %v529
      %v556 = vpop.permute.xlu0 %555
      %559 = vset.pattern.permute.xlu0 0
      %560 = vperm.xlu0 %559, %v530
      %v561 = vpop.permute.xlu0 %560
      %564 = vset.pattern.permute.xlu0 0
      %565 = vperm.xlu0 %564, %v531
      %v566 = vpop.permute.xlu0 %565
      %569 = vset.pattern.permute.xlu0 0
      %570 = vperm.xlu0 %569, %v532
      %v571 = vpop.permute.xlu0 %570
      %574 = vset.pattern.permute.xlu0 0
      %575 = vperm.xlu0 %574, %v533
      %v576 = vpop.permute.xlu0 %575
      %579 = vset.pattern.permute.xlu0 0
      %580 = vperm.xlu0 %579, %v534
      %v581 = vpop.permute.xlu0 %580
      %584 = vset.pattern.permute.xlu0 0
      %585 = vperm.xlu0 %584, %v535
      %v586 = vpop.permute.xlu0 %585
      %589 = vset.pattern.permute.xlu0 0
      %590 = vperm.xlu0 %589, %v536
      %v591 = vpop.permute.xlu0 %590
      %594 = vset.pattern.permute.xlu0 0
      %595 = vperm.xlu0 %594, %v537
      %v596 = vpop.permute.xlu0 %595
      %599 = vset.pattern.permute.xlu0 0
      %600 = vperm.xlu0 %599, %v538
      %v601 = vpop.permute.xlu0 %600
      %604 = vset.pattern.permute.xlu0 0
      %605 = vperm.xlu0 %604, %v539
      %v606 = vpop.permute.xlu0 %605
      %609 = vset.pattern.permute.xlu0 0
      %610 = vperm.xlu0 %609, %v540
      %v611 = vpop.permute.xlu0 %610
      %614 = vset.pattern.permute.xlu0 0
      %615 = vperm.xlu0 %614, %v541
      %v616 = vpop.permute.xlu0 %615
      %619 = vset.pattern.permute.xlu0 0
      %620 = vperm.xlu0 %619, %v542
      %v621 = vpop.permute.xlu0 %620
      %624 = vset.pattern.permute.xlu0 0
      %625 = vperm.xlu0 %624, %v543
      %v626 = vpop.permute.xlu0 %625
      %629 = vset.pattern.permute.xlu0 0
      %630 = vperm.xlu0 %629, %v544
      %v631 = vpop.permute.xlu0 %630
      %634 = vset.pattern.permute.xlu0 0
      %635 = vperm.xlu0 %634, %v545
      %v636 = vpop.permute.xlu0 %635
      %639 = vset.pattern.permute.xlu0 0
      %640 = vperm.xlu0 %639, %v546
      %v641 = vpop.permute.xlu0 %640
      %644 = vset.pattern.permute.xlu0 0
      %645 = vperm.xlu0 %644, %v547
      %v646 = vpop.permute.xlu0 %645
      %v668 = vunpack.c.l.b16 %v508
      %v669 = vunpack.c.l.b16 %v509
      %v670 = vunpack.c.l.b16 %v510
      %v671 = vunpack.c.l.b16 %v511
      %v672 = vunpack.c.l.b16 %v512
      %v673 = vunpack.c.l.b16 %v513
      %v674 = vunpack.c.l.b16 %v514
      %v675 = vunpack.c.l.b16 %v515
      %v676 = vunpack.c.l.b16 %v516
      %v677 = vunpack.c.l.b16 %v517
      %v678 = vunpack.c.l.b16 %v518
      %v679 = vunpack.c.l.b16 %v519
      %v680 = vunpack.c.l.b16 %v520
      %v681 = vunpack.c.l.b16 %v521
      %v682 = vunpack.c.l.b16 %v522
      %v683 = vunpack.c.l.b16 %v523
      %v684 = vunpack.c.l.b16 %v524
      %v685 = vunpack.c.l.b16 %v525
      %v686 = vunpack.c.l.b16 %v526
      %v687 = vunpack.c.l.b16 %v527
      %v688 = vpack.c.b16 %v669, %v668
      %v689 = vpack.c.b16 %v671, %v670
      %v690 = vpack.c.b16 %v673, %v672
      %v691 = vpack.c.b16 %v675, %v674
      %v692 = vpack.c.b16 %v677, %v676
      %v693 = vpack.c.b16 %v679, %v678
      %v694 = vpack.c.b16 %v681, %v680
      %v695 = vpack.c.b16 %v683, %v682
      %v696 = vpack.c.b16 %v685, %v684
      %v697 = vpack.c.b16 %v687, %v686
      %vm698 = vcmask 588800
      %v700 = vsel %vm698, %v688, 0
      %v703 = vsel %vm698, %v689, 0
      %v706 = vsel %vm698, %v690, 0
      %v709 = vsel %vm698, %v691, 0
      %v712 = vsel %vm698, %v692, 0
      %v715 = vsel %vm698, %v693, 0
      %v718 = vsel %vm698, %v694, 0
      %v721 = vsel %vm698, %v695, 0
      %v724 = vsel %vm698, %v696, 0
      %v727 = vsel %vm698, %v697, 0
      %vm729 = vcmask 1043456
      %v731 = vsel %vm729, %v506, 0
      %v734 = vsel %vm729, %v507, 0
      %736 = vmatprep.subr.bf16.mxu0 %v499
      %737 = vmatpush1.bf16.msra.mxu0 %v498
      %738 = vmatprep.subr.bf16.mxu0 %v501
      %739 = vmatpush1.bf16.msra.mxu0 %v500
      %740 = vmatprep.subr.bf16.mxu0 %v503
      %741 = vmatpush1.bf16.msra.mxu0 %v502
      %742 = vmatprep.subr.bf16.mxu0 %v505
      %743 = vmatpush1.bf16.msra.mxu0 %v504
      %744 = vmatprep.subr.bf16.mxu0 %v734
      %745 = vmatpush1.bf16.msra.mxu0 %v731
      %746 = vmatprep.subr.bf16.mxu0 0
      %747 = vmatpush1.bf16.msra.mxu0 0
      %748 = vmatprep.subr.bf16.mxu0 0
      %749 = vmatpush1.bf16.msra.mxu0 0
      %750 = vmatprep.subr.bf16.mxu0 0
      %751 = vmatpush1.bf16.msra.mxu0 0
      %752 = vmatprep.subr.bf16.mxu0 0
      %753 = vmatpush1.bf16.msra.mxu0 0
      %754 = vmatprep.subr.bf16.mxu0 0
      %755 = vmatpush1.bf16.msra.mxu0 0
      %756 = vmatprep.subr.bf16.mxu0 0
      %757 = vmatpush1.bf16.msra.mxu0 0
      %758 = vmatprep.subr.bf16.mxu0 0
      %759 = vmatpush1.bf16.msra.mxu0 0
      %760 = vmatprep.subr.bf16.mxu0 0
      %761 = vmatpush1.bf16.msra.mxu0 0
      %762 = vmatprep.subr.bf16.mxu0 0
      %763 = vmatpush1.bf16.msra.mxu0 0
      %764 = vmatprep.subr.bf16.mxu0 0
      %765 = vmatpush1.bf16.msra.mxu0 0
      %766 = vmatprep.subr.bf16.mxu0 0
      %767 = vmatpush1.bf16.msra.mxu0 0
      %768 = vmatprep.mubr.bf16.mxu0 0
      %769 = vmatmul.mubr.bf16.gmra.mrb[0].mxu0 %v700
      %v770 = vpop.f32.mrb[0].mxu0
      %v771 = vadd.f32 %v551, %v770
      %v772 = vpop.f32.mrb[0].mxu0
      %v773 = vadd.f32 %v551, %v772
      %v774 = vpop.f32.mrb[0].mxu0
      %v775 = vadd.f32 %v556, %v774
      %v776 = vpop.f32.mrb[0].mxu0
      %v777 = vadd.f32 %v556, %v776
      %778 = vmatprep.mubr.bf16.mxu0 0
      %779 = vmatmul.mubr.bf16.gmra.mrb[0].mxu0 %v703
      %v780 = vpop.f32.mrb[0].mxu0
      %v781 = vadd.f32 %v561, %v780
      %v782 = vpop.f32.mrb[0].mxu0
      %v783 = vadd.f32 %v561, %v782
      %v784 = vpop.f32.mrb[0].mxu0
      %v785 = vadd.f32 %v566, %v784
      %v786 = vpop.f32.mrb[0].mxu0
      %v787 = vadd.f32 %v566, %v786
      %788 = vmatprep.mubr.bf16.mxu0 0
      %789 = vmatmul.mubr.bf16.gmra.mrb[0].mxu0 %v706
      %v790 = vpop.f32.mrb[0].mxu0
      %v791 = vadd.f32 %v571, %v790
      %v792 = vpop.f32.mrb[0].mxu0
      %v793 = vadd.f32 %v571, %v792
      %v794 = vpop.f32.mrb[0].mxu0
      %v795 = vadd.f32 %v576, %v794
      %v796 = vpop.f32.mrb[0].mxu0
      %v797 = vadd.f32 %v576, %v796
      %798 = vmatprep.mubr.bf16.mxu0 0
      %799 = vmatmul.mubr.bf16.gmra.mrb[0].mxu0 %v709
      %v800 = vpop.f32.mrb[0].mxu0
      %v801 = vadd.f32 %v581, %v800
      %v802 = vpop.f32.mrb[0].mxu0
      %v803 = vadd.f32 %v581, %v802
      %v804 = vpop.f32.mrb[0].mxu0
      %v805 = vadd.f32 %v586, %v804
      %v806 = vpop.f32.mrb[0].mxu0
      %v807 = vadd.f32 %v586, %v806
      %808 = vmatprep.mubr.bf16.mxu0 0
      %809 = vmatmul.mubr.bf16.gmra.mrb[0].mxu0 %v712
      %v810 = vpop.f32.mrb[0].mxu0
      %v811 = vadd.f32 %v591, %v810
      %v812 = vpop.f32.mrb[0].mxu0
      %v813 = vadd.f32 %v591, %v812
      %v814 = vpop.f32.mrb[0].mxu0
      %v815 = vadd.f32 %v596, %v814
      %v816 = vpop.f32.mrb[0].mxu0
      %v817 = vadd.f32 %v596, %v816
      %818 = vmatprep.mubr.bf16.mxu0 0
      %819 = vmatmul.mubr.bf16.gmra.mrb[0].mxu0 %v715
      %v820 = vpop.f32.mrb[0].mxu0
      %v821 = vadd.f32 %v601, %v820
      %v822 = vpop.f32.mrb[0].mxu0
      %v823 = vadd.f32 %v601, %v822
      %v824 = vpop.f32.mrb[0].mxu0
      %v825 = vadd.f32 %v606, %v824
      %v826 = vpop.f32.mrb[0].mxu0
      %v827 = vadd.f32 %v606, %v826
      %828 = vmatprep.mubr.bf16.mxu0 0
      %829 = vmatmul.mubr.bf16.gmra.mrb[0].mxu0 %v718
      %v830 = vpop.f32.mrb[0].mxu0
      %v831 = vadd.f32 %v611, %v830
      %v832 = vpop.f32.mrb[0].mxu0
      %v833 = vadd.f32 %v611, %v832
      %v834 = vpop.f32.mrb[0].mxu0
      %v835 = vadd.f32 %v616, %v834
      %v836 = vpop.f32.mrb[0].mxu0
      %v837 = vadd.f32 %v616, %v836
      %838 = vmatprep.mubr.bf16.mxu0 0
      %839 = vmatmul.mubr.bf16.gmra.mrb[0].mxu0 %v721
      %v840 = vpop.f32.mrb[0].mxu0
      %v841 = vadd.f32 %v621, %v840
      %v842 = vpop.f32.mrb[0].mxu0
      %v843 = vadd.f32 %v621, %v842
      %v844 = vpop.f32.mrb[0].mxu0
      %v845 = vadd.f32 %v626, %v844
      %v846 = vpop.f32.mrb[0].mxu0
      %v847 = vadd.f32 %v626, %v846
      %848 = vmatprep.mubr.bf16.mxu0 0
      %849 = vmatmul.mubr.bf16.gmra.mrb[0].mxu0 %v724
      %v850 = vpop.f32.mrb[0].mxu0
      %v851 = vadd.f32 %v631, %v850
      %v852 = vpop.f32.mrb[0].mxu0
      %v853 = vadd.f32 %v631, %v852
      %v854 = vpop.f32.mrb[0].mxu0
      %v855 = vadd.f32 %v636, %v854
      %v856 = vpop.f32.mrb[0].mxu0
      %v857 = vadd.f32 %v636, %v856
      %858 = vmatprep.mubr.bf16.mxu0 0
      %859 = vmatmul.mubr.bf16.gmra.mrb[0].mxu0 %v727
      %v860 = vpop.f32.mrb[0].mxu0
      %v861 = vadd.f32 %v641, %v860
      %v862 = vpop.f32.mrb[0].mxu0
      %v863 = vadd.f32 %v641, %v862
      %v864 = vpop.f32.mrb[0].mxu0
      %v865 = vadd.f32 %v646, %v864
      %v866 = vpop.f32.mrb[0].mxu0
      %v867 = vadd.f32 %v646, %v866
      %868 = vdwg.mxu0
      %v869 = vpack.c.bf16 %v775, %v771
      %v870 = vpack.c.bf16 %v777, %v773
      %v871 = vpack.c.bf16 %v785, %v781
      %v872 = vpack.c.bf16 %v787, %v783
      %v873 = vpack.c.bf16 %v795, %v791
      %v874 = vpack.c.bf16 %v797, %v793
      %v875 = vpack.c.bf16 %v805, %v801
      %v876 = vpack.c.bf16 %v807, %v803
      %v877 = vpack.c.bf16 %v815, %v811
      %v878 = vpack.c.bf16 %v817, %v813
      %v879 = vpack.c.bf16 %v825, %v821
      %v880 = vpack.c.bf16 %v827, %v823
      %v881 = vpack.c.bf16 %v835, %v831
      %v882 = vpack.c.bf16 %v837, %v833
      %v883 = vpack.c.bf16 %v845, %v841
      %v884 = vpack.c.bf16 %v847, %v843
      %v885 = vpack.c.bf16 %v855, %v851
      %v886 = vpack.c.bf16 %v857, %v853
      %v887 = vpack.c.bf16 %v865, %v861
      %v888 = vpack.c.bf16 %v867, %v863
      %v909 = vunpack.c.l.b16 %v869
      %v910 = vunpack.c.l.b16 %v870
      %v911 = vunpack.c.h.b16 %v869
      %v912 = vunpack.c.h.b16 %v870
      %v913 = vunpack.c.l.b16 %v871
      %v914 = vunpack.c.l.b16 %v872
      %v915 = vunpack.c.h.b16 %v871
      %v916 = vunpack.c.h.b16 %v872
      %v917 = vunpack.c.l.b16 %v873
      %v918 = vunpack.c.l.b16 %v874
      %v919 = vunpack.c.h.b16 %v873
      %v920 = vunpack.c.h.b16 %v874
      %v921 = vunpack.c.l.b16 %v875
      %v922 = vunpack.c.l.b16 %v876
      %v923 = vunpack.c.h.b16 %v875
      %v924 = vunpack.c.h.b16 %v876
      %v925 = vunpack.c.l.b16 %v877
      %v926 = vunpack.c.l.b16 %v878
      %v927 = vunpack.c.h.b16 %v877
      %v928 = vunpack.c.h.b16 %v878
      %v929 = vunpack.c.l.b16 %v879
      %v930 = vunpack.c.l.b16 %v880
      %v931 = vunpack.c.h.b16 %v879
      %v932 = vunpack.c.h.b16 %v880
      %v933 = vunpack.c.l.b16 %v881
      %v934 = vunpack.c.l.b16 %v882
      %v935 = vunpack.c.h.b16 %v881
      %v936 = vunpack.c.h.b16 %v882
      %v937 = vunpack.c.l.b16 %v883
      %v938 = vunpack.c.l.b16 %v884
      %v939 = vunpack.c.h.b16 %v883
      %v940 = vunpack.c.h.b16 %v884
      %v941 = vunpack.c.l.b16 %v885
      %v942 = vunpack.c.l.b16 %v886
      %v943 = vunpack.c.h.b16 %v885
      %v944 = vunpack.c.h.b16 %v886
      %v945 = vunpack.c.l.b16 %v887
      %v946 = vunpack.c.l.b16 %v888
      %v947 = vunpack.c.h.b16 %v887
      %v948 = vunpack.c.h.b16 %v888
      %v949 = vpack.c.b16 %v910, %v909
      %v950 = vpack.c.b16 %v912, %v911
      %v951 = vpack.c.b16 %v914, %v913
      %v952 = vpack.c.b16 %v916, %v915
      %v953 = vpack.c.b16 %v918, %v917
      %v954 = vpack.c.b16 %v920, %v919
      %v955 = vpack.c.b16 %v922, %v921
      %v956 = vpack.c.b16 %v924, %v923
      %v957 = vpack.c.b16 %v926, %v925
      %v958 = vpack.c.b16 %v928, %v927
      %v959 = vpack.c.b16 %v930, %v929
      %v960 = vpack.c.b16 %v932, %v931
      %v961 = vpack.c.b16 %v934, %v933
      %v962 = vpack.c.b16 %v936, %v935
      %v963 = vpack.c.b16 %v938, %v937
      %v964 = vpack.c.b16 %v940, %v939
      %v965 = vpack.c.b16 %v942, %v941
      %v966 = vpack.c.b16 %v944, %v943
      %v967 = vpack.c.b16 %v946, %v945
      %v968 = vpack.c.b16 %v948, %v947
      %989 = vst [vmem:[%s265] sm:$0xff] %v949
      %990 = vst [vmem:[%s265 + $0x8] sm:$0xff] %v950
      %991 = vst [vmem:[%s265 + $0x10] sm:$0xff] %v951
      %992 = vst [vmem:[%s265 + $0x18] sm:$0xff] %v952
      %993 = vst [vmem:[%s265 + $0x20] sm:$0xff] %v953
      %994 = vst [vmem:[%s265 + $0x28] sm:$0xff] %v954
      %995 = vst [vmem:[%s265 + $0x30] sm:$0xff] %v955
      %996 = vst [vmem:[%s265 + $0x38] sm:$0xff] %v956
      %997 = vst [vmem:[%s265 + $0x40] sm:$0xff] %v957
      %998 = vst [vmem:[%s265 + $0x48] sm:$0xff] %v958
      %999 = vst [vmem:[%s265 + $0x50] sm:$0xff] %v959
      %1000 = vst [vmem:[%s265 + $0x58] sm:$0xff] %v960
      %1001 = vst [vmem:[%s265 + $0x60] sm:$0xff] %v961
      %1002 = vst [vmem:[%s265 + $0x68] sm:$0xff] %v962
      %1003 = vst [vmem:[%s265 + $0x70] sm:$0xff] %v963
      %1004 = vst [vmem:[%s265 + $0x78] sm:$0xff] %v964
      %1005 = vst [vmem:[%s265 + $0x80] sm:$0xff] %v965
      %1006 = vst [vmem:[%s265 + $0x88] sm:$0xff] %v966
      %1007 = vst [vmem:[%s265 + $0x90] sm:$0xff] %v967
      %1008 = vst [vmem:[%s265 + $0x98] sm:$0xff] %v968
      %s1009 = smul.u32 20, %s20
      %p1010 = scmp.lt.s32.totalorder %s19, 1
      %s1011 = scalar_select %p1010, %s19, 1
      %p1012 = scmp.lt.s32.totalorder %s1009, 39
      %s1013 = scalar_select %p1012, %s1009, 39
      %s1014 = smul.addr %s1013, 2
      %s1015 = smul.addr %s1011, 80
      %s1016 = sadd.s32 %s1014, %s1015
      %s1017 = smul.addr %s1016, 4
      %s1018 = scalar_lea.vmem %s4, %s1017
      // Predicated region
      $region37: #{diffusion_forward.4} parent=35 // pred_check
        %p1019 = pneg %p146
      $region38: #{diffusion_forward.4} parent=35 // pred_check_branch
        %1021 = sbr.rel (%p1019) target = $region40
      $region39: #{diffusion_forward.4} parent=35 // pred_region
        %s1022 = smul.u32 20, %s20
      $region40: #{diffusion_forward.4} parent=35 // pred_fallthru
        _
    $region36: #{diffusion_forward.4} parent=5 // pred_fallthru
      _
    %p1023 = scmp.le.s32.totalorder 2, %s10
    // Predicated region
    $region41: #{diffusion_forward.4} parent=5 // pred_check
      %p1024 = pneg %p1023
    $region42: #{diffusion_forward.4} parent=5 // pred_check_branch
      %1026 = sbr.rel (%p1024) target = $region44
    $region43: #{diffusion_forward.4} parent=5 // pred_region
      %s1027 = ssub.s32 %s10, 2
      // Predicated region
      $region45: #{diffusion_forward.4} parent=43 // pred_check
        %p1028 = pneg %p152
      $region46: #{diffusion_forward.4} parent=43 // pred_check_branch
        %1030 = sbr.rel (%p1028) target = $region48
      $region47: #{diffusion_forward.4} parent=43 // pred_region
        %s1031 = smul.u32 20, %s22
        %p1032 = scmp.lt.s32.totalorder %s21, 1
        %s1033 = scalar_select %p1032, %s21, 1
        %p1034 = scmp.lt.s32.totalorder %s1031, 39
        %s1035 = scalar_select %p1034, %s1031, 39
        %s1036 = smul.addr %s1035, 2
        %s1037 = smul.addr %s1033, 80
        %s1038 = sadd.s32 %s1036, %s1037
        %s1039 = smul.addr %s1038, 4
        %s1040 = scalar_lea.vmem %s4, %s1039
      $region48: #{diffusion_forward.4} parent=43 // pred_fallthru
        _
    $region44: #{diffusion_forward.4} parent=5 // pred_fallthru
      _
  $region6: #{diffusion_forward.4} parent=0 // loop_footer
    %s14 = sadd.s32 1, %s10
  $region7: #{diffusion_forward.4} parent=0 // loop_footer_branch
    %9 = sbr.rel target = $region3
  $region8: #{diffusion_forward.4} parent=0 // loop_exit
    _

// kernel: diffusion_forward.5
$region0: #{diffusion_forward.5}
  #allocation0 [shape = 'u32[]', space=smem, size = 0x4, offset = 0x4, fixed_abs, tag = 'smem constant byte address 0x4 - core index']
  #allocation1 [shape = 'u32[144,128]{1,0:T(1,128)}', space=vmem, size = 0x12000, scoped, tag = 'internal scratch']
  %s0 = inlined_call_operand.vmem [shape: bf16[2,320,256], index: 0, kind: input, shape index: {}]
  %s1 = inlined_call_operand.vmem [shape: f32[320,1], index: 1, kind: input, shape index: {}]
  %s2 = inlined_call_operand.vmem [shape: f32[320,1], index: 2, kind: input, shape index: {}]
  %s3 = inlined_call_operand.vmem [shape: f32[320,320], index: 3, kind: input, shape index: {}]
  %s4 = inlined_call_operand.vmem [shape: bf16[72,320], index: 4, kind: input, shape index: {}]
  %s5 = inlined_call_operand.vmem [shape: f32[4,1], index: 5, kind: input, shape index: {}]
  %s6 = inlined_call_operand.vmem [shape: f32[9,1,256], index: 6, kind: input, shape index: {}]
  %s7 = inlined_call_operand.vmem [shape: f32[2,4,256], index: 7, kind: output, shape index: {}]
  %s8 = sld [smem:[#allocation0]]
  $region61: #{diffusion_forward.5} parent=0
    _
  %s10 = ssub.s32 1, %s8
  %s11 = scalar_select 0, %s10, %s8
  loop: start=0, step=1, limit=4
  $region2: #{diffusion_forward.5} parent=0 // loop_pre_header
    _
  $region3: #{diffusion_forward.5} parent=0 // loop_header
    %s13 = sphi 0, %s17
    %p14 = scmp.ge.s32.totalorder %s13, 4
    %s23 = sphi 0, %s25
    %s26 = sphi 0, %s23
    %s27 = sphi 0, %s26
    %s43 = sphi 0, %s27
    %s47 = sphi 0, %s47
    %s49 = sphi 0, %s47
    %s50 = sphi 0, %s49
    %s64 = sphi 0, %s50
    %s68 = sphi 0, %s68
    %s70 = sphi 0, %s68
    %s71 = sphi 0, %s70
    %s85 = sphi 0, %s71
    %s89 = sphi 0, %s89
    %s91 = sphi 0, %s89
    %s92 = sphi 0, %s91
    %s106 = sphi 0, %s92
    %s110 = sphi 0, %s110
    %s112 = sphi 0, %s110
    %s113 = sphi 0, %s112
    %s127 = sphi 0, %s113
    %s131 = sphi 0, %s131
    %s133 = sphi 0, %s131
    %s134 = sphi 0, %s133
    %s148 = sphi 0, %s134
    %s152 = sphi 0, %s152
    %s154 = sphi 0, %s152
    %s155 = sphi 0, %s154
    %s169 = sphi 0, %s155
    %s175 = sphi 0, %s177
    %s178 = sphi 0, %s175
    %s179 = sphi 0, %s178
    %s195 = sphi 0, %s179
  $region4: #{diffusion_forward.5} parent=0 // loop_header_branch
    %16 = sbr.rel (%p14) target = $region8
  $region5: #{diffusion_forward.5} parent=0 // loop_body
    %s18 = ssub.s32 %s13, 1
    %s19 = ssub.s32 %s13, 2
    %s20 = sadd.s32 %s13, 1
    %s21 = ssub.s32 %s13, %s20
    %p22 = scmp.eq.s32.totalorder %s21, 0
    %s24 = sadd.s32 %s23, 1
    %s25 = scalar_select %p22, %s23, %s24
    %p28 = pneg %p22
    %p29 = scmp.eq.s32.totalorder %s13, 1
    %p30 = por %p28, %p29
    %p31 = scmp.ne.s32.totalorder %s23, %s26
    %p32 = scmp.eq.s32.totalorder %s13, 0
    %p33 = por %p31, %p32
    %p34 = scmp.ne.s32.totalorder %s23, %s26
    %p35 = scmp.eq.s32.totalorder %s18, 1
    %p36 = por %p34, %p35
    %p37 = scmp.ne.s32.totalorder %s26, %s27
    %p38 = scmp.eq.s32.totalorder %s18, 0
    %p39 = por %p37, %p38
    %p40 = scmp.ne.s32.totalorder %s26, %s27
    %p41 = scmp.eq.s32.totalorder %s19, 1
    %p42 = por %p40, %p41
    %p44 = scmp.ne.s32.totalorder %s27, %s43
    %p45 = scmp.eq.s32.totalorder %s19, 0
    %p46 = por %p44, %p45
    %s48 = sadd.s32 %s47, 1
    %p51 = scmp.eq.s32.totalorder %s13, 1
    %p52 = scmp.ne.s32.totalorder %s47, %s49
    %p53 = scmp.eq.s32.totalorder %s13, 0
    %p54 = por %p52, %p53
    %p55 = scmp.ne.s32.totalorder %s47, %s49
    %p56 = scmp.eq.s32.totalorder %s18, 1
    %p57 = por %p55, %p56
    %p58 = scmp.ne.s32.totalorder %s49, %s50
    %p59 = scmp.eq.s32.totalorder %s18, 0
    %p60 = por %p58, %p59
    %p61 = scmp.ne.s32.totalorder %s49, %s50
    %p62 = scmp.eq.s32.totalorder %s19, 1
    %p63 = por %p61, %p62
    %p65 = scmp.ne.s32.totalorder %s50, %s64
    %p66 = scmp.eq.s32.totalorder %s19, 0
    %p67 = por %p65, %p66
    %s69 = sadd.s32 %s68, 1
    %p72 = scmp.eq.s32.totalorder %s13, 1
    %p73 = scmp.ne.s32.totalorder %s68, %s70
    %p74 = scmp.eq.s32.totalorder %s13, 0
    %p75 = por %p73, %p74
    %p76 = scmp.ne.s32.totalorder %s68, %s70
    %p77 = scmp.eq.s32.totalorder %s18, 1
    %p78 = por %p76, %p77
    %p79 = scmp.ne.s32.totalorder %s70, %s71
    %p80 = scmp.eq.s32.totalorder %s18, 0
    %p81 = por %p79, %p80
    %p82 = scmp.ne.s32.totalorder %s70, %s71
    %p83 = scmp.eq.s32.totalorder %s19, 1
    %p84 = por %p82, %p83
    %p86 = scmp.ne.s32.totalorder %s71, %s85
    %p87 = scmp.eq.s32.totalorder %s19, 0
    %p88 = por %p86, %p87
    %s90 = sadd.s32 %s89, 1
    %p93 = scmp.eq.s32.totalorder %s13, 1
    %p94 = scmp.ne.s32.totalorder %s89, %s91
    %p95 = scmp.eq.s32.totalorder %s13, 0
    %p96 = por %p94, %p95
    %p97 = scmp.ne.s32.totalorder %s89, %s91
    %p98 = scmp.eq.s32.totalorder %s18, 1
    %p99 = por %p97, %p98
    %p100 = scmp.ne.s32.totalorder %s91, %s92
    %p101 = scmp.eq.s32.totalorder %s18, 0
    %p102 = por %p100, %p101
    %p103 = scmp.ne.s32.totalorder %s91, %s92
    %p104 = scmp.eq.s32.totalorder %s19, 1
    %p105 = por %p103, %p104
    %p107 = scmp.ne.s32.totalorder %s92, %s106
    %p108 = scmp.eq.s32.totalorder %s19, 0
    %p109 = por %p107, %p108
    %s111 = sadd.s32 %s110, 1
    %p114 = scmp.eq.s32.totalorder %s13, 1
    %p115 = scmp.ne.s32.totalorder %s110, %s112
    %p116 = scmp.eq.s32.totalorder %s13, 0
    %p117 = por %p115, %p116
    %p118 = scmp.ne.s32.totalorder %s110, %s112
    %p119 = scmp.eq.s32.totalorder %s18, 1
    %p120 = por %p118, %p119
    %p121 = scmp.ne.s32.totalorder %s112, %s113
    %p122 = scmp.eq.s32.totalorder %s18, 0
    %p123 = por %p121, %p122
    %p124 = scmp.ne.s32.totalorder %s112, %s113
    %p125 = scmp.eq.s32.totalorder %s19, 1
    %p126 = por %p124, %p125
    %p128 = scmp.ne.s32.totalorder %s113, %s127
    %p129 = scmp.eq.s32.totalorder %s19, 0
    %p130 = por %p128, %p129
    %s132 = sadd.s32 %s131, 1
    %p135 = scmp.eq.s32.totalorder %s13, 1
    %p136 = scmp.ne.s32.totalorder %s131, %s133
    %p137 = scmp.eq.s32.totalorder %s13, 0
    %p138 = por %p136, %p137
    %p139 = scmp.ne.s32.totalorder %s131, %s133
    %p140 = scmp.eq.s32.totalorder %s18, 1
    %p141 = por %p139, %p140
    %p142 = scmp.ne.s32.totalorder %s133, %s134
    %p143 = scmp.eq.s32.totalorder %s18, 0
    %p144 = por %p142, %p143
    %p145 = scmp.ne.s32.totalorder %s133, %s134
    %p146 = scmp.eq.s32.totalorder %s19, 1
    %p147 = por %p145, %p146
    %p149 = scmp.ne.s32.totalorder %s134, %s148
    %p150 = scmp.eq.s32.totalorder %s19, 0
    %p151 = por %p149, %p150
    %s153 = sadd.s32 %s152, 1
    %p156 = scmp.eq.s32.totalorder %s13, 1
    %p157 = scmp.ne.s32.totalorder %s152, %s154
    %p158 = scmp.eq.s32.totalorder %s13, 0
    %p159 = por %p157, %p158
    %p160 = scmp.ne.s32.totalorder %s152, %s154
    %p161 = scmp.eq.s32.totalorder %s18, 1
    %p162 = por %p160, %p161
    %p163 = scmp.ne.s32.totalorder %s154, %s155
    %p164 = scmp.eq.s32.totalorder %s18, 0
    %p165 = por %p163, %p164
    %p166 = scmp.ne.s32.totalorder %s154, %s155
    %p167 = scmp.eq.s32.totalorder %s19, 1
    %p168 = por %p166, %p167
    %p170 = scmp.ne.s32.totalorder %s155, %s169
    %p171 = scmp.eq.s32.totalorder %s19, 0
    %p172 = por %p170, %p171
    %s173 = ssub.s32 %s13, %s20
    %p174 = scmp.eq.s32.totalorder %s173, 0
    %s176 = sadd.s32 %s175, 1
    %s177 = scalar_select %p174, %s175, %s176
    %p180 = pneg %p174
    %p181 = scmp.eq.s32.totalorder %s13, 1
    %p182 = por %p180, %p181
    %p183 = scmp.ne.s32.totalorder %s175, %s178
    %p184 = scmp.eq.s32.totalorder %s13, 0
    %p185 = por %p183, %p184
    %p186 = scmp.ne.s32.totalorder %s175, %s178
    %p187 = scmp.eq.s32.totalorder %s18, 1
    %p188 = por %p186, %p187
    %p189 = scmp.ne.s32.totalorder %s178, %s179
    %p190 = scmp.eq.s32.totalorder %s18, 0
    %p191 = por %p189, %p190
    %p192 = scmp.ne.s32.totalorder %s178, %s179
    %p193 = scmp.eq.s32.totalorder %s19, 1
    %p194 = por %p192, %p193
    %p196 = scmp.ne.s32.totalorder %s179, %s195
    %p197 = scmp.eq.s32.totalorder %s19, 0
    %p198 = por %p196, %p197
    %p199 = scmp.le.s32.totalorder 1, %s13
    %p200 = scmp.lt.s32.totalorder %s13, 3
    %p201 = pnand %p199, %p200
    %p202 = pneg %p201
    // Predicated region
    $region9: #{diffusion_forward.5} parent=5 // pred_check
      _
    $region10: #{diffusion_forward.5} parent=5 // pred_check_branch
      %204 = sbr.rel (%p201) target = $region12
    $region11: #{diffusion_forward.5} parent=5 // pred_region
      %s205 = ssub.s32 %s13, 1
      // Predicated region
      $region13: #{diffusion_forward.5} parent=11 // pred_check
        %p206 = pneg %p60
      $region14: #{diffusion_forward.5} parent=11 // pred_check_branch
        %208 = sbr.rel (%p206) target = $region16
      $region15: #{diffusion_forward.5} parent=11 // pred_region
        _
      $region16: #{diffusion_forward.5} parent=11 // pred_fallthru
        _
      // Predicated region
      $region17: #{diffusion_forward.5} parent=11 // pred_check
        %p209 = pneg %p81
      $region18: #{diffusion_forward.5} parent=11 // pred_check_branch
        %211 = sbr.rel (%p209) target = $region20
      $region19: #{diffusion_forward.5} parent=11 // pred_region
        _
      $region20: #{diffusion_forward.5} parent=11 // pred_fallthru
        _
      // Predicated region
      $region21: #{diffusion_forward.5} parent=11 // pred_check
        %p212 = pneg %p102
      $region22: #{diffusion_forward.5} parent=11 // pred_check_branch
        %214 = sbr.rel (%p212) target = $region24
      $region23: #{diffusion_forward.5} parent=11 // pred_region
        _
      $region24: #{diffusion_forward.5} parent=11 // pred_fallthru
        _
      // Predicated region
      $region25: #{diffusion_forward.5} parent=11 // pred_check
        %p215 = pneg %p123
      $region26: #{diffusion_forward.5} parent=11 // pred_check_branch
        %217 = sbr.rel (%p215) target = $region28
      $region27: #{diffusion_forward.5} parent=11 // pred_region
        _
      $region28: #{diffusion_forward.5} parent=11 // pred_fallthru
        _
      // Predicated region
      $region29: #{diffusion_forward.5} parent=11 // pred_check
        %p218 = pneg %p144
      $region30: #{diffusion_forward.5} parent=11 // pred_check_branch
        %220 = sbr.rel (%p218) target = $region32
      $region31: #{diffusion_forward.5} parent=11 // pred_region
        _
      $region32: #{diffusion_forward.5} parent=11 // pred_fallthru
        _
      // Predicated region
      $region33: #{diffusion_forward.5} parent=11 // pred_check
        %p221 = pneg %p165
      $region34: #{diffusion_forward.5} parent=11 // pred_check_branch
        %223 = sbr.rel (%p221) target = $region36
      $region35: #{diffusion_forward.5} parent=11 // pred_region
        _
      $region36: #{diffusion_forward.5} parent=11 // pred_fallthru
        _
    $region12: #{diffusion_forward.5} parent=5 // pred_fallthru
      _
    %p224 = scmp.lt.s32.totalorder %s13, 2
    // Predicated region
    $region37: #{diffusion_forward.5} parent=5 // pred_check
      %p225 = pneg %p224
    $region38: #{diffusion_forward.5} parent=5 // pred_check_branch
      %227 = sbr.rel (%p225) target = $region40
    $region39: #{diffusion_forward.5} parent=5 // pred_region
      // Predicated region
      $region41: #{diffusion_forward.5} parent=39 // pred_check
        %p228 = pneg %p33
      $region42: #{diffusion_forward.5} parent=39 // pred_check_branch
        %230 = sbr.rel (%p228) target = $region44
      $region43: #{diffusion_forward.5} parent=39 // pred_region
        %p231 = scmp.lt.s32.totalorder %s13, 1
        %s232 = scalar_select %p231, %s13, 1
        %s233 = smul.addr %s232, 80
        %s234 = smul.addr %s233, 4
        %s235 = scalar_lea.vmem %s0, %s234
      $region44: #{diffusion_forward.5} parent=39 // pred_fallthru
        _
    $region40: #{diffusion_forward.5} parent=5 // pred_fallthru
      _
    %p236 = scmp.le.s32.totalorder 1, %s13
    %p237 = scmp.lt.s32.totalorder %s13, 3
    %p238 = pnand %p236, %p237
    %p239 = pneg %p238
    // Predicated region
    $region45: #{diffusion_forward.5} parent=5 // pred_check
      _
    $region46: #{diffusion_forward.5} parent=5 // pred_check_branch
      %241 = sbr.rel (%p238) target = $region48
    $region47: #{diffusion_forward.5} parent=5 // pred_region
      %s242 = ssub.s32 %s13, 1
      %p243 = scmp.lt.s32.totalorder %s18, 1
      %s244 = scalar_select %p243, %s18, 1
      %s245 = smul.addr %s244, 80
      %s246 = smul.addr %s245, 4
      %s247 = scalar_lea.vmem %s0, %s246
      %p248 = pneg %p39
      %p249 = pneg %p36
      %p250 = pneg %p60
      %p251 = pneg %p57
      %p252 = pneg %p81
      %p253 = pneg %p78
      %p254 = pneg %p102
      %p255 = pneg %p99
      %p256 = pneg %p123
      %p257 = pneg %p120
      %p258 = pneg %p144
      %p259 = pneg %p141
      %p260 = pneg %p165
      %p261 = pneg %p162
      %p262 = pneg %p191
      %p263 = pneg %p188
      %p264 = scmp.lt.s32.totalorder %s18, 1
      %s265 = scalar_select %p264, %s18, 1
      %s266 = smul.addr %s265, 2
      %s267 = smul.addr %s266, 4
      %s268 = scalar_lea.vmem %s7, %s267
      %p269 = scmp.lt.s32.totalorder %s18, 1
      %s270 = scalar_select %p269, %s18, 1
      %s271 = smul.addr %s270, 80
      %s272 = smul.addr %s271, 4
      %s273 = scalar_lea.vmem %s0, %s272
      %p274 = scmp.lt.s32.totalorder %s18, 1
      %s275 = scalar_select %p274, %s18, 1
      %s276 = smul.addr %s275, 2
      %s277 = smul.addr %s276, 4
      %s278 = scalar_lea.vmem %s7, %s277
      %v280 = vld [vmem:[%s273] sm:$0xff]
      %v281 = vld [vmem:[%s273 + $0x8] sm:$0xff]
      %v282 = vld [vmem:[%s273 + $0x10] sm:$0xff]
      %v283 = vld [vmem:[%s273 + $0x18] sm:$0xff]
      %v284 = vld [vmem:[%s273 + $0x20] sm:$0xff]
      %v285 = vld [vmem:[%s273 + $0x28] sm:$0xff]
      %v286 = vld [vmem:[%s273 + $0x30] sm:$0xff]
      %v287 = vld [vmem:[%s273 + $0x38] sm:$0xff]
      %v288 = vld [vmem:[%s273 + $0x40] sm:$0xff]
      %v289 = vld [vmem:[%s273 + $0x48] sm:$0xff]
      %v290 = vld [vmem:[%s273 + $0x50] sm:$0xff]
      %v291 = vld [vmem:[%s273 + $0x58] sm:$0xff]
      %v292 = vld [vmem:[%s273 + $0x60] sm:$0xff]
      %v293 = vld [vmem:[%s273 + $0x68] sm:$0xff]
      %v294 = vld [vmem:[%s273 + $0x70] sm:$0xff]
      %v295 = vld [vmem:[%s273 + $0x78] sm:$0xff]
      %v296 = vld [vmem:[%s273 + $0x80] sm:$0xff]
      %v297 = vld [vmem:[%s273 + $0x88] sm:$0xff]
      %v298 = vld [vmem:[%s273 + $0x90] sm:$0xff]
      %v299 = vld [vmem:[%s273 + $0x98] sm:$0xff]
      %v300 = vld [vmem:[%s273 + $0xa0] sm:$0xff]
      %v301 = vld [vmem:[%s273 + $0xa8] sm:$0xff]
      %v302 = vld [vmem:[%s273 + $0xb0] sm:$0xff]
      %v303 = vld [vmem:[%s273 + $0xb8] sm:$0xff]
      %v304 = vld [vmem:[%s273 + $0xc0] sm:$0xff]
      %v305 = vld [vmem:[%s273 + $0xc8] sm:$0xff]
      %v306 = vld [vmem:[%s273 + $0xd0] sm:$0xff]
      %v307 = vld [vmem:[%s273 + $0xd8] sm:$0xff]
      %v308 = vld [vmem:[%s273 + $0xe0] sm:$0xff]
      %v309 = vld [vmem:[%s273 + $0xe8] sm:$0xff]
      %v310 = vld [vmem:[%s273 + $0xf0] sm:$0xff]
      %v311 = vld [vmem:[%s273 + $0xf8] sm:$0xff]
      %v312 = vld [vmem:[%s273 + $0x100] sm:$0xff]
      %v313 = vld [vmem:[%s273 + $0x108] sm:$0xff]
      %v314 = vld [vmem:[%s273 + $0x110] sm:$0xff]
      %v315 = vld [vmem:[%s273 + $0x118] sm:$0xff]
      %v316 = vld [vmem:[%s273 + $0x120] sm:$0xff]
      %v317 = vld [vmem:[%s273 + $0x128] sm:$0xff]
      %v318 = vld [vmem:[%s273 + $0x130] sm:$0xff]
      %v319 = vld [vmem:[%s273 + $0x138] sm:$0xff]
      %v320 = vunpack.c.l.bf16 %v280
      %v321 = vunpack.c.h.bf16 %v280
      %v322 = vunpack.c.l.bf16 %v281
      %v323 = vunpack.c.h.bf16 %v281
      %v324 = vunpack.c.l.bf16 %v282
      %v325 = vunpack.c.h.bf16 %v282
      %v326 = vunpack.c.l.bf16 %v283
      %v327 = vunpack.c.h.bf16 %v283
      %v328 = vunpack.c.l.bf16 %v284
      %v329 = vunpack.c.h.bf16 %v284
      %v330 = vunpack.c.l.bf16 %v285
      %v331 = vunpack.c.h.bf16 %v285
      %v332 = vunpack.c.l.bf16 %v286
      %v333 = vunpack.c.h.bf16 %v286
      %v334 = vunpack.c.l.bf16 %v287
      %v335 = vunpack.c.h.bf16 %v287
      %v336 = vunpack.c.l.bf16 %v288
      %v337 = vunpack.c.h.bf16 %v288
      %v338 = vunpack.c.l.bf16 %v289
      %v339 = vunpack.c.h.bf16 %v289
      %v340 = vunpack.c.l.bf16 %v290
      %v341 = vunpack.c.h.bf16 %v290
      %v342 = vunpack.c.l.bf16 %v291
      %v343 = vunpack.c.h.bf16 %v291
      %v344 = vunpack.c.l.bf16 %v292
      %v345 = vunpack.c.h.bf16 %v292
      %v346 = vunpack.c.l.bf16 %v293
      %v347 = vunpack.c.h.bf16 %v293
      %v348 = vunpack.c.l.bf16 %v294
      %v349 = vunpack.c.h.bf16 %v294
      %v350 = vunpack.c.l.bf16 %v295
      %v351 = vunpack.c.h.bf16 %v295
      %v352 = vunpack.c.l.bf16 %v296
      %v353 = vunpack.c.h.bf16 %v296
      %v354 = vunpack.c.l.bf16 %v297
      %v355 = vunpack.c.h.bf16 %v297
      %v356 = vunpack.c.l.bf16 %v298
      %v357 = vunpack.c.h.bf16 %v298
      %v358 = vunpack.c.l.bf16 %v299
      %v359 = vunpack.c.h.bf16 %v299
      %v360 = vunpack.c.l.bf16 %v300
      %v361 = vunpack.c.h.bf16 %v300
      %v362 = vunpack.c.l.bf16 %v301
      %v363 = vunpack.c.h.bf16 %v301
      %v364 = vunpack.c.l.bf16 %v302
      %v365 = vunpack.c.h.bf16 %v302
      %v366 = vunpack.c.l.bf16 %v303
      %v367 = vunpack.c.h.bf16 %v303
      %v368 = vunpack.c.l.bf16 %v304
      %v369 = vunpack.c.h.bf16 %v304
      %v370 = vunpack.c.l.bf16 %v305
      %v371 = vunpack.c.h.bf16 %v305
      %v372 = vunpack.c.l.bf16 %v306
      %v373 = vunpack.c.h.bf16 %v306
      %v374 = vunpack.c.l.bf16 %v307
      %v375 = vunpack.c.h.bf16 %v307
      %v376 = vunpack.c.l.bf16 %v308
      %v377 = vunpack.c.h.bf16 %v308
      %v378 = vunpack.c.l.bf16 %v309
      %v379 = vunpack.c.h.bf16 %v309
      %v380 = vunpack.c.l.bf16 %v310
      %v381 = vunpack.c.h.bf16 %v310
      %v382 = vunpack.c.l.bf16 %v311
      %v383 = vunpack.c.h.bf16 %v311
      %v384 = vunpack.c.l.bf16 %v312
      %v385 = vunpack.c.h.bf16 %v312
      %v386 = vunpack.c.l.bf16 %v313
      %v387 = vunpack.c.h.bf16 %v313
      %v388 = vunpack.c.l.bf16 %v314
      %v389 = vunpack.c.h.bf16 %v314
      %v390 = vunpack.c.l.bf16 %v315
      %v391 = vunpack.c.h.bf16 %v315
      %v392 = vunpack.c.l.bf16 %v316
      %v393 = vunpack.c.h.bf16 %v316
      %v394 = vunpack.c.l.bf16 %v317
      %v395 = vunpack.c.h.bf16 %v317
      %v396 = vunpack.c.l.bf16 %v318
      %v397 = vunpack.c.h.bf16 %v318
      %v398 = vunpack.c.l.bf16 %v319
      %v399 = vunpack.c.h.bf16 %v319
      %v400 = vadd.f32 %v320, %v321
      %401 = vadd.xlane.f32.xlu0 %v400
      %v402 = vpop.xlane.xlu0 %401
      %v403 = vadd.f32 %v322, %v323
      %404 = vadd.xlane.f32.xlu0 %v403
      %v405 = vpop.xlane.xlu0 %404
      %v406 = vadd.f32 %v324, %v325
      %407 = vadd.xlane.f32.xlu0 %v406
      %v408 = vpop.xlane.xlu0 %407
      %v409 = vadd.f32 %v326, %v327
      %410 = vadd.xlane.f32.xlu0 %v409
      %v411 = vpop.xlane.xlu0 %410
      %v412 = vadd.f32 %v328, %v329
      %413 = vadd.xlane.f32.xlu0 %v412
      %v414 = vpop.xlane.xlu0 %413
      %v415 = vadd.f32 %v330, %v331
      %416 = vadd.xlane.f32.xlu0 %v415
      %v417 = vpop.xlane.xlu0 %416
      %v418 = vadd.f32 %v332, %v333
      %419 = vadd.xlane.f32.xlu0 %v418
      %v420 = vpop.xlane.xlu0 %419
      %v421 = vadd.f32 %v334, %v335
      %422 = vadd.xlane.f32.xlu0 %v421
      %v423 = vpop.xlane.xlu0 %422
      %v424 = vadd.f32 %v336, %v337
      %425 = vadd.xlane.f32.xlu0 %v424
      %v426 = vpop.xlane.xlu0 %425
      %v427 = vadd.f32 %v338, %v339
      %428 = vadd.xlane.f32.xlu0 %v427
      %v429 = vpop.xlane.xlu0 %428
      %v430 = vadd.f32 %v340, %v341
      %431 = vadd.xlane.f32.xlu0 %v430
      %v432 = vpop.xlane.xlu0 %431
      %v433 = vadd.f32 %v342, %v343
      %434 = vadd.xlane.f32.xlu0 %v433
      %v435 = vpop.xlane.xlu0 %434
      %v436 = vadd.f32 %v344, %v345
      %437 = vadd.xlane.f32.xlu0 %v436
      %v438 = vpop.xlane.xlu0 %437
      %v439 = vadd.f32 %v346, %v347
      %440 = vadd.xlane.f32.xlu0 %v439
      %v441 = vpop.xlane.xlu0 %440
      %v442 = vadd.f32 %v348, %v349
      %443 = vadd.xlane.f32.xlu0 %v442
      %v444 = vpop.xlane.xlu0 %443
      %v445 = vadd.f32 %v350, %v351
      %446 = vadd.xlane.f32.xlu0 %v445
      %v447 = vpop.xlane.xlu0 %446
      %v448 = vadd.f32 %v352, %v353
      %449 = vadd.xlane.f32.xlu0 %v448
      %v450 = vpop.xlane.xlu0 %449
      %v451 = vadd.f32 %v354, %v355
      %452 = vadd.xlane.f32.xlu0 %v451
      %v453 = vpop.xlane.xlu0 %452
      %v454 = vadd.f32 %v356, %v357
      %455 = vadd.xlane.f32.xlu0 %v454
      %v456 = vpop.xlane.xlu0 %455
      %v457 = vadd.f32 %v358, %v359
      %458 = vadd.xlane.f32.xlu0 %v457
      %v459 = vpop.xlane.xlu0 %458
      %v460 = vadd.f32 %v360, %v361
      %461 = vadd.xlane.f32.xlu0 %v460
      %v462 = vpop.xlane.xlu0 %461
      %v463 = vadd.f32 %v362, %v363
      %464 = vadd.xlane.f32.xlu0 %v463
      %v465 = vpop.xlane.xlu0 %464
      %v466 = vadd.f32 %v364, %v365
      %467 = vadd.xlane.f32.xlu0 %v466
      %v468 = vpop.xlane.xlu0 %467
      %v469 = vadd.f32 %v366, %v367
      %470 = vadd.xlane.f32.xlu0 %v469
      %v471 = vpop.xlane.xlu0 %470
      %v472 = vadd.f32 %v368, %v369
      %473 = vadd.xlane.f32.xlu0 %v472
      %v474 = vpop.xlane.xlu0 %473
      %v475 = vadd.f32 %v370, %v371
      %476 = vadd.xlane.f32.xlu0 %v475
      %v477 = vpop.xlane.xlu0 %476
      %v478 = vadd.f32 %v372, %v373
      %479 = vadd.xlane.f32.xlu0 %v478
      %v480 = vpop.xlane.xlu0 %479
      %v481 = vadd.f32 %v374, %v375
      %482 = vadd.xlane.f32.xlu0 %v481
      %v483 = vpop.xlane.xlu0 %482
      %v484 = vadd.f32 %v376, %v377
      %485 = vadd.xlane.f32.xlu0 %v484
      %v486 = vpop.xlane.xlu0 %485
      %v487 = vadd.f32 %v378, %v379
      %488 = vadd.xlane.f32.xlu0 %v487
      %v489 = vpop.xlane.xlu0 %488
      %v490 = vadd.f32 %v380, %v381
      %491 = vadd.xlane.f32.xlu0 %v490
      %v492 = vpop.xlane.xlu0 %491
      %v493 = vadd.f32 %v382, %v383
      %494 = vadd.xlane.f32.xlu0 %v493
      %v495 = vpop.xlane.xlu0 %494
      %v496 = vadd.f32 %v384, %v385
      %497 = vadd.xlane.f32.xlu0 %v496
      %v498 = vpop.xlane.xlu0 %497
      %v499 = vadd.f32 %v386, %v387
      %500 = vadd.xlane.f32.xlu0 %v499
      %v501 = vpop.xlane.xlu0 %500
      %v502 = vadd.f32 %v388, %v389
      %503 = vadd.xlane.f32.xlu0 %v502
      %v504 = vpop.xlane.xlu0 %503
      %v505 = vadd.f32 %v390, %v391
      %506 = vadd.xlane.f32.xlu0 %v505
      %v507 = vpop.xlane.xlu0 %506
      %v508 = vadd.f32 %v392, %v393
      %509 = vadd.xlane.f32.xlu0 %v508
      %v510 = vpop.xlane.xlu0 %509
      %v511 = vadd.f32 %v394, %v395
      %512 = vadd.xlane.f32.xlu0 %v511
      %v513 = vpop.xlane.xlu0 %512
      %v514 = vadd.f32 %v396, %v397
      %515 = vadd.xlane.f32.xlu0 %v514
      %v516 = vpop.xlane.xlu0 %515
      %v517 = vadd.f32 %v398, %v399
      %518 = vadd.xlane.f32.xlu0 %v517
      %v519 = vpop.xlane.xlu0 %518
      %v520 = vmul.f32 %v320, %v320
      %v521 = vmul.f32 %v321, %v321
      %v522 = vmul.f32 %v322, %v322
      %v523 = vmul.f32 %v323, %v323
      %v524 = vmul.f32 %v324, %v324
      %v525 = vmul.f32 %v325, %v325
      %v526 = vmul.f32 %v326, %v326
      %v527 = vmul.f32 %v327, %v327
      %v528 = vmul.f32 %v328, %v328
      %v529 = vmul.f32 %v329, %v329
      %v530 = vmul.f32 %v330, %v330
      %v531 = vmul.f32 %v331, %v331
      %v532 = vmul.f32 %v332, %v332
      %v533 = vmul.f32 %v333, %v333
      %v534 = vmul.f32 %v334, %v334
      %v535 = vmul.f32 %v335, %v335
      %v536 = vmul.f32 %v336, %v336
      %v537 = vmul.f32 %v337, %v337
      %v538 = vmul.f32 %v338, %v338
      %v539 = vmul.f32 %v339, %v339
      %v540 = vmul.f32 %v340, %v340
      %v541 = vmul.f32 %v341, %v341
      %v542 = vmul.f32 %v342, %v342
      %v543 = vmul.f32 %v343, %v343
      %v544 = vmul.f32 %v344, %v344
      %v545 = vmul.f32 %v345, %v345
      %v546 = vmul.f32 %v346, %v346
      %v547 = vmul.f32 %v347, %v347
      %v548 = vmul.f32 %v348, %v348
      %v549 = vmul.f32 %v349, %v349
      %v550 = vmul.f32 %v350, %v350
      %v551 = vmul.f32 %v351, %v351
      %v552 = vmul.f32 %v352, %v352
      %v553 = vmul.f32 %v353, %v353
      %v554 = vmul.f32 %v354, %v354
      %v555 = vmul.f32 %v355, %v355
      %v556 = vmul.f32 %v356, %v356
      %v557 = vmul.f32 %v357, %v357
      %v558 = vmul.f32 %v358, %v358
      %v559 = vmul.f32 %v359, %v359
      %v560 = vmul.f32 %v360, %v360
      %v561 = vmul.f32 %v361, %v361
      %v562 = vmul.f32 %v362, %v362
      %v563 = vmul.f32 %v363, %v363
      %v564 = vmul.f32 %v364, %v364
      %v565 = vmul.f32 %v365, %v365
      %v566 = vmul.f32 %v366, %v366
      %v567 = vmul.f32 %v367, %v367
      %v568 = vmul.f32 %v368, %v368
      %v569 = vmul.f32 %v369, %v369
      %v570 = vmul.f32 %v370, %v370
      %v571 = vmul.f32 %v371, %v371
      %v572 = vmul.f32 %v372, %v372
      %v573 = vmul.f32 %v373, %v373
      %v574 = vmul.f32 %v374, %v374
      %v575 = vmul.f32 %v375, %v375
      %v576 = vmul.f32 %v376, %v376
      %v577 = vmul.f32 %v377, %v377
      %v578 = vmul.f32 %v378, %v378
      %v579 = vmul.f32 %v379, %v379
      %v580 = vmul.f32 %v380, %v380
      %v581 = vmul.f32 %v381, %v381
      %v582 = vmul.f32 %v382, %v382
      %v583 = vmul.f32 %v383, %v383
      %v584 = vmul.f32 %v384, %v384
      %v585 = vmul.f32 %v385, %v385
      %v586 = vmul.f32 %v386, %v386
      %v587 = vmul.f32 %v387, %v387
      %v588 = vmul.f32 %v388, %v388
      %v589 = vmul.f32 %v389, %v389
      %v590 = vmul.f32 %v390, %v390
      %v591 = vmul.f32 %v391, %v391
      %v592 = vmul.f32 %v392, %v392
      %v593 = vmul.f32 %v393, %v393
      %v594 = vmul.f32 %v394, %v394
      %v595 = vmul.f32 %v395, %v395
      %v596 = vmul.f32 %v396, %v396
      %v597 = vmul.f32 %v397, %v397
      %v598 = vmul.f32 %v398, %v398
      %v599 = vmul.f32 %v399, %v399
      %v600 = vadd.f32 %v520, %v521
      %601 = vadd.xlane.f32.xlu0 %v600
      %v602 = vpop.xlane.xlu0 %601
      %v603 = vadd.f32 %v522, %v523
      %604 = vadd.xlane.f32.xlu0 %v603
      %v605 = vpop.xlane.xlu0 %604
      %v606 = vadd.f32 %v524, %v525
      %607 = vadd.xlane.f32.xlu0 %v606
      %v608 = vpop.xlane.xlu0 %607
      %v609 = vadd.f32 %v526, %v527
      %610 = vadd.xlane.f32.xlu0 %v609
      %v611 = vpop.xlane.xlu0 %610
      %v612 = vadd.f32 %v528, %v529
      %613 = vadd.xlane.f32.xlu0 %v612
      %v614 = vpop.xlane.xlu0 %613
      %v615 = vadd.f32 %v530, %v531
      %616 = vadd.xlane.f32.xlu0 %v615
      %v617 = vpop.xlane.xlu0 %616
      %v618 = vadd.f32 %v532, %v533
      %619 = vadd.xlane.f32.xlu0 %v618
      %v620 = vpop.xlane.xlu0 %619
      %v621 = vadd.f32 %v534, %v535
      %622 = vadd.xlane.f32.xlu0 %v621
      %v623 = vpop.xlane.xlu0 %622
      %v624 = vadd.f32 %v536, %v537
      %625 = vadd.xlane.f32.xlu0 %v624
      %v626 = vpop.xlane.xlu0 %625
      %v627 = vadd.f32 %v538, %v539
      %628 = vadd.xlane.f32.xlu0 %v627
      %v629 = vpop.xlane.xlu0 %628
      %v630 = vadd.f32 %v540, %v541
      %631 = vadd.xlane.f32.xlu0 %v630
      %v632 = vpop.xlane.xlu0 %631
      %v633 = vadd.f32 %v542, %v543
      %634 = vadd.xlane.f32.xlu0 %v633
      %v635 = vpop.xlane.xlu0 %634
      %v636 = vadd.f32 %v544, %v545
      %637 = vadd.xlane.f32.xlu0 %v636
      %v638 = vpop.xlane.xlu0 %637
      %v639 = vadd.f32 %v546, %v547
      %640 = vadd.xlane.f32.xlu0 %v639
      %v641 = vpop.xlane.xlu0 %640
      %v642 = vadd.f32 %v548, %v549
      %643 = vadd.xlane.f32.xlu0 %v642
      %v644 = vpop.xlane.xlu0 %643
      %v645 = vadd.f32 %v550, %v551
      %646 = vadd.xlane.f32.xlu0 %v645
      %v647 = vpop.xlane.xlu0 %646
      %v648 = vadd.f32 %v552, %v553
      %649 = vadd.xlane.f32.xlu0 %v648
      %v650 = vpop.xlane.xlu0 %649
      %v651 = vadd.f32 %v554, %v555
      %652 = vadd.xlane.f32.xlu0 %v651
      %v653 = vpop.xlane.xlu0 %652
      %v654 = vadd.f32 %v556, %v557
      %655 = vadd.xlane.f32.xlu0 %v654
      %v656 = vpop.xlane.xlu0 %655
      %v657 = vadd.f32 %v558, %v559
      %658 = vadd.xlane.f32.xlu0 %v657
      %v659 = vpop.xlane.xlu0 %658
      %v660 = vadd.f32 %v560, %v561
      %661 = vadd.xlane.f32.xlu0 %v660
      %v662 = vpop.xlane.xlu0 %661
      %v663 = vadd.f32 %v562, %v563
      %664 = vadd.xlane.f32.xlu0 %v663
      %v665 = vpop.xlane.xlu0 %664
      %v666 = vadd.f32 %v564, %v565
      %667 = vadd.xlane.f32.xlu0 %v666
      %v668 = vpop.xlane.xlu0 %667
      %v669 = vadd.f32 %v566, %v567
      %670 = vadd.xlane.f32.xlu0 %v669
      %v671 = vpop.xlane.xlu0 %670
      %v672 = vadd.f32 %v568, %v569
      %673 = vadd.xlane.f32.xlu0 %v672
      %v674 = vpop.xlane.xlu0 %673
      %v675 = vadd.f32 %v570, %v571
      %676 = vadd.xlane.f32.xlu0 %v675
      %v677 = vpop.xlane.xlu0 %676
      %v678 = vadd.f32 %v572, %v573
      %679 = vadd.xlane.f32.xlu0 %v678
      %v680 = vpop.xlane.xlu0 %679
      %v681 = vadd.f32 %v574, %v575
      %682 = vadd.xlane.f32.xlu0 %v681
      %v683 = vpop.xlane.xlu0 %682
      %v684 = vadd.f32 %v576, %v577
      %685 = vadd.xlane.f32.xlu0 %v684
      %v686 = vpop.xlane.xlu0 %685
      %v687 = vadd.f32 %v578, %v579
      %688 = vadd.xlane.f32.xlu0 %v687
      %v689 = vpop.xlane.xlu0 %688
      %v690 = vadd.f32 %v580, %v581
      %691 = vadd.xlane.f32.xlu0 %v690
      %v692 = vpop.xlane.xlu0 %691
      %v693 = vadd.f32 %v582, %v583
      %694 = vadd.xlane.f32.xlu0 %v693
      %v695 = vpop.xlane.xlu0 %694
      %v696 = vadd.f32 %v584, %v585
      %697 = vadd.xlane.f32.xlu0 %v696
      %v698 = vpop.xlane.xlu0 %697
      %v699 = vadd.f32 %v586, %v587
      %700 = vadd.xlane.f32.xlu0 %v699
      %v701 = vpop.xlane.xlu0 %700
      %v702 = vadd.f32 %v588, %v589
      %703 = vadd.xlane.f32.xlu0 %v702
      %v704 = vpop.xlane.xlu0 %703
      %v705 = vadd.f32 %v590, %v591
      %706 = vadd.xlane.f32.xlu0 %v705
      %v707 = vpop.xlane.xlu0 %706
      %v708 = vadd.f32 %v592, %v593
      %709 = vadd.xlane.f32.xlu0 %v708
      %v710 = vpop.xlane.xlu0 %709
      %v711 = vadd.f32 %v594, %v595
      %712 = vadd.xlane.f32.xlu0 %v711
      %v713 = vpop.xlane.xlu0 %712
      %v714 = vadd.f32 %v596, %v597
      %715 = vadd.xlane.f32.xlu0 %v714
      %v716 = vpop.xlane.xlu0 %715
      %v717 = vadd.f32 %v598, %v599
      %718 = vadd.xlane.f32.xlu0 %v717
      %v719 = vpop.xlane.xlu0 %718
      %v720 = vld [vmem:[%s3] sm:$0xff]
      %v721 = vld [vmem:[%s3 + $0x8] sm:$0xff]
      %v722 = vld [vmem:[%s3 + $0x10] sm:$0xff]
      %v723 = vld [vmem:[%s3 + $0x18] sm:$0xff]
      %v724 = vld [vmem:[%s3 + $0x20] sm:$0xff]
      %v725 = vld [vmem:[%s3 + $0x28] sm:$0xff]
      %v726 = vld [vmem:[%s3 + $0x30] sm:$0xff]
      %v727 = vld [vmem:[%s3 + $0x38] sm:$0xff]
      %v728 = vld [vmem:[%s3 + $0x40] sm:$0xff]
      %v729 = vld [vmem:[%s3 + $0x48] sm:$0xff]
      %v730 = vld [vmem:[%s3 + $0x50] sm:$0xff]
      %v731 = vld [vmem:[%s3 + $0x58] sm:$0xff]
      %v732 = vld [vmem:[%s3 + $0x60] sm:$0xff]
      %v733 = vld [vmem:[%s3 + $0x68] sm:$0xff]
      %v734 = vld [vmem:[%s3 + $0x70] sm:$0xff]
      %v735 = vld [vmem:[%s3 + $0x78] sm:$0xff]
      %v736 = vld [vmem:[%s3 + $0x80] sm:$0xff]
      %v737 = vld [vmem:[%s3 + $0x88] sm:$0xff]
      %v738 = vld [vmem:[%s3 + $0x90] sm:$0xff]
      %v739 = vld [vmem:[%s3 + $0x98] sm:$0xff]
      %v740 = vld [vmem:[%s3 + $0xa0] sm:$0xff]
      %v741 = vld [vmem:[%s3 + $0xa8] sm:$0xff]
      %v742 = vld [vmem:[%s3 + $0xb0] sm:$0xff]
      %v743 = vld [vmem:[%s3 + $0xb8] sm:$0xff]
      %v744 = vld [vmem:[%s3 + $0xc0] sm:$0xff]
      %v745 = vld [vmem:[%s3 + $0xc8] sm:$0xff]
      %v746 = vld [vmem:[%s3 + $0xd0] sm:$0xff]
      %v747 = vld [vmem:[%s3 + $0xd8] sm:$0xff]
      %v748 = vld [vmem:[%s3 + $0xe0] sm:$0xff]
      %v749 = vld [vmem:[%s3 + $0xe8] sm:$0xff]
      %v750 = vld [vmem:[%s3 + $0xf0] sm:$0xff]
      %v751 = vld [vmem:[%s3 + $0xf8] sm:$0xff]
      %v752 = vld [vmem:[%s3 + $0x100] sm:$0xff]
      %v753 = vld [vmem:[%s3 + $0x108] sm:$0xff]
      %v754 = vld [vmem:[%s3 + $0x110] sm:$0xff]
      %v755 = vld [vmem:[%s3 + $0x118] sm:$0xff]
      %v756 = vld [vmem:[%s3 + $0x120] sm:$0xff]
      %v757 = vld [vmem:[%s3 + $0x128] sm:$0xff]
      %v758 = vld [vmem:[%s3 + $0x130] sm:$0xff]
      %v759 = vld [vmem:[%s3 + $0x138] sm:$0xff]
      %v760 = vld [vmem:[%s3 + $0x140] sm:$0xff]
      %v761 = vld [vmem:[%s3 + $0x148] sm:$0xff]
      %v762 = vld [vmem:[%s3 + $0x150] sm:$0xff]
      %v763 = vld [vmem:[%s3 + $0x158] sm:$0xff]
      %v764 = vld [vmem:[%s3 + $0x160] sm:$0xff]
      %v765 = vld [vmem:[%s3 + $0x168] sm:$0xff]
      %v766 = vld [vmem:[%s3 + $0x170] sm:$0xff]
      %v767 = vld [vmem:[%s3 + $0x178] sm:$0xff]
      %v768 = vld [vmem:[%s3 + $0x180] sm:$0xff]
      %v769 = vld [vmem:[%s3 + $0x188] sm:$0xff]
      %v770 = vld [vmem:[%s3 + $0x190] sm:$0xff]
      %v771 = vld [vmem:[%s3 + $0x198] sm:$0xff]
      %v772 = vld [vmem:[%s3 + $0x1a0] sm:$0xff]
      %v773 = vld [vmem:[%s3 + $0x1a8] sm:$0xff]
      %v774 = vld [vmem:[%s3 + $0x1b0] sm:$0xff]
      %v775 = vld [vmem:[%s3 + $0x1b8] sm:$0xff]
      %v776 = vld [vmem:[%s3 + $0x1c0] sm:$0xff]
      %v777 = vld [vmem:[%s3 + $0x1c8] sm:$0xff]
      %v778 = vld [vmem:[%s3 + $0x1d0] sm:$0xff]
      %v779 = vld [vmem:[%s3 + $0x1d8] sm:$0xff]
      %v780 = vld [vmem:[%s3 + $0x1e0] sm:$0xff]
      %v781 = vld [vmem:[%s3 + $0x1e8] sm:$0xff]
      %v782 = vld [vmem:[%s3 + $0x1f0] sm:$0xff]
      %v783 = vld [vmem:[%s3 + $0x1f8] sm:$0xff]
      %v784 = vld [vmem:[%s3 + $0x200] sm:$0xff]
      %v785 = vld [vmem:[%s3 + $0x208] sm:$0xff]
      %v786 = vld [vmem:[%s3 + $0x210] sm:$0xff]
      %v787 = vld [vmem:[%s3 + $0x218] sm:$0xff]
      %v788 = vld [vmem:[%s3 + $0x220] sm:$0xff]
      %v789 = vld [vmem:[%s3 + $0x228] sm:$0xff]
      %v790 = vld [vmem:[%s3 + $0x230] sm:$0xff]
      %v791 = vld [vmem:[%s3 + $0x238] sm:$0xff]
      %v792 = vld [vmem:[%s3 + $0x240] sm:$0xff]
      %v793 = vld [vmem:[%s3 + $0x248] sm:$0xff]
      %v794 = vld [vmem:[%s3 + $0x250] sm:$0xff]
      %v795 = vld [vmem:[%s3 + $0x258] sm:$0xff]
      %v796 = vld [vmem:[%s3 + $0x260] sm:$0xff]
      %v797 = vld [vmem:[%s3 + $0x268] sm:$0xff]
      %v798 = vld [vmem:[%s3 + $0x270] sm:$0xff]
      %v799 = vld [vmem:[%s3 + $0x278] sm:$0xff]
      %v800 = vld [vmem:[%s3 + $0x280] sm:$0xff]
      %v801 = vld [vmem:[%s3 + $0x288] sm:$0xff]
      %v802 = vld [vmem:[%s3 + $0x290] sm:$0xff]
      %v803 = vld [vmem:[%s3 + $0x298] sm:$0xff]
      %v804 = vld [vmem:[%s3 + $0x2a0] sm:$0xff]
      %v805 = vld [vmem:[%s3 + $0x2a8] sm:$0xff]
      %v806 = vld [vmem:[%s3 + $0x2b0] sm:$0xff]
      %v807 = vld [vmem:[%s3 + $0x2b8] sm:$0xff]
      %v808 = vld [vmem:[%s3 + $0x2c0] sm:$0xff]
      %v809 = vld [vmem:[%s3 + $0x2c8] sm:$0xff]
      %v810 = vld [vmem:[%s3 + $0x2d0] sm:$0xff]
      %v811 = vld [vmem:[%s3 + $0x2d8] sm:$0xff]
      %v812 = vld [vmem:[%s3 + $0x2e0] sm:$0xff]
      %v813 = vld [vmem:[%s3 + $0x2e8] sm:$0xff]
      %v814 = vld [vmem:[%s3 + $0x2f0] sm:$0xff]
      %v815 = vld [vmem:[%s3 + $0x2f8] sm:$0xff]
      %v816 = vld [vmem:[%s3 + $0x300] sm:$0xff]
      %v817 = vld [vmem:[%s3 + $0x308] sm:$0xff]
      %v818 = vld [vmem:[%s3 + $0x310] sm:$0xff]
      %v819 = vld [vmem:[%s3 + $0x318] sm:$0xff]
      %v820 = vld [vmem:[%s3 + $0x320] sm:$0xff]
      %v821 = vld [vmem:[%s3 + $0x328] sm:$0xff]
      %v822 = vld [vmem:[%s3 + $0x330] sm:$0xff]
      %v823 = vld [vmem:[%s3 + $0x338] sm:$0xff]
      %v824 = vld [vmem:[%s3 + $0x340] sm:$0xff]
      %v825 = vld [vmem:[%s3 + $0x348] sm:$0xff]
      %v826 = vld [vmem:[%s3 + $0x350] sm:$0xff]
      %v827 = vld [vmem:[%s3 + $0x358] sm:$0xff]
      %v828 = vld [vmem:[%s3 + $0x360] sm:$0xff]
      %v829 = vld [vmem:[%s3 + $0x368] sm:$0xff]
      %v830 = vld [vmem:[%s3 + $0x370] sm:$0xff]
      %v831 = vld [vmem:[%s3 + $0x378] sm:$0xff]
      %v832 = vld [vmem:[%s3 + $0x380] sm:$0xff]
      %v833 = vld [vmem:[%s3 + $0x388] sm:$0xff]
      %v834 = vld [vmem:[%s3 + $0x390] sm:$0xff]
      %v835 = vld [vmem:[%s3 + $0x398] sm:$0xff]
      %v836 = vld [vmem:[%s3 + $0x3a0] sm:$0xff]
      %v837 = vld [vmem:[%s3 + $0x3a8] sm:$0xff]
      %v838 = vld [vmem:[%s3 + $0x3b0] sm:$0xff]
      %v839 = vld [vmem:[%s3 + $0x3b8] sm:$0xff]
      %vm840 = vcmask 523264
      %v842 = vsel %vm840, %v722, 0
      %v845 = vsel %vm840, %v725, 0
      %v848 = vsel %vm840, %v728, 0
      %v851 = vsel %vm840, %v731, 0
      %v854 = vsel %vm840, %v734, 0
      %v857 = vsel %vm840, %v737, 0
      %v860 = vsel %vm840, %v740, 0
      %v863 = vsel %vm840, %v743, 0
      %v866 = vsel %vm840, %v746, 0
      %v869 = vsel %vm840, %v749, 0
      %v872 = vsel %vm840, %v752, 0
      %v875 = vsel %vm840, %v755, 0
      %v878 = vsel %vm840, %v758, 0
      %v881 = vsel %vm840, %v761, 0
      %v884 = vsel %vm840, %v764, 0
      %v887 = vsel %vm840, %v767, 0
      %v890 = vsel %vm840, %v770, 0
      %v893 = vsel %vm840, %v773, 0
      %v896 = vsel %vm840, %v776, 0
      %v899 = vsel %vm840, %v779, 0
      %v902 = vsel %vm840, %v782, 0
      %v905 = vsel %vm840, %v785, 0
      %v908 = vsel %vm840, %v788, 0
      %v911 = vsel %vm840, %v791, 0
      %v914 = vsel %vm840, %v794, 0
      %v917 = vsel %vm840, %v797, 0
      %v920 = vsel %vm840, %v800, 0
      %v923 = vsel %vm840, %v803, 0
      %v926 = vsel %vm840, %v806, 0
      %v929 = vsel %vm840, %v809, 0
      %v932 = vsel %vm840, %v812, 0
      %v935 = vsel %vm840, %v815, 0
      %v938 = vsel %vm840, %v818, 0
      %v941 = vsel %vm840, %v821, 0
      %v944 = vsel %vm840, %v824, 0
      %v947 = vsel %vm840, %v827, 0
      %v950 = vsel %vm840, %v830, 0
      %v953 = vsel %vm840, %v833, 0
      %v956 = vsel %vm840, %v836, 0
      %v959 = vsel %vm840, %v839, 0
      %961 = vmatprep.subr.mxu0 0.0
      %962 = vmatpush1.msra.mxu0 %v402
      %963 = vmatprep.subr.mxu0 0.0
      %964 = vmatpush1.msra.mxu0 %v405
      %965 = vmatprep.subr.mxu0 0.0
      %966 = vmatpush1.msra.mxu0 %v408
      %967 = vmatprep.subr.mxu0 0.0
      %968 = vmatpush1.msra.mxu0 %v411
      %969 = vmatprep.subr.mxu0 0.0
      %970 = vmatpush1.msra.mxu0 %v414
      %971 = vmatprep.subr.mxu0 0.0
      %972 = vmatpush1.msra.mxu0 %v417
      %973 = vmatprep.subr.mxu0 0.0
      %974 = vmatpush1.msra.mxu0 %v420
      %975 = vmatprep.subr.mxu0 0.0
      %976 = vmatpush1.msra.mxu0 %v423
      %977 = vmatprep.subr.mxu0 0.0
      %978 = vmatpush1.msra.mxu0 %v426
      %979 = vmatprep.subr.mxu0 0.0
      %980 = vmatpush1.msra.mxu0 %v429
      %981 = vmatprep.subr.mxu0 0.0
      %982 = vmatpush1.msra.mxu0 %v432
      %983 = vmatprep.subr.mxu0 0.0
      %984 = vmatpush1.msra.mxu0 %v435
      %985 = vmatprep.subr.mxu0 0.0
      %986 = vmatpush1.msra.mxu0 %v438
      %987 = vmatprep.subr.mxu0 0.0
      %988 = vmatpush1.msra.mxu0 %v441
      %989 = vmatprep.subr.mxu0 0.0
      %990 = vmatpush1.msra.mxu0 %v444
      %991 = vmatprep.subr.mxu0 0.0
      %992 = vmatpush1.msra.mxu0 %v447
      %993 = vmatprep.subr.mxu0 0.0
      %994 = vmatpush1.msra.mxu0 %v450
      %995 = vmatprep.subr.mxu0 0.0
      %996 = vmatpush1.msra.mxu0 %v453
      %997 = vmatprep.subr.mxu0 0.0
      %998 = vmatpush1.msra.mxu0 %v456
      %999 = vmatprep.subr.mxu0 0.0
      %1000 = vmatpush1.msra.mxu0 %v459
      %1001 = vmatprep.subr.mxu0 0.0
      %1002 = vmatpush1.msra.mxu0 %v462
      %1003 = vmatprep.subr.mxu0 0.0
      %1004 = vmatpush1.msra.mxu0 %v465
      %1005 = vmatprep.subr.mxu0 0.0
      %1006 = vmatpush1.msra.mxu0 %v468
      %1007 = vmatprep.subr.mxu0 0.0
      %1008 = vmatpush1.msra.mxu0 %v471
      %1009 = vmatprep.subr.mxu0 0.0
      %1010 = vmatpush1.msra.mxu0 %v474
      %1011 = vmatprep.subr.mxu0 0.0
      %1012 = vmatpush1.msra.mxu0 %v477
      %1013 = vmatprep.subr.mxu0 0.0
      %1014 = vmatpush1.msra.mxu0 %v480
      %1015 = vmatprep.subr.mxu0 0.0
      %1016 = vmatpush1.msra.mxu0 %v483
      %1017 = vmatprep.subr.mxu0 0.0
      %1018 = vmatpush1.msra.mxu0 %v486
      %1019 = vmatprep.subr.mxu0 0.0
      %1020 = vmatpush1.msra.mxu0 %v489
      %1021 = vmatprep.subr.mxu0 0.0
      %1022 = vmatpush1.msra.mxu0 %v492
      %1023 = vmatprep.subr.mxu0 0.0
      %1024 = vmatpush1.msra.mxu0 %v495
      %1025 = vmatprep.mubr.f32.mxu0 %v721
      %1026 = vmatmul.mubr.f32.gmra.mrb[0].mxu0 %v720
      %v1027 = vpop.f32.mrb[0].mxu0
      %v1028 = vadd.f32 0.0, %v1027
      %v1029 = vpop.f32.mrb[0].mxu0
      %1030 = vmatprep.mubr.f32.mxu0 %v724
      %1031 = vmatmul.mubr.f32.gmra.mrb[0].mxu0 %v723
      %v1032 = vpop.f32.mrb[0].mxu0
      %v1033 = vadd.f32 0.0, %v1032
      %v1034 = vpop.f32.mrb[0].mxu0
      %1035 = vmatprep.mubr.f32.mxu0 %v727
      %1036 = vmatmul.mubr.f32.gmra.mrb[0].mxu0 %v726
      %v1037 = vpop.f32.mrb[0].mxu0
      %v1038 = vadd.f32 0.0, %v1037
      %v1039 = vpop.f32.mrb[0].mxu0
      %1040 = vmatprep.mubr.f32.mxu0 %v730
      %1041 = vmatmul.mubr.f32.gmra.mrb[0].mxu0 %v729
      %v1042 = vpop.f32.mrb[0].mxu0
      %v1043 = vadd.f32 0.0, %v1042
      %v1044 = vpop.f32.mrb[0].mxu0
      %1045 = vmatprep.mubr.f32.mxu0 %v733
      %1046 = vmatmul.mubr.f32.gmra.mrb[0].mxu0 %v732
      %v1047 = vpop.f32.mrb[0].mxu0
      %v1048 = vadd.f32 0.0, %v1047
      %v1049 = vpop.f32.mrb[0].mxu0
      %1050 = vmatprep.mubr.f32.mxu0 %v736
      %1051 = vmatmul.mubr.f32.gmra.mrb[0].mxu0 %v735
      %v1052 = vpop.f32.mrb[0].mxu0
      %v1053 = vadd.f32 0.0, %v1052
      %v1054 = vpop.f32.mrb[0].mxu0
      %1055 = vmatprep.mubr.f32.mxu0 %v739
      %1056 = vmatmul.mubr.f32.gmra.mrb[0].mxu0 %v738
      %v1057 = vpop.f32.mrb[0].mxu0
      %v1058 = vadd.f32 0.0, %v1057
      %v1059 = vpop.f32.mrb[0].mxu0
      %1060 = vmatprep.mubr.f32.mxu0 %v742
      %1061 = vmatmul.mubr.f32.gmra.mrb[0].mxu0 %v741
      %v1062 = vpop.f32.mrb[0].mxu0
      %v1063 = vadd.f32 0.0, %v1062
      %v1064 = vpop.f32.mrb[0].mxu0
      %1065 = vmatprep.mubr.f32.mxu0 %v745
      %1066 = vmatmul.mubr.f32.gmra.mrb[0].mxu0 %v744
      %v1067 = vpop.f32.mrb[0].mxu0
      %v1068 = vadd.f32 0.0, %v1067
      %v1069 = vpop.f32.mrb[0].mxu0
      %1070 = vmatprep.mubr.f32.mxu0 %v748
      %1071 = vmatmul.mubr.f32.gmra.mrb[0].mxu0 %v747
      %v1072 = vpop.f32.mrb[0].mxu0
      %v1073 = vadd.f32 0.0, %v1072
      %v1074 = vpop.f32.mrb[0].mxu0
      %1075 = vmatprep.mubr.f32.mxu0 %v751
      %1076 = vmatmul.mubr.f32.gmra.mrb[0].mxu0 %v750
      %v1077 = vpop.f32.mrb[0].mxu0
      %v1078 = vadd.f32 0.0, %v1077
      %v1079 = vpop.f32.mrb[0].mxu0
      %1080 = vmatprep.mubr.f32.mxu0 %v754
      %1081 = vmatmul.mubr.f32.gmra.mrb[0].mxu0 %v753
      %v1082 = vpop.f32.mrb[0].mxu0
      %v1083 = vadd.f32 0.0, %v1082
      %v1084 = vpop.f32.mrb[0].mxu0
      %1085 = vmatprep.mubr.f32.mxu0 %v757
      %1086 = vmatmul.mubr.f32.gmra.mrb[0].mxu0 %v756
      %v1087 = vpop.f32.mrb[0].mxu0
      %v1088 = vadd.f32 0.0, %v1087
      %v1089 = vpop.f32.mrb[0].mxu0
      %1090 = vmatprep.mubr.f32.mxu0 %v760
      %1091 = vmatmul.mubr.f32.gmra.mrb[0].mxu0 %v759
      %v1092 = vpop.f32.mrb[0].mxu0
      %v1093 = vadd.f32 0.0, %v1092
      %v1094 = vpop.f32.mrb[0].mxu0
      %1095 = vmatprep.mubr.f32.mxu0 %v763
      %1096 = vmatmul.mubr.f32.gmra.mrb[0].mxu0 %v762
      %v1097 = vpop.f32.mrb[0].mxu0
      %v1098 = vadd.f32 0.0, %v1097
      %v1099 = vpop.f32.mrb[0].mxu0
      %1100 = vmatprep.mubr.f32.mxu0 %v766
      %1101 = vmatmul.mubr.f32.gmra.mrb[0].mxu0 %v765
      %v1102 = vpop.f32.mrb[0].mxu0
      %v1103 = vadd.f32 0.0, %v1102
      %v1104 = vpop.f32.mrb[0].mxu0
      %1105 = vmatprep.mubr.f32.mxu0 %v769
      %1106 = vmatmul.mubr.f32.gmra.mrb[0].mxu0 %v768
      %v1107 = vpop.f32.mrb[0].mxu0
      %v1108 = vadd.f32 0.0, %v1107
      %v1109 = vpop.f32.mrb[0].mxu0
      %1110 = vmatprep.mubr.f32.mxu0 %v772
      %1111 = vmatmul.mubr.f32.gmra.mrb[0].mxu0 %v771
      %v1112 = vpop.f32.mrb[0].mxu0
      %v1113 = vadd.f32 0.0, %v1112
      %v1114 = vpop.f32.mrb[0].mxu0
      %1115 = vmatprep.mubr.f32.mxu0 %v775
      %1116 = vmatmul.mubr.f32.gmra.mrb[0].mxu0 %v774
      %v1117 = vpop.f32.mrb[0].mxu0
      %v1118 = vadd.f32 0.0, %v1117
      %v1119 = vpop.f32.mrb[0].mxu0
      %1120 = vmatprep.mubr.f32.mxu0 %v778
      %1121 = vmatmul.mubr.f32.gmra.mrb[0].mxu0 %v777
      %v1122 = vpop.f32.mrb[0].mxu0
      %v1123 = vadd.f32 0.0, %v1122
      %v1124 = vpop.f32.mrb[0].mxu0
      %1125 = vmatprep.mubr.f32.mxu0 %v781
      %1126 = vmatmul.mubr.f32.gmra.mrb[0].mxu0 %v780
      %v1127 = vpop.f32.mrb[0].mxu0
      %v1128 = vadd.f32 0.0, %v1127
      %v1129 = vpop.f32.mrb[0].mxu0
      %1130 = vmatprep.mubr.f32.mxu0 %v784
      %1131 = vmatmul.mubr.f32.gmra.mrb[0].mxu0 %v783
      %v1132 = vpop.f32.mrb[0].mxu0
      %v1133 = vadd.f32 0.0, %v1132
      %v1134 = vpop.f32.mrb[0].mxu0
      %1135 = vmatprep.mubr.f32.mxu0 %v787
      %1136 = vmatmul.mubr.f32.gmra.mrb[0].mxu0 %v786
      %v1137 = vpop.f32.mrb[0].mxu0
      %v1138 = vadd.f32 0.0, %v1137
      %v1139 = vpop.f32.mrb[0].mxu0
      %1140 = vmatprep.mubr.f32.mxu0 %v790
      %1141 = vmatmul.mubr.f32.gmra.mrb[0].mxu0 %v789
      %v1142 = vpop.f32.mrb[0].mxu0
      %v1143 = vadd.f32 0.0, %v1142
      %v1144 = vpop.f32.mrb[0].mxu0
      %1145 = vmatprep.mubr.f32.mxu0 %v793
      %1146 = vmatmul.mubr.f32.gmra.mrb[0].mxu0 %v792
      %v1147 = vpop.f32.mrb[0].mxu0
      %v1148 = vadd.f32 0.0, %v1147
      %v1149 = vpop.f32.mrb[0].mxu0
      %1150 = vmatprep.mubr.f32.mxu0 %v796
      %1151 = vmatmul.mubr.f32.gmra.mrb[0].mxu0 %v795
      %v1152 = vpop.f32.mrb[0].mxu0
      %v1153 = vadd.f32 0.0, %v1152
      %v1154 = vpop.f32.mrb[0].mxu0
      %1155 = vmatprep.mubr.f32.mxu0 %v799
      %1156 = vmatmul.mubr.f32.gmra.mrb[0].mxu0 %v798
      %v1157 = vpop.f32.mrb[0].mxu0
      %v1158 = vadd.f32 0.0, %v1157
      %v1159 = vpop.f32.mrb[0].mxu0
      %1160 = vmatprep.mubr.f32.mxu0 %v802
      %1161 = vmatmul.mubr.f32.gmra.mrb[0].mxu0 %v801
      %v1162 = vpop.f32.mrb[0].mxu0
      %v1163 = vadd.f32 0.0, %v1162
      %v1164 = vpop.f32.mrb[0].mxu0
      %1165 = vmatprep.mubr.f32.mxu0 %v805
      %1166 = vmatmul.mubr.f32.gmra.mrb[0].mxu0 %v804
      %v1167 = vpop.f32.mrb[0].mxu0
      %v1168 = vadd.f32 0.0, %v1167
      %v1169 = vpop.f32.mrb[0].mxu0
      %1170 = vmatprep.mubr.f32.mxu0 %v808
      %1171 = vmatmul.mubr.f32.gmra.mrb[0].mxu0 %v807
      %v1172 = vpop.f32.mrb[0].mxu0
      %v1173 = vadd.f32 0.0, %v1172
      %v1174 = vpop.f32.mrb[0].mxu0
      %1175 = vmatprep.mubr.f32.mxu0 %v811
      %1176 = vmatmul.mubr.f32.gmra.mrb[0].mxu0 %v810
      %v1177 = vpop.f32.mrb[0].mxu0
      %v1178 = vadd.f32 0.0, %v1177
      %v1179 = vpop.f32.mrb[0].mxu0
      %1180 = vmatprep.mubr.f32.mxu0 %v814
      %1181 = vmatmul.mubr.f32.gmra.mrb[0].mxu0 %v813
      %v1182 = vpop.f32.mrb[0].mxu0
      %v1183 = vadd.f32 0.0, %v1182
      %v1184 = vpop.f32.mrb[0].mxu0
      %1185 = vmatprep.mubr.f32.mxu0 %v817
      %1186 = vmatmul.mubr.f32.gmra.mrb[0].mxu0 %v816
      %v1187 = vpop.f32.mrb[0].mxu0
      %v1188 = vadd.f32 0.0, %v1187
      %v1189 = vpop.f32.mrb[0].mxu0
      %1190 = vmatprep.mubr.f32.mxu0 %v820
      %1191 = vmatmul.mubr.f32.gmra.mrb[0].mxu0 %v819
      %v1192 = vpop.f32.mrb[0].mxu0
      %v1193 = vadd.f32 0.0, %v1192
      %v1194 = vpop.f32.mrb[0].mxu0
      %1195 = vmatprep.mubr.f32.mxu0 %v823
      %1196 = vmatmul.mubr.f32.gmra.mrb[0].mxu0 %v822
      %v1197 = vpop.f32.mrb[0].mxu0
      %v1198 = vadd.f32 0.0, %v1197
      %v1199 = vpop.f32.mrb[0].mxu0
      %1200 = vmatprep.mubr.f32.mxu0 %v826
      %1201 = vmatmul.mubr.f32.gmra.mrb[0].mxu0 %v825
      %v1202 = vpop.f32.mrb[0].mxu0
      %v1203 = vadd.f32 0.0, %v1202
      %v1204 = vpop.f32.mrb[0].mxu0
      %1205 = vmatprep.mubr.f32.mxu0 %v829
      %1206 = vmatmul.mubr.f32.gmra.mrb[0].mxu0 %v828
      %v1207 = vpop.f32.mrb[0].mxu0
      %v1208 = vadd.f32 0.0, %v1207
      %v1209 = vpop.f32.mrb[0].mxu0
      %1210 = vmatprep.mubr.f32.mxu0 %v832
      %1211 = vmatmul.mubr.f32.gmra.mrb[0].mxu0 %v831
      %v1212 = vpop.f32.mrb[0].mxu0
      %v1213 = vadd.f32 0.0, %v1212
      %v1214 = vpop.f32.mrb[0].mxu0
      %1215 = vmatprep.mubr.f32.mxu0 %v835
      %1216 = vmatmul.mubr.f32.gmra.mrb[0].mxu0 %v834
      %v1217 = vpop.f32.mrb[0].mxu0
      %v1218 = vadd.f32 0.0, %v1217
      %v1219 = vpop.f32.mrb[0].mxu0
      %1220 = vmatprep.mubr.f32.mxu0 %v838
      %1221 = vmatmul.mubr.f32.gmra.mrb[0].mxu0 %v837
      %v1222 = vpop.f32.mrb[0].mxu0
      %v1223 = vadd.f32 0.0, %v1222
      %v1224 = vpop.f32.mrb[0].mxu0
      %1225 = vdwg.mxu0
      %1226 = vmatprep.subr.mxu0 0.0
      %1227 = vmatpush1.msra.mxu0 %v498
      %1228 = vmatprep.subr.mxu0 0.0
      %1229 = vmatpush1.msra.mxu0 %v501
      %1230 = vmatprep.subr.mxu0 0.0
      %1231 = vmatpush1.msra.mxu0 %v504
      %1232 = vmatprep.subr.mxu0 0.0
      %1233 = vmatpush1.msra.mxu0 %v507
      %1234 = vmatprep.subr.mxu0 0.0
      %1235 = vmatpush1.msra.mxu0 %v510
      %1236 = vmatprep.subr.mxu0 0.0
      %1237 = vmatpush1.msra.mxu0 %v513
      %1238 = vmatprep.subr.mxu0 0.0
      %1239 = vmatpush1.msra.mxu0 %v516
      %1240 = vmatprep.subr.mxu0 0.0
      %1241 = vmatpush1.msra.mxu0 %v519
      %1242 = vmatprep.subr.mxu0 0.0
      %1243 = vmatpush1.msra.mxu0 0.0
      %1244 = vmatprep.subr.mxu0 0.0
      %1245 = vmatpush1.msra.mxu0 0.0
      %1246 = vmatprep.subr.mxu0 0.0
      %1247 = vmatpush1.msra.mxu0 0.0
      %1248 = vmatprep.subr.mxu0 0.0
      %1249 = vmatpush1.msra.mxu0 0.0
      %1250 = vmatprep.subr.mxu0 0.0
      %1251 = vmatpush1.msra.mxu0 0.0
      %1252 = vmatprep.subr.mxu0 0.0
      %1253 = vmatpush1.msra.mxu0 0.0
      %1254 = vmatprep.subr.mxu0 0.0
      %1255 = vmatpush1.msra.mxu0 0.0
      %1256 = vmatprep.subr.mxu0 0.0
      %1257 = vmatpush1.msra.mxu0 0.0
      %1258 = vmatprep.subr.mxu0 0.0
      %1259 = vmatpush1.msra.mxu0 0.0
      %1260 = vmatprep.subr.mxu0 0.0
      %1261 = vmatpush1.msra.mxu0 0.0
      %1262 = vmatprep.subr.mxu0 0.0
      %1263 = vmatpush1.msra.mxu0 0.0
      %1264 = vmatprep.subr.mxu0 0.0
      %1265 = vmatpush1.msra.mxu0 0.0
      %1266 = vmatprep.subr.mxu0 0.0
      %1267 = vmatpush1.msra.mxu0 0.0
      %1268 = vmatprep.subr.mxu0 0.0
      %1269 = vmatpush1.msra.mxu0 0.0
      %1270 = vmatprep.subr.mxu0 0.0
      %1271 = vmatpush1.msra.mxu0 0.0
      %1272 = vmatprep.subr.mxu0 0.0
      %1273 = vmatpush1.msra.mxu0 0.0
      %1274 = vmatprep.subr.mxu0 0.0
      %1275 = vmatpush1.msra.mxu0 0.0
      %1276 = vmatprep.subr.mxu0 0.0
      %1277 = vmatpush1.msra.mxu0 0.0
      %1278 = vmatprep.subr.mxu0 0.0
      %1279 = vmatpush1.msra.mxu0 0.0
      %1280 = vmatprep.subr.mxu0 0.0
      %1281 = vmatpush1.msra.mxu0 0.0
      %1282 = vmatprep.subr.mxu0 0.0
      %1283 = vmatpush1.msra.mxu0 0.0
      %1284 = vmatprep.subr.mxu0 0.0
      %1285 = vmatpush1.msra.mxu0 0.0
      %1286 = vmatprep.subr.mxu0 0.0
      %1287 = vmatpush1.msra.mxu0 0.0
      %1288 = vmatprep.subr.mxu0 0.0
      %1289 = vmatpush1.msra.mxu0 0.0
      %1290 = vmatprep.mubr.f32.mxu0 0.0
      %1291 = vmatmul.mubr.f32.gmra.mrb[0].mxu0 %v842
      %v1292 = vpop.f32.mrb[0].mxu0
      %v1293 = vadd.f32 %v1028, %v1292
      %v1294 = vpop.f32.mrb[0].mxu0
      %1295 = vmatprep.mubr.f32.mxu0 0.0
      %1296 = vmatmul.mubr.f32.gmra.mrb[0].mxu0 %v845
      %v1297 = vpop.f32.mrb[0].mxu0
      %v1298 = vadd.f32 %v1033, %v1297
      %v1299 = vpop.f32.mrb[0].mxu0
      %1300 = vmatprep.mubr.f32.mxu0 0.0
      %1301 = vmatmul.mubr.f32.gmra.mrb[0].mxu0 %v848
      %v1302 = vpop.f32.mrb[0].mxu0
      %v1303 = vadd.f32 %v1038, %v1302
      %v1304 = vpop.f32.mrb[0].mxu0
      %1305 = vmatprep.mubr.f32.mxu0 0.0
      %1306 = vmatmul.mubr.f32.gmra.mrb[0].mxu0 %v851
      %v1307 = vpop.f32.mrb[0].mxu0
      %v1308 = vadd.f32 %v1043, %v1307
      %v1309 = vpop.f32.mrb[0].mxu0
      %1310 = vmatprep.mubr.f32.mxu0 0.0
      %1311 = vmatmul.mubr.f32.gmra.mrb[0].mxu0 %v854
      %v1312 = vpop.f32.mrb[0].mxu0
      %v1313 = vadd.f32 %v1048, %v1312
      %v1314 = vpop.f32.mrb[0].mxu0
      %1315 = vmatprep.mubr.f32.mxu0 0.0
      %1316 = vmatmul.mubr.f32.gmra.mrb[0].mxu0 %v857
      %v1317 = vpop.f32.mrb[0].mxu0
      %v1318 = vadd.f32 %v1053, %v1317
      %v1319 = vpop.f32.mrb[0].mxu0
      %1320 = vmatprep.mubr.f32.mxu0 0.0
      %1321 = vmatmul.mubr.f32.gmra.mrb[0].mxu0 %v860
      %v1322 = vpop.f32.mrb[0].mxu0
      %v1323 = vadd.f32 %v1058, %v1322
      %v1324 = vpop.f32.mrb[0].mxu0
      %1325 = vmatprep.mubr.f32.mxu0 0.0
      %1326 = vmatmul.mubr.f32.gmra.mrb[0].mxu0 %v863
      %v1327 = vpop.f32.mrb[0].mxu0
      %v1328 = vadd.f32 %v1063, %v1327
      %v1329 = vpop.f32.mrb[0].mxu0
      %1330 = vmatprep.mubr.f32.mxu0 0.0
      %1331 = vmatmul.mubr.f32.gmra.mrb[0].mxu0 %v866
      %v1332 = vpop.f32.mrb[0].mxu0
      %v1333 = vadd.f32 %v1068, %v1332
      %v1334 = vpop.f32.mrb[0].mxu0
      %1335 = vmatprep.mubr.f32.mxu0 0.0
      %1336 = vmatmul.mubr.f32.gmra.mrb[0].mxu0 %v869
      %v1337 = vpop.f32.mrb[0].mxu0
      %v1338 = vadd.f32 %v1073, %v1337
      %v1339 = vpop.f32.mrb[0].mxu0
      %1340 = vmatprep.mubr.f32.mxu0 0.0
      %1341 = vmatmul.mubr.f32.gmra.mrb[0].mxu0 %v872
      %v1342 = vpop.f32.mrb[0].mxu0
      %v1343 = vadd.f32 %v1078, %v1342
      %v1344 = vpop.f32.mrb[0].mxu0
      %1345 = vmatprep.mubr.f32.mxu0 0.0
      %1346 = vmatmul.mubr.f32.gmra.mrb[0].mxu0 %v875
      %v1347 = vpop.f32.mrb[0].mxu0
      %v1348 = vadd.f32 %v1083, %v1347
      %v1349 = vpop.f32.mrb[0].mxu0
      %1350 = vmatprep.mubr.f32.mxu0 0.0
      %1351 = vmatmul.mubr.f32.gmra.mrb[0].mxu0 %v878
      %v1352 = vpop.f32.mrb[0].mxu0
      %v1353 = vadd.f32 %v1088, %v1352
      %v1354 = vpop.f32.mrb[0].mxu0
      %1355 = vmatprep.mubr.f32.mxu0 0.0
      %1356 = vmatmul.mubr.f32.gmra.mrb[0].mxu0 %v881
      %v1357 = vpop.f32.mrb[0].mxu0
      %v1358 = vadd.f32 %v1093, %v1357
      %v1359 = vpop.f32.mrb[0].mxu0
      %1360 = vmatprep.mubr.f32.mxu0 0.0
      %1361 = vmatmul.mubr.f32.gmra.mrb[0].mxu0 %v884
      %v1362 = vpop.f32.mrb[0].mxu0
      %v1363 = vadd.f32 %v1098, %v1362
      %v1364 = vpop.f32.mrb[0].mxu0
      %1365 = vmatprep.mubr.f32.mxu0 0.0
      %1366 = vmatmul.mubr.f32.gmra.mrb[0].mxu0 %v887
      %v1367 = vpop.f32.mrb[0].mxu0
      %v1368 = vadd.f32 %v1103, %v1367
      %v1369 = vpop.f32.mrb[0].mxu0
      %1370 = vmatprep.mubr.f32.mxu0 0.0
      %1371 = vmatmul.mubr.f32.gmra.mrb[0].mxu0 %v890
      %v1372 = vpop.f32.mrb[0].mxu0
      %v1373 = vadd.f32 %v1108, %v1372
      %v1374 = vpop.f32.mrb[0].mxu0
      %1375 = vmatprep.mubr.f32.mxu0 0.0
      %1376 = vmatmul.mubr.f32.gmra.mrb[0].mxu0 %v893
      %v1377 = vpop.f32.mrb[0].mxu0
      %v1378 = vadd.f32 %v1113, %v1377
      %v1379 = vpop.f32.mrb[0].mxu0
      %1380 = vmatprep.mubr.f32.mxu0 0.0
      %1381 = vmatmul.mubr.f32.gmra.mrb[0].mxu0 %v896
      %v1382 = vpop.f32.mrb[0].mxu0
      %v1383 = vadd.f32 %v1118, %v1382
      %v1384 = vpop.f32.mrb[0].mxu0
      %1385 = vmatprep.mubr.f32.mxu0 0.0
      %1386 = vmatmul.mubr.f32.gmra.mrb[0].mxu0 %v899
      %v1387 = vpop.f32.mrb[0].mxu0
      %v1388 = vadd.f32 %v1123, %v1387
      %v1389 = vpop.f32.mrb[0].mxu0
      %1390 = vmatprep.mubr.f32.mxu0 0.0
      %1391 = vmatmul.mubr.f32.gmra.mrb[0].mxu0 %v902
      %v1392 = vpop.f32.mrb[0].mxu0
      %v1393 = vadd.f32 %v1128, %v1392
      %v1394 = vpop.f32.mrb[0].mxu0
      %1395 = vmatprep.mubr.f32.mxu0 0.0
      %1396 = vmatmul.mubr.f32.gmra.mrb[0].mxu0 %v905
      %v1397 = vpop.f32.mrb[0].mxu0
      %v1398 = vadd.f32 %v1133, %v1397
      %v1399 = vpop.f32.mrb[0].mxu0
      %1400 = vmatprep.mubr.f32.mxu0 0.0
      %1401 = vmatmul.mubr.f32.gmra.mrb[0].mxu0 %v908
      %v1402 = vpop.f32.mrb[0].mxu0
      %v1403 = vadd.f32 %v1138, %v1402
      %v1404 = vpop.f32.mrb[0].mxu0
      %1405 = vmatprep.mubr.f32.mxu0 0.0
      %1406 = vmatmul.mubr.f32.gmra.mrb[0].mxu0 %v911
      %v1407 = vpop.f32.mrb[0].mxu0
      %v1408 = vadd.f32 %v1143, %v1407
      %v1409 = vpop.f32.mrb[0].mxu0
      %1410 = vmatprep.mubr.f32.mxu0 0.0
      %1411 = vmatmul.mubr.f32.gmra.mrb[0].mxu0 %v914
      %v1412 = vpop.f32.mrb[0].mxu0
      %v1413 = vadd.f32 %v1148, %v1412
      %v1414 = vpop.f32.mrb[0].mxu0
      %1415 = vmatprep.mubr.f32.mxu0 0.0
      %1416 = vmatmul.mubr.f32.gmra.mrb[0].mxu0 %v917
      %v1417 = vpop.f32.mrb[0].mxu0
      %v1418 = vadd.f32 %v1153, %v1417
      %v1419 = vpop.f32.mrb[0].mxu0
      %1420 = vmatprep.mubr.f32.mxu0 0.0
      %1421 = vmatmul.mubr.f32.gmra.mrb[0].mxu0 %v920
      %v1422 = vpop.f32.mrb[0].mxu0
      %v1423 = vadd.f32 %v1158, %v1422
      %v1424 = vpop.f32.mrb[0].mxu0
      %1425 = vmatprep.mubr.f32.mxu0 0.0
      %1426 = vmatmul.mubr.f32.gmra.mrb[0].mxu0 %v923
      %v1427 = vpop.f32.mrb[0].mxu0
      %v1428 = vadd.f32 %v1163, %v1427
      %v1429 = vpop.f32.mrb[0].mxu0
      %1430 = vmatprep.mubr.f32.mxu0 0.0
      %1431 = vmatmul.mubr.f32.gmra.mrb[0].mxu0 %v926
      %v1432 = vpop.f32.mrb[0].mxu0
      %v1433 = vadd.f32 %v1168, %v1432
      %v1434 = vpop.f32.mrb[0].mxu0
      %1435 = vmatprep.mubr.f32.mxu0 0.0
      %1436 = vmatmul.mubr.f32.gmra.mrb[0].mxu0 %v929
      %v1437 = vpop.f32.mrb[0].mxu0
      %v1438 = vadd.f32 %v1173, %v1437
      %v1439 = vpop.f32.mrb[0].mxu0
      %1440 = vmatprep.mubr.f32.mxu0 0.0
      %1441 = vmatmul.mubr.f32.gmra.mrb[0].mxu0 %v932
      %v1442 = vpop.f32.mrb[0].mxu0
      %v1443 = vadd.f32 %v1178, %v1442
      %v1444 = vpop.f32.mrb[0].mxu0
      %1445 = vmatprep.mubr.f32.mxu0 0.0
      %1446 = vmatmul.mubr.f32.gmra.mrb[0].mxu0 %v935
      %v1447 = vpop.f32.mrb[0].mxu0
      %v1448 = vadd.f32 %v1183, %v1447
      %v1449 = vpop.f32.mrb[0].mxu0
      %1450 = vmatprep.mubr.f32.mxu0 0.0
      %1451 = vmatmul.mubr.f32.gmra.mrb[0].mxu0 %v938
      %v1452 = vpop.f32.mrb[0].mxu0
      %v1453 = vadd.f32 %v1188, %v1452
      %v1454 = vpop.f32.mrb[0].mxu0
      %1455 = vmatprep.mubr.f32.mxu0 0.0
      %1456 = vmatmul.mubr.f32.gmra.mrb[0].mxu0 %v941
      %v1457 = vpop.f32.mrb[0].mxu0
      %v1458 = vadd.f32 %v1193, %v1457
      %v1459 = vpop.f32.mrb[0].mxu0
      %1460 = vmatprep.mubr.f32.mxu0 0.0
      %1461 = vmatmul.mubr.f32.gmra.mrb[0].mxu0 %v944
      %v1462 = vpop.f32.mrb[0].mxu0
      %v1463 = vadd.f32 %v1198, %v1462
      %v1464 = vpop.f32.mrb[0].mxu0
      %1465 = vmatprep.mubr.f32.mxu0 0.0
      %1466 = vmatmul.mubr.f32.gmra.mrb[0].mxu0 %v947
      %v1467 = vpop.f32.mrb[0].mxu0
      %v1468 = vadd.f32 %v1203, %v1467
      %v1469 = vpop.f32.mrb[0].mxu0
      %1470 = vmatprep.mubr.f32.mxu0 0.0
      %1471 = vmatmul.mubr.f32.gmra.mrb[0].mxu0 %v950
      %v1472 = vpop.f32.mrb[0].mxu0
      %v1473 = vadd.f32 %v1208, %v1472
      %v1474 = vpop.f32.mrb[0].mxu0
      %1475 = vmatprep.mubr.f32.mxu0 0.0
      %1476 = vmatmul.mubr.f32.gmra.mrb[0].mxu0 %v953
      %v1477 = vpop.f32.mrb[0].mxu0
      %v1478 = vadd.f32 %v1213, %v1477
      %v1479 = vpop.f32.mrb[0].mxu0
      %1480 = vmatprep.mubr.f32.mxu0 0.0
      %1481 = vmatmul.mubr.f32.gmra.mrb[0].mxu0 %v956
      %v1482 = vpop.f32.mrb[0].mxu0
      %v1483 = vadd.f32 %v1218, %v1482
      %v1484 = vpop.f32.mrb[0].mxu0
      %1485 = vmatprep.mubr.f32.mxu0 0.0
      %1486 = vmatmul.mubr.f32.gmra.mrb[0].mxu0 %v959
      %v1487 = vpop.f32.mrb[0].mxu0
      %v1488 = vadd.f32 %v1223, %v1487
      %v1489 = vpop.f32.mrb[0].mxu0
      %1490 = vdwg.mxu0
      %v1491 = vmul.f32 %v1293, 0.000390625
      %v1492 = vmul.f32 %v1298, 0.000390625
      %v1493 = vmul.f32 %v1303, 0.000390625
      %v1494 = vmul.f32 %v1308, 0.000390625
      %v1495 = vmul.f32 %v1313, 0.000390625
      %v1496 = vmul.f32 %v1318, 0.000390625
      %v1497 = vmul.f32 %v1323, 0.000390625
      %v1498 = vmul.f32 %v1328, 0.000390625
      %v1499 = vmul.f32 %v1333, 0.000390625
      %v1500 = vmul.f32 %v1338, 0.000390625
      %v1501 = vmul.f32 %v1343, 0.000390625
      %v1502 = vmul.f32 %v1348, 0.000390625
      %v1503 = vmul.f32 %v1353, 0.000390625
      %v1504 = vmul.f32 %v1358, 0.000390625
      %v1505 = vmul.f32 %v1363, 0.000390625
      %v1506 = vmul.f32 %v1368, 0.000390625
      %v1507 = vmul.f32 %v1373, 0.000390625
      %v1508 = vmul.f32 %v1378, 0.000390625
      %v1509 = vmul.f32 %v1383, 0.000390625
      %v1510 = vmul.f32 %v1388, 0.000390625
      %v1511 = vmul.f32 %v1393, 0.000390625
      %v1512 = vmul.f32 %v1398, 0.000390625
      %v1513 = vmul.f32 %v1403, 0.000390625
      %v1514 = vmul.f32 %v1408, 0.000390625
      %v1515 = vmul.f32 %v1413, 0.000390625
      %v1516 = vmul.f32 %v1418, 0.000390625
      %v1517 = vmul.f32 %v1423, 0.000390625
      %v1518 = vmul.f32 %v1428, 0.000390625
      %v1519 = vmul.f32 %v1433, 0.000390625
      %v1520 = vmul.f32 %v1438, 0.000390625
      %v1521 = vmul.f32 %v1443, 0.000390625
      %v1522 = vmul.f32 %v1448, 0.000390625
      %v1523 = vmul.f32 %v1453, 0.000390625
      %v1524 = vmul.f32 %v1458, 0.000390625
      %v1525 = vmul.f32 %v1463, 0.000390625
      %v1526 = vmul.f32 %v1468, 0.000390625
      %v1527 = vmul.f32 %v1473, 0.000390625
      %v1528 = vmul.f32 %v1478, 0.000390625
      %v1529 = vmul.f32 %v1483, 0.000390625
      %v1530 = vmul.f32 %v1488, 0.000390625
      %1531 = vmatprep.subr.mxu0 0.0
      %1532 = vmatpush1.msra.mxu0 %v602
      %1533 = vmatprep.subr.mxu0 0.0
      %1534 = vmatpush1.msra.mxu0 %v605
      %1535 = vmatprep.subr.mxu0 0.0
      %1536 = vmatpush1.msra.mxu0 %v608
      %1537 = vmatprep.subr.mxu0 0.0
      %1538 = vmatpush1.msra.mxu0 %v611
      %1539 = vmatprep.subr.mxu0 0.0
      %1540 = vmatpush1.msra.mxu0 %v614
      %1541 = vmatprep.subr.mxu0 0.0
      %1542 = vmatpush1.msra.mxu0 %v617
      %1543 = vmatprep.subr.mxu0 0.0
      %1544 = vmatpush1.msra.mxu0 %v620
      %1545 = vmatprep.subr.mxu0 0.0
      %1546 = vmatpush1.msra.mxu0 %v623
      %1547 = vmatprep.subr.mxu0 0.0
      %1548 = vmatpush1.msra.mxu0 %v626
      %1549 = vmatprep.subr.mxu0 0.0
      %1550 = vmatpush1.msra.mxu0 %v629
      %1551 = vmatprep.subr.mxu0 0.0
      %1552 = vmatpush1.msra.mxu0 %v632
      %1553 = vmatprep.subr.mxu0 0.0
      %1554 = vmatpush1.msra.mxu0 %v635
      %1555 = vmatprep.subr.mxu0 0.0
      %1556 = vmatpush1.msra.mxu0 %v638
      %1557 = vmatprep.subr.mxu0 0.0
      %1558 = vmatpush1.msra.mxu0 %v641
      %1559 = vmatprep.subr.mxu0 0.0
      %1560 = vmatpush1.msra.mxu0 %v644
      %1561 = vmatprep.subr.mxu0 0.0
      %1562 = vmatpush1.msra.mxu0 %v647
      %1563 = vmatprep.subr.mxu0 0.0
      %1564 = vmatpush1.msra.mxu0 %v650
      %1565 = vmatprep.subr.mxu0 0.0
      %1566 = vmatpush1.msra.mxu0 %v653
      %1567 = vmatprep.subr.mxu0 0.0
      %1568 = vmatpush1.msra.mxu0 %v656
      %1569 = vmatprep.subr.mxu0 0.0
      %1570 = vmatpush1.msra.mxu0 %v659
      %1571 = vmatprep.subr.mxu0 0.0
      %1572 = vmatpush1.msra.mxu0 %v662
      %1573 = vmatprep.subr.mxu0 0.0
      %1574 = vmatpush1.msra.mxu0 %v665
      %1575 = vmatprep.subr.mxu0 0.0
      %1576 = vmatpush1.msra.mxu0 %v668
      %1577 = vmatprep.subr.mxu0 0.0
      %1578 = vmatpush1.msra.mxu0 %v671
      %1579 = vmatprep.subr.mxu0 0.0
      %1580 = vmatpush1.msra.mxu0 %v674
      %1581 = vmatprep.subr.mxu0 0.0
      %1582 = vmatpush1.msra.mxu0 %v677
      %1583 = vmatprep.subr.mxu0 0.0
      %1584 = vmatpush1.msra.mxu0 %v680
      %1585 = vmatprep.subr.mxu0 0.0
      %1586 = vmatpush1.msra.mxu0 %v683
      %1587 = vmatprep.subr.mxu0 0.0
      %1588 = vmatpush1.msra.mxu0 %v686
      %1589 = vmatprep.subr.mxu0 0.0
      %1590 = vmatpush1.msra.mxu0 %v689
      %1591 = vmatprep.subr.mxu0 0.0
      %1592 = vmatpush1.msra.mxu0 %v692
      %1593 = vmatprep.subr.mxu0 0.0
      %1594 = vmatpush1.msra.mxu0 %v695
      %1595 = vmatprep.mubr.f32.mxu0 %v721
      %1596 = vmatmul.mubr.f32.gmra.mrb[0].mxu0 %v720
      %v1597 = vpop.f32.mrb[0].mxu0
      %v1598 = vadd.f32 0.0, %v1597
      %v1599 = vpop.f32.mrb[0].mxu0
      %1600 = vmatprep.mubr.f32.mxu0 %v724
      %1601 = vmatmul.mubr.f32.gmra.mrb[0].mxu0 %v723
      %v1602 = vpop.f32.mrb[0].mxu0
      %v1603 = vadd.f32 0.0, %v1602
      %v1604 = vpop.f32.mrb[0].mxu0
      %1605 = vmatprep.mubr.f32.mxu0 %v727
      %1606 = vmatmul.mubr.f32.gmra.mrb[0].mxu0 %v726
      %v1607 = vpop.f32.mrb[0].mxu0
      %v1608 = vadd.f32 0.0, %v1607
      %v1609 = vpop.f32.mrb[0].mxu0
      %1610 = vmatprep.mubr.f32.mxu0 %v730
      %1611 = vmatmul.mubr.f32.gmra.mrb[0].mxu0 %v729
      %v1612 = vpop.f32.mrb[0].mxu0
      %v1613 = vadd.f32 0.0, %v1612
      %v1614 = vpop.f32.mrb[0].mxu0
      %1615 = vmatprep.mubr.f32.mxu0 %v733
      %1616 = vmatmul.mubr.f32.gmra.mrb[0].mxu0 %v732
      %v1617 = vpop.f32.mrb[0].mxu0
      %v1618 = vadd.f32 0.0, %v1617
      %v1619 = vpop.f32.mrb[0].mxu0
      %1620 = vmatprep.mubr.f32.mxu0 %v736
      %1621 = vmatmul.mubr.f32.gmra.mrb[0].mxu0 %v735
      %v1622 = vpop.f32.mrb[0].mxu0
      %v1623 = vadd.f32 0.0, %v1622
      %v1624 = vpop.f32.mrb[0].mxu0
      %1625 = vmatprep.mubr.f32.mxu0 %v739
      %1626 = vmatmul.mubr.f32.gmra.mrb[0].mxu0 %v738
      %v1627 = vpop.f32.mrb[0].mxu0
      %v1628 = vadd.f32 0.0, %v1627
      %v1629 = vpop.f32.mrb[0].mxu0
      %1630 = vmatprep.mubr.f32.mxu0 %v742
      %1631 = vmatmul.mubr.f32.gmra.mrb[0].mxu0 %v741
      %v1632 = vpop.f32.mrb[0].mxu0
      %v1633 = vadd.f32 0.0, %v1632
      %v1634 = vpop.f32.mrb[0].mxu0
      %1635 = vmatprep.mubr.f32.mxu0 %v745
      %1636 = vmatmul.mubr.f32.gmra.mrb[0].mxu0 %v744
      %v1637 = vpop.f32.mrb[0].mxu0
      %v1638 = vadd.f32 0.0, %v1637
      %v1639 = vpop.f32.mrb[0].mxu0
      %1640 = vmatprep.mubr.f32.mxu0 %v748
      %1641 = vmatmul.mubr.f32.gmra.mrb[0].mxu0 %v747
      %v1642 = vpop.f32.mrb[0].mxu0
      %v1643 = vadd.f32 0.0, %v1642
      %v1644 = vpop.f32.mrb[0].mxu0
      %1645 = vmatprep.mubr.f32.mxu0 %v751
      %1646 = vmatmul.mubr.f32.gmra.mrb[0].mxu0 %v750
      %v1647 = vpop.f32.mrb[0].mxu0
      %v1648 = vadd.f32 0.0, %v1647
      %v1649 = vpop.f32.mrb[0].mxu0
      %1650 = vmatprep.mubr.f32.mxu0 %v754
      %1651 = vmatmul.mubr.f32.gmra.mrb[0].mxu0 %v753
      %v1652 = vpop.f32.mrb[0].mxu0
      %v1653 = vadd.f32 0.0, %v1652
      %v1654 = vpop.f32.mrb[0].mxu0
      %1655 = vmatprep.mubr.f32.mxu0 %v757
      %1656 = vmatmul.mubr.f32.gmra.mrb[0].mxu0 %v756
      %v1657 = vpop.f32.mrb[0].mxu0
      %v1658 = vadd.f32 0.0, %v1657
      %v1659 = vpop.f32.mrb[0].mxu0
      %1660 = vmatprep.mubr.f32.mxu0 %v760
      %1661 = vmatmul.mubr.f32.gmra.mrb[0].mxu0 %v759
      %v1662 = vpop.f32.mrb[0].mxu0
      %v1663 = vadd.f32 0.0, %v1662
      %v1664 = vpop.f32.mrb[0].mxu0
      %1665 = vmatprep.mubr.f32.mxu0 %v763
      %1666 = vmatmul.mubr.f32.gmra.mrb[0].mxu0 %v762
      %v1667 = vpop.f32.mrb[0].mxu0
      %v1668 = vadd.f32 0.0, %v1667
      %v1669 = vpop.f32.mrb[0].mxu0
      %1670 = vmatprep.mubr.f32.mxu0 %v766
      %1671 = vmatmul.mubr.f32.gmra.mrb[0].mxu0 %v765
      %v1672 = vpop.f32.mrb[0].mxu0
      %v1673 = vadd.f32 0.0, %v1672
      %v1674 = vpop.f32.mrb[0].mxu0
      %1675 = vmatprep.mubr.f32.mxu0 %v769
      %1676 = vmatmul.mubr.f32.gmra.mrb[0].mxu0 %v768
      %v1677 = vpop.f32.mrb[0].mxu0
      %v1678 = vadd.f32 0.0, %v1677
      %v1679 = vpop.f32.mrb[0].mxu0
      %1680 = vmatprep.mubr.f32.mxu0 %v772
      %1681 = vmatmul.mubr.f32.gmra.mrb[0].mxu0 %v771
      %v1682 = vpop.f32.mrb[0].mxu0
      %v1683 = vadd.f32 0.0, %v1682
      %v1684 = vpop.f32.mrb[0].mxu0
      %1685 = vmatprep.mubr.f32.mxu0 %v775
      %1686 = vmatmul.mubr.f32.gmra.mrb[0].mxu0 %v774
      %v1687 = vpop.f32.mrb[0].mxu0
      %v1688 = vadd.f32 0.0, %v1687
      %v1689 = vpop.f32.mrb[0].mxu0
      %1690 = vmatprep.mubr.f32.mxu0 %v778
      %1691 = vmatmul.mubr.f32.gmra.mrb[0].mxu0 %v777
      %v1692 = vpop.f32.mrb[0].mxu0
      %v1693 = vadd.f32 0.0, %v1692
      %v1694 = vpop.f32.mrb[0].mxu0
      %1695 = vmatprep.mubr.f32.mxu0 %v781
      %1696 = vmatmul.mubr.f32.gmra.mrb[0].mxu0 %v780
      %v1697 = vpop.f32.mrb[0].mxu0
      %v1698 = vadd.f32 0.0, %v1697
      %v1699 = vpop.f32.mrb[0].mxu0
      %1700 = vmatprep.mubr.f32.mxu0 %v784
      %1701 = vmatmul.mubr.f32.gmra.mrb[0].mxu0 %v783
      %v1702 = vpop.f32.mrb[0].mxu0
      %v1703 = vadd.f32 0.0, %v1702
      %v1704 = vpop.f32.mrb[0].mxu0
      %1705 = vmatprep.mubr.f32.mxu0 %v787
      %1706 = vmatmul.mubr.f32.gmra.mrb[0].mxu0 %v786
      %v1707 = vpop.f32.mrb[0].mxu0
      %v1708 = vadd.f32 0.0, %v1707
      %v1709 = vpop.f32.mrb[0].mxu0
      %1710 = vmatprep.mubr.f32.mxu0 %v790
      %1711 = vmatmul.mubr.f32.gmra.mrb[0].mxu0 %v789
      %v1712 = vpop.f32.mrb[0].mxu0
      %v1713 = vadd.f32 0.0, %v1712
      %v1714 = vpop.f32.mrb[0].mxu0
      %1715 = vmatprep.mubr.f32.mxu0 %v793
      %1716 = vmatmul.mubr.f32.gmra.mrb[0].mxu0 %v792
      %v1717 = vpop.f32.mrb[0].mxu0
      %v1718 = vadd.f32 0.0, %v1717
      %v1719 = vpop.f32.mrb[0].mxu0
      %1720 = vmatprep.mubr.f32.mxu0 %v796
      %1721 = vmatmul.mubr.f32.gmra.mrb[0].mxu0 %v795
      %v1722 = vpop.f32.mrb[0].mxu0
      %v1723 = vadd.f32 0.0, %v1722
      %v1724 = vpop.f32.mrb[0].mxu0
      %1725 = vmatprep.mubr.f32.mxu0 %v799
      %1726 = vmatmul.mubr.f32.gmra.mrb[0].mxu0 %v798
      %v1727 = vpop.f32.mrb[0].mxu0
      %v1728 = vadd.f32 0.0, %v1727
      %v1729 = vpop.f32.mrb[0].mxu0
      %1730 = vmatprep.mubr.f32.mxu0 %v802
      %1731 = vmatmul.mubr.f32.gmra.mrb[0].mxu0 %v801
      %v1732 = vpop.f32.mrb[0].mxu0
      %v1733 = vadd.f32 0.0, %v1732
      %v1734 = vpop.f32.mrb[0].mxu0
      %1735 = vmatprep.mubr.f32.mxu0 %v805
      %1736 = vmatmul.mubr.f32.gmra.mrb[0].mxu0 %v804
      %v1737 = vpop.f32.mrb[0].mxu0
      %v1738 = vadd.f32 0.0, %v1737
      %v1739 = vpop.f32.mrb[0].mxu0
      %1740 = vmatprep.mubr.f32.mxu0 %v808
      %1741 = vmatmul.mubr.f32.gmra.mrb[0].mxu0 %v807
      %v1742 = vpop.f32.mrb[0].mxu0
      %v1743 = vadd.f32 0.0, %v1742
      %v1744 = vpop.f32.mrb[0].mxu0
      %1745 = vmatprep.mubr.f32.mxu0 %v811
      %1746 = vmatmul.mubr.f32.gmra.mrb[0].mxu0 %v810
      %v1747 = vpop.f32.mrb[0].mxu0
      %v1748 = vadd.f32 0.0, %v1747
      %v1749 = vpop.f32.mrb[0].mxu0
      %1750 = vmatprep.mubr.f32.mxu0 %v814
      %1751 = vmatmul.mubr.f32.gmra.mrb[0].mxu0 %v813
      %v1752 = vpop.f32.mrb[0].mxu0
      %v1753 = vadd.f32 0.0, %v1752
      %v1754 = vpop.f32.mrb[0].mxu0
      %1755 = vmatprep.mubr.f32.mxu0 %v817
      %1756 = vmatmul.mubr.f32.gmra.mrb[0].mxu0 %v816
      %v1757 = vpop.f32.mrb[0].mxu0
      %v1758 = vadd.f32 0.0, %v1757
      %v1759 = vpop.f32.mrb[0].mxu0
      %1760 = vmatprep.mubr.f32.mxu0 %v820
      %1761 = vmatmul.mubr.f32.gmra.mrb[0].mxu0 %v819
      %v1762 = vpop.f32.mrb[0].mxu0
      %v1763 = vadd.f32 0.0, %v1762
      %v1764 = vpop.f32.mrb[0].mxu0
      %1765 = vmatprep.mubr.f32.mxu0 %v823
      %1766 = vmatmul.mubr.f32.gmra.mrb[0].mxu0 %v822
      %v1767 = vpop.f32.mrb[0].mxu0
      %v1768 = vadd.f32 0.0, %v1767
      %v1769 = vpop.f32.mrb[0].mxu0
      %1770 = vmatprep.mubr.f32.mxu0 %v826
      %1771 = vmatmul.mubr.f32.gmra.mrb[0].mxu0 %v825
      %v1772 = vpop.f32.mrb[0].mxu0
      %v1773 = vadd.f32 0.0, %v1772
      %v1774 = vpop.f32.mrb[0].mxu0
      %1775 = vmatprep.mubr.f32.mxu0 %v829
      %1776 = vmatmul.mubr.f32.gmra.mrb[0].mxu0 %v828
      %v1777 = vpop.f32.mrb[0].mxu0
      %v1778 = vadd.f32 0.0, %v1777
      %v1779 = vpop.f32.mrb[0].mxu0
      %1780 = vmatprep.mubr.f32.mxu0 %v832
      %1781 = vmatmul.mubr.f32.gmra.mrb[0].mxu0 %v831
      %v1782 = vpop.f32.mrb[0].mxu0
      %v1783 = vadd.f32 0.0, %v1782
      %v1784 = vpop.f32.mrb[0].mxu0
      %1785 = vmatprep.mubr.f32.mxu0 %v835
      %1786 = vmatmul.mubr.f32.gmra.mrb[0].mxu0 %v834
      %v1787 = vpop.f32.mrb[0].mxu0
      %v1788 = vadd.f32 0.0, %v1787
      %v1789 = vpop.f32.mrb[0].mxu0
      %1790 = vmatprep.mubr.f32.mxu0 %v838
      %1791 = vmatmul.mubr.f32.gmra.mrb[0].mxu0 %v837
      %v1792 = vpop.f32.mrb[0].mxu0
      %v1793 = vadd.f32 0.0, %v1792
      %v1794 = vpop.f32.mrb[0].mxu0
      %1795 = vdwg.mxu0
      %1796 = vmatprep.subr.mxu0 0.0
      %1797 = vmatpush1.msra.mxu0 %v698
      %1798 = vmatprep.subr.mxu0 0.0
      %1799 = vmatpush1.msra.mxu0 %v701
      %1800 = vmatprep.subr.mxu0 0.0
      %1801 = vmatpush1.msra.mxu0 %v704
      %1802 = vmatprep.subr.mxu0 0.0
      %1803 = vmatpush1.msra.mxu0 %v707
      %1804 = vmatprep.subr.mxu0 0.0
      %1805 = vmatpush1.msra.mxu0 %v710
      %1806 = vmatprep.subr.mxu0 0.0
      %1807 = vmatpush1.msra.mxu0 %v713
      %1808 = vmatprep.subr.mxu0 0.0
      %1809 = vmatpush1.msra.mxu0 %v716
      %1810 = vmatprep.subr.mxu0 0.0
      %1811 = vmatpush1.msra.mxu0 %v719
      %1812 = vmatprep.subr.mxu0 0.0
      %1813 = vmatpush1.msra.mxu0 0.0
      %1814 = vmatprep.subr.mxu0 0.0
      %1815 = vmatpush1.msra.mxu0 0.0
      %1816 = vmatprep.subr.mxu0 0.0
      %1817 = vmatpush1.msra.mxu0 0.0
      %1818 = vmatprep.subr.mxu0 0.0
      %1819 = vmatpush1.msra.mxu0 0.0
      %1820 = vmatprep.subr.mxu0 0.0
      %1821 = vmatpush1.msra.mxu0 0.0
      %1822 = vmatprep.subr.mxu0 0.0
      %1823 = vmatpush1.msra.mxu0 0.0
      %1824 = vmatprep.subr.mxu0 0.0
      %1825 = vmatpush1.msra.mxu0 0.0
      %1826 = vmatprep.subr.mxu0 0.0
      %1827 = vmatpush1.msra.mxu0 0.0
      %1828 = vmatprep.subr.mxu0 0.0
      %1829 = vmatpush1.msra.mxu0 0.0
      %1830 = vmatprep.subr.mxu0 0.0
      %1831 = vmatpush1.msra.mxu0 0.0
      %1832 = vmatprep.subr.mxu0 0.0
      %1833 = vmatpush1.msra.mxu0 0.0
      %1834 = vmatprep.subr.mxu0 0.0
      %1835 = vmatpush1.msra.mxu0 0.0
      %1836 = vmatprep.subr.mxu0 0.0
      %1837 = vmatpush1.msra.mxu0 0.0
      %1838 = vmatprep.subr.mxu0 0.0
      %1839 = vmatpush1.msra.mxu0 0.0
      %1840 = vmatprep.subr.mxu0 0.0
      %1841 = vmatpush1.msra.mxu0 0.0
      %1842 = vmatprep.subr.mxu0 0.0
      %1843 = vmatpush1.msra.mxu0 0.0
      %1844 = vmatprep.subr.mxu0 0.0
      %1845 = vmatpush1.msra.mxu0 0.0
      %1846 = vmatprep.subr.mxu0 0.0
      %1847 = vmatpush1.msra.mxu0 0.0
      %1848 = vmatprep.subr.mxu0 0.0
      %1849 = vmatpush1.msra.mxu0 0.0
      %1850 = vmatprep.subr.mxu0 0.0
      %1851 = vmatpush1.msra.mxu0 0.0
      %1852 = vmatprep.subr.mxu0 0.0
      %1853 = vmatpush1.msra.mxu0 0.0
      %1854 = vmatprep.subr.mxu0 0.0
      %1855 = vmatpush1.msra.mxu0 0.0
      %1856 = vmatprep.subr.mxu0 0.0
      %1857 = vmatpush1.msra.mxu0 0.0
      %1858 = vmatprep.subr.mxu0 0.0
      %1859 = vmatpush1.msra.mxu0 0.0
      %1860 = vmatprep.mubr.f32.mxu0 0.0
      %1861 = vmatmul.mubr.f32.gmra.mrb[0].mxu0 %v842
      %v1862 = vpop.f32.mrb[0].mxu0
      %v1863 = vadd.f32 %v1598, %v1862
      %v1864 = vpop.f32.mrb[0].mxu0
      %1865 = vmatprep.mubr.f32.mxu0 0.0
      %1866 = vmatmul.mubr.f32.gmra.mrb[0].mxu0 %v845
      %v1867 = vpop.f32.mrb[0].mxu0
      %v1868 = vadd.f32 %v1603, %v1867
      %v1869 = vpop.f32.mrb[0].mxu0
      %1870 = vmatprep.mubr.f32.mxu0 0.0
      %1871 = vmatmul.mubr.f32.gmra.mrb[0].mxu0 %v848
      %v1872 = vpop.f32.mrb[0].mxu0
      %v1873 = vadd.f32 %v1608, %v1872
      %v1874 = vpop.f32.mrb[0].mxu0
      %1875 = vmatprep.mubr.f32.mxu0 0.0
      %1876 = vmatmul.mubr.f32.gmra.mrb[0].mxu0 %v851
      %v1877 = vpop.f32.mrb[0].mxu0
      %v1878 = vadd.f32 %v1613, %v1877
      %v1879 = vpop.f32.mrb[0].mxu0
      %1880 = vmatprep.mubr.f32.mxu0 0.0
      %1881 = vmatmul.mubr.f32.gmra.mrb[0].mxu0 %v854
      %v1882 = vpop.f32.mrb[0].mxu0
      %v1883 = vadd.f32 %v1618, %v1882
      %v1884 = vpop.f32.mrb[0].mxu0
      %1885 = vmatprep.mubr.f32.mxu0 0.0
      %1886 = vmatmul.mubr.f32.gmra.mrb[0].mxu0 %v857
      %v1887 = vpop.f32.mrb[0].mxu0
      %v1888 = vadd.f32 %v1623, %v1887
      %v1889 = vpop.f32.mrb[0].mxu0
      %1890 = vmatprep.mubr.f32.mxu0 0.0
      %1891 = vmatmul.mubr.f32.gmra.mrb[0].mxu0 %v860
      %v1892 = vpop.f32.mrb[0].mxu0
      %v1893 = vadd.f32 %v1628, %v1892
      %v1894 = vpop.f32.mrb[0].mxu0
      %1895 = vmatprep.mubr.f32.mxu0 0.0
      %1896 = vmatmul.mubr.f32.gmra.mrb[0].mxu0 %v863
      %v1897 = vpop.f32.mrb[0].mxu0
      %v1898 = vadd.f32 %v1633, %v1897
      %v1899 = vpop.f32.mrb[0].mxu0
      %1900 = vmatprep.mubr.f32.mxu0 0.0
      %1901 = vmatmul.mubr.f32.gmra.mrb[0].mxu0 %v866
      %v1902 = vpop.f32.mrb[0].mxu0
      %v1903 = vadd.f32 %v1638, %v1902
      %v1904 = vpop.f32.mrb[0].mxu0
      %1905 = vmatprep.mubr.f32.mxu0 0.0
      %1906 = vmatmul.mubr.f32.gmra.mrb[0].mxu0 %v869
      %v1907 = vpop.f32.mrb[0].mxu0
      %v1908 = vadd.f32 %v1643, %v1907
      %v1909 = vpop.f32.mrb[0].mxu0
      %1910 = vmatprep.mubr.f32.mxu0 0.0
      %1911 = vmatmul.mubr.f32.gmra.mrb[0].mxu0 %v872
      %v1912 = vpop.f32.mrb[0].mxu0
      %v1913 = vadd.f32 %v1648, %v1912
      %v1914 = vpop.f32.mrb[0].mxu0
      %1915 = vmatprep.mubr.f32.mxu0 0.0
      %1916 = vmatmul.mubr.f32.gmra.mrb[0].mxu0 %v875
      %v1917 = vpop.f32.mrb[0].mxu0
      %v1918 = vadd.f32 %v1653, %v1917
      %v1919 = vpop.f32.mrb[0].mxu0
      %1920 = vmatprep.mubr.f32.mxu0 0.0
      %1921 = vmatmul.mubr.f32.gmra.mrb[0].mxu0 %v878
      %v1922 = vpop.f32.mrb[0].mxu0
      %v1923 = vadd.f32 %v1658, %v1922
      %v1924 = vpop.f32.mrb[0].mxu0
      %1925 = vmatprep.mubr.f32.mxu0 0.0
      %1926 = vmatmul.mubr.f32.gmra.mrb[0].mxu0 %v881
      %v1927 = vpop.f32.mrb[0].mxu0
      %v1928 = vadd.f32 %v1663, %v1927
      %v1929 = vpop.f32.mrb[0].mxu0
      %1930 = vmatprep.mubr.f32.mxu0 0.0
      %1931 = vmatmul.mubr.f32.gmra.mrb[0].mxu0 %v884
      %v1932 = vpop.f32.mrb[0].mxu0
      %v1933 = vadd.f32 %v1668, %v1932
      %v1934 = vpop.f32.mrb[0].mxu0
      %1935 = vmatprep.mubr.f32.mxu0 0.0
      %1936 = vmatmul.mubr.f32.gmra.mrb[0].mxu0 %v887
      %v1937 = vpop.f32.mrb[0].mxu0
      %v1938 = vadd.f32 %v1673, %v1937
      %v1939 = vpop.f32.mrb[0].mxu0
      %1940 = vmatprep.mubr.f32.mxu0 0.0
      %1941 = vmatmul.mubr.f32.gmra.mrb[0].mxu0 %v890
      %v1942 = vpop.f32.mrb[0].mxu0
      %v1943 = vadd.f32 %v1678, %v1942
      %v1944 = vpop.f32.mrb[0].mxu0
      %1945 = vmatprep.mubr.f32.mxu0 0.0
      %1946 = vmatmul.mubr.f32.gmra.mrb[0].mxu0 %v893
      %v1947 = vpop.f32.mrb[0].mxu0
      %v1948 = vadd.f32 %v1683, %v1947
      %v1949 = vpop.f32.mrb[0].mxu0
      %1950 = vmatprep.mubr.f32.mxu0 0.0
      %1951 = vmatmul.mubr.f32.gmra.mrb[0].mxu0 %v896
      %v1952 = vpop.f32.mrb[0].mxu0
      %v1953 = vadd.f32 %v1688, %v1952
      %v1954 = vpop.f32.mrb[0].mxu0
      %1955 = vmatprep.mubr.f32.mxu0 0.0
      %1956 = vmatmul.mubr.f32.gmra.mrb[0].mxu0 %v899
      %v1957 = vpop.f32.mrb[0].mxu0
      %v1958 = vadd.f32 %v1693, %v1957
      %v1959 = vpop.f32.mrb[0].mxu0
      %1960 = vmatprep.mubr.f32.mxu0 0.0
      %1961 = vmatmul.mubr.f32.gmra.mrb[0].mxu0 %v902
      %v1962 = vpop.f32.mrb[0].mxu0
      %v1963 = vadd.f32 %v1698, %v1962
      %v1964 = vpop.f32.mrb[0].mxu0
      %1965 = vmatprep.mubr.f32.mxu0 0.0
      %1966 = vmatmul.mubr.f32.gmra.mrb[0].mxu0 %v905
      %v1967 = vpop.f32.mrb[0].mxu0
      %v1968 = vadd.f32 %v1703, %v1967
      %v1969 = vpop.f32.mrb[0].mxu0
      %1970 = vmatprep.mubr.f32.mxu0 0.0
      %1971 = vmatmul.mubr.f32.gmra.mrb[0].mxu0 %v908
      %v1972 = vpop.f32.mrb[0].mxu0
      %v1973 = vadd.f32 %v1708, %v1972
      %v1974 = vpop.f32.mrb[0].mxu0
      %1975 = vmatprep.mubr.f32.mxu0 0.0
      %1976 = vmatmul.mubr.f32.gmra.mrb[0].mxu0 %v911
      %v1977 = vpop.f32.mrb[0].mxu0
      %v1978 = vadd.f32 %v1713, %v1977
      %v1979 = vpop.f32.mrb[0].mxu0
      %1980 = vmatprep.mubr.f32.mxu0 0.0
      %1981 = vmatmul.mubr.f32.gmra.mrb[0].mxu0 %v914
      %v1982 = vpop.f32.mrb[0].mxu0
      %v1983 = vadd.f32 %v1718, %v1982
      %v1984 = vpop.f32.mrb[0].mxu0
      %1985 = vmatprep.mubr.f32.mxu0 0.0
      %1986 = vmatmul.mubr.f32.gmra.mrb[0].mxu0 %v917
      %v1987 = vpop.f32.mrb[0].mxu0
      %v1988 = vadd.f32 %v1723, %v1987
      %v1989 = vpop.f32.mrb[0].mxu0
      %1990 = vmatprep.mubr.f32.mxu0 0.0
      %1991 = vmatmul.mubr.f32.gmra.mrb[0].mxu0 %v920
      %v1992 = vpop.f32.mrb[0].mxu0
      %v1993 = vadd.f32 %v1728, %v1992
      %v1994 = vpop.f32.mrb[0].mxu0
      %1995 = vmatprep.mubr.f32.mxu0 0.0
      %1996 = vmatmul.mubr.f32.gmra.mrb[0].mxu0 %v923
      %v1997 = vpop.f32.mrb[0].mxu0
      %v1998 = vadd.f32 %v1733, %v1997
      %v1999 = vpop.f32.mrb[0].mxu0
      %2000 = vmatprep.mubr.f32.mxu0 0.0
      %2001 = vmatmul.mubr.f32.gmra.mrb[0].mxu0 %v926
      %v2002 = vpop.f32.mrb[0].mxu0
      %v2003 = vadd.f32 %v1738, %v2002
      %v2004 = vpop.f32.mrb[0].mxu0
      %2005 = vmatprep.mubr.f32.mxu0 0.0
      %2006 = vmatmul.mubr.f32.gmra.mrb[0].mxu0 %v929
      %v2007 = vpop.f32.mrb[0].mxu0
      %v2008 = vadd.f32 %v1743, %v2007
      %v2009 = vpop.f32.mrb[0].mxu0
      %2010 = vmatprep.mubr.f32.mxu0 0.0
      %2011 = vmatmul.mubr.f32.gmra.mrb[0].mxu0 %v932
      %v2012 = vpop.f32.mrb[0].mxu0
      %v2013 = vadd.f32 %v1748, %v2012
      %v2014 = vpop.f32.mrb[0].mxu0
      %2015 = vmatprep.mubr.f32.mxu0 0.0
      %2016 = vmatmul.mubr.f32.gmra.mrb[0].mxu0 %v935
      %v2017 = vpop.f32.mrb[0].mxu0
      %v2018 = vadd.f32 %v1753, %v2017
      %v2019 = vpop.f32.mrb[0].mxu0
      %2020 = vmatprep.mubr.f32.mxu0 0.0
      %2021 = vmatmul.mubr.f32.gmra.mrb[0].mxu0 %v938
      %v2022 = vpop.f32.mrb[0].mxu0
      %v2023 = vadd.f32 %v1758, %v2022
      %v2024 = vpop.f32.mrb[0].mxu0
      %2025 = vmatprep.mubr.f32.mxu0 0.0
      %2026 = vmatmul.mubr.f32.gmra.mrb[0].mxu0 %v941
      %v2027 = vpop.f32.mrb[0].mxu0
      %v2028 = vadd.f32 %v1763, %v2027
      %v2029 = vpop.f32.mrb[0].mxu0
      %2030 = vmatprep.mubr.f32.mxu0 0.0
      %2031 = vmatmul.mubr.f32.gmra.mrb[0].mxu0 %v944
      %v2032 = vpop.f32.mrb[0].mxu0
      %v2033 = vadd.f32 %v1768, %v2032
      %v2034 = vpop.f32.mrb[0].mxu0
      %2035 = vmatprep.mubr.f32.mxu0 0.0
      %2036 = vmatmul.mubr.f32.gmra.mrb[0].mxu0 %v947
      %v2037 = vpop.f32.mrb[0].mxu0
      %v2038 = vadd.f32 %v1773, %v2037
      %v2039 = vpop.f32.mrb[0].mxu0
      %2040 = vmatprep.mubr.f32.mxu0 0.0
      %2041 = vmatmul.mubr.f32.gmra.mrb[0].mxu0 %v950
      %v2042 = vpop.f32.mrb[0].mxu0
      %v2043 = vadd.f32 %v1778, %v2042
      %v2044 = vpop.f32.mrb[0].mxu0
      %2045 = vmatprep.mubr.f32.mxu0 0.0
      %2046 = vmatmul.mubr.f32.gmra.mrb[0].mxu0 %v953
      %v2047 = vpop.f32.mrb[0].mxu0
      %v2048 = vadd.f32 %v1783, %v2047
      %v2049 = vpop.f32.mrb[0].mxu0
      %2050 = vmatprep.mubr.f32.mxu0 0.0
      %2051 = vmatmul.mubr.f32.gmra.mrb[0].mxu0 %v956
      %v2052 = vpop.f32.mrb[0].mxu0
      %v2053 = vadd.f32 %v1788, %v2052
      %v2054 = vpop.f32.mrb[0].mxu0
      %2055 = vmatprep.mubr.f32.mxu0 0.0
      %2056 = vmatmul.mubr.f32.gmra.mrb[0].mxu0 %v959
      %v2057 = vpop.f32.mrb[0].mxu0
      %v2058 = vadd.f32 %v1793, %v2057
      %v2059 = vpop.f32.mrb[0].mxu0
      %2060 = vdwg.mxu0
      %v2061 = vmul.f32 %v1863, 0.000390625
      %v2062 = vmul.f32 %v1868, 0.000390625
      %v2063 = vmul.f32 %v1873, 0.000390625
      %v2064 = vmul.f32 %v1878, 0.000390625
      %v2065 = vmul.f32 %v1883, 0.000390625
      %v2066 = vmul.f32 %v1888, 0.000390625
      %v2067 = vmul.f32 %v1893, 0.000390625
      %v2068 = vmul.f32 %v1898, 0.000390625
      %v2069 = vmul.f32 %v1903, 0.000390625
      %v2070 = vmul.f32 %v1908, 0.000390625
      %v2071 = vmul.f32 %v1913, 0.000390625
      %v2072 = vmul.f32 %v1918, 0.000390625
      %v2073 = vmul.f32 %v1923, 0.000390625
      %v2074 = vmul.f32 %v1928, 0.000390625
      %v2075 = vmul.f32 %v1933, 0.000390625
      %v2076 = vmul.f32 %v1938, 0.000390625
      %v2077 = vmul.f32 %v1943, 0.000390625
      %v2078 = vmul.f32 %v1948, 0.000390625
      %v2079 = vmul.f32 %v1953, 0.000390625
      %v2080 = vmul.f32 %v1958, 0.000390625
      %v2081 = vmul.f32 %v1963, 0.000390625
      %v2082 = vmul.f32 %v1968, 0.000390625
      %v2083 = vmul.f32 %v1973, 0.000390625
      %v2084 = vmul.f32 %v1978, 0.000390625
      %v2085 = vmul.f32 %v1983, 0.000390625
      %v2086 = vmul.f32 %v1988, 0.000390625
      %v2087 = vmul.f32 %v1993, 0.000390625
      %v2088 = vmul.f32 %v1998, 0.000390625
      %v2089 = vmul.f32 %v2003, 0.000390625
      %v2090 = vmul.f32 %v2008, 0.000390625
      %v2091 = vmul.f32 %v2013, 0.000390625
      %v2092 = vmul.f32 %v2018, 0.000390625
      %v2093 = vmul.f32 %v2023, 0.000390625
      %v2094 = vmul.f32 %v2028, 0.000390625
      %v2095 = vmul.f32 %v2033, 0.000390625
      %v2096 = vmul.f32 %v2038, 0.000390625
      %v2097 = vmul.f32 %v2043, 0.000390625
      %v2098 = vmul.f32 %v2048, 0.000390625
      %v2099 = vmul.f32 %v2053, 0.000390625
      %v2100 = vmul.f32 %v2058, 0.000390625
      %v2101 = vmul.f32 %v1491, %v1491
      %v2102 = vmul.f32 %v1492, %v1492
      %v2103 = vmul.f32 %v1493, %v1493
      %v2104 = vmul.f32 %v1494, %v1494
      %v2105 = vmul.f32 %v1495, %v1495
      %v2106 = vmul.f32 %v1496, %v1496
      %v2107 = vmul.f32 %v1497, %v1497
      %v2108 = vmul.f32 %v1498, %v1498
      %v2109 = vmul.f32 %v1499, %v1499
      %v2110 = vmul.f32 %v1500, %v1500
      %v2111 = vmul.f32 %v1501, %v1501
      %v2112 = vmul.f32 %v1502, %v1502
      %v2113 = vmul.f32 %v1503, %v1503
      %v2114 = vmul.f32 %v1504, %v1504
      %v2115 = vmul.f32 %v1505, %v1505
      %v2116 = vmul.f32 %v1506, %v1506
      %v2117 = vmul.f32 %v1507, %v1507
      %v2118 = vmul.f32 %v1508, %v1508
      %v2119 = vmul.f32 %v1509, %v1509
      %v2120 = vmul.f32 %v1510, %v1510
      %v2121 = vmul.f32 %v1511, %v1511
      %v2122 = vmul.f32 %v1512, %v1512
      %v2123 = vmul.f32 %v1513, %v1513
      %v2124 = vmul.f32 %v1514, %v1514
      %v2125 = vmul.f32 %v1515, %v1515
      %v2126 = vmul.f32 %v1516, %v1516
      %v2127 = vmul.f32 %v1517, %v1517
      %v2128 = vmul.f32 %v1518, %v1518
      %v2129 = vmul.f32 %v1519, %v1519
      %v2130 = vmul.f32 %v1520, %v1520
      %v2131 = vmul.f32 %v1521, %v1521
      %v2132 = vmul.f32 %v1522, %v1522
      %v2133 = vmul.f32 %v1523, %v1523
      %v2134 = vmul.f32 %v1524, %v1524
      %v2135 = vmul.f32 %v1525, %v1525
      %v2136 = vmul.f32 %v1526, %v1526
      %v2137 = vmul.f32 %v1527, %v1527
      %v2138 = vmul.f32 %v1528, %v1528
      %v2139 = vmul.f32 %v1529, %v1529
      %v2140 = vmul.f32 %v1530, %v1530
      %v2141 = vsub.f32 %v2061, %v2101
      %v2142 = vsub.f32 %v2062, %v2102
      %v2143 = vsub.f32 %v2063, %v2103
      %v2144 = vsub.f32 %v2064, %v2104
      %v2145 = vsub.f32 %v2065, %v2105
      %v2146 = vsub.f32 %v2066, %v2106
      %v2147 = vsub.f32 %v2067, %v2107
      %v2148 = vsub.f32 %v2068, %v2108
      %v2149 = vsub.f32 %v2069, %v2109
      %v2150 = vsub.f32 %v2070, %v2110
      %v2151 = vsub.f32 %v2071, %v2111
      %v2152 = vsub.f32 %v2072, %v2112
      %v2153 = vsub.f32 %v2073, %v2113
      %v2154 = vsub.f32 %v2074, %v2114
      %v2155 = vsub.f32 %v2075, %v2115
      %v2156 = vsub.f32 %v2076, %v2116
      %v2157 = vsub.f32 %v2077, %v2117
      %v2158 = vsub.f32 %v2078, %v2118
      %v2159 = vsub.f32 %v2079, %v2119
      %v2160 = vsub.f32 %v2080, %v2120
      %v2161 = vsub.f32 %v2081, %v2121
      %v2162 = vsub.f32 %v2082, %v2122
      %v2163 = vsub.f32 %v2083, %v2123
      %v2164 = vsub.f32 %v2084, %v2124
      %v2165 = vsub.f32 %v2085, %v2125
      %v2166 = vsub.f32 %v2086, %v2126
      %v2167 = vsub.f32 %v2087, %v2127
      %v2168 = vsub.f32 %v2088, %v2128
      %v2169 = vsub.f32 %v2089, %v2129
      %v2170 = vsub.f32 %v2090, %v2130
      %v2171 = vsub.f32 %v2091, %v2131
      %v2172 = vsub.f32 %v2092, %v2132
      %v2173 = vsub.f32 %v2093, %v2133
      %v2174 = vsub.f32 %v2094, %v2134
      %v2175 = vsub.f32 %v2095, %v2135
      %v2176 = vsub.f32 %v2096, %v2136
      %v2177 = vsub.f32 %v2097, %v2137
      %v2178 = vsub.f32 %v2098, %v2138
      %v2179 = vsub.f32 %v2099, %v2139
      %v2180 = vsub.f32 %v2100, %v2140
      %v2181 = vadd.f32 %v2141, 1e-05
      %v2182 = vadd.f32 %v2142, 1e-05
      %v2183 = vadd.f32 %v2143, 1e-05
      %v2184 = vadd.f32 %v2144, 1e-05
      %v2185 = vadd.f32 %v2145, 1e-05
      %v2186 = vadd.f32 %v2146, 1e-05
      %v2187 = vadd.f32 %v2147, 1e-05
      %v2188 = vadd.f32 %v2148, 1e-05
      %v2189 = vadd.f32 %v2149, 1e-05
      %v2190 = vadd.f32 %v2150, 1e-05
      %v2191 = vadd.f32 %v2151, 1e-05
      %v2192 = vadd.f32 %v2152, 1e-05
      %v2193 = vadd.f32 %v2153, 1e-05
      %v2194 = vadd.f32 %v2154, 1e-05
      %v2195 = vadd.f32 %v2155, 1e-05
      %v2196 = vadd.f32 %v2156, 1e-05
      %v2197 = vadd.f32 %v2157, 1e-05
      %v2198 = vadd.f32 %v2158, 1e-05
      %v2199 = vadd.f32 %v2159, 1e-05
      %v2200 = vadd.f32 %v2160, 1e-05
      %v2201 = vadd.f32 %v2161, 1e-05
      %v2202 = vadd.f32 %v2162, 1e-05
      %v2203 = vadd.f32 %v2163, 1e-05
      %v2204 = vadd.f32 %v2164, 1e-05
      %v2205 = vadd.f32 %v2165, 1e-05
      %v2206 = vadd.f32 %v2166, 1e-05
      %v2207 = vadd.f32 %v2167, 1e-05
      %v2208 = vadd.f32 %v2168, 1e-05
      %v2209 = vadd.f32 %v2169, 1e-05
      %v2210 = vadd.f32 %v2170, 1e-05
      %v2211 = vadd.f32 %v2171, 1e-05
      %v2212 = vadd.f32 %v2172, 1e-05
      %v2213 = vadd.f32 %v2173, 1e-05
      %v2214 = vadd.f32 %v2174, 1e-05
      %v2215 = vadd.f32 %v2175, 1e-05
      %v2216 = vadd.f32 %v2176, 1e-05
      %v2217 = vadd.f32 %v2177, 1e-05
      %v2218 = vadd.f32 %v2178, 1e-05
      %v2219 = vadd.f32 %v2179, 1e-05
      %v2220 = vadd.f32 %v2180, 1e-05
      %v2221 = vrsqrt.pop %v2181
      %v2222 = vrsqrt.pop %v2182
      %v2223 = vrsqrt.pop %v2183
      %v2224 = vrsqrt.pop %v2184
      %v2225 = vrsqrt.pop %v2185
      %v2226 = vrsqrt.pop %v2186
      %v2227 = vrsqrt.pop %v2187
      %v2228 = vrsqrt.pop %v2188
      %v2229 = vrsqrt.pop %v2189
      %v2230 = vrsqrt.pop %v2190
      %v2231 = vrsqrt.pop %v2191
      %v2232 = vrsqrt.pop %v2192
      %v2233 = vrsqrt.pop %v2193
      %v2234 = vrsqrt.pop %v2194
      %v2235 = vrsqrt.pop %v2195
      %v2236 = vrsqrt.pop %v2196
      %v2237 = vrsqrt.pop %v2197
      %v2238 = vrsqrt.pop %v2198
      %v2239 = vrsqrt.pop %v2199
      %v2240 = vrsqrt.pop %v2200
      %v2241 = vrsqrt.pop %v2201
      %v2242 = vrsqrt.pop %v2202
      %v2243 = vrsqrt.pop %v2203
      %v2244 = vrsqrt.pop %v2204
      %v2245 = vrsqrt.pop %v2205
      %v2246 = vrsqrt.pop %v2206
      %v2247 = vrsqrt.pop %v2207
      %v2248 = vrsqrt.pop %v2208
      %v2249 = vrsqrt.pop %v2209
      %v2250 = vrsqrt.pop %v2210
      %v2251 = vrsqrt.pop %v2211
      %v2252 = vrsqrt.pop %v2212
      %v2253 = vrsqrt.pop %v2213
      %v2254 = vrsqrt.pop %v2214
      %v2255 = vrsqrt.pop %v2215
      %v2256 = vrsqrt.pop %v2216
      %v2257 = vrsqrt.pop %v2217
      %v2258 = vrsqrt.pop %v2218
      %v2259 = vrsqrt.pop %v2219
      %v2260 = vrsqrt.pop %v2220
      %v2261 = vld [vmem:[%s1] sm:$0xff]
      %v2262 = vld [vmem:[%s1 + $0x8] sm:$0xff]
      %v2263 = vld [vmem:[%s1 + $0x10] sm:$0xff]
      %v2264 = vld [vmem:[%s1 + $0x18] sm:$0xff]
      %v2265 = vld [vmem:[%s1 + $0x20] sm:$0xff]
      %v2266 = vld [vmem:[%s1 + $0x28] sm:$0xff]
      %v2267 = vld [vmem:[%s1 + $0x30] sm:$0xff]
      %v2268 = vld [vmem:[%s1 + $0x38] sm:$0xff]
      %v2269 = vld [vmem:[%s1 + $0x40] sm:$0xff]
      %v2270 = vld [vmem:[%s1 + $0x48] sm:$0xff]
      %v2271 = vld [vmem:[%s1 + $0x50] sm:$0xff]
      %v2272 = vld [vmem:[%s1 + $0x58] sm:$0xff]
      %v2273 = vld [vmem:[%s1 + $0x60] sm:$0xff]
      %v2274 = vld [vmem:[%s1 + $0x68] sm:$0xff]
      %v2275 = vld [vmem:[%s1 + $0x70] sm:$0xff]
      %v2276 = vld [vmem:[%s1 + $0x78] sm:$0xff]
      %v2277 = vld [vmem:[%s1 + $0x80] sm:$0xff]
      %v2278 = vld [vmem:[%s1 + $0x88] sm:$0xff]
      %v2279 = vld [vmem:[%s1 + $0x90] sm:$0xff]
      %v2280 = vld [vmem:[%s1 + $0x98] sm:$0xff]
      %v2281 = vld [vmem:[%s1 + $0xa0] sm:$0xff]
      %v2282 = vld [vmem:[%s1 + $0xa8] sm:$0xff]
      %v2283 = vld [vmem:[%s1 + $0xb0] sm:$0xff]
      %v2284 = vld [vmem:[%s1 + $0xb8] sm:$0xff]
      %v2285 = vld [vmem:[%s1 + $0xc0] sm:$0xff]
      %v2286 = vld [vmem:[%s1 + $0xc8] sm:$0xff]
      %v2287 = vld [vmem:[%s1 + $0xd0] sm:$0xff]
      %v2288 = vld [vmem:[%s1 + $0xd8] sm:$0xff]
      %v2289 = vld [vmem:[%s1 + $0xe0] sm:$0xff]
      %v2290 = vld [vmem:[%s1 + $0xe8] sm:$0xff]
      %v2291 = vld [vmem:[%s1 + $0xf0] sm:$0xff]
      %v2292 = vld [vmem:[%s1 + $0xf8] sm:$0xff]
      %v2293 = vld [vmem:[%s1 + $0x100] sm:$0xff]
      %v2294 = vld [vmem:[%s1 + $0x108] sm:$0xff]
      %v2295 = vld [vmem:[%s1 + $0x110] sm:$0xff]
      %v2296 = vld [vmem:[%s1 + $0x118] sm:$0xff]
      %v2297 = vld [vmem:[%s1 + $0x120] sm:$0xff]
      %v2298 = vld [vmem:[%s1 + $0x128] sm:$0xff]
      %v2299 = vld [vmem:[%s1 + $0x130] sm:$0xff]
      %v2300 = vld [vmem:[%s1 + $0x138] sm:$0xff]
      %v2301 = vmul.f32 %v2221, %v2261
      %v2302 = vmul.f32 %v2222, %v2262
      %v2303 = vmul.f32 %v2223, %v2263
      %v2304 = vmul.f32 %v2224, %v2264
      %v2305 = vmul.f32 %v2225, %v2265
      %v2306 = vmul.f32 %v2226, %v2266
      %v2307 = vmul.f32 %v2227, %v2267
      %v2308 = vmul.f32 %v2228, %v2268
      %v2309 = vmul.f32 %v2229, %v2269
      %v2310 = vmul.f32 %v2230, %v2270
      %v2311 = vmul.f32 %v2231, %v2271
      %v2312 = vmul.f32 %v2232, %v2272
      %v2313 = vmul.f32 %v2233, %v2273
      %v2314 = vmul.f32 %v2234, %v2274
      %v2315 = vmul.f32 %v2235, %v2275
      %v2316 = vmul.f32 %v2236, %v2276
      %v2317 = vmul.f32 %v2237, %v2277
      %v2318 = vmul.f32 %v2238, %v2278
      %v2319 = vmul.f32 %v2239, %v2279
      %v2320 = vmul.f32 %v2240, %v2280
      %v2321 = vmul.f32 %v2241, %v2281
      %v2322 = vmul.f32 %v2242, %v2282
      %v2323 = vmul.f32 %v2243, %v2283
      %v2324 = vmul.f32 %v2244, %v2284
      %v2325 = vmul.f32 %v2245, %v2285
      %v2326 = vmul.f32 %v2246, %v2286
      %v2327 = vmul.f32 %v2247, %v2287
      %v2328 = vmul.f32 %v2248, %v2288
      %v2329 = vmul.f32 %v2249, %v2289
      %v2330 = vmul.f32 %v2250, %v2290
      %v2331 = vmul.f32 %v2251, %v2291
      %v2332 = vmul.f32 %v2252, %v2292
      %v2333 = vmul.f32 %v2253, %v2293
      %v2334 = vmul.f32 %v2254, %v2294
      %v2335 = vmul.f32 %v2255, %v2295
      %v2336 = vmul.f32 %v2256, %v2296
      %v2337 = vmul.f32 %v2257, %v2297
      %v2338 = vmul.f32 %v2258, %v2298
      %v2339 = vmul.f32 %v2259, %v2299
      %v2340 = vmul.f32 %v2260, %v2300
      %v2341 = vld [vmem:[%s2] sm:$0xff]
      %v2342 = vld [vmem:[%s2 + $0x8] sm:$0xff]
      %v2343 = vld [vmem:[%s2 + $0x10] sm:$0xff]
      %v2344 = vld [vmem:[%s2 + $0x18] sm:$0xff]
      %v2345 = vld [vmem:[%s2 + $0x20] sm:$0xff]
      %v2346 = vld [vmem:[%s2 + $0x28] sm:$0xff]
      %v2347 = vld [vmem:[%s2 + $0x30] sm:$0xff]
      %v2348 = vld [vmem:[%s2 + $0x38] sm:$0xff]
      %v2349 = vld [vmem:[%s2 + $0x40] sm:$0xff]
      %v2350 = vld [vmem:[%s2 + $0x48] sm:$0xff]
      %v2351 = vld [vmem:[%s2 + $0x50] sm:$0xff]
      %v2352 = vld [vmem:[%s2 + $0x58] sm:$0xff]
      %v2353 = vld [vmem:[%s2 + $0x60] sm:$0xff]
      %v2354 = vld [vmem:[%s2 + $0x68] sm:$0xff]
      %v2355 = vld [vmem:[%s2 + $0x70] sm:$0xff]
      %v2356 = vld [vmem:[%s2 + $0x78] sm:$0xff]
      %v2357 = vld [vmem:[%s2 + $0x80] sm:$0xff]
      %v2358 = vld [vmem:[%s2 + $0x88] sm:$0xff]
      %v2359 = vld [vmem:[%s2 + $0x90] sm:$0xff]
      %v2360 = vld [vmem:[%s2 + $0x98] sm:$0xff]
      %v2361 = vld [vmem:[%s2 + $0xa0] sm:$0xff]
      %v2362 = vld [vmem:[%s2 + $0xa8] sm:$0xff]
      %v2363 = vld [vmem:[%s2 + $0xb0] sm:$0xff]
      %v2364 = vld [vmem:[%s2 + $0xb8] sm:$0xff]
      %v2365 = vld [vmem:[%s2 + $0xc0] sm:$0xff]
      %v2366 = vld [vmem:[%s2 + $0xc8] sm:$0xff]
      %v2367 = vld [vmem:[%s2 + $0xd0] sm:$0xff]
      %v2368 = vld [vmem:[%s2 + $0xd8] sm:$0xff]
      %v2369 = vld [vmem:[%s2 + $0xe0] sm:$0xff]
      %v2370 = vld [vmem:[%s2 + $0xe8] sm:$0xff]
      %v2371 = vld [vmem:[%s2 + $0xf0] sm:$0xff]
      %v2372 = vld [vmem:[%s2 + $0xf8] sm:$0xff]
      %v2373 = vld [vmem:[%s2 + $0x100] sm:$0xff]
      %v2374 = vld [vmem:[%s2 + $0x108] sm:$0xff]
      %v2375 = vld [vmem:[%s2 + $0x110] sm:$0xff]
      %v2376 = vld [vmem:[%s2 + $0x118] sm:$0xff]
      %v2377 = vld [vmem:[%s2 + $0x120] sm:$0xff]
      %v2378 = vld [vmem:[%s2 + $0x128] sm:$0xff]
      %v2379 = vld [vmem:[%s2 + $0x130] sm:$0xff]
      %v2380 = vld [vmem:[%s2 + $0x138] sm:$0xff]
      %v2381 = vmul.f32 %v1491, %v2301
      %v2382 = vmul.f32 %v1492, %v2302
      %v2383 = vmul.f32 %v1493, %v2303
      %v2384 = vmul.f32 %v1494, %v2304
      %v2385 = vmul.f32 %v1495, %v2305
      %v2386 = vmul.f32 %v1496, %v2306
      %v2387 = vmul.f32 %v1497, %v2307
      %v2388 = vmul.f32 %v1498, %v2308
      %v2389 = vmul.f32 %v1499, %v2309
      %v2390 = vmul.f32 %v1500, %v2310
      %v2391 = vmul.f32 %v1501, %v2311
      %v2392 = vmul.f32 %v1502, %v2312
      %v2393 = vmul.f32 %v1503, %v2313
      %v2394 = vmul.f32 %v1504, %v2314
      %v2395 = vmul.f32 %v1505, %v2315
      %v2396 = vmul.f32 %v1506, %v2316
      %v2397 = vmul.f32 %v1507, %v2317
      %v2398 = vmul.f32 %v1508, %v2318
      %v2399 = vmul.f32 %v1509, %v2319
      %v2400 = vmul.f32 %v1510, %v2320
      %v2401 = vmul.f32 %v1511, %v2321
      %v2402 = vmul.f32 %v1512, %v2322
      %v2403 = vmul.f32 %v1513, %v2323
      %v2404 = vmul.f32 %v1514, %v2324
      %v2405 = vmul.f32 %v1515, %v2325
      %v2406 = vmul.f32 %v1516, %v2326
      %v2407 = vmul.f32 %v1517, %v2327
      %v2408 = vmul.f32 %v1518, %v2328
      %v2409 = vmul.f32 %v1519, %v2329
      %v2410 = vmul.f32 %v1520, %v2330
      %v2411 = vmul.f32 %v1521, %v2331
      %v2412 = vmul.f32 %v1522, %v2332
      %v2413 = vmul.f32 %v1523, %v2333
      %v2414 = vmul.f32 %v1524, %v2334
      %v2415 = vmul.f32 %v1525, %v2335
      %v2416 = vmul.f32 %v1526, %v2336
      %v2417 = vmul.f32 %v1527, %v2337
      %v2418 = vmul.f32 %v1528, %v2338
      %v2419 = vmul.f32 %v1529, %v2339
      %v2420 = vmul.f32 %v1530, %v2340
      %v2421 = vsub.f32 %v2341, %v2381
      %v2422 = vsub.f32 %v2342, %v2382
      %v2423 = vsub.f32 %v2343, %v2383
      %v2424 = vsub.f32 %v2344, %v2384
      %v2425 = vsub.f32 %v2345, %v2385
      %v2426 = vsub.f32 %v2346, %v2386
      %v2427 = vsub.f32 %v2347, %v2387
      %v2428 = vsub.f32 %v2348, %v2388
      %v2429 = vsub.f32 %v2349, %v2389
      %v2430 = vsub.f32 %v2350, %v2390
      %v2431 = vsub.f32 %v2351, %v2391
      %v2432 = vsub.f32 %v2352, %v2392
      %v2433 = vsub.f32 %v2353, %v2393
      %v2434 = vsub.f32 %v2354, %v2394
      %v2435 = vsub.f32 %v2355, %v2395
      %v2436 = vsub.f32 %v2356, %v2396
      %v2437 = vsub.f32 %v2357, %v2397
      %v2438 = vsub.f32 %v2358, %v2398
      %v2439 = vsub.f32 %v2359, %v2399
      %v2440 = vsub.f32 %v2360, %v2400
      %v2441 = vsub.f32 %v2361, %v2401
      %v2442 = vsub.f32 %v2362, %v2402
      %v2443 = vsub.f32 %v2363, %v2403
      %v2444 = vsub.f32 %v2364, %v2404
      %v2445 = vsub.f32 %v2365, %v2405
      %v2446 = vsub.f32 %v2366, %v2406
      %v2447 = vsub.f32 %v2367, %v2407
      %v2448 = vsub.f32 %v2368, %v2408
      %v2449 = vsub.f32 %v2369, %v2409
      %v2450 = vsub.f32 %v2370, %v2410
      %v2451 = vsub.f32 %v2371, %v2411
      %v2452 = vsub.f32 %v2372, %v2412
      %v2453 = vsub.f32 %v2373, %v2413
      %v2454 = vsub.f32 %v2374, %v2414
      %v2455 = vsub.f32 %v2375, %v2415
      %v2456 = vsub.f32 %v2376, %v2416
      %v2457 = vsub.f32 %v2377, %v2417
      %v2458 = vsub.f32 %v2378, %v2418
      %v2459 = vsub.f32 %v2379, %v2419
      %v2460 = vsub.f32 %v2380, %v2420
      %2462 = vset.pattern.permute.xlu0 0
      %2463 = vperm.xlu0 %2462, %v2301
      %v2464 = vpop.permute.xlu0 %2463
      %2467 = vset.pattern.permute.xlu0 0
      %2468 = vperm.xlu0 %2467, %v2302
      %v2469 = vpop.permute.xlu0 %2468
      %2472 = vset.pattern.permute.xlu0 0
      %2473 = vperm.xlu0 %2472, %v2303
      %v2474 = vpop.permute.xlu0 %2473
      %2477 = vset.pattern.permute.xlu0 0
      %2478 = vperm.xlu0 %2477, %v2304
      %v2479 = vpop.permute.xlu0 %2478
      %2482 = vset.pattern.permute.xlu0 0
      %2483 = vperm.xlu0 %2482, %v2305
      %v2484 = vpop.permute.xlu0 %2483
      %2487 = vset.pattern.permute.xlu0 0
      %2488 = vperm.xlu0 %2487, %v2306
      %v2489 = vpop.permute.xlu0 %2488
      %2492 = vset.pattern.permute.xlu0 0
      %2493 = vperm.xlu0 %2492, %v2307
      %v2494 = vpop.permute.xlu0 %2493
      %2497 = vset.pattern.permute.xlu0 0
      %2498 = vperm.xlu0 %2497, %v2308
      %v2499 = vpop.permute.xlu0 %2498
      %2502 = vset.pattern.permute.xlu0 0
      %2503 = vperm.xlu0 %2502, %v2309
      %v2504 = vpop.permute.xlu0 %2503
      %2507 = vset.pattern.permute.xlu0 0
      %2508 = vperm.xlu0 %2507, %v2310
      %v2509 = vpop.permute.xlu0 %2508
      %2512 = vset.pattern.permute.xlu0 0
      %2513 = vperm.xlu0 %2512, %v2311
      %v2514 = vpop.permute.xlu0 %2513
      %2517 = vset.pattern.permute.xlu0 0
      %2518 = vperm.xlu0 %2517, %v2312
      %v2519 = vpop.permute.xlu0 %2518
      %2522 = vset.pattern.permute.xlu0 0
      %2523 = vperm.xlu0 %2522, %v2313
      %v2524 = vpop.permute.xlu0 %2523
      %2527 = vset.pattern.permute.xlu0 0
      %2528 = vperm.xlu0 %2527, %v2314
      %v2529 = vpop.permute.xlu0 %2528
      %2532 = vset.pattern.permute.xlu0 0
      %2533 = vperm.xlu0 %2532, %v2315
      %v2534 = vpop.permute.xlu0 %2533
      %2537 = vset.pattern.permute.xlu0 0
      %2538 = vperm.xlu0 %2537, %v2316
      %v2539 = vpop.permute.xlu0 %2538
      %2542 = vset.pattern.permute.xlu0 0
      %2543 = vperm.xlu0 %2542, %v2317
      %v2544 = vpop.permute.xlu0 %2543
      %2547 = vset.pattern.permute.xlu0 0
      %2548 = vperm.xlu0 %2547, %v2318
      %v2549 = vpop.permute.xlu0 %2548
      %2552 = vset.pattern.permute.xlu0 0
      %2553 = vperm.xlu0 %2552, %v2319
      %v2554 = vpop.permute.xlu0 %2553
      %2557 = vset.pattern.permute.xlu0 0
      %2558 = vperm.xlu0 %2557, %v2320
      %v2559 = vpop.permute.xlu0 %2558
      %2562 = vset.pattern.permute.xlu0 0
      %2563 = vperm.xlu0 %2562, %v2321
      %v2564 = vpop.permute.xlu0 %2563
      %2567 = vset.pattern.permute.xlu0 0
      %2568 = vperm.xlu0 %2567, %v2322
      %v2569 = vpop.permute.xlu0 %2568
      %2572 = vset.pattern.permute.xlu0 0
      %2573 = vperm.xlu0 %2572, %v2323
      %v2574 = vpop.permute.xlu0 %2573
      %2577 = vset.pattern.permute.xlu0 0
      %2578 = vperm.xlu0 %2577, %v2324
      %v2579 = vpop.permute.xlu0 %2578
      %2582 = vset.pattern.permute.xlu0 0
      %2583 = vperm.xlu0 %2582, %v2325
      %v2584 = vpop.permute.xlu0 %2583
      %2587 = vset.pattern.permute.xlu0 0
      %2588 = vperm.xlu0 %2587, %v2326
      %v2589 = vpop.permute.xlu0 %2588
      %2592 = vset.pattern.permute.xlu0 0
      %2593 = vperm.xlu0 %2592, %v2327
      %v2594 = vpop.permute.xlu0 %2593
      %2597 = vset.pattern.permute.xlu0 0
      %2598 = vperm.xlu0 %2597, %v2328
      %v2599 = vpop.permute.xlu0 %2598
      %2602 = vset.pattern.permute.xlu0 0
      %2603 = vperm.xlu0 %2602, %v2329
      %v2604 = vpop.permute.xlu0 %2603
      %2607 = vset.pattern.permute.xlu0 0
      %2608 = vperm.xlu0 %2607, %v2330
      %v2609 = vpop.permute.xlu0 %2608
      %2612 = vset.pattern.permute.xlu0 0
      %2613 = vperm.xlu0 %2612, %v2331
      %v2614 = vpop.permute.xlu0 %2613
      %2617 = vset.pattern.permute.xlu0 0
      %2618 = vperm.xlu0 %2617, %v2332
      %v2619 = vpop.permute.xlu0 %2618
      %2622 = vset.pattern.permute.xlu0 0
      %2623 = vperm.xlu0 %2622, %v2333
      %v2624 = vpop.permute.xlu0 %2623
      %2627 = vset.pattern.permute.xlu0 0
      %2628 = vperm.xlu0 %2627, %v2334
      %v2629 = vpop.permute.xlu0 %2628
      %2632 = vset.pattern.permute.xlu0 0
      %2633 = vperm.xlu0 %2632, %v2335
      %v2634 = vpop.permute.xlu0 %2633
      %2637 = vset.pattern.permute.xlu0 0
      %2638 = vperm.xlu0 %2637, %v2336
      %v2639 = vpop.permute.xlu0 %2638
      %2642 = vset.pattern.permute.xlu0 0
      %2643 = vperm.xlu0 %2642, %v2337
      %v2644 = vpop.permute.xlu0 %2643
      %2647 = vset.pattern.permute.xlu0 0
      %2648 = vperm.xlu0 %2647, %v2338
      %v2649 = vpop.permute.xlu0 %2648
      %2652 = vset.pattern.permute.xlu0 0
      %2653 = vperm.xlu0 %2652, %v2339
      %v2654 = vpop.permute.xlu0 %2653
      %2657 = vset.pattern.permute.xlu0 0
      %2658 = vperm.xlu0 %2657, %v2340
      %v2659 = vpop.permute.xlu0 %2658
      %v2661 = vmul.f32 %v320, %v2464
      %v2662 = vmul.f32 %v321, %v2464
      %v2663 = vmul.f32 %v322, %v2469
      %v2664 = vmul.f32 %v323, %v2469
      %v2665 = vmul.f32 %v324, %v2474
      %v2666 = vmul.f32 %v325, %v2474
      %v2667 = vmul.f32 %v326, %v2479
      %v2668 = vmul.f32 %v327, %v2479
      %v2669 = vmul.f32 %v328, %v2484
      %v2670 = vmul.f32 %v329, %v2484
      %v2671 = vmul.f32 %v330, %v2489
      %v2672 = vmul.f32 %v331, %v2489
      %v2673 = vmul.f32 %v332, %v2494
      %v2674 = vmul.f32 %v333, %v2494
      %v2675 = vmul.f32 %v334, %v2499
      %v2676 = vmul.f32 %v335, %v2499
      %v2677 = vmul.f32 %v336, %v2504
      %v2678 = vmul.f32 %v337, %v2504
      %v2679 = vmul.f32 %v338, %v2509
      %v2680 = vmul.f32 %v339, %v2509
      %v2681 = vmul.f32 %v340, %v2514
      %v2682 = vmul.f32 %v341, %v2514
      %v2683 = vmul.f32 %v342, %v2519
      %v2684 = vmul.f32 %v343, %v2519
      %v2685 = vmul.f32 %v344, %v2524
      %v2686 = vmul.f32 %v345, %v2524
      %v2687 = vmul.f32 %v346, %v2529
      %v2688 = vmul.f32 %v347, %v2529
      %v2689 = vmul.f32 %v348, %v2534
      %v2690 = vmul.f32 %v349, %v2534
      %v2691 = vmul.f32 %v350, %v2539
      %v2692 = vmul.f32 %v351, %v2539
      %v2693 = vmul.f32 %v352, %v2544
      %v2694 = vmul.f32 %v353, %v2544
      %v2695 = vmul.f32 %v354, %v2549
      %v2696 = vmul.f32 %v355, %v2549
      %v2697 = vmul.f32 %v356, %v2554
      %v2698 = vmul.f32 %v357, %v2554
      %v2699 = vmul.f32 %v358, %v2559
      %v2700 = vmul.f32 %v359, %v2559
      %v2701 = vmul.f32 %v360, %v2564
      %v2702 = vmul.f32 %v361, %v2564
      %v2703 = vmul.f32 %v362, %v2569
      %v2704 = vmul.f32 %v363, %v2569
      %v2705 = vmul.f32 %v364, %v2574
      %v2706 = vmul.f32 %v365, %v2574
      %v2707 = vmul.f32 %v366, %v2579
      %v2708 = vmul.f32 %v367, %v2579
      %v2709 = vmul.f32 %v368, %v2584
      %v2710 = vmul.f32 %v369, %v2584
      %v2711 = vmul.f32 %v370, %v2589
      %v2712 = vmul.f32 %v371, %v2589
      %v2713 = vmul.f32 %v372, %v2594
      %v2714 = vmul.f32 %v373, %v2594
      %v2715 = vmul.f32 %v374, %v2599
      %v2716 = vmul.f32 %v375, %v2599
      %v2717 = vmul.f32 %v376, %v2604
      %v2718 = vmul.f32 %v377, %v2604
      %v2719 = vmul.f32 %v378, %v2609
      %v2720 = vmul.f32 %v379, %v2609
      %v2721 = vmul.f32 %v380, %v2614
      %v2722 = vmul.f32 %v381, %v2614
      %v2723 = vmul.f32 %v382, %v2619
      %v2724 = vmul.f32 %v383, %v2619
      %v2725 = vmul.f32 %v384, %v2624
      %v2726 = vmul.f32 %v385, %v2624
      %v2727 = vmul.f32 %v386, %v2629
      %v2728 = vmul.f32 %v387, %v2629
      %v2729 = vmul.f32 %v388, %v2634
      %v2730 = vmul.f32 %v389, %v2634
      %v2731 = vmul.f32 %v390, %v2639
      %v2732 = vmul.f32 %v391, %v2639
      %v2733 = vmul.f32 %v392, %v2644
      %v2734 = vmul.f32 %v393, %v2644
      %v2735 = vmul.f32 %v394, %v2649
      %v2736 = vmul.f32 %v395, %v2649
      %v2737 = vmul.f32 %v396, %v2654
      %v2738 = vmul.f32 %v397, %v2654
      %v2739 = vmul.f32 %v398, %v2659
      %v2740 = vmul.f32 %v399, %v2659
      %2742 = vset.pattern.permute.xlu0 0
      %2743 = vperm.xlu0 %2742, %v2421
      %v2744 = vpop.permute.xlu0 %2743
      %2747 = vset.pattern.permute.xlu0 0
      %2748 = vperm.xlu0 %2747, %v2422
      %v2749 = vpop.permute.xlu0 %2748
      %2752 = vset.pattern.permute.xlu0 0
      %2753 = vperm.xlu0 %2752, %v2423
      %v2754 = vpop.permute.xlu0 %2753
      %2757 = vset.pattern.permute.xlu0 0
      %2758 = vperm.xlu0 %2757, %v2424
      %v2759 = vpop.permute.xlu0 %2758
      %2762 = vset.pattern.permute.xlu0 0
      %2763 = vperm.xlu0 %2762, %v2425
      %v2764 = vpop.permute.xlu0 %2763
      %2767 = vset.pattern.permute.xlu0 0
      %2768 = vperm.xlu0 %2767, %v2426
      %v2769 = vpop.permute.xlu0 %2768
      %2772 = vset.pattern.permute.xlu0 0
      %2773 = vperm.xlu0 %2772, %v2427
      %v2774 = vpop.permute.xlu0 %2773
      %2777 = vset.pattern.permute.xlu0 0
      %2778 = vperm.xlu0 %2777, %v2428
      %v2779 = vpop.permute.xlu0 %2778
      %2782 = vset.pattern.permute.xlu0 0
      %2783 = vperm.xlu0 %2782, %v2429
      %v2784 = vpop.permute.xlu0 %2783
      %2787 = vset.pattern.permute.xlu0 0
      %2788 = vperm.xlu0 %2787, %v2430
      %v2789 = vpop.permute.xlu0 %2788
      %2792 = vset.pattern.permute.xlu0 0
      %2793 = vperm.xlu0 %2792, %v2431
      %v2794 = vpop.permute.xlu0 %2793
      %2797 = vset.pattern.permute.xlu0 0
      %2798 = vperm.xlu0 %2797, %v2432
      %v2799 = vpop.permute.xlu0 %2798
      %2802 = vset.pattern.permute.xlu0 0
      %2803 = vperm.xlu0 %2802, %v2433
      %v2804 = vpop.permute.xlu0 %2803
      %2807 = vset.pattern.permute.xlu0 0
      %2808 = vperm.xlu0 %2807, %v2434
      %v2809 = vpop.permute.xlu0 %2808
      %2812 = vset.pattern.permute.xlu0 0
      %2813 = vperm.xlu0 %2812, %v2435
      %v2814 = vpop.permute.xlu0 %2813
      %2817 = vset.pattern.permute.xlu0 0
      %2818 = vperm.xlu0 %2817, %v2436
      %v2819 = vpop.permute.xlu0 %2818
      %2822 = vset.pattern.permute.xlu0 0
      %2823 = vperm.xlu0 %2822, %v2437
      %v2824 = vpop.permute.xlu0 %2823
      %2827 = vset.pattern.permute.xlu0 0
      %2828 = vperm.xlu0 %2827, %v2438
      %v2829 = vpop.permute.xlu0 %2828
      %2832 = vset.pattern.permute.xlu0 0
      %2833 = vperm.xlu0 %2832, %v2439
      %v2834 = vpop.permute.xlu0 %2833
      %2837 = vset.pattern.permute.xlu0 0
      %2838 = vperm.xlu0 %2837, %v2440
      %v2839 = vpop.permute.xlu0 %2838
      %2842 = vset.pattern.permute.xlu0 0
      %2843 = vperm.xlu0 %2842, %v2441
      %v2844 = vpop.permute.xlu0 %2843
      %2847 = vset.pattern.permute.xlu0 0
      %2848 = vperm.xlu0 %2847, %v2442
      %v2849 = vpop.permute.xlu0 %2848
      %2852 = vset.pattern.permute.xlu0 0
      %2853 = vperm.xlu0 %2852, %v2443
      %v2854 = vpop.permute.xlu0 %2853
      %2857 = vset.pattern.permute.xlu0 0
      %2858 = vperm.xlu0 %2857, %v2444
      %v2859 = vpop.permute.xlu0 %2858
      %2862 = vset.pattern.permute.xlu0 0
      %2863 = vperm.xlu0 %2862, %v2445
      %v2864 = vpop.permute.xlu0 %2863
      %2867 = vset.pattern.permute.xlu0 0
      %2868 = vperm.xlu0 %2867, %v2446
      %v2869 = vpop.permute.xlu0 %2868
      %2872 = vset.pattern.permute.xlu0 0
      %2873 = vperm.xlu0 %2872, %v2447
      %v2874 = vpop.permute.xlu0 %2873
      %2877 = vset.pattern.permute.xlu0 0
      %2878 = vperm.xlu0 %2877, %v2448
      %v2879 = vpop.permute.xlu0 %2878
      %2882 = vset.pattern.permute.xlu0 0
      %2883 = vperm.xlu0 %2882, %v2449
      %v2884 = vpop.permute.xlu0 %2883
      %2887 = vset.pattern.permute.xlu0 0
      %2888 = vperm.xlu0 %2887, %v2450
      %v2889 = vpop.permute.xlu0 %2888
      %2892 = vset.pattern.permute.xlu0 0
      %2893 = vperm.xlu0 %2892, %v2451
      %v2894 = vpop.permute.xlu0 %2893
      %2897 = vset.pattern.permute.xlu0 0
      %2898 = vperm.xlu0 %2897, %v2452
      %v2899 = vpop.permute.xlu0 %2898
      %2902 = vset.pattern.permute.xlu0 0
      %2903 = vperm.xlu0 %2902, %v2453
      %v2904 = vpop.permute.xlu0 %2903
      %2907 = vset.pattern.permute.xlu0 0
      %2908 = vperm.xlu0 %2907, %v2454
      %v2909 = vpop.permute.xlu0 %2908
      %2912 = vset.pattern.permute.xlu0 0
      %2913 = vperm.xlu0 %2912, %v2455
      %v2914 = vpop.permute.xlu0 %2913
      %2917 = vset.pattern.permute.xlu0 0
      %2918 = vperm.xlu0 %2917, %v2456
      %v2919 = vpop.permute.xlu0 %2918
      %2922 = vset.pattern.permute.xlu0 0
      %2923 = vperm.xlu0 %2922, %v2457
      %v2924 = vpop.permute.xlu0 %2923
      %2927 = vset.pattern.permute.xlu0 0
      %2928 = vperm.xlu0 %2927, %v2458
      %v2929 = vpop.permute.xlu0 %2928
      %2932 = vset.pattern.permute.xlu0 0
      %2933 = vperm.xlu0 %2932, %v2459
      %v2934 = vpop.permute.xlu0 %2933
      %2937 = vset.pattern.permute.xlu0 0
      %2938 = vperm.xlu0 %2937, %v2460
      %v2939 = vpop.permute.xlu0 %2938
      %v2941 = vadd.f32 %v2661, %v2744
      %v2942 = vadd.f32 %v2662, %v2744
      %v2943 = vadd.f32 %v2663, %v2749
      %v2944 = vadd.f32 %v2664, %v2749
      %v2945 = vadd.f32 %v2665, %v2754
      %v2946 = vadd.f32 %v2666, %v2754
      %v2947 = vadd.f32 %v2667, %v2759
      %v2948 = vadd.f32 %v2668, %v2759
      %v2949 = vadd.f32 %v2669, %v2764
      %v2950 = vadd.f32 %v2670, %v2764
      %v2951 = vadd.f32 %v2671, %v2769
      %v2952 = vadd.f32 %v2672, %v2769
      %v2953 = vadd.f32 %v2673, %v2774
      %v2954 = vadd.f32 %v2674, %v2774
      %v2955 = vadd.f32 %v2675, %v2779
      %v2956 = vadd.f32 %v2676, %v2779
      %v2957 = vadd.f32 %v2677, %v2784
      %v2958 = vadd.f32 %v2678, %v2784
      %v2959 = vadd.f32 %v2679, %v2789
      %v2960 = vadd.f32 %v2680, %v2789
      %v2961 = vadd.f32 %v2681, %v2794
      %v2962 = vadd.f32 %v2682, %v2794
      %v2963 = vadd.f32 %v2683, %v2799
      %v2964 = vadd.f32 %v2684, %v2799
      %v2965 = vadd.f32 %v2685, %v2804
      %v2966 = vadd.f32 %v2686, %v2804
      %v2967 = vadd.f32 %v2687, %v2809
      %v2968 = vadd.f32 %v2688, %v2809
      %v2969 = vadd.f32 %v2689, %v2814
      %v2970 = vadd.f32 %v2690, %v2814
      %v2971 = vadd.f32 %v2691, %v2819
      %v2972 = vadd.f32 %v2692, %v2819
      %v2973 = vadd.f32 %v2693, %v2824
      %v2974 = vadd.f32 %v2694, %v2824
      %v2975 = vadd.f32 %v2695, %v2829
      %v2976 = vadd.f32 %v2696, %v2829
      %v2977 = vadd.f32 %v2697, %v2834
      %v2978 = vadd.f32 %v2698, %v2834
      %v2979 = vadd.f32 %v2699, %v2839
      %v2980 = vadd.f32 %v2700, %v2839
      %v2981 = vadd.f32 %v2701, %v2844
      %v2982 = vadd.f32 %v2702, %v2844
      %v2983 = vadd.f32 %v2703, %v2849
      %v2984 = vadd.f32 %v2704, %v2849
      %v2985 = vadd.f32 %v2705, %v2854
      %v2986 = vadd.f32 %v2706, %v2854
      %v2987 = vadd.f32 %v2707, %v2859
      %v2988 = vadd.f32 %v2708, %v2859
      %v2989 = vadd.f32 %v2709, %v2864
      %v2990 = vadd.f32 %v2710, %v2864
      %v2991 = vadd.f32 %v2711, %v2869
      %v2992 = vadd.f32 %v2712, %v2869
      %v2993 = vadd.f32 %v2713, %v2874
      %v2994 = vadd.f32 %v2714, %v2874
      %v2995 = vadd.f32 %v2715, %v2879
      %v2996 = vadd.f32 %v2716, %v2879
      %v2997 = vadd.f32 %v2717, %v2884
      %v2998 = vadd.f32 %v2718, %v2884
      %v2999 = vadd.f32 %v2719, %v2889
      %v3000 = vadd.f32 %v2720, %v2889
      %v3001 = vadd.f32 %v2721, %v2894
      %v3002 = vadd.f32 %v2722, %v2894
      %v3003 = vadd.f32 %v2723, %v2899
      %v3004 = vadd.f32 %v2724, %v2899
      %v3005 = vadd.f32 %v2725, %v2904
      %v3006 = vadd.f32 %v2726, %v2904
      %v3007 = vadd.f32 %v2727, %v2909
      %v3008 = vadd.f32 %v2728, %v2909
      %v3009 = vadd.f32 %v2729, %v2914
      %v3010 = vadd.f32 %v2730, %v2914
      %v3011 = vadd.f32 %v2731, %v2919
      %v3012 = vadd.f32 %v2732, %v2919
      %v3013 = vadd.f32 %v2733, %v2924
      %v3014 = vadd.f32 %v2734, %v2924
      %v3015 = vadd.f32 %v2735, %v2929
      %v3016 = vadd.f32 %v2736, %v2929
      %v3017 = vadd.f32 %v2737, %v2934
      %v3018 = vadd.f32 %v2738, %v2934
      %v3019 = vadd.f32 %v2739, %v2939
      %v3020 = vadd.f32 %v2740, %v2939
      %v3021 = vxor.u32 %v2941, 2147483648
      %v3022 = vxor.u32 %v2942, 2147483648
      %v3023 = vxor.u32 %v2943, 2147483648
      %v3024 = vxor.u32 %v2944, 2147483648
      %v3025 = vxor.u32 %v2945, 2147483648
      %v3026 = vxor.u32 %v2946, 2147483648
      %v3027 = vxor.u32 %v2947, 2147483648
      %v3028 = vxor.u32 %v2948, 2147483648
      %v3029 = vxor.u32 %v2949, 2147483648
      %v3030 = vxor.u32 %v2950, 2147483648
      %v3031 = vxor.u32 %v2951, 2147483648
      %v3032 = vxor.u32 %v2952, 2147483648
      %v3033 = vxor.u32 %v2953, 2147483648
      %v3034 = vxor.u32 %v2954, 2147483648
      %v3035 = vxor.u32 %v2955, 2147483648
      %v3036 = vxor.u32 %v2956, 2147483648
      %v3037 = vxor.u32 %v2957, 2147483648
      %v3038 = vxor.u32 %v2958, 2147483648
      %v3039 = vxor.u32 %v2959, 2147483648
      %v3040 = vxor.u32 %v2960, 2147483648
      %v3041 = vxor.u32 %v2961, 2147483648
      %v3042 = vxor.u32 %v2962, 2147483648
      %v3043 = vxor.u32 %v2963, 2147483648
      %v3044 = vxor.u32 %v2964, 2147483648
      %v3045 = vxor.u32 %v2965, 2147483648
      %v3046 = vxor.u32 %v2966, 2147483648
      %v3047 = vxor.u32 %v2967, 2147483648
      %v3048 = vxor.u32 %v2968, 2147483648
      %v3049 = vxor.u32 %v2969, 2147483648
      %v3050 = vxor.u32 %v2970, 2147483648
      %v3051 = vxor.u32 %v2971, 2147483648
      %v3052 = vxor.u32 %v2972, 2147483648
      %v3053 = vxor.u32 %v2973, 2147483648
      %v3054 = vxor.u32 %v2974, 2147483648
      %v3055 = vxor.u32 %v2975, 2147483648
      %v3056 = vxor.u32 %v2976, 2147483648
      %v3057 = vxor.u32 %v2977, 2147483648
      %v3058 = vxor.u32 %v2978, 2147483648
      %v3059 = vxor.u32 %v2979, 2147483648
      %v3060 = vxor.u32 %v2980, 2147483648
      %v3061 = vxor.u32 %v2981, 2147483648
      %v3062 = vxor.u32 %v2982, 2147483648
      %v3063 = vxor.u32 %v2983, 2147483648
      %v3064 = vxor.u32 %v2984, 2147483648
      %v3065 = vxor.u32 %v2985, 2147483648
      %v3066 = vxor.u32 %v2986, 2147483648
      %v3067 = vxor.u32 %v2987, 2147483648
      %v3068 = vxor.u32 %v2988, 2147483648
      %v3069 = vxor.u32 %v2989, 2147483648
      %v3070 = vxor.u32 %v2990, 2147483648
      %v3071 = vxor.u32 %v2991, 2147483648
      %v3072 = vxor.u32 %v2992, 2147483648
      %v3073 = vxor.u32 %v2993, 2147483648
      %v3074 = vxor.u32 %v2994, 2147483648
      %v3075 = vxor.u32 %v2995, 2147483648
      %v3076 = vxor.u32 %v2996, 2147483648
      %v3077 = vxor.u32 %v2997, 2147483648
      %v3078 = vxor.u32 %v2998, 2147483648
      %v3079 = vxor.u32 %v2999, 2147483648
      %v3080 = vxor.u32 %v3000, 2147483648
      %v3081 = vxor.u32 %v3001, 2147483648
      %v3082 = vxor.u32 %v3002, 2147483648
      %v3083 = vxor.u32 %v3003, 2147483648
      %v3084 = vxor.u32 %v3004, 2147483648
      %v3085 = vxor.u32 %v3005, 2147483648
      %v3086 = vxor.u32 %v3006, 2147483648
      %v3087 = vxor.u32 %v3007, 2147483648
      %v3088 = vxor.u32 %v3008, 2147483648
      %v3089 = vxor.u32 %v3009, 2147483648
      %v3090 = vxor.u32 %v3010, 2147483648
      %v3091 = vxor.u32 %v3011, 2147483648
      %v3092 = vxor.u32 %v3012, 2147483648
      %v3093 = vxor.u32 %v3013, 2147483648
      %v3094 = vxor.u32 %v3014, 2147483648
      %v3095 = vxor.u32 %v3015, 2147483648
      %v3096 = vxor.u32 %v3016, 2147483648
      %v3097 = vxor.u32 %v3017, 2147483648
      %v3098 = vxor.u32 %v3018, 2147483648
      %v3099 = vxor.u32 %v3019, 2147483648
      %v3100 = vxor.u32 %v3020, 2147483648
      %v3101 = vmul.f32 %v3021, 1.442695
      %v3102 = vpow.pop %v3101
      %v3103 = vmul.f32 %v3022, 1.442695
      %v3104 = vpow.pop %v3103
      %v3105 = vmul.f32 %v3023, 1.442695
      %v3106 = vpow.pop %v3105
      %v3107 = vmul.f32 %v3024, 1.442695
      %v3108 = vpow.pop %v3107
      %v3109 = vmul.f32 %v3025, 1.442695
      %v3110 = vpow.pop %v3109
      %v3111 = vmul.f32 %v3026, 1.442695
      %v3112 = vpow.pop %v3111
      %v3113 = vmul.f32 %v3027, 1.442695
      %v3114 = vpow.pop %v3113
      %v3115 = vmul.f32 %v3028, 1.442695
      %v3116 = vpow.pop %v3115
      %v3117 = vmul.f32 %v3029, 1.442695
      %v3118 = vpow.pop %v3117
      %v3119 = vmul.f32 %v3030, 1.442695
      %v3120 = vpow.pop %v3119
      %v3121 = vmul.f32 %v3031, 1.442695
      %v3122 = vpow.pop %v3121
      %v3123 = vmul.f32 %v3032, 1.442695
      %v3124 = vpow.pop %v3123
      %v3125 = vmul.f32 %v3033, 1.442695
      %v3126 = vpow.pop %v3125
      %v3127 = vmul.f32 %v3034, 1.442695
      %v3128 = vpow.pop %v3127
      %v3129 = vmul.f32 %v3035, 1.442695
      %v3130 = vpow.pop %v3129
      %v3131 = vmul.f32 %v3036, 1.442695
      %v3132 = vpow.pop %v3131
      %v3133 = vmul.f32 %v3037, 1.442695
      %v3134 = vpow.pop %v3133
      %v3135 = vmul.f32 %v3038, 1.442695
      %v3136 = vpow.pop %v3135
      %v3137 = vmul.f32 %v3039, 1.442695
      %v3138 = vpow.pop %v3137
      %v3139 = vmul.f32 %v3040, 1.442695
      %v3140 = vpow.pop %v3139
      %v3141 = vmul.f32 %v3041, 1.442695
      %v3142 = vpow.pop %v3141
      %v3143 = vmul.f32 %v3042, 1.442695
      %v3144 = vpow.pop %v3143
      %v3145 = vmul.f32 %v3043, 1.442695
      %v3146 = vpow.pop %v3145
      %v3147 = vmul.f32 %v3044, 1.442695
      %v3148 = vpow.pop %v3147
      %v3149 = vmul.f32 %v3045, 1.442695
      %v3150 = vpow.pop %v3149
      %v3151 = vmul.f32 %v3046, 1.442695
      %v3152 = vpow.pop %v3151
      %v3153 = vmul.f32 %v3047, 1.442695
      %v3154 = vpow.pop %v3153
      %v3155 = vmul.f32 %v3048, 1.442695
      %v3156 = vpow.pop %v3155
      %v3157 = vmul.f32 %v3049, 1.442695
      %v3158 = vpow.pop %v3157
      %v3159 = vmul.f32 %v3050, 1.442695
      %v3160 = vpow.pop %v3159
      %v3161 = vmul.f32 %v3051, 1.442695
      %v3162 = vpow.pop %v3161
      %v3163 = vmul.f32 %v3052, 1.442695
      %v3164 = vpow.pop %v3163
      %v3165 = vmul.f32 %v3053, 1.442695
      %v3166 = vpow.pop %v3165
      %v3167 = vmul.f32 %v3054, 1.442695
      %v3168 = vpow.pop %v3167
      %v3169 = vmul.f32 %v3055, 1.442695
      %v3170 = vpow.pop %v3169
      %v3171 = vmul.f32 %v3056, 1.442695
      %v3172 = vpow.pop %v3171
      %v3173 = vmul.f32 %v3057, 1.442695
      %v3174 = vpow.pop %v3173
      %v3175 = vmul.f32 %v3058, 1.442695
      %v3176 = vpow.pop %v3175
      %v3177 = vmul.f32 %v3059, 1.442695
      %v3178 = vpow.pop %v3177
      %v3179 = vmul.f32 %v3060, 1.442695
      %v3180 = vpow.pop %v3179
      %v3181 = vmul.f32 %v3061, 1.442695
      %v3182 = vpow.pop %v3181
      %v3183 = vmul.f32 %v3062, 1.442695
      %v3184 = vpow.pop %v3183
      %v3185 = vmul.f32 %v3063, 1.442695
      %v3186 = vpow.pop %v3185
      %v3187 = vmul.f32 %v3064, 1.442695
      %v3188 = vpow.pop %v3187
      %v3189 = vmul.f32 %v3065, 1.442695
      %v3190 = vpow.pop %v3189
      %v3191 = vmul.f32 %v3066, 1.442695
      %v3192 = vpow.pop %v3191
      %v3193 = vmul.f32 %v3067, 1.442695
      %v3194 = vpow.pop %v3193
      %v3195 = vmul.f32 %v3068, 1.442695
      %v3196 = vpow.pop %v3195
      %v3197 = vmul.f32 %v3069, 1.442695
      %v3198 = vpow.pop %v3197
      %v3199 = vmul.f32 %v3070, 1.442695
      %v3200 = vpow.pop %v3199
      %v3201 = vmul.f32 %v3071, 1.442695
      %v3202 = vpow.pop %v3201
      %v3203 = vmul.f32 %v3072, 1.442695
      %v3204 = vpow.pop %v3203
      %v3205 = vmul.f32 %v3073, 1.442695
      %v3206 = vpow.pop %v3205
      %v3207 = vmul.f32 %v3074, 1.442695
      %v3208 = vpow.pop %v3207
      %v3209 = vmul.f32 %v3075, 1.442695
      %v3210 = vpow.pop %v3209
      %v3211 = vmul.f32 %v3076, 1.442695
      %v3212 = vpow.pop %v3211
      %v3213 = vmul.f32 %v3077, 1.442695
      %v3214 = vpow.pop %v3213
      %v3215 = vmul.f32 %v3078, 1.442695
      %v3216 = vpow.pop %v3215
      %v3217 = vmul.f32 %v3079, 1.442695
      %v3218 = vpow.pop %v3217
      %v3219 = vmul.f32 %v3080, 1.442695
      %v3220 = vpow.pop %v3219
      %v3221 = vmul.f32 %v3081, 1.442695
      %v3222 = vpow.pop %v3221
      %v3223 = vmul.f32 %v3082, 1.442695
      %v3224 = vpow.pop %v3223
      %v3225 = vmul.f32 %v3083, 1.442695
      %v3226 = vpow.pop %v3225
      %v3227 = vmul.f32 %v3084, 1.442695
      %v3228 = vpow.pop %v3227
      %v3229 = vmul.f32 %v3085, 1.442695
      %v3230 = vpow.pop %v3229
      %v3231 = vmul.f32 %v3086, 1.442695
      %v3232 = vpow.pop %v3231
      %v3233 = vmul.f32 %v3087, 1.442695
      %v3234 = vpow.pop %v3233
      %v3235 = vmul.f32 %v3088, 1.442695
      %v3236 = vpow.pop %v3235
      %v3237 = vmul.f32 %v3089, 1.442695
      %v3238 = vpow.pop %v3237
      %v3239 = vmul.f32 %v3090, 1.442695
      %v3240 = vpow.pop %v3239
      %v3241 = vmul.f32 %v3091, 1.442695
      %v3242 = vpow.pop %v3241
      %v3243 = vmul.f32 %v3092, 1.442695
      %v3244 = vpow.pop %v3243
      %v3245 = vmul.f32 %v3093, 1.442695
      %v3246 = vpow.pop %v3245
      %v3247 = vmul.f32 %v3094, 1.442695
      %v3248 = vpow.pop %v3247
      %v3249 = vmul.f32 %v3095, 1.442695
      %v3250 = vpow.pop %v3249
      %v3251 = vmul.f32 %v3096, 1.442695
      %v3252 = vpow.pop %v3251
      %v3253 = vmul.f32 %v3097, 1.442695
      %v3254 = vpow.pop %v3253
      %v3255 = vmul.f32 %v3098, 1.442695
      %v3256 = vpow.pop %v3255
      %v3257 = vmul.f32 %v3099, 1.442695
      %v3258 = vpow.pop %v3257
      %v3259 = vmul.f32 %v3100, 1.442695
      %v3260 = vpow.pop %v3259
      %v3261 = vadd.f32 %v3102, 1.0
      %v3262 = vadd.f32 %v3104, 1.0
      %v3263 = vadd.f32 %v3106, 1.0
      %v3264 = vadd.f32 %v3108, 1.0
      %v3265 = vadd.f32 %v3110, 1.0
      %v3266 = vadd.f32 %v3112, 1.0
      %v3267 = vadd.f32 %v3114, 1.0
      %v3268 = vadd.f32 %v3116, 1.0
      %v3269 = vadd.f32 %v3118, 1.0
      %v3270 = vadd.f32 %v3120, 1.0
      %v3271 = vadd.f32 %v3122, 1.0
      %v3272 = vadd.f32 %v3124, 1.0
      %v3273 = vadd.f32 %v3126, 1.0
      %v3274 = vadd.f32 %v3128, 1.0
      %v3275 = vadd.f32 %v3130, 1.0
      %v3276 = vadd.f32 %v3132, 1.0
      %v3277 = vadd.f32 %v3134, 1.0
      %v3278 = vadd.f32 %v3136, 1.0
      %v3279 = vadd.f32 %v3138, 1.0
      %v3280 = vadd.f32 %v3140, 1.0
      %v3281 = vadd.f32 %v3142, 1.0
      %v3282 = vadd.f32 %v3144, 1.0
      %v3283 = vadd.f32 %v3146, 1.0
      %v3284 = vadd.f32 %v3148, 1.0
      %v3285 = vadd.f32 %v3150, 1.0
      %v3286 = vadd.f32 %v3152, 1.0
      %v3287 = vadd.f32 %v3154, 1.0
      %v3288 = vadd.f32 %v3156, 1.0
      %v3289 = vadd.f32 %v3158, 1.0
      %v3290 = vadd.f32 %v3160, 1.0
      %v3291 = vadd.f32 %v3162, 1.0
      %v3292 = vadd.f32 %v3164, 1.0
      %v3293 = vadd.f32 %v3166, 1.0
      %v3294 = vadd.f32 %v3168, 1.0
      %v3295 = vadd.f32 %v3170, 1.0
      %v3296 = vadd.f32 %v3172, 1.0
      %v3297 = vadd.f32 %v3174, 1.0
      %v3298 = vadd.f32 %v3176, 1.0
      %v3299 = vadd.f32 %v3178, 1.0
      %v3300 = vadd.f32 %v3180, 1.0
      %v3301 = vadd.f32 %v3182, 1.0
      %v3302 = vadd.f32 %v3184, 1.0
      %v3303 = vadd.f32 %v3186, 1.0
      %v3304 = vadd.f32 %v3188, 1.0
      %v3305 = vadd.f32 %v3190, 1.0
      %v3306 = vadd.f32 %v3192, 1.0
      %v3307 = vadd.f32 %v3194, 1.0
      %v3308 = vadd.f32 %v3196, 1.0
      %v3309 = vadd.f32 %v3198, 1.0
      %v3310 = vadd.f32 %v3200, 1.0
      %v3311 = vadd.f32 %v3202, 1.0
      %v3312 = vadd.f32 %v3204, 1.0
      %v3313 = vadd.f32 %v3206, 1.0
      %v3314 = vadd.f32 %v3208, 1.0
      %v3315 = vadd.f32 %v3210, 1.0
      %v3316 = vadd.f32 %v3212, 1.0
      %v3317 = vadd.f32 %v3214, 1.0
      %v3318 = vadd.f32 %v3216, 1.0
      %v3319 = vadd.f32 %v3218, 1.0
      %v3320 = vadd.f32 %v3220, 1.0
      %v3321 = vadd.f32 %v3222, 1.0
      %v3322 = vadd.f32 %v3224, 1.0
      %v3323 = vadd.f32 %v3226, 1.0
      %v3324 = vadd.f32 %v3228, 1.0
      %v3325 = vadd.f32 %v3230, 1.0
      %v3326 = vadd.f32 %v3232, 1.0
      %v3327 = vadd.f32 %v3234, 1.0
      %v3328 = vadd.f32 %v3236, 1.0
      %v3329 = vadd.f32 %v3238, 1.0
      %v3330 = vadd.f32 %v3240, 1.0
      %v3331 = vadd.f32 %v3242, 1.0
      %v3332 = vadd.f32 %v3244, 1.0
      %v3333 = vadd.f32 %v3246, 1.0
      %v3334 = vadd.f32 %v3248, 1.0
      %v3335 = vadd.f32 %v3250, 1.0
      %v3336 = vadd.f32 %v3252, 1.0
      %v3337 = vadd.f32 %v3254, 1.0
      %v3338 = vadd.f32 %v3256, 1.0
      %v3339 = vadd.f32 %v3258, 1.0
      %v3340 = vadd.f32 %v3260, 1.0
      %v3341 = vrcp.pop %v3261
      %v3342 = vmul.f32 1.0, %v3341
      %v3343 = vrcp.pop %v3262
      %v3344 = vmul.f32 1.0, %v3343
      %v3345 = vrcp.pop %v3263
      %v3346 = vmul.f32 1.0, %v3345
      %v3347 = vrcp.pop %v3264
      %v3348 = vmul.f32 1.0, %v3347
      %v3349 = vrcp.pop %v3265
      %v3350 = vmul.f32 1.0, %v3349
      %v3351 = vrcp.pop %v3266
      %v3352 = vmul.f32 1.0, %v3351
      %v3353 = vrcp.pop %v3267
      %v3354 = vmul.f32 1.0, %v3353
      %v3355 = vrcp.pop %v3268
      %v3356 = vmul.f32 1.0, %v3355
      %v3357 = vrcp.pop %v3269
      %v3358 = vmul.f32 1.0, %v3357
      %v3359 = vrcp.pop %v3270
      %v3360 = vmul.f32 1.0, %v3359
      %v3361 = vrcp.pop %v3271
      %v3362 = vmul.f32 1.0, %v3361
      %v3363 = vrcp.pop %v3272
      %v3364 = vmul.f32 1.0, %v3363
      %v3365 = vrcp.pop %v3273
      %v3366 = vmul.f32 1.0, %v3365
      %v3367 = vrcp.pop %v3274
      %v3368 = vmul.f32 1.0, %v3367
      %v3369 = vrcp.pop %v3275
      %v3370 = vmul.f32 1.0, %v3369
      %v3371 = vrcp.pop %v3276
      %v3372 = vmul.f32 1.0, %v3371
      %v3373 = vrcp.pop %v3277
      %v3374 = vmul.f32 1.0, %v3373
      %v3375 = vrcp.pop %v3278
      %v3376 = vmul.f32 1.0, %v3375
      %v3377 = vrcp.pop %v3279
      %v3378 = vmul.f32 1.0, %v3377
      %v3379 = vrcp.pop %v3280
      %v3380 = vmul.f32 1.0, %v3379
      %v3381 = vrcp.pop %v3281
      %v3382 = vmul.f32 1.0, %v3381
      %v3383 = vrcp.pop %v3282
      %v3384 = vmul.f32 1.0, %v3383
      %v3385 = vrcp.pop %v3283
      %v3386 = vmul.f32 1.0, %v3385
      %v3387 = vrcp.pop %v3284
      %v3388 = vmul.f32 1.0, %v3387
      %v3389 = vrcp.pop %v3285
      %v3390 = vmul.f32 1.0, %v3389
      %v3391 = vrcp.pop %v3286
      %v3392 = vmul.f32 1.0, %v3391
      %v3393 = vrcp.pop %v3287
      %v3394 = vmul.f32 1.0, %v3393
      %v3395 = vrcp.pop %v3288
      %v3396 = vmul.f32 1.0, %v3395
      %v3397 = vrcp.pop %v3289
      %v3398 = vmul.f32 1.0, %v3397
      %v3399 = vrcp.pop %v3290
      %v3400 = vmul.f32 1.0, %v3399
      %v3401 = vrcp.pop %v3291
      %v3402 = vmul.f32 1.0, %v3401
      %v3403 = vrcp.pop %v3292
      %v3404 = vmul.f32 1.0, %v3403
      %v3405 = vrcp.pop %v3293
      %v3406 = vmul.f32 1.0, %v3405
      %v3407 = vrcp.pop %v3294
      %v3408 = vmul.f32 1.0, %v3407
      %v3409 = vrcp.pop %v3295
      %v3410 = vmul.f32 1.0, %v3409
      %v3411 = vrcp.pop %v3296
      %v3412 = vmul.f32 1.0, %v3411
      %v3413 = vrcp.pop %v3297
      %v3414 = vmul.f32 1.0, %v3413
      %v3415 = vrcp.pop %v3298
      %v3416 = vmul.f32 1.0, %v3415
      %v3417 = vrcp.pop %v3299
      %v3418 = vmul.f32 1.0, %v3417
      %v3419 = vrcp.pop %v3300
      %v3420 = vmul.f32 1.0, %v3419
      %v3421 = vrcp.pop %v3301
      %v3422 = vmul.f32 1.0, %v3421
      %v3423 = vrcp.pop %v3302
      %v3424 = vmul.f32 1.0, %v3423
      %v3425 = vrcp.pop %v3303
      %v3426 = vmul.f32 1.0, %v3425
      %v3427 = vrcp.pop %v3304
      %v3428 = vmul.f32 1.0, %v3427
      %v3429 = vrcp.pop %v3305
      %v3430 = vmul.f32 1.0, %v3429
      %v3431 = vrcp.pop %v3306
      %v3432 = vmul.f32 1.0, %v3431
      %v3433 = vrcp.pop %v3307
      %v3434 = vmul.f32 1.0, %v3433
      %v3435 = vrcp.pop %v3308
      %v3436 = vmul.f32 1.0, %v3435
      %v3437 = vrcp.pop %v3309
      %v3438 = vmul.f32 1.0, %v3437
      %v3439 = vrcp.pop %v3310
      %v3440 = vmul.f32 1.0, %v3439
      %v3441 = vrcp.pop %v3311
      %v3442 = vmul.f32 1.0, %v3441
      %v3443 = vrcp.pop %v3312
      %v3444 = vmul.f32 1.0, %v3443
      %v3445 = vrcp.pop %v3313
      %v3446 = vmul.f32 1.0, %v3445
      %v3447 = vrcp.pop %v3314
      %v3448 = vmul.f32 1.0, %v3447
      %v3449 = vrcp.pop %v3315
      %v3450 = vmul.f32 1.0, %v3449
      %v3451 = vrcp.pop %v3316
      %v3452 = vmul.f32 1.0, %v3451
      %v3453 = vrcp.pop %v3317
      %v3454 = vmul.f32 1.0, %v3453
      %v3455 = vrcp.pop %v3318
      %v3456 = vmul.f32 1.0, %v3455
      %v3457 = vrcp.pop %v3319
      %v3458 = vmul.f32 1.0, %v3457
      %v3459 = vrcp.pop %v3320
      %v3460 = vmul.f32 1.0, %v3459
      %v3461 = vrcp.pop %v3321
      %v3462 = vmul.f32 1.0, %v3461
      %v3463 = vrcp.pop %v3322
      %v3464 = vmul.f32 1.0, %v3463
      %v3465 = vrcp.pop %v3323
      %v3466 = vmul.f32 1.0, %v3465
      %v3467 = vrcp.pop %v3324
      %v3468 = vmul.f32 1.0, %v3467
      %v3469 = vrcp.pop %v3325
      %v3470 = vmul.f32 1.0, %v3469
      %v3471 = vrcp.pop %v3326
      %v3472 = vmul.f32 1.0, %v3471
      %v3473 = vrcp.pop %v3327
      %v3474 = vmul.f32 1.0, %v3473
      %v3475 = vrcp.pop %v3328
      %v3476 = vmul.f32 1.0, %v3475
      %v3477 = vrcp.pop %v3329
      %v3478 = vmul.f32 1.0, %v3477
      %v3479 = vrcp.pop %v3330
      %v3480 = vmul.f32 1.0, %v3479
      %v3481 = vrcp.pop %v3331
      %v3482 = vmul.f32 1.0, %v3481
      %v3483 = vrcp.pop %v3332
      %v3484 = vmul.f32 1.0, %v3483
      %v3485 = vrcp.pop %v3333
      %v3486 = vmul.f32 1.0, %v3485
      %v3487 = vrcp.pop %v3334
      %v3488 = vmul.f32 1.0, %v3487
      %v3489 = vrcp.pop %v3335
      %v3490 = vmul.f32 1.0, %v3489
      %v3491 = vrcp.pop %v3336
      %v3492 = vmul.f32 1.0, %v3491
      %v3493 = vrcp.pop %v3337
      %v3494 = vmul.f32 1.0, %v3493
      %v3495 = vrcp.pop %v3338
      %v3496 = vmul.f32 1.0, %v3495
      %v3497 = vrcp.pop %v3339
      %v3498 = vmul.f32 1.0, %v3497
      %v3499 = vrcp.pop %v3340
      %v3500 = vmul.f32 1.0, %v3499
      %v3501 = vmul.f32 %v2941, %v3342
      %v3502 = vmul.f32 %v2942, %v3344
      %v3503 = vmul.f32 %v2943, %v3346
      %v3504 = vmul.f32 %v2944, %v3348
      %v3505 = vmul.f32 %v2945, %v3350
      %v3506 = vmul.f32 %v2946, %v3352
      %v3507 = vmul.f32 %v2947, %v3354
      %v3508 = vmul.f32 %v2948, %v3356
      %v3509 = vmul.f32 %v2949, %v3358
      %v3510 = vmul.f32 %v2950, %v3360
      %v3511 = vmul.f32 %v2951, %v3362
      %v3512 = vmul.f32 %v2952, %v3364
      %v3513 = vmul.f32 %v2953, %v3366
      %v3514 = vmul.f32 %v2954, %v3368
      %v3515 = vmul.f32 %v2955, %v3370
      %v3516 = vmul.f32 %v2956, %v3372
      %v3517 = vmul.f32 %v2957, %v3374
      %v3518 = vmul.f32 %v2958, %v3376
      %v3519 = vmul.f32 %v2959, %v3378
      %v3520 = vmul.f32 %v2960, %v3380
      %v3521 = vmul.f32 %v2961, %v3382
      %v3522 = vmul.f32 %v2962, %v3384
      %v3523 = vmul.f32 %v2963, %v3386
      %v3524 = vmul.f32 %v2964, %v3388
      %v3525 = vmul.f32 %v2965, %v3390
      %v3526 = vmul.f32 %v2966, %v3392
      %v3527 = vmul.f32 %v2967, %v3394
      %v3528 = vmul.f32 %v2968, %v3396
      %v3529 = vmul.f32 %v2969, %v3398
      %v3530 = vmul.f32 %v2970, %v3400
      %v3531 = vmul.f32 %v2971, %v3402
      %v3532 = vmul.f32 %v2972, %v3404
      %v3533 = vmul.f32 %v2973, %v3406
      %v3534 = vmul.f32 %v2974, %v3408
      %v3535 = vmul.f32 %v2975, %v3410
      %v3536 = vmul.f32 %v2976, %v3412
      %v3537 = vmul.f32 %v2977, %v3414
      %v3538 = vmul.f32 %v2978, %v3416
      %v3539 = vmul.f32 %v2979, %v3418
      %v3540 = vmul.f32 %v2980, %v3420
      %v3541 = vmul.f32 %v2981, %v3422
      %v3542 = vmul.f32 %v2982, %v3424
      %v3543 = vmul.f32 %v2983, %v3426
      %v3544 = vmul.f32 %v2984, %v3428
      %v3545 = vmul.f32 %v2985, %v3430
      %v3546 = vmul.f32 %v2986, %v3432
      %v3547 = vmul.f32 %v2987, %v3434
      %v3548 = vmul.f32 %v2988, %v3436
      %v3549 = vmul.f32 %v2989, %v3438
      %v3550 = vmul.f32 %v2990, %v3440
      %v3551 = vmul.f32 %v2991, %v3442
      %v3552 = vmul.f32 %v2992, %v3444
      %v3553 = vmul.f32 %v2993, %v3446
      %v3554 = vmul.f32 %v2994, %v3448
      %v3555 = vmul.f32 %v2995, %v3450
      %v3556 = vmul.f32 %v2996, %v3452
      %v3557 = vmul.f32 %v2997, %v3454
      %v3558 = vmul.f32 %v2998, %v3456
      %v3559 = vmul.f32 %v2999, %v3458
      %v3560 = vmul.f32 %v3000, %v3460
      %v3561 = vmul.f32 %v3001, %v3462
      %v3562 = vmul.f32 %v3002, %v3464
      %v3563 = vmul.f32 %v3003, %v3466
      %v3564 = vmul.f32 %v3004, %v3468
      %v3565 = vmul.f32 %v3005, %v3470
      %v3566 = vmul.f32 %v3006, %v3472
      %v3567 = vmul.f32 %v3007, %v3474
      %v3568 = vmul.f32 %v3008, %v3476
      %v3569 = vmul.f32 %v3009, %v3478
      %v3570 = vmul.f32 %v3010, %v3480
      %v3571 = vmul.f32 %v3011, %v3482
      %v3572 = vmul.f32 %v3012, %v3484
      %v3573 = vmul.f32 %v3013, %v3486
      %v3574 = vmul.f32 %v3014, %v3488
      %v3575 = vmul.f32 %v3015, %v3490
      %v3576 = vmul.f32 %v3016, %v3492
      %v3577 = vmul.f32 %v3017, %v3494
      %v3578 = vmul.f32 %v3018, %v3496
      %v3579 = vmul.f32 %v3019, %v3498
      %v3580 = vmul.f32 %v3020, %v3500
      %v3581 = vld [vmem:[%s4] sm:$0xff]
      %v3582 = vld [vmem:[%s4 + $0x8] sm:$0xf]
      %v3583 = vld [vmem:[%s4 + $0xc] sm:$0xff]
      %v3584 = vld [vmem:[%s4 + $0x14] sm:$0xf]
      %v3585 = vld [vmem:[%s4 + $0x18] sm:$0xff]
      %v3586 = vld [vmem:[%s4 + $0x20] sm:$0xf]
      %v3587 = vld [vmem:[%s4 + $0x24] sm:$0xff]
      %v3588 = vld [vmem:[%s4 + $0x2c] sm:$0xf]
      %v3589 = vld [vmem:[%s4 + $0x30] sm:$0xff]
      %v3590 = vld [vmem:[%s4 + $0x38] sm:$0xf]
      %v3591 = vld [vmem:[%s4 + $0x3c] sm:$0xff]
      %v3592 = vld [vmem:[%s4 + $0x44] sm:$0xf]
      %v3593 = vld [vmem:[%s4 + $0x48] sm:$0xff]
      %v3594 = vld [vmem:[%s4 + $0x50] sm:$0xf]
      %v3595 = vld [vmem:[%s4 + $0x54] sm:$0xff]
      %v3596 = vld [vmem:[%s4 + $0x5c] sm:$0xf]
      %v3597 = vld [vmem:[%s4 + $0x60] sm:$0xff]
      %v3598 = vld [vmem:[%s4 + $0x68] sm:$0xf]
      %v3599 = vpack.c.bf16 %v3503, %v3501
      %v3600 = vpack.c.bf16 %v3504, %v3502
      %v3601 = vpack.c.bf16 %v3507, %v3505
      %v3602 = vpack.c.bf16 %v3508, %v3506
      %v3603 = vpack.c.bf16 %v3511, %v3509
      %v3604 = vpack.c.bf16 %v3512, %v3510
      %v3605 = vpack.c.bf16 %v3515, %v3513
      %v3606 = vpack.c.bf16 %v3516, %v3514
      %v3607 = vpack.c.bf16 %v3519, %v3517
      %v3608 = vpack.c.bf16 %v3520, %v3518
      %v3609 = vpack.c.bf16 %v3523, %v3521
      %v3610 = vpack.c.bf16 %v3524, %v3522
      %v3611 = vpack.c.bf16 %v3527, %v3525
      %v3612 = vpack.c.bf16 %v3528, %v3526
      %v3613 = vpack.c.bf16 %v3531, %v3529
      %v3614 = vpack.c.bf16 %v3532, %v3530
      %v3615 = vpack.c.bf16 %v3535, %v3533
      %v3616 = vpack.c.bf16 %v3536, %v3534
      %v3617 = vpack.c.bf16 %v3539, %v3537
      %v3618 = vpack.c.bf16 %v3540, %v3538
      %v3619 = vpack.c.bf16 %v3543, %v3541
      %v3620 = vpack.c.bf16 %v3544, %v3542
      %v3621 = vpack.c.bf16 %v3547, %v3545
      %v3622 = vpack.c.bf16 %v3548, %v3546
      %v3623 = vpack.c.bf16 %v3551, %v3549
      %v3624 = vpack.c.bf16 %v3552, %v3550
      %v3625 = vpack.c.bf16 %v3555, %v3553
      %v3626 = vpack.c.bf16 %v3556, %v3554
      %v3627 = vpack.c.bf16 %v3559, %v3557
      %v3628 = vpack.c.bf16 %v3560, %v3558
      %v3629 = vpack.c.bf16 %v3563, %v3561
      %v3630 = vpack.c.bf16 %v3564, %v3562
      %v3631 = vpack.c.bf16 %v3567, %v3565
      %v3632 = vpack.c.bf16 %v3568, %v3566
      %v3633 = vpack.c.bf16 %v3571, %v3569
      %v3634 = vpack.c.bf16 %v3572, %v3570
      %v3635 = vpack.c.bf16 %v3575, %v3573
      %v3636 = vpack.c.bf16 %v3576, %v3574
      %v3637 = vpack.c.bf16 %v3579, %v3577
      %v3638 = vpack.c.bf16 %v3580, %v3578
      %v3657 = vunpack.c.l.b16 %v3581
      %v3658 = vunpack.c.h.b16 %v3581
      %v3659 = vunpack.c.l.b16 %v3582
      %v3660 = vunpack.c.l.b16 %v3583
      %v3661 = vunpack.c.h.b16 %v3583
      %v3662 = vunpack.c.l.b16 %v3584
      %v3663 = vunpack.c.l.b16 %v3585
      %v3664 = vunpack.c.h.b16 %v3585
      %v3665 = vunpack.c.l.b16 %v3586
      %v3666 = vunpack.c.l.b16 %v3587
      %v3667 = vunpack.c.h.b16 %v3587
      %v3668 = vunpack.c.l.b16 %v3588
      %v3669 = vunpack.c.l.b16 %v3589
      %v3670 = vunpack.c.h.b16 %v3589
      %v3671 = vunpack.c.l.b16 %v3590
      %v3672 = vunpack.c.l.b16 %v3591
      %v3673 = vunpack.c.h.b16 %v3591
      %v3674 = vunpack.c.l.b16 %v3592
      %v3675 = vunpack.c.l.b16 %v3593
      %v3676 = vunpack.c.h.b16 %v3593
      %v3677 = vunpack.c.l.b16 %v3594
      %v3678 = vunpack.c.l.b16 %v3595
      %v3679 = vunpack.c.h.b16 %v3595
      %v3680 = vunpack.c.l.b16 %v3596
      %v3681 = vunpack.c.l.b16 %v3597
      %v3682 = vunpack.c.h.b16 %v3597
      %v3683 = vunpack.c.l.b16 %v3598
      %v3684 = vpack.c.b16 %v3660, %v3657
      %v3685 = vpack.c.b16 %v3661, %v3658
      %v3686 = vpack.c.b16 %v3662, %v3659
      %v3687 = vpack.c.b16 %v3666, %v3663
      %v3688 = vpack.c.b16 %v3667, %v3664
      %v3689 = vpack.c.b16 %v3668, %v3665
      %v3690 = vpack.c.b16 %v3672, %v3669
      %v3691 = vpack.c.b16 %v3673, %v3670
      %v3692 = vpack.c.b16 %v3674, %v3671
      %v3693 = vpack.c.b16 %v3678, %v3675
      %v3694 = vpack.c.b16 %v3679, %v3676
      %v3695 = vpack.c.b16 %v3680, %v3677
      %v3696 = vpack.c.b16 %v3681, %v3681
      %v3697 = vpack.c.b16 %v3682, %v3682
      %v3698 = vpack.c.b16 %v3683, %v3683
      %v3710 = vsel %vm840, %v3686, 0
      %v3713 = vsel %vm840, %v3689, 0
      %v3716 = vsel %vm840, %v3692, 0
      %v3719 = vsel %vm840, %v3695, 0
      %v3722 = vsel %vm840, %v3698, 0
      %3724 = vmatprep.subr.bf16.mxu0 %v3600
      %3725 = vmatpush1.bf16.msra.mxu0 %v3599
      %3726 = vmatprep.subr.bf16.mxu0 %v3602
      %3727 = vmatpush1.bf16.msra.mxu0 %v3601
      %3728 = vmatprep.subr.bf16.mxu0 %v3604
      %3729 = vmatpush1.bf16.msra.mxu0 %v3603
      %3730 = vmatprep.subr.bf16.mxu0 %v3606
      %3731 = vmatpush1.bf16.msra.mxu0 %v3605
      %3732 = vmatprep.subr.bf16.mxu0 %v3608
      %3733 = vmatpush1.bf16.msra.mxu0 %v3607
      %3734 = vmatprep.subr.bf16.mxu0 %v3610
      %3735 = vmatpush1.bf16.msra.mxu0 %v3609
      %3736 = vmatprep.subr.bf16.mxu0 %v3612
      %3737 = vmatpush1.bf16.msra.mxu0 %v3611
      %3738 = vmatprep.subr.bf16.mxu0 %v3614
      %3739 = vmatpush1.bf16.msra.mxu0 %v3613
      %3740 = vmatprep.subr.bf16.mxu0 %v3616
      %3741 = vmatpush1.bf16.msra.mxu0 %v3615
      %3742 = vmatprep.subr.bf16.mxu0 %v3618
      %3743 = vmatpush1.bf16.msra.mxu0 %v3617
      %3744 = vmatprep.subr.bf16.mxu0 %v3620
      %3745 = vmatpush1.bf16.msra.mxu0 %v3619
      %3746 = vmatprep.subr.bf16.mxu0 %v3622
      %3747 = vmatpush1.bf16.msra.mxu0 %v3621
      %3748 = vmatprep.subr.bf16.mxu0 %v3624
      %3749 = vmatpush1.bf16.msra.mxu0 %v3623
      %3750 = vmatprep.subr.bf16.mxu0 %v3626
      %3751 = vmatpush1.bf16.msra.mxu0 %v3625
      %3752 = vmatprep.subr.bf16.mxu0 %v3628
      %3753 = vmatpush1.bf16.msra.mxu0 %v3627
      %3754 = vmatprep.subr.bf16.mxu0 %v3630
      %3755 = vmatpush1.bf16.msra.mxu0 %v3629
      %3756 = vmatprep.mubr.bf16.mxu0 %v3685
      %3757 = vmatmul.mubr.bf16.gmra.mrb[0].mxu0 %v3684
      %v3758 = vpop.f32.mrb[0].mxu0
      %v3759 = vadd.f32 0.0, %v3758
      %v3760 = vpop.f32.mrb[0].mxu0
      %v3761 = vadd.f32 0.0, %v3760
      %v3762 = vpop.f32.mrb[0].mxu0
      %v3763 = vadd.f32 0.0, %v3762
      %v3764 = vpop.f32.mrb[0].mxu0
      %v3765 = vadd.f32 0.0, %v3764
      %3766 = vmatprep.mubr.bf16.mxu0 %v3688
      %3767 = vmatmul.mubr.bf16.gmra.mrb[0].mxu0 %v3687
      %v3768 = vpop.f32.mrb[0].mxu0
      %v3769 = vadd.f32 0.0, %v3768
      %v3770 = vpop.f32.mrb[0].mxu0
      %v3771 = vadd.f32 0.0, %v3770
      %v3772 = vpop.f32.mrb[0].mxu0
      %v3773 = vadd.f32 0.0, %v3772
      %v3774 = vpop.f32.mrb[0].mxu0
      %v3775 = vadd.f32 0.0, %v3774
      %3776 = vmatprep.mubr.bf16.mxu0 %v3691
      %3777 = vmatmul.mubr.bf16.gmra.mrb[0].mxu0 %v3690
      %v3778 = vpop.f32.mrb[0].mxu0
      %v3779 = vadd.f32 0.0, %v3778
      %v3780 = vpop.f32.mrb[0].mxu0
      %v3781 = vadd.f32 0.0, %v3780
      %v3782 = vpop.f32.mrb[0].mxu0
      %v3783 = vadd.f32 0.0, %v3782
      %v3784 = vpop.f32.mrb[0].mxu0
      %v3785 = vadd.f32 0.0, %v3784
      %3786 = vmatprep.mubr.bf16.mxu0 %v3694
      %3787 = vmatmul.mubr.bf16.gmra.mrb[0].mxu0 %v3693
      %v3788 = vpop.f32.mrb[0].mxu0
      %v3789 = vadd.f32 0.0, %v3788
      %v3790 = vpop.f32.mrb[0].mxu0
      %v3791 = vadd.f32 0.0, %v3790
      %v3792 = vpop.f32.mrb[0].mxu0
      %v3793 = vadd.f32 0.0, %v3792
      %v3794 = vpop.f32.mrb[0].mxu0
      %v3795 = vadd.f32 0.0, %v3794
      %3796 = vmatprep.mubr.bf16.mxu0 %v3697
      %3797 = vmatmul.mubr.bf16.gmra.mrb[0].mxu0 %v3696
      %v3798 = vpop.f32.mrb[0].mxu0
      %v3799 = vadd.f32 0.0, %v3798
      %v3800 = vpop.f32.mrb[0].mxu0
      %v3801 = vadd.f32 0.0, %v3800
      %v3802 = vpop.f32.mrb[0].mxu0
      %v3803 = vpop.f32.mrb[0].mxu0
      %3804 = vdwg.mxu0
      %3805 = vmatprep.subr.bf16.mxu0 %v3632
      %3806 = vmatpush1.bf16.msra.mxu0 %v3631
      %3807 = vmatprep.subr.bf16.mxu0 %v3634
      %3808 = vmatpush1.bf16.msra.mxu0 %v3633
      %3809 = vmatprep.subr.bf16.mxu0 %v3636
      %3810 = vmatpush1.bf16.msra.mxu0 %v3635
      %3811 = vmatprep.subr.bf16.mxu0 %v3638
      %3812 = vmatpush1.bf16.msra.mxu0 %v3637
      %3813 = vmatprep.subr.bf16.mxu0 0
      %3814 = vmatpush1.bf16.msra.mxu0 0
      %3815 = vmatprep.subr.bf16.mxu0 0
      %3816 = vmatpush1.bf16.msra.mxu0 0
      %3817 = vmatprep.subr.bf16.mxu0 0
      %3818 = vmatpush1.bf16.msra.mxu0 0
      %3819 = vmatprep.subr.bf16.mxu0 0
      %3820 = vmatpush1.bf16.msra.mxu0 0
      %3821 = vmatprep.subr.bf16.mxu0 0
      %3822 = vmatpush1.bf16.msra.mxu0 0
      %3823 = vmatprep.subr.bf16.mxu0 0
      %3824 = vmatpush1.bf16.msra.mxu0 0
      %3825 = vmatprep.subr.bf16.mxu0 0
      %3826 = vmatpush1.bf16.msra.mxu0 0
      %3827 = vmatprep.subr.bf16.mxu0 0
      %3828 = vmatpush1.bf16.msra.mxu0 0
      %3829 = vmatprep.subr.bf16.mxu0 0
      %3830 = vmatpush1.bf16.msra.mxu0 0
      %3831 = vmatprep.subr.bf16.mxu0 0
      %3832 = vmatpush1.bf16.msra.mxu0 0
      %3833 = vmatprep.subr.bf16.mxu0 0
      %3834 = vmatpush1.bf16.msra.mxu0 0
      %3835 = vmatprep.subr.bf16.mxu0 0
      %3836 = vmatpush1.bf16.msra.mxu0 0
      %3837 = vmatprep.mubr.bf16.mxu0 0
      %3838 = vmatmul.mubr.bf16.gmra.mrb[0].mxu0 %v3710
      %v3839 = vpop.f32.mrb[0].mxu0
      %v3840 = vadd.f32 %v3759, %v3839
      %v3841 = vpop.f32.mrb[0].mxu0
      %v3842 = vadd.f32 %v3761, %v3841
      %v3843 = vpop.f32.mrb[0].mxu0
      %v3844 = vadd.f32 %v3763, %v3843
      %v3845 = vpop.f32.mrb[0].mxu0
      %v3846 = vadd.f32 %v3765, %v3845
      %3847 = vmatprep.mubr.bf16.mxu0 0
      %3848 = vmatmul.mubr.bf16.gmra.mrb[0].mxu0 %v3713
      %v3849 = vpop.f32.mrb[0].mxu0
      %v3850 = vadd.f32 %v3769, %v3849
      %v3851 = vpop.f32.mrb[0].mxu0
      %v3852 = vadd.f32 %v3771, %v3851
      %v3853 = vpop.f32.mrb[0].mxu0
      %v3854 = vadd.f32 %v3773, %v3853
      %v3855 = vpop.f32.mrb[0].mxu0
      %v3856 = vadd.f32 %v3775, %v3855
      %3857 = vmatprep.mubr.bf16.mxu0 0
      %3858 = vmatmul.mubr.bf16.gmra.mrb[0].mxu0 %v3716
      %v3859 = vpop.f32.mrb[0].mxu0
      %v3860 = vadd.f32 %v3779, %v3859
      %v3861 = vpop.f32.mrb[0].mxu0
      %v3862 = vadd.f32 %v3781, %v3861
      %v3863 = vpop.f32.mrb[0].mxu0
      %v3864 = vadd.f32 %v3783, %v3863
      %v3865 = vpop.f32.mrb[0].mxu0
      %v3866 = vadd.f32 %v3785, %v3865
      %3867 = vmatprep.mubr.bf16.mxu0 0
      %3868 = vmatmul.mubr.bf16.gmra.mrb[0].mxu0 %v3719
      %v3869 = vpop.f32.mrb[0].mxu0
      %v3870 = vadd.f32 %v3789, %v3869
      %v3871 = vpop.f32.mrb[0].mxu0
      %v3872 = vadd.f32 %v3791, %v3871
      %v3873 = vpop.f32.mrb[0].mxu0
      %v3874 = vadd.f32 %v3793, %v3873
      %v3875 = vpop.f32.mrb[0].mxu0
      %v3876 = vadd.f32 %v3795, %v3875
      %3877 = vmatprep.mubr.bf16.mxu0 0
      %3878 = vmatmul.mubr.bf16.gmra.mrb[0].mxu0 %v3722
      %v3879 = vpop.f32.mrb[0].mxu0
      %v3880 = vadd.f32 %v3799, %v3879
      %v3881 = vpop.f32.mrb[0].mxu0
      %v3882 = vadd.f32 %v3801, %v3881
      %v3883 = vpop.f32.mrb[0].mxu0
      %v3884 = vpop.f32.mrb[0].mxu0
      %3885 = vdwg.mxu0
      %3886 = vrot.lane.b32.xlu0 %v3840, 17
      %v3887 = vpop.permute.xlu0 %3886
      %3888 = vrot.lane.b32.xlu0 %v3842, 17
      %v3889 = vpop.permute.xlu0 %3888
      %v3890 = vlaneseq
      %v3891 = vand.u32 %v3890, 127
      %vm3892 = vcmp.lt.s32.totalorder %v3891, 17
      %v3893 = vsel %vm3892, %v3887, %v3889
      %v3894 = vsel %vm3892, %v3889, %v3887
      %v3895 = vld [vmem:[%s6] sm:$0x3]
      %v3897 = vlaneseq
      %v3898 = vshrl.u32 %v3897, 7
      %v3899 = vsub.s32 0, %v3898
      %v3900 = vrot.slane %v3895, %v3899
      %v3901 = vlaneseq
      %v3902 = vshrl.u32 %v3901, 7
      %v3903 = vsub.s32 1, %v3902
      %v3904 = vrot.slane %v3895, %v3903
      %v3907 = vmul.f32 %v3894, %v3900
      %v3908 = vmul.f32 %v3893, %v3904
      %v3909 = vadd.f32 %v3907, 0.0
      %v3910 = vadd.f32 %v3908, 0.0
      %3911 = vrot.lane.b32.xlu0 %v3844, 16
      %v3912 = vpop.permute.xlu0 %3911
      %3913 = vrot.lane.b32.xlu0 %v3846, 16
      %v3914 = vpop.permute.xlu0 %3913
      %vm3915 = vcmp.lt.s32.totalorder %v3891, 16
      %v3916 = vsel %vm3915, %v3912, %v3914
      %v3917 = vsel %vm3915, %v3914, %v3912
      %s3918 = scalar_lea.vmem %s6, 2
      %v3919 = vld [vmem:[%s3918] sm:$0x3]
      %v3921 = vlaneseq
      %v3922 = vshrl.u32 %v3921, 7
      %v3923 = vsub.s32 0, %v3922
      %v3924 = vrot.slane %v3919, %v3923
      %v3925 = vlaneseq
      %v3926 = vshrl.u32 %v3925, 7
      %v3927 = vsub.s32 1, %v3926
      %v3928 = vrot.slane %v3919, %v3927
      %v3931 = vmul.f32 %v3917, %v3924
      %v3932 = vmul.f32 %v3916, %v3928
      %v3933 = vadd.f32 %v3909, %v3931
      %v3934 = vadd.f32 %v3910, %v3932
      %3935 = vrot.lane.b32.xlu0 %v3850, 15
      %v3936 = vpop.permute.xlu0 %3935
      %3937 = vrot.lane.b32.xlu0 %v3852, 15
      %v3938 = vpop.permute.xlu0 %3937
      %vm3939 = vcmp.lt.s32.totalorder %v3891, 15
      %v3940 = vsel %vm3939, %v3936, %v3938
      %v3941 = vsel %vm3939, %v3938, %v3936
      %s3942 = scalar_lea.vmem %s6, 4
      %v3943 = vld [vmem:[%s3942] sm:$0x3]
      %v3945 = vlaneseq
      %v3946 = vshrl.u32 %v3945, 7
      %v3947 = vsub.s32 0, %v3946
      %v3948 = vrot.slane %v3943, %v3947
      %v3949 = vlaneseq
      %v3950 = vshrl.u32 %v3949, 7
      %v3951 = vsub.s32 1, %v3950
      %v3952 = vrot.slane %v3943, %v3951
      %v3955 = vmul.f32 %v3941, %v3948
      %v3956 = vmul.f32 %v3940, %v3952
      %v3957 = vadd.f32 %v3933, %v3955
      %v3958 = vadd.f32 %v3934, %v3956
      %3959 = vrot.lane.b32.xlu0 %v3854, 1
      %v3960 = vpop.permute.xlu0 %3959
      %3961 = vrot.lane.b32.xlu0 %v3856, 1
      %v3962 = vpop.permute.xlu0 %3961
      %vm3963 = vcmp.lt.s32.totalorder %v3891, 1
      %v3964 = vsel %vm3963, %v3960, %v3962
      %v3965 = vsel %vm3963, %v3962, %v3960
      %s3966 = scalar_lea.vmem %s6, 6
      %v3967 = vld [vmem:[%s3966] sm:$0x3]
      %v3969 = vlaneseq
      %v3970 = vshrl.u32 %v3969, 7
      %v3971 = vsub.s32 0, %v3970
      %v3972 = vrot.slane %v3967, %v3971
      %v3973 = vlaneseq
      %v3974 = vshrl.u32 %v3973, 7
      %v3975 = vsub.s32 1, %v3974
      %v3976 = vrot.slane %v3967, %v3975
      %v3979 = vmul.f32 %v3965, %v3972
      %v3980 = vmul.f32 %v3964, %v3976
      %v3981 = vadd.f32 %v3957, %v3979
      %v3982 = vadd.f32 %v3958, %v3980
      %s3983 = scalar_lea.vmem %s6, 8
      %v3984 = vld [vmem:[%s3983] sm:$0x3]
      %v3986 = vlaneseq
      %v3987 = vshrl.u32 %v3986, 7
      %v3988 = vsub.s32 0, %v3987
      %v3989 = vrot.slane %v3984, %v3988
      %v3990 = vlaneseq
      %v3991 = vshrl.u32 %v3990, 7
      %v3992 = vsub.s32 1, %v3991
      %v3993 = vrot.slane %v3984, %v3992
      %v3996 = vmul.f32 %v3860, %v3989
      %v3997 = vmul.f32 %v3862, %v3993
      %v3998 = vadd.f32 %v3981, %v3996
      %v3999 = vadd.f32 %v3982, %v3997
      %4000 = vrot.lane.b32.xlu0 %v3864, 127
      %v4001 = vpop.permute.xlu0 %4000
      %4002 = vrot.lane.b32.xlu0 %v3866, 127
      %v4003 = vpop.permute.xlu0 %4002
      %vm4004 = vcmp.lt.s32.totalorder %v3891, 127
      %v4005 = vsel %vm4004, %v4001, %v4003
      %v4006 = vsel %vm4004, %v4003, %v4001
      %s4007 = scalar_lea.vmem %s6, 10
      %v4008 = vld [vmem:[%s4007] sm:$0x3]
      %v4010 = vlaneseq
      %v4011 = vshrl.u32 %v4010, 7
      %v4012 = vsub.s32 0, %v4011
      %v4013 = vrot.slane %v4008, %v4012
      %v4014 = vlaneseq
      %v4015 = vshrl.u32 %v4014, 7
      %v4016 = vsub.s32 1, %v4015
      %v4017 = vrot.slane %v4008, %v4016
      %v4020 = vmul.f32 %v4005, %v4013
      %v4021 = vmul.f32 %v4006, %v4017
      %v4022 = vadd.f32 %v3998, %v4020
      %v4023 = vadd.f32 %v3999, %v4021
      %4024 = vrot.lane.b32.xlu0 %v3870, 113
      %v4025 = vpop.permute.xlu0 %4024
      %4026 = vrot.lane.b32.xlu0 %v3872, 113
      %v4027 = vpop.permute.xlu0 %4026
      %vm4028 = vcmp.lt.s32.totalorder %v3891, 113
      %v4029 = vsel %vm4028, %v4025, %v4027
      %v4030 = vsel %vm4028, %v4027, %v4025
      %s4031 = scalar_lea.vmem %s6, 12
      %v4032 = vld [vmem:[%s4031] sm:$0x3]
      %v4034 = vlaneseq
      %v4035 = vshrl.u32 %v4034, 7
      %v4036 = vsub.s32 0, %v4035
      %v4037 = vrot.slane %v4032, %v4036
      %v4038 = vlaneseq
      %v4039 = vshrl.u32 %v4038, 7
      %v4040 = vsub.s32 1, %v4039
      %v4041 = vrot.slane %v4032, %v4040
      %v4044 = vmul.f32 %v4029, %v4037
      %v4045 = vmul.f32 %v4030, %v4041
      %v4046 = vadd.f32 %v4022, %v4044
      %v4047 = vadd.f32 %v4023, %v4045
      %4048 = vrot.lane.b32.xlu0 %v3874, 112
      %v4049 = vpop.permute.xlu0 %4048
      %4050 = vrot.lane.b32.xlu0 %v3876, 112
      %v4051 = vpop.permute.xlu0 %4050
      %vm4052 = vcmp.lt.s32.totalorder %v3891, 112
      %v4053 = vsel %vm4052, %v4049, %v4051
      %v4054 = vsel %vm4052, %v4051, %v4049
      %s4055 = scalar_lea.vmem %s6, 14
      %v4056 = vld [vmem:[%s4055] sm:$0x3]
      %v4058 = vlaneseq
      %v4059 = vshrl.u32 %v4058, 7
      %v4060 = vsub.s32 0, %v4059
      %v4061 = vrot.slane %v4056, %v4060
      %v4062 = vlaneseq
      %v4063 = vshrl.u32 %v4062, 7
      %v4064 = vsub.s32 1, %v4063
      %v4065 = vrot.slane %v4056, %v4064
      %v4068 = vmul.f32 %v4053, %v4061
      %v4069 = vmul.f32 %v4054, %v4065
      %v4070 = vadd.f32 %v4046, %v4068
      %v4071 = vadd.f32 %v4047, %v4069
      %4072 = vrot.lane.b32.xlu0 %v3880, 111
      %v4073 = vpop.permute.xlu0 %4072
      %4074 = vrot.lane.b32.xlu0 %v3882, 111
      %v4075 = vpop.permute.xlu0 %4074
      %vm4076 = vcmp.lt.s32.totalorder %v3891, 111
      %v4077 = vsel %vm4076, %v4073, %v4075
      %v4078 = vsel %vm4076, %v4075, %v4073
      %s4079 = scalar_lea.vmem %s6, 16
      %v4080 = vld [vmem:[%s4079] sm:$0x3]
      %v4082 = vlaneseq
      %v4083 = vshrl.u32 %v4082, 7
      %v4084 = vsub.s32 0, %v4083
      %v4085 = vrot.slane %v4080, %v4084
      %v4086 = vlaneseq
      %v4087 = vshrl.u32 %v4086, 7
      %v4088 = vsub.s32 1, %v4087
      %v4089 = vrot.slane %v4080, %v4088
      %v4092 = vmul.f32 %v4077, %v4085
      %v4093 = vmul.f32 %v4078, %v4089
      %v4094 = vadd.f32 %v4070, %v4092
      %v4095 = vadd.f32 %v4071, %v4093
      %v4096 = vld [vmem:[%s5] sm:$0xf]
      %4098 = vset.pattern.permute.xlu0 0
      %4099 = vperm.xlu0 %4098, %v4096
      %v4100 = vpop.permute.xlu0 %4099
      %v4102 = vadd.f32 %v4094, %v4100
      %v4103 = vadd.f32 %v4095, %v4100
      %v4106 = vcombine.low %v4102, %v4103
      %4108 = vst [vmem:[%s278] sm:$0xff] %v4106
      %p4109 = scmp.lt.s32.totalorder %s18, 1
      %s4110 = scalar_select %p4109, %s18, 1
      %s4111 = smul.addr %s4110, 2
      %s4112 = smul.addr %s4111, 4
      %s4113 = scalar_lea.vmem %s7, %s4112
      // Predicated region
      $region49: #{diffusion_forward.5} parent=47 // pred_check
        %p4114 = pneg %p188
      $region50: #{diffusion_forward.5} parent=47 // pred_check_branch
        %4116 = sbr.rel (%p4114) target = $region52
      $region51: #{diffusion_forward.5} parent=47 // pred_region
        _
      $region52: #{diffusion_forward.5} parent=47 // pred_fallthru
        _
    $region48: #{diffusion_forward.5} parent=5 // pred_fallthru
      _
    %p4117 = scmp.le.s32.totalorder 2, %s13
    // Predicated region
    $region53: #{diffusion_forward.5} parent=5 // pred_check
      %p4118 = pneg %p4117
    $region54: #{diffusion_forward.5} parent=5 // pred_check_branch
      %4120 = sbr.rel (%p4118) target = $region56
    $region55: #{diffusion_forward.5} parent=5 // pred_region
      %s4121 = ssub.s32 %s13, 2
      // Predicated region
      $region57: #{diffusion_forward.5} parent=55 // pred_check
        %p4122 = pneg %p194
      $region58: #{diffusion_forward.5} parent=55 // pred_check_branch
        %4124 = sbr.rel (%p4122) target = $region60
      $region59: #{diffusion_forward.5} parent=55 // pred_region
        %p4125 = scmp.lt.s32.totalorder %s19, 1
        %s4126 = scalar_select %p4125, %s19, 1
        %s4127 = smul.addr %s4126, 2
        %s4128 = smul.addr %s4127, 4
        %s4129 = scalar_lea.vmem %s7, %s4128
      $region60: #{diffusion_forward.5} parent=55 // pred_fallthru
        _
    $region56: #{diffusion_forward.5} parent=5 // pred_fallthru
      _
  $region6: #{diffusion_forward.5} parent=0 // loop_footer
    %s17 = sadd.s32 1, %s13
  $region7: #{diffusion_forward.5} parent=0 // loop_footer_branch
    %12 = sbr.rel target = $region3
  $region8: #{diffusion_forward.5} parent=0 // loop_exit
    _

// kernel: diffusion_forward.3
$region0: #{diffusion_forward.3}
  #allocation0 [shape = 'u32[]', space=smem, size = 0x4, offset = 0x4, fixed_abs, tag = 'smem constant byte address 0x4 - core index']
  #allocation1 [shape = 'u32[144,128]{1,0:T(1,128)}', space=vmem, size = 0x12000, scoped, tag = 'internal scratch']
  %s0 = inlined_call_operand.vmem [shape: f32[1,320], index: 0, kind: input, shape index: {}]
  %s1 = inlined_call_operand.vmem [shape: bf16[320,1280], index: 1, kind: input, shape index: {}]
  %s2 = inlined_call_operand.vmem [shape: f32[1,1280], index: 2, kind: input, shape index: {}]
  %s3 = inlined_call_operand.vmem [shape: bf16[1280,1280], index: 3, kind: input, shape index: {}]
  %s4 = inlined_call_operand.vmem [shape: f32[1,1280], index: 4, kind: input, shape index: {}]
  %s5 = inlined_call_operand.hbm [shape: f32[1,1280], index: 5, kind: output, shape index: {}]
  %s6 = sld [smem:[#allocation0]]
  $region79: #{diffusion_forward.3} parent=0
    _
  %s8 = ssub.s32 1, %s6
  %s9 = scalar_select 0, %s8, %s6
  $region1: #{diffusion_forward.3} parent=0
    #allocation2 [shape = 'u8[3276800]{0}', space=vmem, size = 0x320000, scoped, tag = 'input window, operand 3']
    #allocation3 [shape = 'u8[5120]{0}', space=vmem, size = 0x1400, scoped, tag = 'output window, operand 0']
    #allocation4 [shape = 's32[2]{0}', space=sflag, size = 0x8, scoped, tag = 'scoped memory for diffusion_forward.3']
    %10 = vsyncpa [#allocation4], 0
    %s11 = scalar_lea.sflag [#allocation4], 1
    %12 = vsyncpa %s11, 0
    loop: start=0, step=1, limit=4
    $region2: #{diffusion_forward.3} parent=1 // loop_pre_header
      _
    $region3: #{diffusion_forward.3} parent=1 // loop_header
      %s14 = sphi 0, %s18
      %p15 = scmp.ge.s32.totalorder %s14, 4
      %s22 = sphi 0, %s22
      %s24 = sphi 0, %s22
      %s25 = sphi 0, %s24
      %s39 = sphi 0, %s25
      %s43 = sphi 0, %s43
      %s45 = sphi 0, %s43
      %s46 = sphi 0, %s45
      %s60 = sphi 0, %s46
      %s64 = sphi 0, %s64
      %s66 = sphi 0, %s64
      %s67 = sphi 0, %s66
      %s81 = sphi 0, %s67
      %s87 = sphi 0, %s89
      %s90 = sphi 0, %s87
      %s91 = sphi 0, %s90
      %s107 = sphi 0, %s91
      %s113 = sphi 0, %s115
      %s116 = sphi 0, %s113
      %s117 = sphi 0, %s116
      %s133 = sphi 0, %s117
      %s139 = sphi 0, %s141
      %s142 = sphi 0, %s139
      %s143 = sphi 0, %s142
      %s159 = sphi 0, %s143
    $region4: #{diffusion_forward.3} parent=1 // loop_header_branch
      %17 = sbr.rel (%p15) target = $region8
    $region5: #{diffusion_forward.3} parent=1 // loop_body
      %s19 = ssub.s32 %s14, 1
      %s20 = ssub.s32 %s14, 2
      %s21 = sadd.s32 %s14, 1
      %s23 = sadd.s32 %s22, 1
      %p26 = scmp.eq.s32.totalorder %s14, 1
      %p27 = scmp.ne.s32.totalorder %s22, %s24
      %p28 = scmp.eq.s32.totalorder %s14, 0
      %p29 = por %p27, %p28
      %p30 = scmp.ne.s32.totalorder %s22, %s24
      %p31 = scmp.eq.s32.totalorder %s19, 1
      %p32 = por %p30, %p31
      %p33 = scmp.ne.s32.totalorder %s24, %s25
      %p34 = scmp.eq.s32.totalorder %s19, 0
      %p35 = por %p33, %p34
      %p36 = scmp.ne.s32.totalorder %s24, %s25
      %p37 = scmp.eq.s32.totalorder %s20, 1
      %p38 = por %p36, %p37
      %p40 = scmp.ne.s32.totalorder %s25, %s39
      %p41 = scmp.eq.s32.totalorder %s20, 0
      %p42 = por %p40, %p41
      %s44 = sadd.s32 %s43, 1
      %p47 = scmp.eq.s32.totalorder %s14, 1
      %p48 = scmp.ne.s32.totalorder %s43, %s45
      %p49 = scmp.eq.s32.totalorder %s14, 0
      %p50 = por %p48, %p49
      %p51 = scmp.ne.s32.totalorder %s43, %s45
      %p52 = scmp.eq.s32.totalorder %s19, 1
      %p53 = por %p51, %p52
      %p54 = scmp.ne.s32.totalorder %s45, %s46
      %p55 = scmp.eq.s32.totalorder %s19, 0
      %p56 = por %p54, %p55
      %p57 = scmp.ne.s32.totalorder %s45, %s46
      %p58 = scmp.eq.s32.totalorder %s20, 1
      %p59 = por %p57, %p58
      %p61 = scmp.ne.s32.totalorder %s46, %s60
      %p62 = scmp.eq.s32.totalorder %s20, 0
      %p63 = por %p61, %p62
      %s65 = sadd.s32 %s64, 1
      %p68 = scmp.eq.s32.totalorder %s14, 1
      %p69 = scmp.ne.s32.totalorder %s64, %s66
      %p70 = scmp.eq.s32.totalorder %s14, 0
      %p71 = por %p69, %p70
      %p72 = scmp.ne.s32.totalorder %s64, %s66
      %p73 = scmp.eq.s32.totalorder %s19, 1
      %p74 = por %p72, %p73
      %p75 = scmp.ne.s32.totalorder %s66, %s67
      %p76 = scmp.eq.s32.totalorder %s19, 0
      %p77 = por %p75, %p76
      %p78 = scmp.ne.s32.totalorder %s66, %s67
      %p79 = scmp.eq.s32.totalorder %s20, 1
      %p80 = por %p78, %p79
      %p82 = scmp.ne.s32.totalorder %s67, %s81
      %p83 = scmp.eq.s32.totalorder %s20, 0
      %p84 = por %p82, %p83
      %s85 = ssub.s32 %s14, %s21
      %p86 = scmp.eq.s32.totalorder %s85, 0
      %s88 = sadd.s32 %s87, 1
      %s89 = scalar_select %p86, %s87, %s88
      %p92 = pneg %p86
      %p93 = scmp.eq.s32.totalorder %s14, 1
      %p94 = por %p92, %p93
      %p95 = scmp.ne.s32.totalorder %s87, %s90
      %p96 = scmp.eq.s32.totalorder %s14, 0
      %p97 = por %p95, %p96
      %p98 = scmp.ne.s32.totalorder %s87, %s90
      %p99 = scmp.eq.s32.totalorder %s19, 1
      %p100 = por %p98, %p99
      %p101 = scmp.ne.s32.totalorder %s90, %s91
      %p102 = scmp.eq.s32.totalorder %s19, 0
      %p103 = por %p101, %p102
      %p104 = scmp.ne.s32.totalorder %s90, %s91
      %p105 = scmp.eq.s32.totalorder %s20, 1
      %p106 = por %p104, %p105
      %p108 = scmp.ne.s32.totalorder %s91, %s107
      %p109 = scmp.eq.s32.totalorder %s20, 0
      %p110 = por %p108, %p109
      %s111 = ssub.s32 %s14, %s21
      %p112 = scmp.eq.s32.totalorder %s111, 0
      %s114 = sadd.s32 %s113, 1
      %s115 = scalar_select %p112, %s113, %s114
      %p118 = pneg %p112
      %p119 = scmp.eq.s32.totalorder %s14, 1
      %p120 = por %p118, %p119
      %p121 = scmp.ne.s32.totalorder %s113, %s116
      %p122 = scmp.eq.s32.totalorder %s14, 0
      %p123 = por %p121, %p122
      %p124 = scmp.ne.s32.totalorder %s113, %s116
      %p125 = scmp.eq.s32.totalorder %s19, 1
      %p126 = por %p124, %p125
      %p127 = scmp.ne.s32.totalorder %s116, %s117
      %p128 = scmp.eq.s32.totalorder %s19, 0
      %p129 = por %p127, %p128
      %p130 = scmp.ne.s32.totalorder %s116, %s117
      %p131 = scmp.eq.s32.totalorder %s20, 1
      %p132 = por %p130, %p131
      %p134 = scmp.ne.s32.totalorder %s117, %s133
      %p135 = scmp.eq.s32.totalorder %s20, 0
      %p136 = por %p134, %p135
      %s137 = ssub.s32 %s14, %s21
      %p138 = scmp.eq.s32.totalorder %s137, 0
      %s140 = sadd.s32 %s139, 1
      %s141 = scalar_select %p138, %s139, %s140
      %p144 = pneg %p138
      %p145 = scmp.eq.s32.totalorder %s14, 1
      %p146 = por %p144, %p145
      %p147 = scmp.ne.s32.totalorder %s139, %s142
      %p148 = scmp.eq.s32.totalorder %s14, 0
      %p149 = por %p147, %p148
      %p150 = scmp.ne.s32.totalorder %s139, %s142
      %p151 = scmp.eq.s32.totalorder %s19, 1
      %p152 = por %p150, %p151
      %p153 = scmp.ne.s32.totalorder %s142, %s143
      %p154 = scmp.eq.s32.totalorder %s19, 0
      %p155 = por %p153, %p154
      %p156 = scmp.ne.s32.totalorder %s142, %s143
      %p157 = scmp.eq.s32.totalorder %s20, 1
      %p158 = por %p156, %p157
      %p160 = scmp.ne.s32.totalorder %s143, %s159
      %p161 = scmp.eq.s32.totalorder %s20, 0
      %p162 = por %p160, %p161
      %p163 = scmp.le.s32.totalorder 1, %s14
      %p164 = scmp.lt.s32.totalorder %s14, 3
      %p165 = pnand %p163, %p164
      %p166 = pneg %p165
      // Predicated region
      $region9: #{diffusion_forward.3} parent=5 // pred_check
        _
      $region10: #{diffusion_forward.3} parent=5 // pred_check_branch
        %168 = sbr.rel (%p165) target = $region12
      $region11: #{diffusion_forward.3} parent=5 // pred_region
        %s169 = ssub.s32 %s14, 1
        // Predicated region
        $region13: #{diffusion_forward.3} parent=11 // pred_check
          %p170 = pneg %p35
        $region14: #{diffusion_forward.3} parent=11 // pred_check_branch
          %172 = sbr.rel (%p170) target = $region16
        $region15: #{diffusion_forward.3} parent=11 // pred_region
          _
        $region16: #{diffusion_forward.3} parent=11 // pred_fallthru
          _
        // Predicated region
        $region17: #{diffusion_forward.3} parent=11 // pred_check
          %p173 = pneg %p56
        $region18: #{diffusion_forward.3} parent=11 // pred_check_branch
          %175 = sbr.rel (%p173) target = $region20
        $region19: #{diffusion_forward.3} parent=11 // pred_region
          _
        $region20: #{diffusion_forward.3} parent=11 // pred_fallthru
          _
        // Predicated region
        $region21: #{diffusion_forward.3} parent=11 // pred_check
          %p176 = pneg %p77
        $region22: #{diffusion_forward.3} parent=11 // pred_check_branch
          %178 = sbr.rel (%p176) target = $region24
        $region23: #{diffusion_forward.3} parent=11 // pred_region
          _
        $region24: #{diffusion_forward.3} parent=11 // pred_fallthru
          _
      $region12: #{diffusion_forward.3} parent=5 // pred_fallthru
        _
      %p179 = scmp.lt.s32.totalorder %s14, 2
      // Predicated region
      $region25: #{diffusion_forward.3} parent=5 // pred_check
        %p180 = pneg %p179
      $region26: #{diffusion_forward.3} parent=5 // pred_check_branch
        %182 = sbr.rel (%p180) target = $region28
      $region27: #{diffusion_forward.3} parent=5 // pred_region
        // Predicated region
        $region29: #{diffusion_forward.3} parent=27 // pred_check
          %p183 = pneg %p97
        $region30: #{diffusion_forward.3} parent=27 // pred_check_branch
          %185 = sbr.rel (%p183) target = $region32
        $region31: #{diffusion_forward.3} parent=27 // pred_region
          %s186 = sand.u32 %s87, 1
          %s187 = sand.u32 %s87, 1
          %s188 = smul.addr %s187, 3200
          %s189 = scalar_lea.vmem [#allocation2], %s188
          %s190 = smul.u32 5, %s14
          %s191 = smul.addr %s190, 4
          %s192 = scalar_lea.vmem %s3, %s191
          // Predicated region
          $region33: #{diffusion_forward.3} parent=31 // pred_check
            _
          $region34: #{diffusion_forward.3} parent=31 // pred_check_branch
            %194 = sbr.rel (0) target = $region36
          $region35: #{diffusion_forward.3} parent=31 // pred_region
            // Predicated region
            $region37: #{diffusion_forward.3} parent=35 // pred_check
              _
            $region38: #{diffusion_forward.3} parent=35 // pred_check_branch
              %196 = sbr.rel (0) target = $region40
            $region39: #{diffusion_forward.3} parent=35 // pred_region
              %s197 = scalar_lea.vmem %s192, 16
              %s198 = scalar_lea.vmem %s189, 16 [#allocation2]
              loop: start=0, step=1, limit=1
              $region41: #{diffusion_forward.3} parent=39 // loop_pre_header
                _
              $region42: #{diffusion_forward.3} parent=39 // loop_header
                %s200 = sphi 0, %s204
                %p201 = scmp.ge.s32.totalorder %s200, 1
                %s205 = sphi %s192, %s192
                %s206 = sphi %s189, %s189
              $region43: #{diffusion_forward.3} parent=39 // loop_header_branch
                %203 = sbr.rel (%p201) target = $region47
              $region44: #{diffusion_forward.3} parent=39 // loop_body
                %v207 = vld [vmem:[%s205] sm:$0xff]
                %208 = vst [vmem:[%s206] sm:$0xff] %v207
                %v209 = vld [vmem:[%s205 + $0x8] sm:$0xff]
                %210 = vst [vmem:[%s206 + $0x8] sm:$0xff] %v209
                %v211 = vld [vmem:[%s205 + $0x28] sm:$0xff]
                %212 = vst [vmem:[%s206 + $0x14] sm:$0xff] %v211
                %v213 = vld [vmem:[%s205 + $0x30] sm:$0xff]
                %214 = vst [vmem:[%s206 + $0x1c] sm:$0xff] %v213
                %v215 = vld [vmem:[%s205 + $0x50] sm:$0xff]
                %216 = vst [vmem:[%s206 + $0x28] sm:$0xff] %v215
                %v217 = vld [vmem:[%s205 + $0x58] sm:$0xff]
                %218 = vst [vmem:[%s206 + $0x30] sm:$0xff] %v217
                %v219 = vld [vmem:[%s205 + $0x78] sm:$0xff]
                %220 = vst [vmem:[%s206 + $0x3c] sm:$0xff] %v219
                %v221 = vld [vmem:[%s205 + $0x80] sm:$0xff]
                %222 = vst [vmem:[%s206 + $0x44] sm:$0xff] %v221
                %v223 = vld [vmem:[%s205 + $0xa0] sm:$0xff]
                %224 = vst [vmem:[%s206 + $0x50] sm:$0xff] %v223
                %v225 = vld [vmem:[%s205 + $0xa8] sm:$0xff]
                %226 = vst [vmem:[%s206 + $0x58] sm:$0xff] %v225
                %v227 = vld [vmem:[%s205 + $0xc8] sm:$0xff]
                %228 = vst [vmem:[%s206 + $0x64] sm:$0xff] %v227
                %v229 = vld [vmem:[%s205 + $0xd0] sm:$0xff]
                %230 = vst [vmem:[%s206 + $0x6c] sm:$0xff] %v229
                %v231 = vld [vmem:[%s205 + $0xf0] sm:$0xff]
                %232 = vst [vmem:[%s206 + $0x78] sm:$0xff] %v231
                %v233 = vld [vmem:[%s205 + $0xf8] sm:$0xff]
                %234 = vst [vmem:[%s206 + $0x80] sm:$0xff] %v233
                %v235 = vld [vmem:[%s205 + $0x118] sm:$0xff]
                %236 = vst [vmem:[%s206 + $0x8c] sm:$0xff] %v235
                %v237 = vld [vmem:[%s205 + $0x120] sm:$0xff]
                %238 = vst [vmem:[%s206 + $0x94] sm:$0xff] %v237
                %v239 = vld [vmem:[%s205 + $0x140] sm:$0xff]
                %240 = vst [vmem:[%s206 + $0xa0] sm:$0xff] %v239
                %v241 = vld [vmem:[%s205 + $0x148] sm:$0xff]
                %242 = vst [vmem:[%s206 + $0xa8] sm:$0xff] %v241
                %v243 = vld [vmem:[%s205 + $0x168] sm:$0xff]
                %244 = vst [vmem:[%s206 + $0xb4] sm:$0xff] %v243
                %v245 = vld [vmem:[%s205 + $0x170] sm:$0xff]
                %246 = vst [vmem:[%s206 + $0xbc] sm:$0xff] %v245
                %v247 = vld [vmem:[%s205 + $0x190] sm:$0xff]
                %248 = vst [vmem:[%s206 + $0xc8] sm:$0xff] %v247
                %v249 = vld [vmem:[%s205 + $0x198] sm:$0xff]
                %250 = vst [vmem:[%s206 + $0xd0] sm:$0xff] %v249
                %v251 = vld [vmem:[%s205 + $0x1b8] sm:$0xff]
                %252 = vst [vmem:[%s206 + $0xdc] sm:$0xff] %v251
                %v253 = vld [vmem:[%s205 + $0x1c0] sm:$0xff]
                %254 = vst [vmem:[%s206 + $0xe4] sm:$0xff] %v253
                %v255 = vld [vmem:[%s205 + $0x1e0] sm:$0xff]
                %256 = vst [vmem:[%s206 + $0xf0] sm:$0xff] %v255
                %v257 = vld [vmem:[%s205 + $0x1e8] sm:$0xff]
                %258 = vst [vmem:[%s206 + $0xf8] sm:$0xff] %v257
                %v259 = vld [vmem:[%s205 + $0x208] sm:$0xff]
                %260 = vst [vmem:[%s206 + $0x104] sm:$0xff] %v259
                %v261 = vld [vmem:[%s205 + $0x210] sm:$0xff]
                %262 = vst [vmem:[%s206 + $0x10c] sm:$0xff] %v261
                %v263 = vld [vmem:[%s205 + $0x230] sm:$0xff]
                %264 = vst [vmem:[%s206 + $0x118] sm:$0xff] %v263
                %v265 = vld [vmem:[%s205 + $0x238] sm:$0xff]
                %266 = vst [vmem:[%s206 + $0x120] sm:$0xff] %v265
                %v267 = vld [vmem:[%s205 + $0x258] sm:$0xff]
                %268 = vst [vmem:[%s206 + $0x12c] sm:$0xff] %v267
                %v269 = vld [vmem:[%s205 + $0x260] sm:$0xff]
                %270 = vst [vmem:[%s206 + $0x134] sm:$0xff] %v269
                %v271 = vld [vmem:[%s205 + $0x280] sm:$0xff]
                %272 = vst [vmem:[%s206 + $0x140] sm:$0xff] %v271
                %v273 = vld [vmem:[%s205 + $0x288] sm:$0xff]
                %274 = vst [vmem:[%s206 + $0x148] sm:$0xff] %v273
                %v275 = vld [vmem:[%s205 + $0x2a8] sm:$0xff]
                %276 = vst [vmem:[%s206 + $0x154] sm:$0xff] %v275
                %v277 = vld [vmem:[%s205 + $0x2b0] sm:$0xff]
                %278 = vst [vmem:[%s206 + $0x15c] sm:$0xff] %v277
                %v279 = vld [vmem:[%s205 + $0x2d0] sm:$0xff]
                %280 = vst [vmem:[%s206 + $0x168] sm:$0xff] %v279
                %v281 = vld [vmem:[%s205 + $0x2d8] sm:$0xff]
                %282 = vst [vmem:[%s206 + $0x170] sm:$0xff] %v281
                %v283 = vld [vmem:[%s205 + $0x2f8] sm:$0xff]
                %284 = vst [vmem:[%s206 + $0x17c] sm:$0xff] %v283
                %v285 = vld [vmem:[%s205 + $0x300] sm:$0xff]
                %286 = vst [vmem:[%s206 + $0x184] sm:$0xff] %v285
                %v287 = vld [vmem:[%s205 + $0x320] sm:$0xff]
                %288 = vst [vmem:[%s206 + $0x190] sm:$0xff] %v287
                %v289 = vld [vmem:[%s205 + $0x328] sm:$0xff]
                %290 = vst [vmem:[%s206 + $0x198] sm:$0xff] %v289
                %v291 = vld [vmem:[%s205 + $0x348] sm:$0xff]
                %292 = vst [vmem:[%s206 + $0x1a4] sm:$0xff] %v291
                %v293 = vld [vmem:[%s205 + $0x350] sm:$0xff]
                %294 = vst [vmem:[%s206 + $0x1ac] sm:$0xff] %v293
                %v295 = vld [vmem:[%s205 + $0x370] sm:$0xff]
                %296 = vst [vmem:[%s206 + $0x1b8] sm:$0xff] %v295
                %v297 = vld [vmem:[%s205 + $0x378] sm:$0xff]
                %298 = vst [vmem:[%s206 + $0x1c0] sm:$0xff] %v297
                %v299 = vld [vmem:[%s205 + $0x398] sm:$0xff]
                %300 = vst [vmem:[%s206 + $0x1cc] sm:$0xff] %v299
                %v301 = vld [vmem:[%s205 + $0x3a0] sm:$0xff]
                %302 = vst [vmem:[%s206 + $0x1d4] sm:$0xff] %v301
                %v303 = vld [vmem:[%s205 + $0x3c0] sm:$0xff]
                %304 = vst [vmem:[%s206 + $0x1e0] sm:$0xff] %v303
                %v305 = vld [vmem:[%s205 + $0x3c8] sm:$0xff]
                %306 = vst [vmem:[%s206 + $0x1e8] sm:$0xff] %v305
                %v307 = vld [vmem:[%s205 + $0x3e8] sm:$0xff]
                %308 = vst [vmem:[%s206 + $0x1f4] sm:$0xff] %v307
                %v309 = vld [vmem:[%s205 + $0x3f0] sm:$0xff]
                %310 = vst [vmem:[%s206 + $0x1fc] sm:$0xff] %v309
                %v311 = vld [vmem:[%s205 + $0x410] sm:$0xff]
                %312 = vst [vmem:[%s206 + $0x208] sm:$0xff] %v311
                %v313 = vld [vmem:[%s205 + $0x418] sm:$0xff]
                %314 = vst [vmem:[%s206 + $0x210] sm:$0xff] %v313
                %v315 = vld [vmem:[%s205 + $0x438] sm:$0xff]
                %316 = vst [vmem:[%s206 + $0x21c] sm:$0xff] %v315
                %v317 = vld [vmem:[%s205 + $0x440] sm:$0xff]
                %318 = vst [vmem:[%s206 + $0x224] sm:$0xff] %v317
                %v319 = vld [vmem:[%s205 + $0x460] sm:$0xff]
                %320 = vst [vmem:[%s206 + $0x230] sm:$0xff] %v319
                %v321 = vld [vmem:[%s205 + $0x468] sm:$0xff]
                %322 = vst [vmem:[%s206 + $0x238] sm:$0xff] %v321
                %v323 = vld [vmem:[%s205 + $0x488] sm:$0xff]
                %324 = vst [vmem:[%s206 + $0x244] sm:$0xff] %v323
                %v325 = vld [vmem:[%s205 + $0x490] sm:$0xff]
                %326 = vst [vmem:[%s206 + $0x24c] sm:$0xff] %v325
                %v327 = vld [vmem:[%s205 + $0x4b0] sm:$0xff]
                %328 = vst [vmem:[%s206 + $0x258] sm:$0xff] %v327
                %v329 = vld [vmem:[%s205 + $0x4b8] sm:$0xff]
                %330 = vst [vmem:[%s206 + $0x260] sm:$0xff] %v329
                %v331 = vld [vmem:[%s205 + $0x4d8] sm:$0xff]
                %332 = vst [vmem:[%s206 + $0x26c] sm:$0xff] %v331
                %v333 = vld [vmem:[%s205 + $0x4e0] sm:$0xff]
                %334 = vst [vmem:[%s206 + $0x274] sm:$0xff] %v333
                %v335 = vld [vmem:[%s205 + $0x500] sm:$0xff]
                %336 = vst [vmem:[%s206 + $0x280] sm:$0xff] %v335
                %v337 = vld [vmem:[%s205 + $0x508] sm:$0xff]
                %338 = vst [vmem:[%s206 + $0x288] sm:$0xff] %v337
                %v339 = vld [vmem:[%s205 + $0x528] sm:$0xff]
                %340 = vst [vmem:[%s206 + $0x294] sm:$0xff] %v339
                %v341 = vld [vmem:[%s205 + $0x530] sm:$0xff]
                %342 = vst [vmem:[%s206 + $0x29c] sm:$0xff] %v341
                %v343 = vld [vmem:[%s205 + $0x550] sm:$0xff]
                %344 = vst [vmem:[%s206 + $0x2a8] sm:$0xff] %v343
                %v345 = vld [vmem:[%s205 + $0x558] sm:$0xff]
                %346 = vst [vmem:[%s206 + $0x2b0] sm:$0xff] %v345
                %v347 = vld [vmem:[%s205 + $0x578] sm:$0xff]
                %348 = vst [vmem:[%s206 + $0x2bc] sm:$0xff] %v347
                %v349 = vld [vmem:[%s205 + $0x580] sm:$0xff]
                %350 = vst [vmem:[%s206 + $0x2c4] sm:$0xff] %v349
                %v351 = vld [vmem:[%s205 + $0x5a0] sm:$0xff]
                %352 = vst [vmem:[%s206 + $0x2d0] sm:$0xff] %v351
                %v353 = vld [vmem:[%s205 + $0x5a8] sm:$0xff]
                %354 = vst [vmem:[%s206 + $0x2d8] sm:$0xff] %v353
                %v355 = vld [vmem:[%s205 + $0x5c8] sm:$0xff]
                %356 = vst [vmem:[%s206 + $0x2e4] sm:$0xff] %v355
                %v357 = vld [vmem:[%s205 + $0x5d0] sm:$0xff]
                %358 = vst [vmem:[%s206 + $0x2ec] sm:$0xff] %v357
                %v359 = vld [vmem:[%s205 + $0x5f0] sm:$0xff]
                %360 = vst [vmem:[%s206 + $0x2f8] sm:$0xff] %v359
                %v361 = vld [vmem:[%s205 + $0x5f8] sm:$0xff]
                %362 = vst [vmem:[%s206 + $0x300] sm:$0xff] %v361
                %v363 = vld [vmem:[%s205 + $0x618] sm:$0xff]
                %364 = vst [vmem:[%s206 + $0x30c] sm:$0xff] %v363
                %v365 = vld [vmem:[%s205 + $0x620] sm:$0xff]
                %366 = vst [vmem:[%s206 + $0x314] sm:$0xff] %v365
                %v367 = vld [vmem:[%s205 + $0x640] sm:$0xff]
                %368 = vst [vmem:[%s206 + $0x320] sm:$0xff] %v367
                %v369 = vld [vmem:[%s205 + $0x648] sm:$0xff]
                %370 = vst [vmem:[%s206 + $0x328] sm:$0xff] %v369
                %v371 = vld [vmem:[%s205 + $0x668] sm:$0xff]
                %372 = vst [vmem:[%s206 + $0x334] sm:$0xff] %v371
                %v373 = vld [vmem:[%s205 + $0x670] sm:$0xff]
                %374 = vst [vmem:[%s206 + $0x33c] sm:$0xff] %v373
                %v375 = vld [vmem:[%s205 + $0x690] sm:$0xff]
                %376 = vst [vmem:[%s206 + $0x348] sm:$0xff] %v375
                %v377 = vld [vmem:[%s205 + $0x698] sm:$0xff]
                %378 = vst [vmem:[%s206 + $0x350] sm:$0xff] %v377
                %v379 = vld [vmem:[%s205 + $0x6b8] sm:$0xff]
                %380 = vst [vmem:[%s206 + $0x35c] sm:$0xff] %v379
                %v381 = vld [vmem:[%s205 + $0x6c0] sm:$0xff]
                %382 = vst [vmem:[%s206 + $0x364] sm:$0xff] %v381
                %v383 = vld [vmem:[%s205 + $0x6e0] sm:$0xff]
                %384 = vst [vmem:[%s206 + $0x370] sm:$0xff] %v383
                %v385 = vld [vmem:[%s205 + $0x6e8] sm:$0xff]
                %386 = vst [vmem:[%s206 + $0x378] sm:$0xff] %v385
                %v387 = vld [vmem:[%s205 + $0x708] sm:$0xff]
                %388 = vst [vmem:[%s206 + $0x384] sm:$0xff] %v387
                %v389 = vld [vmem:[%s205 + $0x710] sm:$0xff]
                %390 = vst [vmem:[%s206 + $0x38c] sm:$0xff] %v389
                %v391 = vld [vmem:[%s205 + $0x730] sm:$0xff]
                %392 = vst [vmem:[%s206 + $0x398] sm:$0xff] %v391
                %v393 = vld [vmem:[%s205 + $0x738] sm:$0xff]
                %394 = vst [vmem:[%s206 + $0x3a0] sm:$0xff] %v393
                %v395 = vld [vmem:[%s205 + $0x758] sm:$0xff]
                %396 = vst [vmem:[%s206 + $0x3ac] sm:$0xff] %v395
                %v397 = vld [vmem:[%s205 + $0x760] sm:$0xff]
                %398 = vst [vmem:[%s206 + $0x3b4] sm:$0xff] %v397
                %v399 = vld [vmem:[%s205 + $0x780] sm:$0xff]
                %400 = vst [vmem:[%s206 + $0x3c0] sm:$0xff] %v399
                %v401 = vld [vmem:[%s205 + $0x788] sm:$0xff]
                %402 = vst [vmem:[%s206 + $0x3c8] sm:$0xff] %v401
                %v403 = vld [vmem:[%s205 + $0x7a8] sm:$0xff]
                %404 = vst [vmem:[%s206 + $0x3d4] sm:$0xff] %v403
                %v405 = vld [vmem:[%s205 + $0x7b0] sm:$0xff]
                %406 = vst [vmem:[%s206 + $0x3dc] sm:$0xff] %v405
                %v407 = vld [vmem:[%s205 + $0x7d0] sm:$0xff]
                %408 = vst [vmem:[%s206 + $0x3e8] sm:$0xff] %v407
                %v409 = vld [vmem:[%s205 + $0x7d8] sm:$0xff]
                %410 = vst [vmem:[%s206 + $0x3f0] sm:$0xff] %v409
                %v411 = vld [vmem:[%s205 + $0x7f8] sm:$0xff]
                %412 = vst [vmem:[%s206 + $0x3fc] sm:$0xff] %v411
                %v413 = vld [vmem:[%s205 + $0x800] sm:$0xff]
                %414 = vst [vmem:[%s206 + $0x404] sm:$0xff] %v413
                %v415 = vld [vmem:[%s205 + $0x820] sm:$0xff]
                %416 = vst [vmem:[%s206 + $0x410] sm:$0xff] %v415
                %v417 = vld [vmem:[%s205 + $0x828] sm:$0xff]
                %418 = vst [vmem:[%s206 + $0x418] sm:$0xff] %v417
                %v419 = vld [vmem:[%s205 + $0x848] sm:$0xff]
                %420 = vst [vmem:[%s206 + $0x424] sm:$0xff] %v419
                %v421 = vld [vmem:[%s205 + $0x850] sm:$0xff]
                %422 = vst [vmem:[%s206 + $0x42c] sm:$0xff] %v421
                %v423 = vld [vmem:[%s205 + $0x870] sm:$0xff]
                %424 = vst [vmem:[%s206 + $0x438] sm:$0xff] %v423
                %v425 = vld [vmem:[%s205 + $0x878] sm:$0xff]
                %426 = vst [vmem:[%s206 + $0x440] sm:$0xff] %v425
                %v427 = vld [vmem:[%s205 + $0x898] sm:$0xff]
                %428 = vst [vmem:[%s206 + $0x44c] sm:$0xff] %v427
                %v429 = vld [vmem:[%s205 + $0x8a0] sm:$0xff]
                %430 = vst [vmem:[%s206 + $0x454] sm:$0xff] %v429
                %v431 = vld [vmem:[%s205 + $0x8c0] sm:$0xff]
                %432 = vst [vmem:[%s206 + $0x460] sm:$0xff] %v431
                %v433 = vld [vmem:[%s205 + $0x8c8] sm:$0xff]
                %434 = vst [vmem:[%s206 + $0x468] sm:$0xff] %v433
                %v435 = vld [vmem:[%s205 + $0x8e8] sm:$0xff]
                %436 = vst [vmem:[%s206 + $0x474] sm:$0xff] %v435
                %v437 = vld [vmem:[%s205 + $0x8f0] sm:$0xff]
                %438 = vst [vmem:[%s206 + $0x47c] sm:$0xff] %v437
                %v439 = vld [vmem:[%s205 + $0x910] sm:$0xff]
                %440 = vst [vmem:[%s206 + $0x488] sm:$0xff] %v439
                %v441 = vld [vmem:[%s205 + $0x918] sm:$0xff]
                %442 = vst [vmem:[%s206 + $0x490] sm:$0xff] %v441
                %v443 = vld [vmem:[%s205 + $0x938] sm:$0xff]
                %444 = vst [vmem:[%s206 + $0x49c] sm:$0xff] %v443
                %v445 = vld [vmem:[%s205 + $0x940] sm:$0xff]
                %446 = vst [vmem:[%s206 + $0x4a4] sm:$0xff] %v445
                %v447 = vld [vmem:[%s205 + $0x960] sm:$0xff]
                %448 = vst [vmem:[%s206 + $0x4b0] sm:$0xff] %v447
                %v449 = vld [vmem:[%s205 + $0x968] sm:$0xff]
                %450 = vst [vmem:[%s206 + $0x4b8] sm:$0xff] %v449
                %v451 = vld [vmem:[%s205 + $0x988] sm:$0xff]
                %452 = vst [vmem:[%s206 + $0x4c4] sm:$0xff] %v451
                %v453 = vld [vmem:[%s205 + $0x990] sm:$0xff]
                %454 = vst [vmem:[%s206 + $0x4cc] sm:$0xff] %v453
                %v455 = vld [vmem:[%s205 + $0x9b0] sm:$0xff]
                %456 = vst [vmem:[%s206 + $0x4d8] sm:$0xff] %v455
                %v457 = vld [vmem:[%s205 + $0x9b8] sm:$0xff]
                %458 = vst [vmem:[%s206 + $0x4e0] sm:$0xff] %v457
                %v459 = vld [vmem:[%s205 + $0x9d8] sm:$0xff]
                %460 = vst [vmem:[%s206 + $0x4ec] sm:$0xff] %v459
                %v461 = vld [vmem:[%s205 + $0x9e0] sm:$0xff]
                %462 = vst [vmem:[%s206 + $0x4f4] sm:$0xff] %v461
                %v463 = vld [vmem:[%s205 + $0xa00] sm:$0xff]
                %464 = vst [vmem:[%s206 + $0x500] sm:$0xff] %v463
                %v465 = vld [vmem:[%s205 + $0xa08] sm:$0xff]
                %466 = vst [vmem:[%s206 + $0x508] sm:$0xff] %v465
                %v467 = vld [vmem:[%s205 + $0xa28] sm:$0xff]
                %468 = vst [vmem:[%s206 + $0x514] sm:$0xff] %v467
                %v469 = vld [vmem:[%s205 + $0xa30] sm:$0xff]
                %470 = vst [vmem:[%s206 + $0x51c] sm:$0xff] %v469
                %v471 = vld [vmem:[%s205 + $0xa50] sm:$0xff]
                %472 = vst [vmem:[%s206 + $0x528] sm:$0xff] %v471
                %v473 = vld [vmem:[%s205 + $0xa58] sm:$0xff]
                %474 = vst [vmem:[%s206 + $0x530] sm:$0xff] %v473
                %v475 = vld [vmem:[%s205 + $0xa78] sm:$0xff]
                %476 = vst [vmem:[%s206 + $0x53c] sm:$0xff] %v475
                %v477 = vld [vmem:[%s205 + $0xa80] sm:$0xff]
                %478 = vst [vmem:[%s206 + $0x544] sm:$0xff] %v477
                %v479 = vld [vmem:[%s205 + $0xaa0] sm:$0xff]
                %480 = vst [vmem:[%s206 + $0x550] sm:$0xff] %v479
                %v481 = vld [vmem:[%s205 + $0xaa8] sm:$0xff]
                %482 = vst [vmem:[%s206 + $0x558] sm:$0xff] %v481
                %v483 = vld [vmem:[%s205 + $0xac8] sm:$0xff]
                %484 = vst [vmem:[%s206 + $0x564] sm:$0xff] %v483
                %v485 = vld [vmem:[%s205 + $0xad0] sm:$0xff]
                %486 = vst [vmem:[%s206 + $0x56c] sm:$0xff] %v485
                %v487 = vld [vmem:[%s205 + $0xaf0] sm:$0xff]
                %488 = vst [vmem:[%s206 + $0x578] sm:$0xff] %v487
                %v489 = vld [vmem:[%s205 + $0xaf8] sm:$0xff]
                %490 = vst [vmem:[%s206 + $0x580] sm:$0xff] %v489
                %v491 = vld [vmem:[%s205 + $0xb18] sm:$0xff]
                %492 = vst [vmem:[%s206 + $0x58c] sm:$0xff] %v491
                %v493 = vld [vmem:[%s205 + $0xb20] sm:$0xff]
                %494 = vst [vmem:[%s206 + $0x594] sm:$0xff] %v493
                %v495 = vld [vmem:[%s205 + $0xb40] sm:$0xff]
                %496 = vst [vmem:[%s206 + $0x5a0] sm:$0xff] %v495
                %v497 = vld [vmem:[%s205 + $0xb48] sm:$0xff]
                %498 = vst [vmem:[%s206 + $0x5a8] sm:$0xff] %v497
                %v499 = vld [vmem:[%s205 + $0xb68] sm:$0xff]
                %500 = vst [vmem:[%s206 + $0x5b4] sm:$0xff] %v499
                %v501 = vld [vmem:[%s205 + $0xb70] sm:$0xff]
                %502 = vst [vmem:[%s206 + $0x5bc] sm:$0xff] %v501
                %v503 = vld [vmem:[%s205 + $0xb90] sm:$0xff]
                %504 = vst [vmem:[%s206 + $0x5c8] sm:$0xff] %v503
                %v505 = vld [vmem:[%s205 + $0xb98] sm:$0xff]
                %506 = vst [vmem:[%s206 + $0x5d0] sm:$0xff] %v505
                %v507 = vld [vmem:[%s205 + $0xbb8] sm:$0xff]
                %508 = vst [vmem:[%s206 + $0x5dc] sm:$0xff] %v507
                %v509 = vld [vmem:[%s205 + $0xbc0] sm:$0xff]
                %510 = vst [vmem:[%s206 + $0x5e4] sm:$0xff] %v509
                %v511 = vld [vmem:[%s205 + $0xbe0] sm:$0xff]
                %512 = vst [vmem:[%s206 + $0x5f0] sm:$0xff] %v511
                %v513 = vld [vmem:[%s205 + $0xbe8] sm:$0xff]
                %514 = vst [vmem:[%s206 + $0x5f8] sm:$0xff] %v513
                %v515 = vld [vmem:[%s205 + $0xc08] sm:$0xff]
                %516 = vst [vmem:[%s206 + $0x604] sm:$0xff] %v515
                %v517 = vld [vmem:[%s205 + $0xc10] sm:$0xff]
                %518 = vst [vmem:[%s206 + $0x60c] sm:$0xff] %v517
                %v519 = vld [vmem:[%s205 + $0xc30] sm:$0xff]
                %520 = vst [vmem:[%s206 + $0x618] sm:$0xff] %v519
                %v521 = vld [vmem:[%s205 + $0xc38] sm:$0xff]
                %522 = vst [vmem:[%s206 + $0x620] sm:$0xff] %v521
                %v523 = vld [vmem:[%s205 + $0xc58] sm:$0xff]
                %524 = vst [vmem:[%s206 + $0x62c] sm:$0xff] %v523
                %v525 = vld [vmem:[%s205 + $0xc60] sm:$0xff]
                %526 = vst [vmem:[%s206 + $0x634] sm:$0xff] %v525
                %v527 = vld [vmem:[%s205 + $0xc80] sm:$0xff]
                %528 = vst [vmem:[%s206 + $0x640] sm:$0xff] %v527
                %v529 = vld [vmem:[%s205 + $0xc88] sm:$0xff]
                %530 = vst [vmem:[%s206 + $0x648] sm:$0xff] %v529
                %v531 = vld [vmem:[%s205 + $0xca8] sm:$0xff]
                %532 = vst [vmem:[%s206 + $0x654] sm:$0xff] %v531
                %v533 = vld [vmem:[%s205 + $0xcb0] sm:$0xff]
                %534 = vst [vmem:[%s206 + $0x65c] sm:$0xff] %v533
                %v535 = vld [vmem:[%s205 + $0xcd0] sm:$0xff]
                %536 = vst [vmem:[%s206 + $0x668] sm:$0xff] %v535
                %v537 = vld [vmem:[%s205 + $0xcd8] sm:$0xff]
                %538 = vst [vmem:[%s206 + $0x670] sm:$0xff] %v537
                %v539 = vld [vmem:[%s205 + $0xcf8] sm:$0xff]
                %540 = vst [vmem:[%s206 + $0x67c] sm:$0xff] %v539
                %v541 = vld [vmem:[%s205 + $0xd00] sm:$0xff]
                %542 = vst [vmem:[%s206 + $0x684] sm:$0xff] %v541
                %v543 = vld [vmem:[%s205 + $0xd20] sm:$0xff]
                %544 = vst [vmem:[%s206 + $0x690] sm:$0xff] %v543
                %v545 = vld [vmem:[%s205 + $0xd28] sm:$0xff]
                %546 = vst [vmem:[%s206 + $0x698] sm:$0xff] %v545
                %v547 = vld [vmem:[%s205 + $0xd48] sm:$0xff]
                %548 = vst [vmem:[%s206 + $0x6a4] sm:$0xff] %v547
                %v549 = vld [vmem:[%s205 + $0xd50] sm:$0xff]
                %550 = vst [vmem:[%s206 + $0x6ac] sm:$0xff] %v549
                %v551 = vld [vmem:[%s205 + $0xd70] sm:$0xff]
                %552 = vst [vmem:[%s206 + $0x6b8] sm:$0xff] %v551
                %v553 = vld [vmem:[%s205 + $0xd78] sm:$0xff]
                %554 = vst [vmem:[%s206 + $0x6c0] sm:$0xff] %v553
                %v555 = vld [vmem:[%s205 + $0xd98] sm:$0xff]
                %556 = vst [vmem:[%s206 + $0x6cc] sm:$0xff] %v555
                %v557 = vld [vmem:[%s205 + $0xda0] sm:$0xff]
                %558 = vst [vmem:[%s206 + $0x6d4] sm:$0xff] %v557
                %v559 = vld [vmem:[%s205 + $0xdc0] sm:$0xff]
                %560 = vst [vmem:[%s206 + $0x6e0] sm:$0xff] %v559
                %v561 = vld [vmem:[%s205 + $0xdc8] sm:$0xff]
                %562 = vst [vmem:[%s206 + $0x6e8] sm:$0xff] %v561
                %v563 = vld [vmem:[%s205 + $0xde8] sm:$0xff]
                %564 = vst [vmem:[%s206 + $0x6f4] sm:$0xff] %v563
                %v565 = vld [vmem:[%s205 + $0xdf0] sm:$0xff]
                %566 = vst [vmem:[%s206 + $0x6fc] sm:$0xff] %v565
                %v567 = vld [vmem:[%s205 + $0xe10] sm:$0xff]
                %568 = vst [vmem:[%s206 + $0x708] sm:$0xff] %v567
                %v569 = vld [vmem:[%s205 + $0xe18] sm:$0xff]
                %570 = vst [vmem:[%s206 + $0x710] sm:$0xff] %v569
                %v571 = vld [vmem:[%s205 + $0xe38] sm:$0xff]
                %572 = vst [vmem:[%s206 + $0x71c] sm:$0xff] %v571
                %v573 = vld [vmem:[%s205 + $0xe40] sm:$0xff]
                %574 = vst [vmem:[%s206 + $0x724] sm:$0xff] %v573
                %v575 = vld [vmem:[%s205 + $0xe60] sm:$0xff]
                %576 = vst [vmem:[%s206 + $0x730] sm:$0xff] %v575
                %v577 = vld [vmem:[%s205 + $0xe68] sm:$0xff]
                %578 = vst [vmem:[%s206 + $0x738] sm:$0xff] %v577
                %v579 = vld [vmem:[%s205 + $0xe88] sm:$0xff]
                %580 = vst [vmem:[%s206 + $0x744] sm:$0xff] %v579
                %v581 = vld [vmem:[%s205 + $0xe90] sm:$0xff]
                %582 = vst [vmem:[%s206 + $0x74c] sm:$0xff] %v581
                %v583 = vld [vmem:[%s205 + $0xeb0] sm:$0xff]
                %584 = vst [vmem:[%s206 + $0x758] sm:$0xff] %v583
                %v585 = vld [vmem:[%s205 + $0xeb8] sm:$0xff]
                %586 = vst [vmem:[%s206 + $0x760] sm:$0xff] %v585
                %v587 = vld [vmem:[%s205 + $0xed8] sm:$0xff]
                %588 = vst [vmem:[%s206 + $0x76c] sm:$0xff] %v587
                %v589 = vld [vmem:[%s205 + $0xee0] sm:$0xff]
                %590 = vst [vmem:[%s206 + $0x774] sm:$0xff] %v589
                %v591 = vld [vmem:[%s205 + $0xf00] sm:$0xff]
                %592 = vst [vmem:[%s206 + $0x780] sm:$0xff] %v591
                %v593 = vld [vmem:[%s205 + $0xf08] sm:$0xff]
                %594 = vst [vmem:[%s206 + $0x788] sm:$0xff] %v593
                %v595 = vld [vmem:[%s205 + $0xf28] sm:$0xff]
                %596 = vst [vmem:[%s206 + $0x794] sm:$0xff] %v595
                %v597 = vld [vmem:[%s205 + $0xf30] sm:$0xff]
                %598 = vst [vmem:[%s206 + $0x79c] sm:$0xff] %v597
                %v599 = vld [vmem:[%s205 + $0xf50] sm:$0xff]
                %600 = vst [vmem:[%s206 + $0x7a8] sm:$0xff] %v599
                %v601 = vld [vmem:[%s205 + $0xf58] sm:$0xff]
                %602 = vst [vmem:[%s206 + $0x7b0] sm:$0xff] %v601
                %v603 = vld [vmem:[%s205 + $0xf78] sm:$0xff]
                %604 = vst [vmem:[%s206 + $0x7bc] sm:$0xff] %v603
                %v605 = vld [vmem:[%s205 + $0xf80] sm:$0xff]
                %606 = vst [vmem:[%s206 + $0x7c4] sm:$0xff] %v605
                %v607 = vld [vmem:[%s205 + $0xfa0] sm:$0xff]
                %608 = vst [vmem:[%s206 + $0x7d0] sm:$0xff] %v607
                %v609 = vld [vmem:[%s205 + $0xfa8] sm:$0xff]
                %610 = vst [vmem:[%s206 + $0x7d8] sm:$0xff] %v609
                %v611 = vld [vmem:[%s205 + $0xfc8] sm:$0xff]
                %612 = vst [vmem:[%s206 + $0x7e4] sm:$0xff] %v611
                %v613 = vld [vmem:[%s205 + $0xfd0] sm:$0xff]
                %614 = vst [vmem:[%s206 + $0x7ec] sm:$0xff] %v613
                %v615 = vld [vmem:[%s205 + $0xff0] sm:$0xff]
                %616 = vst [vmem:[%s206 + $0x7f8] sm:$0xff] %v615
                %v617 = vld [vmem:[%s205 + $0xff8] sm:$0xff]
                %618 = vst [vmem:[%s206 + $0x800] sm:$0xff] %v617
                %v619 = vld [vmem:[%s205 + $0x1018] sm:$0xff]
                %620 = vst [vmem:[%s206 + $0x80c] sm:$0xff] %v619
                %v621 = vld [vmem:[%s205 + $0x1020] sm:$0xff]
                %622 = vst [vmem:[%s206 + $0x814] sm:$0xff] %v621
                %v623 = vld [vmem:[%s205 + $0x1040] sm:$0xff]
                %624 = vst [vmem:[%s206 + $0x820] sm:$0xff] %v623
                %v625 = vld [vmem:[%s205 + $0x1048] sm:$0xff]
                %626 = vst [vmem:[%s206 + $0x828] sm:$0xff] %v625
                %v627 = vld [vmem:[%s205 + $0x1068] sm:$0xff]
                %628 = vst [vmem:[%s206 + $0x834] sm:$0xff] %v627
                %v629 = vld [vmem:[%s205 + $0x1070] sm:$0xff]
                %630 = vst [vmem:[%s206 + $0x83c] sm:$0xff] %v629
                %v631 = vld [vmem:[%s205 + $0x1090] sm:$0xff]
                %632 = vst [vmem:[%s206 + $0x848] sm:$0xff] %v631
                %v633 = vld [vmem:[%s205 + $0x1098] sm:$0xff]
                %634 = vst [vmem:[%s206 + $0x850] sm:$0xff] %v633
                %v635 = vld [vmem:[%s205 + $0x10b8] sm:$0xff]
                %636 = vst [vmem:[%s206 + $0x85c] sm:$0xff] %v635
                %v637 = vld [vmem:[%s205 + $0x10c0] sm:$0xff]
                %638 = vst [vmem:[%s206 + $0x864] sm:$0xff] %v637
                %v639 = vld [vmem:[%s205 + $0x10e0] sm:$0xff]
                %640 = vst [vmem:[%s206 + $0x870] sm:$0xff] %v639
                %v641 = vld [vmem:[%s205 + $0x10e8] sm:$0xff]
                %642 = vst [vmem:[%s206 + $0x878] sm:$0xff] %v641
                %v643 = vld [vmem:[%s205 + $0x1108] sm:$0xff]
                %644 = vst [vmem:[%s206 + $0x884] sm:$0xff] %v643
                %v645 = vld [vmem:[%s205 + $0x1110] sm:$0xff]
                %646 = vst [vmem:[%s206 + $0x88c] sm:$0xff] %v645
                %v647 = vld [vmem:[%s205 + $0x1130] sm:$0xff]
                %648 = vst [vmem:[%s206 + $0x898] sm:$0xff] %v647
                %v649 = vld [vmem:[%s205 + $0x1138] sm:$0xff]
                %650 = vst [vmem:[%s206 + $0x8a0] sm:$0xff] %v649
                %v651 = vld [vmem:[%s205 + $0x1158] sm:$0xff]
                %652 = vst [vmem:[%s206 + $0x8ac] sm:$0xff] %v651
                %v653 = vld [vmem:[%s205 + $0x1160] sm:$0xff]
                %654 = vst [vmem:[%s206 + $0x8b4] sm:$0xff] %v653
                %v655 = vld [vmem:[%s205 + $0x1180] sm:$0xff]
                %656 = vst [vmem:[%s206 + $0x8c0] sm:$0xff] %v655
                %v657 = vld [vmem:[%s205 + $0x1188] sm:$0xff]
                %658 = vst [vmem:[%s206 + $0x8c8] sm:$0xff] %v657
                %v659 = vld [vmem:[%s205 + $0x11a8] sm:$0xff]
                %660 = vst [vmem:[%s206 + $0x8d4] sm:$0xff] %v659
                %v661 = vld [vmem:[%s205 + $0x11b0] sm:$0xff]
                %662 = vst [vmem:[%s206 + $0x8dc] sm:$0xff] %v661
                %v663 = vld [vmem:[%s205 + $0x11d0] sm:$0xff]
                %664 = vst [vmem:[%s206 + $0x8e8] sm:$0xff] %v663
                %v665 = vld [vmem:[%s205 + $0x11d8] sm:$0xff]
                %666 = vst [vmem:[%s206 + $0x8f0] sm:$0xff] %v665
                %v667 = vld [vmem:[%s205 + $0x11f8] sm:$0xff]
                %668 = vst [vmem:[%s206 + $0x8fc] sm:$0xff] %v667
                %v669 = vld [vmem:[%s205 + $0x1200] sm:$0xff]
                %670 = vst [vmem:[%s206 + $0x904] sm:$0xff] %v669
                %v671 = vld [vmem:[%s205 + $0x1220] sm:$0xff]
                %672 = vst [vmem:[%s206 + $0x910] sm:$0xff] %v671
                %v673 = vld [vmem:[%s205 + $0x1228] sm:$0xff]
                %674 = vst [vmem:[%s206 + $0x918] sm:$0xff] %v673
                %v675 = vld [vmem:[%s205 + $0x1248] sm:$0xff]
                %676 = vst [vmem:[%s206 + $0x924] sm:$0xff] %v675
                %v677 = vld [vmem:[%s205 + $0x1250] sm:$0xff]
                %678 = vst [vmem:[%s206 + $0x92c] sm:$0xff] %v677
                %v679 = vld [vmem:[%s205 + $0x1270] sm:$0xff]
                %680 = vst [vmem:[%s206 + $0x938] sm:$0xff] %v679
                %v681 = vld [vmem:[%s205 + $0x1278] sm:$0xff]
                %682 = vst [vmem:[%s206 + $0x940] sm:$0xff] %v681
                %v683 = vld [vmem:[%s205 + $0x1298] sm:$0xff]
                %684 = vst [vmem:[%s206 + $0x94c] sm:$0xff] %v683
                %v685 = vld [vmem:[%s205 + $0x12a0] sm:$0xff]
                %686 = vst [vmem:[%s206 + $0x954] sm:$0xff] %v685
                %v687 = vld [vmem:[%s205 + $0x12c0] sm:$0xff]
                %688 = vst [vmem:[%s206 + $0x960] sm:$0xff] %v687
                %v689 = vld [vmem:[%s205 + $0x12c8] sm:$0xff]
                %690 = vst [vmem:[%s206 + $0x968] sm:$0xff] %v689
                %v691 = vld [vmem:[%s205 + $0x12e8] sm:$0xff]
                %692 = vst [vmem:[%s206 + $0x974] sm:$0xff] %v691
                %v693 = vld [vmem:[%s205 + $0x12f0] sm:$0xff]
                %694 = vst [vmem:[%s206 + $0x97c] sm:$0xff] %v693
                %v695 = vld [vmem:[%s205 + $0x1310] sm:$0xff]
                %696 = vst [vmem:[%s206 + $0x988] sm:$0xff] %v695
                %v697 = vld [vmem:[%s205 + $0x1318] sm:$0xff]
                %698 = vst [vmem:[%s206 + $0x990] sm:$0xff] %v697
                %v699 = vld [vmem:[%s205 + $0x1338] sm:$0xff]
                %700 = vst [vmem:[%s206 + $0x99c] sm:$0xff] %v699
                %v701 = vld [vmem:[%s205 + $0x1340] sm:$0xff]
                %702 = vst [vmem:[%s206 + $0x9a4] sm:$0xff] %v701
                %v703 = vld [vmem:[%s205 + $0x1360] sm:$0xff]
                %704 = vst [vmem:[%s206 + $0x9b0] sm:$0xff] %v703
                %v705 = vld [vmem:[%s205 + $0x1368] sm:$0xff]
                %706 = vst [vmem:[%s206 + $0x9b8] sm:$0xff] %v705
                %v707 = vld [vmem:[%s205 + $0x1388] sm:$0xff]
                %708 = vst [vmem:[%s206 + $0x9c4] sm:$0xff] %v707
                %v709 = vld [vmem:[%s205 + $0x1390] sm:$0xff]
                %710 = vst [vmem:[%s206 + $0x9cc] sm:$0xff] %v709
                %v711 = vld [vmem:[%s205 + $0x13b0] sm:$0xff]
                %712 = vst [vmem:[%s206 + $0x9d8] sm:$0xff] %v711
                %v713 = vld [vmem:[%s205 + $0x13b8] sm:$0xff]
                %714 = vst [vmem:[%s206 + $0x9e0] sm:$0xff] %v713
                %v715 = vld [vmem:[%s205 + $0x13d8] sm:$0xff]
                %716 = vst [vmem:[%s206 + $0x9ec] sm:$0xff] %v715
                %v717 = vld [vmem:[%s205 + $0x13e0] sm:$0xff]
                %718 = vst [vmem:[%s206 + $0x9f4] sm:$0xff] %v717
                %v719 = vld [vmem:[%s205 + $0x1400] sm:$0xff]
                %720 = vst [vmem:[%s206 + $0xa00] sm:$0xff] %v719
                %v721 = vld [vmem:[%s205 + $0x1408] sm:$0xff]
                %722 = vst [vmem:[%s206 + $0xa08] sm:$0xff] %v721
                %v723 = vld [vmem:[%s205 + $0x1428] sm:$0xff]
                %724 = vst [vmem:[%s206 + $0xa14] sm:$0xff] %v723
                %v725 = vld [vmem:[%s205 + $0x1430] sm:$0xff]
                %726 = vst [vmem:[%s206 + $0xa1c] sm:$0xff] %v725
                %v727 = vld [vmem:[%s205 + $0x1450] sm:$0xff]
                %728 = vst [vmem:[%s206 + $0xa28] sm:$0xff] %v727
                %v729 = vld [vmem:[%s205 + $0x1458] sm:$0xff]
                %730 = vst [vmem:[%s206 + $0xa30] sm:$0xff] %v729
                %v731 = vld [vmem:[%s205 + $0x1478] sm:$0xff]
                %732 = vst [vmem:[%s206 + $0xa3c] sm:$0xff] %v731
                %v733 = vld [vmem:[%s205 + $0x1480] sm:$0xff]
                %734 = vst [vmem:[%s206 + $0xa44] sm:$0xff] %v733
                %v735 = vld [vmem:[%s205 + $0x14a0] sm:$0xff]
                %736 = vst [vmem:[%s206 + $0xa50] sm:$0xff] %v735
                %v737 = vld [vmem:[%s205 + $0x14a8] sm:$0xff]
                %738 = vst [vmem:[%s206 + $0xa58] sm:$0xff] %v737
                %v739 = vld [vmem:[%s205 + $0x14c8] sm:$0xff]
                %740 = vst [vmem:[%s206 + $0xa64] sm:$0xff] %v739
                %v741 = vld [vmem:[%s205 + $0x14d0] sm:$0xff]
                %742 = vst [vmem:[%s206 + $0xa6c] sm:$0xff] %v741
                %v743 = vld [vmem:[%s205 + $0x14f0] sm:$0xff]
                %744 = vst [vmem:[%s206 + $0xa78] sm:$0xff] %v743
                %v745 = vld [vmem:[%s205 + $0x14f8] sm:$0xff]
                %746 = vst [vmem:[%s206 + $0xa80] sm:$0xff] %v745
                %v747 = vld [vmem:[%s205 + $0x1518] sm:$0xff]
                %748 = vst [vmem:[%s206 + $0xa8c] sm:$0xff] %v747
                %v749 = vld [vmem:[%s205 + $0x1520] sm:$0xff]
                %750 = vst [vmem:[%s206 + $0xa94] sm:$0xff] %v749
                %v751 = vld [vmem:[%s205 + $0x1540] sm:$0xff]
                %752 = vst [vmem:[%s206 + $0xaa0] sm:$0xff] %v751
                %v753 = vld [vmem:[%s205 + $0x1548] sm:$0xff]
                %754 = vst [vmem:[%s206 + $0xaa8] sm:$0xff] %v753
                %v755 = vld [vmem:[%s205 + $0x1568] sm:$0xff]
                %756 = vst [vmem:[%s206 + $0xab4] sm:$0xff] %v755
                %v757 = vld [vmem:[%s205 + $0x1570] sm:$0xff]
                %758 = vst [vmem:[%s206 + $0xabc] sm:$0xff] %v757
                %v759 = vld [vmem:[%s205 + $0x1590] sm:$0xff]
                %760 = vst [vmem:[%s206 + $0xac8] sm:$0xff] %v759
                %v761 = vld [vmem:[%s205 + $0x1598] sm:$0xff]
                %762 = vst [vmem:[%s206 + $0xad0] sm:$0xff] %v761
                %v763 = vld [vmem:[%s205 + $0x15b8] sm:$0xff]
                %764 = vst [vmem:[%s206 + $0xadc] sm:$0xff] %v763
                %v765 = vld [vmem:[%s205 + $0x15c0] sm:$0xff]
                %766 = vst [vmem:[%s206 + $0xae4] sm:$0xff] %v765
                %v767 = vld [vmem:[%s205 + $0x15e0] sm:$0xff]
                %768 = vst [vmem:[%s206 + $0xaf0] sm:$0xff] %v767
                %v769 = vld [vmem:[%s205 + $0x15e8] sm:$0xff]
                %770 = vst [vmem:[%s206 + $0xaf8] sm:$0xff] %v769
                %v771 = vld [vmem:[%s205 + $0x1608] sm:$0xff]
                %772 = vst [vmem:[%s206 + $0xb04] sm:$0xff] %v771
                %v773 = vld [vmem:[%s205 + $0x1610] sm:$0xff]
                %774 = vst [vmem:[%s206 + $0xb0c] sm:$0xff] %v773
                %v775 = vld [vmem:[%s205 + $0x1630] sm:$0xff]
                %776 = vst [vmem:[%s206 + $0xb18] sm:$0xff] %v775
                %v777 = vld [vmem:[%s205 + $0x1638] sm:$0xff]
                %778 = vst [vmem:[%s206 + $0xb20] sm:$0xff] %v777
                %v779 = vld [vmem:[%s205 + $0x1658] sm:$0xff]
                %780 = vst [vmem:[%s206 + $0xb2c] sm:$0xff] %v779
                %v781 = vld [vmem:[%s205 + $0x1660] sm:$0xff]
                %782 = vst [vmem:[%s206 + $0xb34] sm:$0xff] %v781
                %v783 = vld [vmem:[%s205 + $0x1680] sm:$0xff]
                %784 = vst [vmem:[%s206 + $0xb40] sm:$0xff] %v783
                %v785 = vld [vmem:[%s205 + $0x1688] sm:$0xff]
                %786 = vst [vmem:[%s206 + $0xb48] sm:$0xff] %v785
                %v787 = vld [vmem:[%s205 + $0x16a8] sm:$0xff]
                %788 = vst [vmem:[%s206 + $0xb54] sm:$0xff] %v787
                %v789 = vld [vmem:[%s205 + $0x16b0] sm:$0xff]
                %790 = vst [vmem:[%s206 + $0xb5c] sm:$0xff] %v789
                %v791 = vld [vmem:[%s205 + $0x16d0] sm:$0xff]
                %792 = vst [vmem:[%s206 + $0xb68] sm:$0xff] %v791
                %v793 = vld [vmem:[%s205 + $0x16d8] sm:$0xff]
                %794 = vst [vmem:[%s206 + $0xb70] sm:$0xff] %v793
                %v795 = vld [vmem:[%s205 + $0x16f8] sm:$0xff]
                %796 = vst [vmem:[%s206 + $0xb7c] sm:$0xff] %v795
                %v797 = vld [vmem:[%s205 + $0x1700] sm:$0xff]
                %798 = vst [vmem:[%s206 + $0xb84] sm:$0xff] %v797
                %v799 = vld [vmem:[%s205 + $0x1720] sm:$0xff]
                %800 = vst [vmem:[%s206 + $0xb90] sm:$0xff] %v799
                %v801 = vld [vmem:[%s205 + $0x1728] sm:$0xff]
                %802 = vst [vmem:[%s206 + $0xb98] sm:$0xff] %v801
                %v803 = vld [vmem:[%s205 + $0x1748] sm:$0xff]
                %804 = vst [vmem:[%s206 + $0xba4] sm:$0xff] %v803
                %v805 = vld [vmem:[%s205 + $0x1750] sm:$0xff]
                %806 = vst [vmem:[%s206 + $0xbac] sm:$0xff] %v805
                %v807 = vld [vmem:[%s205 + $0x1770] sm:$0xff]
                %808 = vst [vmem:[%s206 + $0xbb8] sm:$0xff] %v807
                %v809 = vld [vmem:[%s205 + $0x1778] sm:$0xff]
                %810 = vst [vmem:[%s206 + $0xbc0] sm:$0xff] %v809
                %v811 = vld [vmem:[%s205 + $0x1798] sm:$0xff]
                %812 = vst [vmem:[%s206 + $0xbcc] sm:$0xff] %v811
                %v813 = vld [vmem:[%s205 + $0x17a0] sm:$0xff]
                %814 = vst [vmem:[%s206 + $0xbd4] sm:$0xff] %v813
                %v815 = vld [vmem:[%s205 + $0x17c0] sm:$0xff]
                %816 = vst [vmem:[%s206 + $0xbe0] sm:$0xff] %v815
                %v817 = vld [vmem:[%s205 + $0x17c8] sm:$0xff]
                %818 = vst [vmem:[%s206 + $0xbe8] sm:$0xff] %v817
                %v819 = vld [vmem:[%s205 + $0x17e8] sm:$0xff]
                %820 = vst [vmem:[%s206 + $0xbf4] sm:$0xff] %v819
                %v821 = vld [vmem:[%s205 + $0x17f0] sm:$0xff]
                %822 = vst [vmem:[%s206 + $0xbfc] sm:$0xff] %v821
                %v823 = vld [vmem:[%s205 + $0x1810] sm:$0xff]
                %824 = vst [vmem:[%s206 + $0xc08] sm:$0xff] %v823
                %v825 = vld [vmem:[%s205 + $0x1818] sm:$0xff]
                %826 = vst [vmem:[%s206 + $0xc10] sm:$0xff] %v825
                %v827 = vld [vmem:[%s205 + $0x1838] sm:$0xff]
                %828 = vst [vmem:[%s206 + $0xc1c] sm:$0xff] %v827
                %v829 = vld [vmem:[%s205 + $0x1840] sm:$0xff]
                %830 = vst [vmem:[%s206 + $0xc24] sm:$0xff] %v829
                %v831 = vld [vmem:[%s205 + $0x1860] sm:$0xff]
                %832 = vst [vmem:[%s206 + $0xc30] sm:$0xff] %v831
                %v833 = vld [vmem:[%s205 + $0x1868] sm:$0xff]
                %834 = vst [vmem:[%s206 + $0xc38] sm:$0xff] %v833
                %v835 = vld [vmem:[%s205 + $0x1888] sm:$0xff]
                %836 = vst [vmem:[%s206 + $0xc44] sm:$0xff] %v835
                %v837 = vld [vmem:[%s205 + $0x1890] sm:$0xff]
                %838 = vst [vmem:[%s206 + $0xc4c] sm:$0xff] %v837
                %v839 = vld [vmem:[%s205 + $0x18b0] sm:$0xff]
                %840 = vst [vmem:[%s206 + $0xc58] sm:$0xff] %v839
                %v841 = vld [vmem:[%s205 + $0x18b8] sm:$0xff]
                %842 = vst [vmem:[%s206 + $0xc60] sm:$0xff] %v841
                %v843 = vld [vmem:[%s205 + $0x18d8] sm:$0xff]
                %844 = vst [vmem:[%s206 + $0xc6c] sm:$0xff] %v843
                %v845 = vld [vmem:[%s205 + $0x18e0] sm:$0xff]
                %846 = vst [vmem:[%s206 + $0xc74] sm:$0xff] %v845
              $region45: #{diffusion_forward.3} parent=39 // loop_footer
                %s204 = sadd.s32 1, %s200
              $region46: #{diffusion_forward.3} parent=39 // loop_footer_branch
                %199 = sbr.rel target = $region42
              $region47: #{diffusion_forward.3} parent=39 // loop_exit
                _
              loop: start=0, step=1, limit=1
              $region48: #{diffusion_forward.3} parent=39 // loop_pre_header
                _
              $region49: #{diffusion_forward.3} parent=39 // loop_header
                %s849 = sphi 0, %s853
                %p850 = scmp.ge.s32.totalorder %s849, 1
                %s854 = sphi %s197, %s197
                %s855 = sphi %s198, %s198
              $region50: #{diffusion_forward.3} parent=39 // loop_header_branch
                %852 = sbr.rel (%p850) target = $region54
              $region51: #{diffusion_forward.3} parent=39 // loop_body
                %v856 = vld [vmem:[%s854] sm:$0xf]
                %857 = vst [vmem:[%s855] sm:$0xf] %v856
                %v858 = vld [vmem:[%s854 + $0x28] sm:$0xf]
                %859 = vst [vmem:[%s855 + $0x14] sm:$0xf] %v858
                %v860 = vld [vmem:[%s854 + $0x50] sm:$0xf]
                %861 = vst [vmem:[%s855 + $0x28] sm:$0xf] %v860
                %v862 = vld [vmem:[%s854 + $0x78] sm:$0xf]
                %863 = vst [vmem:[%s855 + $0x3c] sm:$0xf] %v862
                %v864 = vld [vmem:[%s854 + $0xa0] sm:$0xf]
                %865 = vst [vmem:[%s855 + $0x50] sm:$0xf] %v864
                %v866 = vld [vmem:[%s854 + $0xc8] sm:$0xf]
                %867 = vst [vmem:[%s855 + $0x64] sm:$0xf] %v866
                %v868 = vld [vmem:[%s854 + $0xf0] sm:$0xf]
                %869 = vst [vmem:[%s855 + $0x78] sm:$0xf] %v868
                %v870 = vld [vmem:[%s854 + $0x118] sm:$0xf]
                %871 = vst [vmem:[%s855 + $0x8c] sm:$0xf] %v870
                %v872 = vld [vmem:[%s854 + $0x140] sm:$0xf]
                %873 = vst [vmem:[%s855 + $0xa0] sm:$0xf] %v872
                %v874 = vld [vmem:[%s854 + $0x168] sm:$0xf]
                %875 = vst [vmem:[%s855 + $0xb4] sm:$0xf] %v874
                %v876 = vld [vmem:[%s854 + $0x190] sm:$0xf]
                %877 = vst [vmem:[%s855 + $0xc8] sm:$0xf] %v876
                %v878 = vld [vmem:[%s854 + $0x1b8] sm:$0xf]
                %879 = vst [vmem:[%s855 + $0xdc] sm:$0xf] %v878
                %v880 = vld [vmem:[%s854 + $0x1e0] sm:$0xf]
                %881 = vst [vmem:[%s855 + $0xf0] sm:$0xf] %v880
                %v882 = vld [vmem:[%s854 + $0x208] sm:$0xf]
                %883 = vst [vmem:[%s855 + $0x104] sm:$0xf] %v882
                %v884 = vld [vmem:[%s854 + $0x230] sm:$0xf]
                %885 = vst [vmem:[%s855 + $0x118] sm:$0xf] %v884
                %v886 = vld [vmem:[%s854 + $0x258] sm:$0xf]
                %887 = vst [vmem:[%s855 + $0x12c] sm:$0xf] %v886
                %v888 = vld [vmem:[%s854 + $0x280] sm:$0xf]
                %889 = vst [vmem:[%s855 + $0x140] sm:$0xf] %v888
                %v890 = vld [vmem:[%s854 + $0x2a8] sm:$0xf]
                %891 = vst [vmem:[%s855 + $0x154] sm:$0xf] %v890
                %v892 = vld [vmem:[%s854 + $0x2d0] sm:$0xf]
                %893 = vst [vmem:[%s855 + $0x168] sm:$0xf] %v892
                %v894 = vld [vmem:[%s854 + $0x2f8] sm:$0xf]
                %895 = vst [vmem:[%s855 + $0x17c] sm:$0xf] %v894
                %v896 = vld [vmem:[%s854 + $0x320] sm:$0xf]
                %897 = vst [vmem:[%s855 + $0x190] sm:$0xf] %v896
                %v898 = vld [vmem:[%s854 + $0x348] sm:$0xf]
                %899 = vst [vmem:[%s855 + $0x1a4] sm:$0xf] %v898
                %v900 = vld [vmem:[%s854 + $0x370] sm:$0xf]
                %901 = vst [vmem:[%s855 + $0x1b8] sm:$0xf] %v900
                %v902 = vld [vmem:[%s854 + $0x398] sm:$0xf]
                %903 = vst [vmem:[%s855 + $0x1cc] sm:$0xf] %v902
                %v904 = vld [vmem:[%s854 + $0x3c0] sm:$0xf]
                %905 = vst [vmem:[%s855 + $0x1e0] sm:$0xf] %v904
                %v906 = vld [vmem:[%s854 + $0x3e8] sm:$0xf]
                %907 = vst [vmem:[%s855 + $0x1f4] sm:$0xf] %v906
                %v908 = vld [vmem:[%s854 + $0x410] sm:$0xf]
                %909 = vst [vmem:[%s855 + $0x208] sm:$0xf] %v908
                %v910 = vld [vmem:[%s854 + $0x438] sm:$0xf]
                %911 = vst [vmem:[%s855 + $0x21c] sm:$0xf] %v910
                %v912 = vld [vmem:[%s854 + $0x460] sm:$0xf]
                %913 = vst [vmem:[%s855 + $0x230] sm:$0xf] %v912
                %v914 = vld [vmem:[%s854 + $0x488] sm:$0xf]
                %915 = vst [vmem:[%s855 + $0x244] sm:$0xf] %v914
                %v916 = vld [vmem:[%s854 + $0x4b0] sm:$0xf]
                %917 = vst [vmem:[%s855 + $0x258] sm:$0xf] %v916
                %v918 = vld [vmem:[%s854 + $0x4d8] sm:$0xf]
                %919 = vst [vmem:[%s855 + $0x26c] sm:$0xf] %v918
                %v920 = vld [vmem:[%s854 + $0x500] sm:$0xf]
                %921 = vst [vmem:[%s855 + $0x280] sm:$0xf] %v920
                %v922 = vld [vmem:[%s854 + $0x528] sm:$0xf]
                %923 = vst [vmem:[%s855 + $0x294] sm:$0xf] %v922
                %v924 = vld [vmem:[%s854 + $0x550] sm:$0xf]
                %925 = vst [vmem:[%s855 + $0x2a8] sm:$0xf] %v924
                %v926 = vld [vmem:[%s854 + $0x578] sm:$0xf]
                %927 = vst [vmem:[%s855 + $0x2bc] sm:$0xf] %v926
                %v928 = vld [vmem:[%s854 + $0x5a0] sm:$0xf]
                %929 = vst [vmem:[%s855 + $0x2d0] sm:$0xf] %v928
                %v930 = vld [vmem:[%s854 + $0x5c8] sm:$0xf]
                %931 = vst [vmem:[%s855 + $0x2e4] sm:$0xf] %v930
                %v932 = vld [vmem:[%s854 + $0x5f0] sm:$0xf]
                %933 = vst [vmem:[%s855 + $0x2f8] sm:$0xf] %v932
                %v934 = vld [vmem:[%s854 + $0x618] sm:$0xf]
                %935 = vst [vmem:[%s855 + $0x30c] sm:$0xf] %v934
                %v936 = vld [vmem:[%s854 + $0x640] sm:$0xf]
                %937 = vst [vmem:[%s855 + $0x320] sm:$0xf] %v936
                %v938 = vld [vmem:[%s854 + $0x668] sm:$0xf]
                %939 = vst [vmem:[%s855 + $0x334] sm:$0xf] %v938
                %v940 = vld [vmem:[%s854 + $0x690] sm:$0xf]
                %941 = vst [vmem:[%s855 + $0x348] sm:$0xf] %v940
                %v942 = vld [vmem:[%s854 + $0x6b8] sm:$0xf]
                %943 = vst [vmem:[%s855 + $0x35c] sm:$0xf] %v942
                %v944 = vld [vmem:[%s854 + $0x6e0] sm:$0xf]
                %945 = vst [vmem:[%s855 + $0x370] sm:$0xf] %v944
                %v946 = vld [vmem:[%s854 + $0x708] sm:$0xf]
                %947 = vst [vmem:[%s855 + $0x384] sm:$0xf] %v946
                %v948 = vld [vmem:[%s854 + $0x730] sm:$0xf]
                %949 = vst [vmem:[%s855 + $0x398] sm:$0xf] %v948
                %v950 = vld [vmem:[%s854 + $0x758] sm:$0xf]
                %951 = vst [vmem:[%s855 + $0x3ac] sm:$0xf] %v950
                %v952 = vld [vmem:[%s854 + $0x780] sm:$0xf]
                %953 = vst [vmem:[%s855 + $0x3c0] sm:$0xf] %v952
                %v954 = vld [vmem:[%s854 + $0x7a8] sm:$0xf]
                %955 = vst [vmem:[%s855 + $0x3d4] sm:$0xf] %v954
                %v956 = vld [vmem:[%s854 + $0x7d0] sm:$0xf]
                %957 = vst [vmem:[%s855 + $0x3e8] sm:$0xf] %v956
                %v958 = vld [vmem:[%s854 + $0x7f8] sm:$0xf]
                %959 = vst [vmem:[%s855 + $0x3fc] sm:$0xf] %v958
                %v960 = vld [vmem:[%s854 + $0x820] sm:$0xf]
                %961 = vst [vmem:[%s855 + $0x410] sm:$0xf] %v960
                %v962 = vld [vmem:[%s854 + $0x848] sm:$0xf]
                %963 = vst [vmem:[%s855 + $0x424] sm:$0xf] %v962
                %v964 = vld [vmem:[%s854 + $0x870] sm:$0xf]
                %965 = vst [vmem:[%s855 + $0x438] sm:$0xf] %v964
                %v966 = vld [vmem:[%s854 + $0x898] sm:$0xf]
                %967 = vst [vmem:[%s855 + $0x44c] sm:$0xf] %v966
                %v968 = vld [vmem:[%s854 + $0x8c0] sm:$0xf]
                %969 = vst [vmem:[%s855 + $0x460] sm:$0xf] %v968
                %v970 = vld [vmem:[%s854 + $0x8e8] sm:$0xf]
                %971 = vst [vmem:[%s855 + $0x474] sm:$0xf] %v970
                %v972 = vld [vmem:[%s854 + $0x910] sm:$0xf]
                %973 = vst [vmem:[%s855 + $0x488] sm:$0xf] %v972
                %v974 = vld [vmem:[%s854 + $0x938] sm:$0xf]
                %975 = vst [vmem:[%s855 + $0x49c] sm:$0xf] %v974
                %v976 = vld [vmem:[%s854 + $0x960] sm:$0xf]
                %977 = vst [vmem:[%s855 + $0x4b0] sm:$0xf] %v976
                %v978 = vld [vmem:[%s854 + $0x988] sm:$0xf]
                %979 = vst [vmem:[%s855 + $0x4c4] sm:$0xf] %v978
                %v980 = vld [vmem:[%s854 + $0x9b0] sm:$0xf]
                %981 = vst [vmem:[%s855 + $0x4d8] sm:$0xf] %v980
                %v982 = vld [vmem:[%s854 + $0x9d8] sm:$0xf]
                %983 = vst [vmem:[%s855 + $0x4ec] sm:$0xf] %v982
                %v984 = vld [vmem:[%s854 + $0xa00] sm:$0xf]
                %985 = vst [vmem:[%s855 + $0x500] sm:$0xf] %v984
                %v986 = vld [vmem:[%s854 + $0xa28] sm:$0xf]
                %987 = vst [vmem:[%s855 + $0x514] sm:$0xf] %v986
                %v988 = vld [vmem:[%s854 + $0xa50] sm:$0xf]
                %989 = vst [vmem:[%s855 + $0x528] sm:$0xf] %v988
                %v990 = vld [vmem:[%s854 + $0xa78] sm:$0xf]
                %991 = vst [vmem:[%s855 + $0x53c] sm:$0xf] %v990
                %v992 = vld [vmem:[%s854 + $0xaa0] sm:$0xf]
                %993 = vst [vmem:[%s855 + $0x550] sm:$0xf] %v992
                %v994 = vld [vmem:[%s854 + $0xac8] sm:$0xf]
                %995 = vst [vmem:[%s855 + $0x564] sm:$0xf] %v994
                %v996 = vld [vmem:[%s854 + $0xaf0] sm:$0xf]
                %997 = vst [vmem:[%s855 + $0x578] sm:$0xf] %v996
                %v998 = vld [vmem:[%s854 + $0xb18] sm:$0xf]
                %999 = vst [vmem:[%s855 + $0x58c] sm:$0xf] %v998
                %v1000 = vld [vmem:[%s854 + $0xb40] sm:$0xf]
                %1001 = vst [vmem:[%s855 + $0x5a0] sm:$0xf] %v1000
                %v1002 = vld [vmem:[%s854 + $0xb68] sm:$0xf]
                %1003 = vst [vmem:[%s855 + $0x5b4] sm:$0xf] %v1002
                %v1004 = vld [vmem:[%s854 + $0xb90] sm:$0xf]
                %1005 = vst [vmem:[%s855 + $0x5c8] sm:$0xf] %v1004
                %v1006 = vld [vmem:[%s854 + $0xbb8] sm:$0xf]
                %1007 = vst [vmem:[%s855 + $0x5dc] sm:$0xf] %v1006
                %v1008 = vld [vmem:[%s854 + $0xbe0] sm:$0xf]
                %1009 = vst [vmem:[%s855 + $0x5f0] sm:$0xf] %v1008
                %v1010 = vld [vmem:[%s854 + $0xc08] sm:$0xf]
                %1011 = vst [vmem:[%s855 + $0x604] sm:$0xf] %v1010
                %v1012 = vld [vmem:[%s854 + $0xc30] sm:$0xf]
                %1013 = vst [vmem:[%s855 + $0x618] sm:$0xf] %v1012
                %v1014 = vld [vmem:[%s854 + $0xc58] sm:$0xf]
                %1015 = vst [vmem:[%s855 + $0x62c] sm:$0xf] %v1014
                %v1016 = vld [vmem:[%s854 + $0xc80] sm:$0xf]
                %1017 = vst [vmem:[%s855 + $0x640] sm:$0xf] %v1016
                %v1018 = vld [vmem:[%s854 + $0xca8] sm:$0xf]
                %1019 = vst [vmem:[%s855 + $0x654] sm:$0xf] %v1018
                %v1020 = vld [vmem:[%s854 + $0xcd0] sm:$0xf]
                %1021 = vst [vmem:[%s855 + $0x668] sm:$0xf] %v1020
                %v1022 = vld [vmem:[%s854 + $0xcf8] sm:$0xf]
                %1023 = vst [vmem:[%s855 + $0x67c] sm:$0xf] %v1022
                %v1024 = vld [vmem:[%s854 + $0xd20] sm:$0xf]
                %1025 = vst [vmem:[%s855 + $0x690] sm:$0xf] %v1024
                %v1026 = vld [vmem:[%s854 + $0xd48] sm:$0xf]
                %1027 = vst [vmem:[%s855 + $0x6a4] sm:$0xf] %v1026
                %v1028 = vld [vmem:[%s854 + $0xd70] sm:$0xf]
                %1029 = vst [vmem:[%s855 + $0x6b8] sm:$0xf] %v1028
                %v1030 = vld [vmem:[%s854 + $0xd98] sm:$0xf]
                %1031 = vst [vmem:[%s855 + $0x6cc] sm:$0xf] %v1030
                %v1032 = vld [vmem:[%s854 + $0xdc0] sm:$0xf]
                %1033 = vst [vmem:[%s855 + $0x6e0] sm:$0xf] %v1032
                %v1034 = vld [vmem:[%s854 + $0xde8] sm:$0xf]
                %1035 = vst [vmem:[%s855 + $0x6f4] sm:$0xf] %v1034
                %v1036 = vld [vmem:[%s854 + $0xe10] sm:$0xf]
                %1037 = vst [vmem:[%s855 + $0x708] sm:$0xf] %v1036
                %v1038 = vld [vmem:[%s854 + $0xe38] sm:$0xf]
                %1039 = vst [vmem:[%s855 + $0x71c] sm:$0xf] %v1038
                %v1040 = vld [vmem:[%s854 + $0xe60] sm:$0xf]
                %1041 = vst [vmem:[%s855 + $0x730] sm:$0xf] %v1040
                %v1042 = vld [vmem:[%s854 + $0xe88] sm:$0xf]
                %1043 = vst [vmem:[%s855 + $0x744] sm:$0xf] %v1042
                %v1044 = vld [vmem:[%s854 + $0xeb0] sm:$0xf]
                %1045 = vst [vmem:[%s855 + $0x758] sm:$0xf] %v1044
                %v1046 = vld [vmem:[%s854 + $0xed8] sm:$0xf]
                %1047 = vst [vmem:[%s855 + $0x76c] sm:$0xf] %v1046
                %v1048 = vld [vmem:[%s854 + $0xf00] sm:$0xf]
                %1049 = vst [vmem:[%s855 + $0x780] sm:$0xf] %v1048
                %v1050 = vld [vmem:[%s854 + $0xf28] sm:$0xf]
                %1051 = vst [vmem:[%s855 + $0x794] sm:$0xf] %v1050
                %v1052 = vld [vmem:[%s854 + $0xf50] sm:$0xf]
                %1053 = vst [vmem:[%s855 + $0x7a8] sm:$0xf] %v1052
                %v1054 = vld [vmem:[%s854 + $0xf78] sm:$0xf]
                %1055 = vst [vmem:[%s855 + $0x7bc] sm:$0xf] %v1054
                %v1056 = vld [vmem:[%s854 + $0xfa0] sm:$0xf]
                %1057 = vst [vmem:[%s855 + $0x7d0] sm:$0xf] %v1056
                %v1058 = vld [vmem:[%s854 + $0xfc8] sm:$0xf]
                %1059 = vst [vmem:[%s855 + $0x7e4] sm:$0xf] %v1058
                %v1060 = vld [vmem:[%s854 + $0xff0] sm:$0xf]
                %1061 = vst [vmem:[%s855 + $0x7f8] sm:$0xf] %v1060
                %v1062 = vld [vmem:[%s854 + $0x1018] sm:$0xf]
                %1063 = vst [vmem:[%s855 + $0x80c] sm:$0xf] %v1062
                %v1064 = vld [vmem:[%s854 + $0x1040] sm:$0xf]
                %1065 = vst [vmem:[%s855 + $0x820] sm:$0xf] %v1064
                %v1066 = vld [vmem:[%s854 + $0x1068] sm:$0xf]
                %1067 = vst [vmem:[%s855 + $0x834] sm:$0xf] %v1066
                %v1068 = vld [vmem:[%s854 + $0x1090] sm:$0xf]
                %1069 = vst [vmem:[%s855 + $0x848] sm:$0xf] %v1068
                %v1070 = vld [vmem:[%s854 + $0x10b8] sm:$0xf]
                %1071 = vst [vmem:[%s855 + $0x85c] sm:$0xf] %v1070
                %v1072 = vld [vmem:[%s854 + $0x10e0] sm:$0xf]
                %1073 = vst [vmem:[%s855 + $0x870] sm:$0xf] %v1072
                %v1074 = vld [vmem:[%s854 + $0x1108] sm:$0xf]
                %1075 = vst [vmem:[%s855 + $0x884] sm:$0xf] %v1074
                %v1076 = vld [vmem:[%s854 + $0x1130] sm:$0xf]
                %1077 = vst [vmem:[%s855 + $0x898] sm:$0xf] %v1076
                %v1078 = vld [vmem:[%s854 + $0x1158] sm:$0xf]
                %1079 = vst [vmem:[%s855 + $0x8ac] sm:$0xf] %v1078
                %v1080 = vld [vmem:[%s854 + $0x1180] sm:$0xf]
                %1081 = vst [vmem:[%s855 + $0x8c0] sm:$0xf] %v1080
                %v1082 = vld [vmem:[%s854 + $0x11a8] sm:$0xf]
                %1083 = vst [vmem:[%s855 + $0x8d4] sm:$0xf] %v1082
                %v1084 = vld [vmem:[%s854 + $0x11d0] sm:$0xf]
                %1085 = vst [vmem:[%s855 + $0x8e8] sm:$0xf] %v1084
                %v1086 = vld [vmem:[%s854 + $0x11f8] sm:$0xf]
                %1087 = vst [vmem:[%s855 + $0x8fc] sm:$0xf] %v1086
                %v1088 = vld [vmem:[%s854 + $0x1220] sm:$0xf]
                %1089 = vst [vmem:[%s855 + $0x910] sm:$0xf] %v1088
                %v1090 = vld [vmem:[%s854 + $0x1248] sm:$0xf]
                %1091 = vst [vmem:[%s855 + $0x924] sm:$0xf] %v1090
                %v1092 = vld [vmem:[%s854 + $0x1270] sm:$0xf]
                %1093 = vst [vmem:[%s855 + $0x938] sm:$0xf] %v1092
                %v1094 = vld [vmem:[%s854 + $0x1298] sm:$0xf]
                %1095 = vst [vmem:[%s855 + $0x94c] sm:$0xf] %v1094
                %v1096 = vld [vmem:[%s854 + $0x12c0] sm:$0xf]
                %1097 = vst [vmem:[%s855 + $0x960] sm:$0xf] %v1096
                %v1098 = vld [vmem:[%s854 + $0x12e8] sm:$0xf]
                %1099 = vst [vmem:[%s855 + $0x974] sm:$0xf] %v1098
                %v1100 = vld [vmem:[%s854 + $0x1310] sm:$0xf]
                %1101 = vst [vmem:[%s855 + $0x988] sm:$0xf] %v1100
                %v1102 = vld [vmem:[%s854 + $0x1338] sm:$0xf]
                %1103 = vst [vmem:[%s855 + $0x99c] sm:$0xf] %v1102
                %v1104 = vld [vmem:[%s854 + $0x1360] sm:$0xf]
                %1105 = vst [vmem:[%s855 + $0x9b0] sm:$0xf] %v1104
                %v1106 = vld [vmem:[%s854 + $0x1388] sm:$0xf]
                %1107 = vst [vmem:[%s855 + $0x9c4] sm:$0xf] %v1106
                %v1108 = vld [vmem:[%s854 + $0x13b0] sm:$0xf]
                %1109 = vst [vmem:[%s855 + $0x9d8] sm:$0xf] %v1108
                %v1110 = vld [vmem:[%s854 + $0x13d8] sm:$0xf]
                %1111 = vst [vmem:[%s855 + $0x9ec] sm:$0xf] %v1110
                %v1112 = vld [vmem:[%s854 + $0x1400] sm:$0xf]
                %1113 = vst [vmem:[%s855 + $0xa00] sm:$0xf] %v1112
                %v1114 = vld [vmem:[%s854 + $0x1428] sm:$0xf]
                %1115 = vst [vmem:[%s855 + $0xa14] sm:$0xf] %v1114
                %v1116 = vld [vmem:[%s854 + $0x1450] sm:$0xf]
                %1117 = vst [vmem:[%s855 + $0xa28] sm:$0xf] %v1116
                %v1118 = vld [vmem:[%s854 + $0x1478] sm:$0xf]
                %1119 = vst [vmem:[%s855 + $0xa3c] sm:$0xf] %v1118
                %v1120 = vld [vmem:[%s854 + $0x14a0] sm:$0xf]
                %1121 = vst [vmem:[%s855 + $0xa50] sm:$0xf] %v1120
                %v1122 = vld [vmem:[%s854 + $0x14c8] sm:$0xf]
                %1123 = vst [vmem:[%s855 + $0xa64] sm:$0xf] %v1122
                %v1124 = vld [vmem:[%s854 + $0x14f0] sm:$0xf]
                %1125 = vst [vmem:[%s855 + $0xa78] sm:$0xf] %v1124
                %v1126 = vld [vmem:[%s854 + $0x1518] sm:$0xf]
                %1127 = vst [vmem:[%s855 + $0xa8c] sm:$0xf] %v1126
                %v1128 = vld [vmem:[%s854 + $0x1540] sm:$0xf]
                %1129 = vst [vmem:[%s855 + $0xaa0] sm:$0xf] %v1128
                %v1130 = vld [vmem:[%s854 + $0x1568] sm:$0xf]
                %1131 = vst [vmem:[%s855 + $0xab4] sm:$0xf] %v1130
                %v1132 = vld [vmem:[%s854 + $0x1590] sm:$0xf]
                %1133 = vst [vmem:[%s855 + $0xac8] sm:$0xf] %v1132
                %v1134 = vld [vmem:[%s854 + $0x15b8] sm:$0xf]
                %1135 = vst [vmem:[%s855 + $0xadc] sm:$0xf] %v1134
                %v1136 = vld [vmem:[%s854 + $0x15e0] sm:$0xf]
                %1137 = vst [vmem:[%s855 + $0xaf0] sm:$0xf] %v1136
                %v1138 = vld [vmem:[%s854 + $0x1608] sm:$0xf]
                %1139 = vst [vmem:[%s855 + $0xb04] sm:$0xf] %v1138
                %v1140 = vld [vmem:[%s854 + $0x1630] sm:$0xf]
                %1141 = vst [vmem:[%s855 + $0xb18] sm:$0xf] %v1140
                %v1142 = vld [vmem:[%s854 + $0x1658] sm:$0xf]
                %1143 = vst [vmem:[%s855 + $0xb2c] sm:$0xf] %v1142
                %v1144 = vld [vmem:[%s854 + $0x1680] sm:$0xf]
                %1145 = vst [vmem:[%s855 + $0xb40] sm:$0xf] %v1144
                %v1146 = vld [vmem:[%s854 + $0x16a8] sm:$0xf]
                %1147 = vst [vmem:[%s855 + $0xb54] sm:$0xf] %v1146
                %v1148 = vld [vmem:[%s854 + $0x16d0] sm:$0xf]
                %1149 = vst [vmem:[%s855 + $0xb68] sm:$0xf] %v1148
                %v1150 = vld [vmem:[%s854 + $0x16f8] sm:$0xf]
                %1151 = vst [vmem:[%s855 + $0xb7c] sm:$0xf] %v1150
                %v1152 = vld [vmem:[%s854 + $0x1720] sm:$0xf]
                %1153 = vst [vmem:[%s855 + $0xb90] sm:$0xf] %v1152
                %v1154 = vld [vmem:[%s854 + $0x1748] sm:$0xf]
                %1155 = vst [vmem:[%s855 + $0xba4] sm:$0xf] %v1154
                %v1156 = vld [vmem:[%s854 + $0x1770] sm:$0xf]
                %1157 = vst [vmem:[%s855 + $0xbb8] sm:$0xf] %v1156
                %v1158 = vld [vmem:[%s854 + $0x1798] sm:$0xf]
                %1159 = vst [vmem:[%s855 + $0xbcc] sm:$0xf] %v1158
                %v1160 = vld [vmem:[%s854 + $0x17c0] sm:$0xf]
                %1161 = vst [vmem:[%s855 + $0xbe0] sm:$0xf] %v1160
                %v1162 = vld [vmem:[%s854 + $0x17e8] sm:$0xf]
                %1163 = vst [vmem:[%s855 + $0xbf4] sm:$0xf] %v1162
                %v1164 = vld [vmem:[%s854 + $0x1810] sm:$0xf]
                %1165 = vst [vmem:[%s855 + $0xc08] sm:$0xf] %v1164
                %v1166 = vld [vmem:[%s854 + $0x1838] sm:$0xf]
                %1167 = vst [vmem:[%s855 + $0xc1c] sm:$0xf] %v1166
                %v1168 = vld [vmem:[%s854 + $0x1860] sm:$0xf]
                %1169 = vst [vmem:[%s855 + $0xc30] sm:$0xf] %v1168
                %v1170 = vld [vmem:[%s854 + $0x1888] sm:$0xf]
                %1171 = vst [vmem:[%s855 + $0xc44] sm:$0xf] %v1170
                %v1172 = vld [vmem:[%s854 + $0x18b0] sm:$0xf]
                %1173 = vst [vmem:[%s855 + $0xc58] sm:$0xf] %v1172
                %v1174 = vld [vmem:[%s854 + $0x18d8] sm:$0xf]
                %1175 = vst [vmem:[%s855 + $0xc6c] sm:$0xf] %v1174
              $region52: #{diffusion_forward.3} parent=39 // loop_footer
                %s853 = sadd.s32 1, %s849
              $region53: #{diffusion_forward.3} parent=39 // loop_footer_branch
                %848 = sbr.rel target = $region49
              $region54: #{diffusion_forward.3} parent=39 // loop_exit
                _
            $region40: #{diffusion_forward.3} parent=35 // pred_fallthru
              _
          $region36: #{diffusion_forward.3} parent=31 // pred_fallthru
            _
          %1176 = vnop
        $region32: #{diffusion_forward.3} parent=27 // pred_fallthru
          _
        // Predicated region
        $region55: #{diffusion_forward.3} parent=27 // pred_check
          %p1177 = pneg %p123
        $region56: #{diffusion_forward.3} parent=27 // pred_check_branch
          %1179 = sbr.rel (%p1177) target = $region58
        $region57: #{diffusion_forward.3} parent=27 // pred_region
          %s1180 = smul.u32 5, %s14
          %p1181 = scmp.lt.s32.totalorder %s1180, 9
          %s1182 = scalar_select %p1181, %s1180, 9
          %s1183 = scalar_lea.vmem %s4, %s1182
          %s1184 = smul.u32 5, %s14
        $region58: #{diffusion_forward.3} parent=27 // pred_fallthru
          _
      $region28: #{diffusion_forward.3} parent=5 // pred_fallthru
        _
      %p1185 = scmp.le.s32.totalorder 1, %s14
      %p1186 = scmp.lt.s32.totalorder %s14, 3
      %p1187 = pnand %p1185, %p1186
      %p1188 = pneg %p1187
      // Predicated region
      $region59: #{diffusion_forward.3} parent=5 // pred_check
        _
      $region60: #{diffusion_forward.3} parent=5 // pred_check_branch
        %1190 = sbr.rel (%p1187) target = $region62
      $region61: #{diffusion_forward.3} parent=5 // pred_region
        %s1191 = ssub.s32 %s14, 1
        %s1192 = sand.u32 %s90, 1
        %s1193 = sand.u32 %s90, 1
        %s1194 = smul.addr %s1193, 3200
        %s1195 = scalar_lea.vmem [#allocation2], %s1194
        // Predicated region
        $region63: #{diffusion_forward.3} parent=61 // pred_check
          %p1196 = pneg %p103
        $region64: #{diffusion_forward.3} parent=61 // pred_check_branch
          %1198 = sbr.rel (%p1196) target = $region66
        $region65: #{diffusion_forward.3} parent=61 // pred_region
          _
        $region66: #{diffusion_forward.3} parent=61 // pred_fallthru
          _
        %p1199 = pneg %p35
        %p1200 = pneg %p32
        %p1201 = pneg %p56
        %p1202 = pneg %p53
        %p1203 = pneg %p77
        %p1204 = pneg %p74
        %s1205 = sand.u32 %s90, 1
        %s1206 = sand.u32 %s90, 1
        %s1207 = smul.addr %s1206, 3200
        %s1208 = scalar_lea.vmem [#allocation2], %s1207
        %p1209 = pneg %p103
        %p1210 = pneg %p100
        %s1211 = smul.u32 5, %s19
        %p1212 = scmp.lt.s32.totalorder %s1211, 9
        %s1213 = scalar_select %p1212, %s1211, 9
        %s1214 = scalar_lea.vmem %s4, %s1213
        %p1215 = pneg %p129
        %p1216 = pneg %p126
        %p1217 = pneg %p155
        %p1218 = pneg %p152
        %s1219 = sand.u32 %s142, 1
        %s1220 = scalar_lea.sflag [#allocation4], %s1219
        %s1221 = sand.u32 %s142, 1
        %s1222 = smul.addr %s1221, 5
        %s1223 = scalar_lea.vmem [#allocation3], %s1222
        %s1224 = smul.u32 5, %s19
        %s1225 = smul.u32 5, %s19
        %p1226 = scmp.lt.s32.totalorder %s1225, 9
        %s1227 = scalar_select %p1226, %s1225, 9
        %s1228 = scalar_lea.vmem %s4, %s1227
        %s1229 = smul.u32 5, %s19
        %s1230 = smul.u32 5, %s19
        %v1232 = vld [vmem:[%s0] sm:$0x7]
        %v1234 = vlaneseq
        %v1235 = vshrl.u32 %v1234, 7
        %v1236 = vsub.s32 0, %v1235
        %v1237 = vrot.slane %v1232, %v1236
        %v1238 = vlaneseq
        %v1239 = vshrl.u32 %v1238, 7
        %v1240 = vsub.s32 1, %v1239
        %v1241 = vrot.slane %v1232, %v1240
        %v1242 = vlaneseq
        %v1243 = vshrl.u32 %v1242, 7
        %v1244 = vsub.s32 2, %v1243
        %v1245 = vrot.slane %v1232, %v1244
        %v1249 = vpack.c.bf16 %v1237, %v1237
        %v1250 = vpack.c.bf16 %v1241, %v1241
        %v1251 = vpack.c.bf16 %v1245, %v1245
        %v1252 = vld [vmem:[%s1] sm:$0xff]
        %v1253 = vld [vmem:[%s1 + $0x8] sm:$0xff]
        %v1254 = vld [vmem:[%s1 + $0x10] sm:$0xff]
        %v1255 = vld [vmem:[%s1 + $0x18] sm:$0xff]
        %v1256 = vld [vmem:[%s1 + $0x20] sm:$0xff]
        %v1257 = vld [vmem:[%s1 + $0x28] sm:$0xff]
        %v1258 = vld [vmem:[%s1 + $0x30] sm:$0xff]
        %v1259 = vld [vmem:[%s1 + $0x38] sm:$0xff]
        %v1260 = vld [vmem:[%s1 + $0x40] sm:$0xff]
        %v1261 = vld [vmem:[%s1 + $0x48] sm:$0xff]
        %v1262 = vld [vmem:[%s1 + $0x50] sm:$0xff]
        %v1263 = vld [vmem:[%s1 + $0x58] sm:$0xff]
        %v1264 = vld [vmem:[%s1 + $0x60] sm:$0xff]
        %v1265 = vld [vmem:[%s1 + $0x68] sm:$0xff]
        %v1266 = vld [vmem:[%s1 + $0x70] sm:$0xff]
        %v1267 = vld [vmem:[%s1 + $0x78] sm:$0xff]
        %v1268 = vld [vmem:[%s1 + $0x80] sm:$0xff]
        %v1269 = vld [vmem:[%s1 + $0x88] sm:$0xff]
        %v1270 = vld [vmem:[%s1 + $0x90] sm:$0xff]
        %v1271 = vld [vmem:[%s1 + $0x98] sm:$0xff]
        %v1272 = vld [vmem:[%s1 + $0xa0] sm:$0xff]
        %v1273 = vld [vmem:[%s1 + $0xa8] sm:$0xff]
        %v1274 = vld [vmem:[%s1 + $0xb0] sm:$0xff]
        %v1275 = vld [vmem:[%s1 + $0xb8] sm:$0xff]
        %v1276 = vld [vmem:[%s1 + $0xc0] sm:$0xff]
        %v1277 = vld [vmem:[%s1 + $0xc8] sm:$0xff]
        %v1278 = vld [vmem:[%s1 + $0xd0] sm:$0xff]
        %v1279 = vld [vmem:[%s1 + $0xd8] sm:$0xff]
        %v1280 = vld [vmem:[%s1 + $0xe0] sm:$0xff]
        %v1281 = vld [vmem:[%s1 + $0xe8] sm:$0xff]
        %v1282 = vld [vmem:[%s1 + $0xf0] sm:$0xff]
        %v1283 = vld [vmem:[%s1 + $0xf8] sm:$0xff]
        %v1284 = vld [vmem:[%s1 + $0x100] sm:$0xff]
        %v1285 = vld [vmem:[%s1 + $0x108] sm:$0xff]
        %v1286 = vld [vmem:[%s1 + $0x110] sm:$0xff]
        %v1287 = vld [vmem:[%s1 + $0x118] sm:$0xff]
        %v1288 = vld [vmem:[%s1 + $0x120] sm:$0xff]
        %v1289 = vld [vmem:[%s1 + $0x128] sm:$0xff]
        %v1290 = vld [vmem:[%s1 + $0x130] sm:$0xff]
        %v1291 = vld [vmem:[%s1 + $0x138] sm:$0xff]
        %v1292 = vld [vmem:[%s1 + $0x140] sm:$0xff]
        %v1293 = vld [vmem:[%s1 + $0x148] sm:$0xff]
        %v1294 = vld [vmem:[%s1 + $0x150] sm:$0xff]
        %v1295 = vld [vmem:[%s1 + $0x158] sm:$0xff]
        %v1296 = vld [vmem:[%s1 + $0x160] sm:$0xff]
        %v1297 = vld [vmem:[%s1 + $0x168] sm:$0xff]
        %v1298 = vld [vmem:[%s1 + $0x170] sm:$0xff]
        %v1299 = vld [vmem:[%s1 + $0x178] sm:$0xff]
        %v1300 = vld [vmem:[%s1 + $0x180] sm:$0xff]
        %v1301 = vld [vmem:[%s1 + $0x188] sm:$0xff]
        %v1302 = vld [vmem:[%s1 + $0x190] sm:$0xff]
        %v1303 = vld [vmem:[%s1 + $0x198] sm:$0xff]
        %v1304 = vld [vmem:[%s1 + $0x1a0] sm:$0xff]
        %v1305 = vld [vmem:[%s1 + $0x1a8] sm:$0xff]
        %v1306 = vld [vmem:[%s1 + $0x1b0] sm:$0xff]
        %v1307 = vld [vmem:[%s1 + $0x1b8] sm:$0xff]
        %v1308 = vld [vmem:[%s1 + $0x1c0] sm:$0xff]
        %v1309 = vld [vmem:[%s1 + $0x1c8] sm:$0xff]
        %v1310 = vld [vmem:[%s1 + $0x1d0] sm:$0xff]
        %v1311 = vld [vmem:[%s1 + $0x1d8] sm:$0xff]
        %v1312 = vld [vmem:[%s1 + $0x1e0] sm:$0xff]
        %v1313 = vld [vmem:[%s1 + $0x1e8] sm:$0xff]
        %v1314 = vld [vmem:[%s1 + $0x1f0] sm:$0xff]
        %v1315 = vld [vmem:[%s1 + $0x1f8] sm:$0xff]
        %v1316 = vld [vmem:[%s1 + $0x200] sm:$0xff]
        %v1317 = vld [vmem:[%s1 + $0x208] sm:$0xff]
        %v1318 = vld [vmem:[%s1 + $0x210] sm:$0xff]
        %v1319 = vld [vmem:[%s1 + $0x218] sm:$0xff]
        %v1320 = vld [vmem:[%s1 + $0x220] sm:$0xff]
        %v1321 = vld [vmem:[%s1 + $0x228] sm:$0xff]
        %v1322 = vld [vmem:[%s1 + $0x230] sm:$0xff]
        %v1323 = vld [vmem:[%s1 + $0x238] sm:$0xff]
        %v1324 = vld [vmem:[%s1 + $0x240] sm:$0xff]
        %v1325 = vld [vmem:[%s1 + $0x248] sm:$0xff]
        %v1326 = vld [vmem:[%s1 + $0x250] sm:$0xff]
        %v1327 = vld [vmem:[%s1 + $0x258] sm:$0xff]
        %v1328 = vld [vmem:[%s1 + $0x260] sm:$0xff]
        %v1329 = vld [vmem:[%s1 + $0x268] sm:$0xff]
        %v1330 = vld [vmem:[%s1 + $0x270] sm:$0xff]
        %v1331 = vld [vmem:[%s1 + $0x278] sm:$0xff]
        %v1332 = vld [vmem:[%s1 + $0x280] sm:$0xff]
        %v1333 = vld [vmem:[%s1 + $0x288] sm:$0xff]
        %v1334 = vld [vmem:[%s1 + $0x290] sm:$0xff]
        %v1335 = vld [vmem:[%s1 + $0x298] sm:$0xff]
        %v1336 = vld [vmem:[%s1 + $0x2a0] sm:$0xff]
        %v1337 = vld [vmem:[%s1 + $0x2a8] sm:$0xff]
        %v1338 = vld [vmem:[%s1 + $0x2b0] sm:$0xff]
        %v1339 = vld [vmem:[%s1 + $0x2b8] sm:$0xff]
        %v1340 = vld [vmem:[%s1 + $0x2c0] sm:$0xff]
        %v1341 = vld [vmem:[%s1 + $0x2c8] sm:$0xff]
        %v1342 = vld [vmem:[%s1 + $0x2d0] sm:$0xff]
        %v1343 = vld [vmem:[%s1 + $0x2d8] sm:$0xff]
        %v1344 = vld [vmem:[%s1 + $0x2e0] sm:$0xff]
        %v1345 = vld [vmem:[%s1 + $0x2e8] sm:$0xff]
        %v1346 = vld [vmem:[%s1 + $0x2f0] sm:$0xff]
        %v1347 = vld [vmem:[%s1 + $0x2f8] sm:$0xff]
        %v1348 = vld [vmem:[%s1 + $0x300] sm:$0xff]
        %v1349 = vld [vmem:[%s1 + $0x308] sm:$0xff]
        %v1350 = vld [vmem:[%s1 + $0x310] sm:$0xff]
        %v1351 = vld [vmem:[%s1 + $0x318] sm:$0xff]
        %v1352 = vld [vmem:[%s1 + $0x320] sm:$0xff]
        %v1353 = vld [vmem:[%s1 + $0x328] sm:$0xff]
        %v1354 = vld [vmem:[%s1 + $0x330] sm:$0xff]
        %v1355 = vld [vmem:[%s1 + $0x338] sm:$0xff]
        %v1356 = vld [vmem:[%s1 + $0x340] sm:$0xff]
        %v1357 = vld [vmem:[%s1 + $0x348] sm:$0xff]
        %v1358 = vld [vmem:[%s1 + $0x350] sm:$0xff]
        %v1359 = vld [vmem:[%s1 + $0x358] sm:$0xff]
        %v1360 = vld [vmem:[%s1 + $0x360] sm:$0xff]
        %v1361 = vld [vmem:[%s1 + $0x368] sm:$0xff]
        %v1362 = vld [vmem:[%s1 + $0x370] sm:$0xff]
        %v1363 = vld [vmem:[%s1 + $0x378] sm:$0xff]
        %v1364 = vld [vmem:[%s1 + $0x380] sm:$0xff]
        %v1365 = vld [vmem:[%s1 + $0x388] sm:$0xff]
        %v1366 = vld [vmem:[%s1 + $0x390] sm:$0xff]
        %v1367 = vld [vmem:[%s1 + $0x398] sm:$0xff]
        %v1368 = vld [vmem:[%s1 + $0x3a0] sm:$0xff]
        %v1369 = vld [vmem:[%s1 + $0x3a8] sm:$0xff]
        %v1370 = vld [vmem:[%s1 + $0x3b0] sm:$0xff]
        %v1371 = vld [vmem:[%s1 + $0x3b8] sm:$0xff]
        %v1372 = vld [vmem:[%s1 + $0x3c0] sm:$0xff]
        %v1373 = vld [vmem:[%s1 + $0x3c8] sm:$0xff]
        %v1374 = vld [vmem:[%s1 + $0x3d0] sm:$0xff]
        %v1375 = vld [vmem:[%s1 + $0x3d8] sm:$0xff]
        %v1376 = vld [vmem:[%s1 + $0x3e0] sm:$0xff]
        %v1377 = vld [vmem:[%s1 + $0x3e8] sm:$0xff]
        %v1378 = vld [vmem:[%s1 + $0x3f0] sm:$0xff]
        %v1379 = vld [vmem:[%s1 + $0x3f8] sm:$0xff]
        %v1380 = vld [vmem:[%s1 + $0x400] sm:$0xff]
        %v1381 = vld [vmem:[%s1 + $0x408] sm:$0xff]
        %v1382 = vld [vmem:[%s1 + $0x410] sm:$0xff]
        %v1383 = vld [vmem:[%s1 + $0x418] sm:$0xff]
        %v1384 = vld [vmem:[%s1 + $0x420] sm:$0xff]
        %v1385 = vld [vmem:[%s1 + $0x428] sm:$0xff]
        %v1386 = vld [vmem:[%s1 + $0x430] sm:$0xff]
        %v1387 = vld [vmem:[%s1 + $0x438] sm:$0xff]
        %v1388 = vld [vmem:[%s1 + $0x440] sm:$0xff]
        %v1389 = vld [vmem:[%s1 + $0x448] sm:$0xff]
        %v1390 = vld [vmem:[%s1 + $0x450] sm:$0xff]
        %v1391 = vld [vmem:[%s1 + $0x458] sm:$0xff]
        %v1392 = vld [vmem:[%s1 + $0x460] sm:$0xff]
        %v1393 = vld [vmem:[%s1 + $0x468] sm:$0xff]
        %v1394 = vld [vmem:[%s1 + $0x470] sm:$0xff]
        %v1395 = vld [vmem:[%s1 + $0x478] sm:$0xff]
        %v1396 = vld [vmem:[%s1 + $0x480] sm:$0xff]
        %v1397 = vld [vmem:[%s1 + $0x488] sm:$0xff]
        %v1398 = vld [vmem:[%s1 + $0x490] sm:$0xff]
        %v1399 = vld [vmem:[%s1 + $0x498] sm:$0xff]
        %v1400 = vld [vmem:[%s1 + $0x4a0] sm:$0xff]
        %v1401 = vld [vmem:[%s1 + $0x4a8] sm:$0xff]
        %v1402 = vld [vmem:[%s1 + $0x4b0] sm:$0xff]
        %v1403 = vld [vmem:[%s1 + $0x4b8] sm:$0xff]
        %v1404 = vld [vmem:[%s1 + $0x4c0] sm:$0xff]
        %v1405 = vld [vmem:[%s1 + $0x4c8] sm:$0xff]
        %v1406 = vld [vmem:[%s1 + $0x4d0] sm:$0xff]
        %v1407 = vld [vmem:[%s1 + $0x4d8] sm:$0xff]
        %v1408 = vld [vmem:[%s1 + $0x4e0] sm:$0xff]
        %v1409 = vld [vmem:[%s1 + $0x4e8] sm:$0xff]
        %v1410 = vld [vmem:[%s1 + $0x4f0] sm:$0xff]
        %v1411 = vld [vmem:[%s1 + $0x4f8] sm:$0xff]
        %v1412 = vld [vmem:[%s1 + $0x500] sm:$0xff]
        %v1413 = vld [vmem:[%s1 + $0x508] sm:$0xff]
        %v1414 = vld [vmem:[%s1 + $0x510] sm:$0xff]
        %v1415 = vld [vmem:[%s1 + $0x518] sm:$0xff]
        %v1416 = vld [vmem:[%s1 + $0x520] sm:$0xff]
        %v1417 = vld [vmem:[%s1 + $0x528] sm:$0xff]
        %v1418 = vld [vmem:[%s1 + $0x530] sm:$0xff]
        %v1419 = vld [vmem:[%s1 + $0x538] sm:$0xff]
        %v1420 = vld [vmem:[%s1 + $0x540] sm:$0xff]
        %v1421 = vld [vmem:[%s1 + $0x548] sm:$0xff]
        %v1422 = vld [vmem:[%s1 + $0x550] sm:$0xff]
        %v1423 = vld [vmem:[%s1 + $0x558] sm:$0xff]
        %v1424 = vld [vmem:[%s1 + $0x560] sm:$0xff]
        %v1425 = vld [vmem:[%s1 + $0x568] sm:$0xff]
        %v1426 = vld [vmem:[%s1 + $0x570] sm:$0xff]
        %v1427 = vld [vmem:[%s1 + $0x578] sm:$0xff]
        %v1428 = vld [vmem:[%s1 + $0x580] sm:$0xff]
        %v1429 = vld [vmem:[%s1 + $0x588] sm:$0xff]
        %v1430 = vld [vmem:[%s1 + $0x590] sm:$0xff]
        %v1431 = vld [vmem:[%s1 + $0x598] sm:$0xff]
        %v1432 = vld [vmem:[%s1 + $0x5a0] sm:$0xff]
        %v1433 = vld [vmem:[%s1 + $0x5a8] sm:$0xff]
        %v1434 = vld [vmem:[%s1 + $0x5b0] sm:$0xff]
        %v1435 = vld [vmem:[%s1 + $0x5b8] sm:$0xff]
        %v1436 = vld [vmem:[%s1 + $0x5c0] sm:$0xff]
        %v1437 = vld [vmem:[%s1 + $0x5c8] sm:$0xff]
        %v1438 = vld [vmem:[%s1 + $0x5d0] sm:$0xff]
        %v1439 = vld [vmem:[%s1 + $0x5d8] sm:$0xff]
        %v1440 = vld [vmem:[%s1 + $0x5e0] sm:$0xff]
        %v1441 = vld [vmem:[%s1 + $0x5e8] sm:$0xff]
        %v1442 = vld [vmem:[%s1 + $0x5f0] sm:$0xff]
        %v1443 = vld [vmem:[%s1 + $0x5f8] sm:$0xff]
        %v1444 = vld [vmem:[%s1 + $0x600] sm:$0xff]
        %v1445 = vld [vmem:[%s1 + $0x608] sm:$0xff]
        %v1446 = vld [vmem:[%s1 + $0x610] sm:$0xff]
        %v1447 = vld [vmem:[%s1 + $0x618] sm:$0xff]
        %v1448 = vld [vmem:[%s1 + $0x620] sm:$0xff]
        %v1449 = vld [vmem:[%s1 + $0x628] sm:$0xff]
        %v1450 = vld [vmem:[%s1 + $0x630] sm:$0xff]
        %v1451 = vld [vmem:[%s1 + $0x638] sm:$0xff]
        %v1452 = vld [vmem:[%s2] sm:$0xff]
        %v1453 = vld [vmem:[%s2 + $0x8] sm:$0x3]
        %v1654 = vunpack.c.l.b16 %v1252
        %v1655 = vunpack.c.h.b16 %v1252
        %v1656 = vunpack.c.l.b16 %v1253
        %v1657 = vunpack.c.h.b16 %v1253
        %v1658 = vunpack.c.l.b16 %v1254
        %v1659 = vunpack.c.h.b16 %v1254
        %v1660 = vunpack.c.l.b16 %v1255
        %v1661 = vunpack.c.h.b16 %v1255
        %v1662 = vunpack.c.l.b16 %v1256
        %v1663 = vunpack.c.h.b16 %v1256
        %v1664 = vunpack.c.l.b16 %v1257
        %v1665 = vunpack.c.h.b16 %v1257
        %v1666 = vunpack.c.l.b16 %v1258
        %v1667 = vunpack.c.h.b16 %v1258
        %v1668 = vunpack.c.l.b16 %v1259
        %v1669 = vunpack.c.h.b16 %v1259
        %v1670 = vunpack.c.l.b16 %v1260
        %v1671 = vunpack.c.h.b16 %v1260
        %v1672 = vunpack.c.l.b16 %v1261
        %v1673 = vunpack.c.h.b16 %v1261
        %v1674 = vunpack.c.l.b16 %v1262
        %v1675 = vunpack.c.h.b16 %v1262
        %v1676 = vunpack.c.l.b16 %v1263
        %v1677 = vunpack.c.h.b16 %v1263
        %v1678 = vunpack.c.l.b16 %v1264
        %v1679 = vunpack.c.h.b16 %v1264
        %v1680 = vunpack.c.l.b16 %v1265
        %v1681 = vunpack.c.h.b16 %v1265
        %v1682 = vunpack.c.l.b16 %v1266
        %v1683 = vunpack.c.h.b16 %v1266
        %v1684 = vunpack.c.l.b16 %v1267
        %v1685 = vunpack.c.h.b16 %v1267
        %v1686 = vunpack.c.l.b16 %v1268
        %v1687 = vunpack.c.h.b16 %v1268
        %v1688 = vunpack.c.l.b16 %v1269
        %v1689 = vunpack.c.h.b16 %v1269
        %v1690 = vunpack.c.l.b16 %v1270
        %v1691 = vunpack.c.h.b16 %v1270
        %v1692 = vunpack.c.l.b16 %v1271
        %v1693 = vunpack.c.h.b16 %v1271
        %v1694 = vunpack.c.l.b16 %v1272
        %v1695 = vunpack.c.h.b16 %v1272
        %v1696 = vunpack.c.l.b16 %v1273
        %v1697 = vunpack.c.h.b16 %v1273
        %v1698 = vunpack.c.l.b16 %v1274
        %v1699 = vunpack.c.h.b16 %v1274
        %v1700 = vunpack.c.l.b16 %v1275
        %v1701 = vunpack.c.h.b16 %v1275
        %v1702 = vunpack.c.l.b16 %v1276
        %v1703 = vunpack.c.h.b16 %v1276
        %v1704 = vunpack.c.l.b16 %v1277
        %v1705 = vunpack.c.h.b16 %v1277
        %v1706 = vunpack.c.l.b16 %v1278
        %v1707 = vunpack.c.h.b16 %v1278
        %v1708 = vunpack.c.l.b16 %v1279
        %v1709 = vunpack.c.h.b16 %v1279
        %v1710 = vunpack.c.l.b16 %v1280
        %v1711 = vunpack.c.h.b16 %v1280
        %v1712 = vunpack.c.l.b16 %v1281
        %v1713 = vunpack.c.h.b16 %v1281
        %v1714 = vunpack.c.l.b16 %v1282
        %v1715 = vunpack.c.h.b16 %v1282
        %v1716 = vunpack.c.l.b16 %v1283
        %v1717 = vunpack.c.h.b16 %v1283
        %v1718 = vunpack.c.l.b16 %v1284
        %v1719 = vunpack.c.h.b16 %v1284
        %v1720 = vunpack.c.l.b16 %v1285
        %v1721 = vunpack.c.h.b16 %v1285
        %v1722 = vunpack.c.l.b16 %v1286
        %v1723 = vunpack.c.h.b16 %v1286
        %v1724 = vunpack.c.l.b16 %v1287
        %v1725 = vunpack.c.h.b16 %v1287
        %v1726 = vunpack.c.l.b16 %v1288
        %v1727 = vunpack.c.h.b16 %v1288
        %v1728 = vunpack.c.l.b16 %v1289
        %v1729 = vunpack.c.h.b16 %v1289
        %v1730 = vunpack.c.l.b16 %v1290
        %v1731 = vunpack.c.h.b16 %v1290
        %v1732 = vunpack.c.l.b16 %v1291
        %v1733 = vunpack.c.h.b16 %v1291
        %v1734 = vunpack.c.l.b16 %v1292
        %v1735 = vunpack.c.h.b16 %v1292
        %v1736 = vunpack.c.l.b16 %v1293
        %v1737 = vunpack.c.h.b16 %v1293
        %v1738 = vunpack.c.l.b16 %v1294
        %v1739 = vunpack.c.h.b16 %v1294
        %v1740 = vunpack.c.l.b16 %v1295
        %v1741 = vunpack.c.h.b16 %v1295
        %v1742 = vunpack.c.l.b16 %v1296
        %v1743 = vunpack.c.h.b16 %v1296
        %v1744 = vunpack.c.l.b16 %v1297
        %v1745 = vunpack.c.h.b16 %v1297
        %v1746 = vunpack.c.l.b16 %v1298
        %v1747 = vunpack.c.h.b16 %v1298
        %v1748 = vunpack.c.l.b16 %v1299
        %v1749 = vunpack.c.h.b16 %v1299
        %v1750 = vunpack.c.l.b16 %v1300
        %v1751 = vunpack.c.h.b16 %v1300
        %v1752 = vunpack.c.l.b16 %v1301
        %v1753 = vunpack.c.h.b16 %v1301
        %v1754 = vunpack.c.l.b16 %v1302
        %v1755 = vunpack.c.h.b16 %v1302
        %v1756 = vunpack.c.l.b16 %v1303
        %v1757 = vunpack.c.h.b16 %v1303
        %v1758 = vunpack.c.l.b16 %v1304
        %v1759 = vunpack.c.h.b16 %v1304
        %v1760 = vunpack.c.l.b16 %v1305
        %v1761 = vunpack.c.h.b16 %v1305
        %v1762 = vunpack.c.l.b16 %v1306
        %v1763 = vunpack.c.h.b16 %v1306
        %v1764 = vunpack.c.l.b16 %v1307
        %v1765 = vunpack.c.h.b16 %v1307
        %v1766 = vunpack.c.l.b16 %v1308
        %v1767 = vunpack.c.h.b16 %v1308
        %v1768 = vunpack.c.l.b16 %v1309
        %v1769 = vunpack.c.h.b16 %v1309
        %v1770 = vunpack.c.l.b16 %v1310
        %v1771 = vunpack.c.h.b16 %v1310
        %v1772 = vunpack.c.l.b16 %v1311
        %v1773 = vunpack.c.h.b16 %v1311
        %v1774 = vunpack.c.l.b16 %v1312
        %v1775 = vunpack.c.h.b16 %v1312
        %v1776 = vunpack.c.l.b16 %v1313
        %v1777 = vunpack.c.h.b16 %v1313
        %v1778 = vunpack.c.l.b16 %v1314
        %v1779 = vunpack.c.h.b16 %v1314
        %v1780 = vunpack.c.l.b16 %v1315
        %v1781 = vunpack.c.h.b16 %v1315
        %v1782 = vunpack.c.l.b16 %v1316
        %v1783 = vunpack.c.h.b16 %v1316
        %v1784 = vunpack.c.l.b16 %v1317
        %v1785 = vunpack.c.h.b16 %v1317
        %v1786 = vunpack.c.l.b16 %v1318
        %v1787 = vunpack.c.h.b16 %v1318
        %v1788 = vunpack.c.l.b16 %v1319
        %v1789 = vunpack.c.h.b16 %v1319
        %v1790 = vunpack.c.l.b16 %v1320
        %v1791 = vunpack.c.h.b16 %v1320
        %v1792 = vunpack.c.l.b16 %v1321
        %v1793 = vunpack.c.h.b16 %v1321
        %v1794 = vunpack.c.l.b16 %v1322
        %v1795 = vunpack.c.h.b16 %v1322
        %v1796 = vunpack.c.l.b16 %v1323
        %v1797 = vunpack.c.h.b16 %v1323
        %v1798 = vunpack.c.l.b16 %v1324
        %v1799 = vunpack.c.h.b16 %v1324
        %v1800 = vunpack.c.l.b16 %v1325
        %v1801 = vunpack.c.h.b16 %v1325
        %v1802 = vunpack.c.l.b16 %v1326
        %v1803 = vunpack.c.h.b16 %v1326
        %v1804 = vunpack.c.l.b16 %v1327
        %v1805 = vunpack.c.h.b16 %v1327
        %v1806 = vunpack.c.l.b16 %v1328
        %v1807 = vunpack.c.h.b16 %v1328
        %v1808 = vunpack.c.l.b16 %v1329
        %v1809 = vunpack.c.h.b16 %v1329
        %v1810 = vunpack.c.l.b16 %v1330
        %v1811 = vunpack.c.h.b16 %v1330
        %v1812 = vunpack.c.l.b16 %v1331
        %v1813 = vunpack.c.h.b16 %v1331
        %v1814 = vunpack.c.l.b16 %v1332
        %v1815 = vunpack.c.h.b16 %v1332
        %v1816 = vunpack.c.l.b16 %v1333
        %v1817 = vunpack.c.h.b16 %v1333
        %v1818 = vunpack.c.l.b16 %v1334
        %v1819 = vunpack.c.h.b16 %v1334
        %v1820 = vunpack.c.l.b16 %v1335
        %v1821 = vunpack.c.h.b16 %v1335
        %v1822 = vunpack.c.l.b16 %v1336
        %v1823 = vunpack.c.h.b16 %v1336
        %v1824 = vunpack.c.l.b16 %v1337
        %v1825 = vunpack.c.h.b16 %v1337
        %v1826 = vunpack.c.l.b16 %v1338
        %v1827 = vunpack.c.h.b16 %v1338
        %v1828 = vunpack.c.l.b16 %v1339
        %v1829 = vunpack.c.h.b16 %v1339
        %v1830 = vunpack.c.l.b16 %v1340
        %v1831 = vunpack.c.h.b16 %v1340
        %v1832 = vunpack.c.l.b16 %v1341
        %v1833 = vunpack.c.h.b16 %v1341
        %v1834 = vunpack.c.l.b16 %v1342
        %v1835 = vunpack.c.h.b16 %v1342
        %v1836 = vunpack.c.l.b16 %v1343
        %v1837 = vunpack.c.h.b16 %v1343
        %v1838 = vunpack.c.l.b16 %v1344
        %v1839 = vunpack.c.h.b16 %v1344
        %v1840 = vunpack.c.l.b16 %v1345
        %v1841 = vunpack.c.h.b16 %v1345
        %v1842 = vunpack.c.l.b16 %v1346
        %v1843 = vunpack.c.h.b16 %v1346
        %v1844 = vunpack.c.l.b16 %v1347
        %v1845 = vunpack.c.h.b16 %v1347
        %v1846 = vunpack.c.l.b16 %v1348
        %v1847 = vunpack.c.h.b16 %v1348
        %v1848 = vunpack.c.l.b16 %v1349
        %v1849 = vunpack.c.h.b16 %v1349
        %v1850 = vunpack.c.l.b16 %v1350
        %v1851 = vunpack.c.h.b16 %v1350
        %v1852 = vunpack.c.l.b16 %v1351
        %v1853 = vunpack.c.h.b16 %v1351
        %v1854 = vunpack.c.l.b16 %v1352
        %v1855 = vunpack.c.h.b16 %v1352
        %v1856 = vunpack.c.l.b16 %v1353
        %v1857 = vunpack.c.h.b16 %v1353
        %v1858 = vunpack.c.l.b16 %v1354
        %v1859 = vunpack.c.h.b16 %v1354
        %v1860 = vunpack.c.l.b16 %v1355
        %v1861 = vunpack.c.h.b16 %v1355
        %v1862 = vunpack.c.l.b16 %v1356
        %v1863 = vunpack.c.h.b16 %v1356
        %v1864 = vunpack.c.l.b16 %v1357
        %v1865 = vunpack.c.h.b16 %v1357
        %v1866 = vunpack.c.l.b16 %v1358
        %v1867 = vunpack.c.h.b16 %v1358
        %v1868 = vunpack.c.l.b16 %v1359
        %v1869 = vunpack.c.h.b16 %v1359
        %v1870 = vunpack.c.l.b16 %v1360
        %v1871 = vunpack.c.h.b16 %v1360
        %v1872 = vunpack.c.l.b16 %v1361
        %v1873 = vunpack.c.h.b16 %v1361
        %v1874 = vunpack.c.l.b16 %v1362
        %v1875 = vunpack.c.h.b16 %v1362
        %v1876 = vunpack.c.l.b16 %v1363
        %v1877 = vunpack.c.h.b16 %v1363
        %v1878 = vunpack.c.l.b16 %v1364
        %v1879 = vunpack.c.h.b16 %v1364
        %v1880 = vunpack.c.l.b16 %v1365
        %v1881 = vunpack.c.h.b16 %v1365
        %v1882 = vunpack.c.l.b16 %v1366
        %v1883 = vunpack.c.h.b16 %v1366
        %v1884 = vunpack.c.l.b16 %v1367
        %v1885 = vunpack.c.h.b16 %v1367
        %v1886 = vunpack.c.l.b16 %v1368
        %v1887 = vunpack.c.h.b16 %v1368
        %v1888 = vunpack.c.l.b16 %v1369
        %v1889 = vunpack.c.h.b16 %v1369
        %v1890 = vunpack.c.l.b16 %v1370
        %v1891 = vunpack.c.h.b16 %v1370
        %v1892 = vunpack.c.l.b16 %v1371
        %v1893 = vunpack.c.h.b16 %v1371
        %v1894 = vunpack.c.l.b16 %v1372
        %v1895 = vunpack.c.h.b16 %v1372
        %v1896 = vunpack.c.l.b16 %v1373
        %v1897 = vunpack.c.h.b16 %v1373
        %v1898 = vunpack.c.l.b16 %v1374
        %v1899 = vunpack.c.h.b16 %v1374
        %v1900 = vunpack.c.l.b16 %v1375
        %v1901 = vunpack.c.h.b16 %v1375
        %v1902 = vunpack.c.l.b16 %v1376
        %v1903 = vunpack.c.h.b16 %v1376
        %v1904 = vunpack.c.l.b16 %v1377
        %v1905 = vunpack.c.h.b16 %v1377
        %v1906 = vunpack.c.l.b16 %v1378
        %v1907 = vunpack.c.h.b16 %v1378
        %v1908 = vunpack.c.l.b16 %v1379
        %v1909 = vunpack.c.h.b16 %v1379
        %v1910 = vunpack.c.l.b16 %v1380
        %v1911 = vunpack.c.h.b16 %v1380
        %v1912 = vunpack.c.l.b16 %v1381
        %v1913 = vunpack.c.h.b16 %v1381
        %v1914 = vunpack.c.l.b16 %v1382
        %v1915 = vunpack.c.h.b16 %v1382
        %v1916 = vunpack.c.l.b16 %v1383
        %v1917 = vunpack.c.h.b16 %v1383
        %v1918 = vunpack.c.l.b16 %v1384
        %v1919 = vunpack.c.h.b16 %v1384
        %v1920 = vunpack.c.l.b16 %v1385
        %v1921 = vunpack.c.h.b16 %v1385
        %v1922 = vunpack.c.l.b16 %v1386
        %v1923 = vunpack.c.h.b16 %v1386
        %v1924 = vunpack.c.l.b16 %v1387
        %v1925 = vunpack.c.h.b16 %v1387
        %v1926 = vunpack.c.l.b16 %v1388
        %v1927 = vunpack.c.h.b16 %v1388
        %v1928 = vunpack.c.l.b16 %v1389
        %v1929 = vunpack.c.h.b16 %v1389
        %v1930 = vunpack.c.l.b16 %v1390
        %v1931 = vunpack.c.h.b16 %v1390
        %v1932 = vunpack.c.l.b16 %v1391
        %v1933 = vunpack.c.h.b16 %v1391
        %v1934 = vunpack.c.l.b16 %v1392
        %v1935 = vunpack.c.h.b16 %v1392
        %v1936 = vunpack.c.l.b16 %v1393
        %v1937 = vunpack.c.h.b16 %v1393
        %v1938 = vunpack.c.l.b16 %v1394
        %v1939 = vunpack.c.h.b16 %v1394
        %v1940 = vunpack.c.l.b16 %v1395
        %v1941 = vunpack.c.h.b16 %v1395
        %v1942 = vunpack.c.l.b16 %v1396
        %v1943 = vunpack.c.h.b16 %v1396
        %v1944 = vunpack.c.l.b16 %v1397
        %v1945 = vunpack.c.h.b16 %v1397
        %v1946 = vunpack.c.l.b16 %v1398
        %v1947 = vunpack.c.h.b16 %v1398
        %v1948 = vunpack.c.l.b16 %v1399
        %v1949 = vunpack.c.h.b16 %v1399
        %v1950 = vunpack.c.l.b16 %v1400
        %v1951 = vunpack.c.h.b16 %v1400
        %v1952 = vunpack.c.l.b16 %v1401
        %v1953 = vunpack.c.h.b16 %v1401
        %v1954 = vunpack.c.l.b16 %v1402
        %v1955 = vunpack.c.h.b16 %v1402
        %v1956 = vunpack.c.l.b16 %v1403
        %v1957 = vunpack.c.h.b16 %v1403
        %v1958 = vunpack.c.l.b16 %v1404
        %v1959 = vunpack.c.h.b16 %v1404
        %v1960 = vunpack.c.l.b16 %v1405
        %v1961 = vunpack.c.h.b16 %v1405
        %v1962 = vunpack.c.l.b16 %v1406
        %v1963 = vunpack.c.h.b16 %v1406
        %v1964 = vunpack.c.l.b16 %v1407
        %v1965 = vunpack.c.h.b16 %v1407
        %v1966 = vunpack.c.l.b16 %v1408
        %v1967 = vunpack.c.h.b16 %v1408
        %v1968 = vunpack.c.l.b16 %v1409
        %v1969 = vunpack.c.h.b16 %v1409
        %v1970 = vunpack.c.l.b16 %v1410
        %v1971 = vunpack.c.h.b16 %v1410
        %v1972 = vunpack.c.l.b16 %v1411
        %v1973 = vunpack.c.h.b16 %v1411
        %v1974 = vunpack.c.l.b16 %v1412
        %v1975 = vunpack.c.h.b16 %v1412
        %v1976 = vunpack.c.l.b16 %v1413
        %v1977 = vunpack.c.h.b16 %v1413
        %v1978 = vunpack.c.l.b16 %v1414
        %v1979 = vunpack.c.h.b16 %v1414
        %v1980 = vunpack.c.l.b16 %v1415
        %v1981 = vunpack.c.h.b16 %v1415
        %v1982 = vunpack.c.l.b16 %v1416
        %v1983 = vunpack.c.h.b16 %v1416
        %v1984 = vunpack.c.l.b16 %v1417
        %v1985 = vunpack.c.h.b16 %v1417
        %v1986 = vunpack.c.l.b16 %v1418
        %v1987 = vunpack.c.h.b16 %v1418
        %v1988 = vunpack.c.l.b16 %v1419
        %v1989 = vunpack.c.h.b16 %v1419
        %v1990 = vunpack.c.l.b16 %v1420
        %v1991 = vunpack.c.h.b16 %v1420
        %v1992 = vunpack.c.l.b16 %v1421
        %v1993 = vunpack.c.h.b16 %v1421
        %v1994 = vunpack.c.l.b16 %v1422
        %v1995 = vunpack.c.h.b16 %v1422
        %v1996 = vunpack.c.l.b16 %v1423
        %v1997 = vunpack.c.h.b16 %v1423
        %v1998 = vunpack.c.l.b16 %v1424
        %v1999 = vunpack.c.h.b16 %v1424
        %v2000 = vunpack.c.l.b16 %v1425
        %v2001 = vunpack.c.h.b16 %v1425
        %v2002 = vunpack.c.l.b16 %v1426
        %v2003 = vunpack.c.h.b16 %v1426
        %v2004 = vunpack.c.l.b16 %v1427
        %v2005 = vunpack.c.h.b16 %v1427
        %v2006 = vunpack.c.l.b16 %v1428
        %v2007 = vunpack.c.h.b16 %v1428
        %v2008 = vunpack.c.l.b16 %v1429
        %v2009 = vunpack.c.h.b16 %v1429
        %v2010 = vunpack.c.l.b16 %v1430
        %v2011 = vunpack.c.h.b16 %v1430
        %v2012 = vunpack.c.l.b16 %v1431
        %v2013 = vunpack.c.h.b16 %v1431
        %v2014 = vunpack.c.l.b16 %v1432
        %v2015 = vunpack.c.h.b16 %v1432
        %v2016 = vunpack.c.l.b16 %v1433
        %v2017 = vunpack.c.h.b16 %v1433
        %v2018 = vunpack.c.l.b16 %v1434
        %v2019 = vunpack.c.h.b16 %v1434
        %v2020 = vunpack.c.l.b16 %v1435
        %v2021 = vunpack.c.h.b16 %v1435
        %v2022 = vunpack.c.l.b16 %v1436
        %v2023 = vunpack.c.h.b16 %v1436
        %v2024 = vunpack.c.l.b16 %v1437
        %v2025 = vunpack.c.h.b16 %v1437
        %v2026 = vunpack.c.l.b16 %v1438
        %v2027 = vunpack.c.h.b16 %v1438
        %v2028 = vunpack.c.l.b16 %v1439
        %v2029 = vunpack.c.h.b16 %v1439
        %v2030 = vunpack.c.l.b16 %v1440
        %v2031 = vunpack.c.h.b16 %v1440
        %v2032 = vunpack.c.l.b16 %v1441
        %v2033 = vunpack.c.h.b16 %v1441
        %v2034 = vunpack.c.l.b16 %v1442
        %v2035 = vunpack.c.h.b16 %v1442
        %v2036 = vunpack.c.l.b16 %v1443
        %v2037 = vunpack.c.h.b16 %v1443
        %v2038 = vunpack.c.l.b16 %v1444
        %v2039 = vunpack.c.h.b16 %v1444
        %v2040 = vunpack.c.l.b16 %v1445
        %v2041 = vunpack.c.h.b16 %v1445
        %v2042 = vunpack.c.l.b16 %v1446
        %v2043 = vunpack.c.h.b16 %v1446
        %v2044 = vunpack.c.l.b16 %v1447
        %v2045 = vunpack.c.h.b16 %v1447
        %v2046 = vunpack.c.l.b16 %v1448
        %v2047 = vunpack.c.h.b16 %v1448
        %v2048 = vunpack.c.l.b16 %v1449
        %v2049 = vunpack.c.h.b16 %v1449
        %v2050 = vunpack.c.l.b16 %v1450
        %v2051 = vunpack.c.h.b16 %v1450
        %v2052 = vunpack.c.l.b16 %v1451
        %v2053 = vunpack.c.h.b16 %v1451
        %v2054 = vpack.c.b16 %v1664, %v1654
        %v2055 = vpack.c.b16 %v1665, %v1655
        %v2056 = vpack.c.b16 %v1666, %v1656
        %v2057 = vpack.c.b16 %v1667, %v1657
        %v2058 = vpack.c.b16 %v1668, %v1658
        %v2059 = vpack.c.b16 %v1669, %v1659
        %v2060 = vpack.c.b16 %v1670, %v1660
        %v2061 = vpack.c.b16 %v1671, %v1661
        %v2062 = vpack.c.b16 %v1672, %v1662
        %v2063 = vpack.c.b16 %v1673, %v1663
        %v2064 = vpack.c.b16 %v1684, %v1674
        %v2065 = vpack.c.b16 %v1685, %v1675
        %v2066 = vpack.c.b16 %v1686, %v1676
        %v2067 = vpack.c.b16 %v1687, %v1677
        %v2068 = vpack.c.b16 %v1688, %v1678
        %v2069 = vpack.c.b16 %v1689, %v1679
        %v2070 = vpack.c.b16 %v1690, %v1680
        %v2071 = vpack.c.b16 %v1691, %v1681
        %v2072 = vpack.c.b16 %v1692, %v1682
        %v2073 = vpack.c.b16 %v1693, %v1683
        %v2074 = vpack.c.b16 %v1704, %v1694
        %v2075 = vpack.c.b16 %v1705, %v1695
        %v2076 = vpack.c.b16 %v1706, %v1696
        %v2077 = vpack.c.b16 %v1707, %v1697
        %v2078 = vpack.c.b16 %v1708, %v1698
        %v2079 = vpack.c.b16 %v1709, %v1699
        %v2080 = vpack.c.b16 %v1710, %v1700
        %v2081 = vpack.c.b16 %v1711, %v1701
        %v2082 = vpack.c.b16 %v1712, %v1702
        %v2083 = vpack.c.b16 %v1713, %v1703
        %v2084 = vpack.c.b16 %v1724, %v1714
        %v2085 = vpack.c.b16 %v1725, %v1715
        %v2086 = vpack.c.b16 %v1726, %v1716
        %v2087 = vpack.c.b16 %v1727, %v1717
        %v2088 = vpack.c.b16 %v1728, %v1718
        %v2089 = vpack.c.b16 %v1729, %v1719
        %v2090 = vpack.c.b16 %v1730, %v1720
        %v2091 = vpack.c.b16 %v1731, %v1721
        %v2092 = vpack.c.b16 %v1732, %v1722
        %v2093 = vpack.c.b16 %v1733, %v1723
        %v2094 = vpack.c.b16 %v1744, %v1734
        %v2095 = vpack.c.b16 %v1745, %v1735
        %v2096 = vpack.c.b16 %v1746, %v1736
        %v2097 = vpack.c.b16 %v1747, %v1737
        %v2098 = vpack.c.b16 %v1748, %v1738
        %v2099 = vpack.c.b16 %v1749, %v1739
        %v2100 = vpack.c.b16 %v1750, %v1740
        %v2101 = vpack.c.b16 %v1751, %v1741
        %v2102 = vpack.c.b16 %v1752, %v1742
        %v2103 = vpack.c.b16 %v1753, %v1743
        %v2104 = vpack.c.b16 %v1764, %v1754
        %v2105 = vpack.c.b16 %v1765, %v1755
        %v2106 = vpack.c.b16 %v1766, %v1756
        %v2107 = vpack.c.b16 %v1767, %v1757
        %v2108 = vpack.c.b16 %v1768, %v1758
        %v2109 = vpack.c.b16 %v1769, %v1759
        %v2110 = vpack.c.b16 %v1770, %v1760
        %v2111 = vpack.c.b16 %v1771, %v1761
        %v2112 = vpack.c.b16 %v1772, %v1762
        %v2113 = vpack.c.b16 %v1773, %v1763
        %v2114 = vpack.c.b16 %v1784, %v1774
        %v2115 = vpack.c.b16 %v1785, %v1775
        %v2116 = vpack.c.b16 %v1786, %v1776
        %v2117 = vpack.c.b16 %v1787, %v1777
        %v2118 = vpack.c.b16 %v1788, %v1778
        %v2119 = vpack.c.b16 %v1789, %v1779
        %v2120 = vpack.c.b16 %v1790, %v1780
        %v2121 = vpack.c.b16 %v1791, %v1781
        %v2122 = vpack.c.b16 %v1792, %v1782
        %v2123 = vpack.c.b16 %v1793, %v1783
        %v2124 = vpack.c.b16 %v1804, %v1794
        %v2125 = vpack.c.b16 %v1805, %v1795
        %v2126 = vpack.c.b16 %v1806, %v1796
        %v2127 = vpack.c.b16 %v1807, %v1797
        %v2128 = vpack.c.b16 %v1808, %v1798
        %v2129 = vpack.c.b16 %v1809, %v1799
        %v2130 = vpack.c.b16 %v1810, %v1800
        %v2131 = vpack.c.b16 %v1811, %v1801
        %v2132 = vpack.c.b16 %v1812, %v1802
        %v2133 = vpack.c.b16 %v1813, %v1803
        %v2134 = vpack.c.b16 %v1824, %v1814
        %v2135 = vpack.c.b16 %v1825, %v1815
        %v2136 = vpack.c.b16 %v1826, %v1816
        %v2137 = vpack.c.b16 %v1827, %v1817
        %v2138 = vpack.c.b16 %v1828, %v1818
        %v2139 = vpack.c.b16 %v1829, %v1819
        %v2140 = vpack.c.b16 %v1830, %v1820
        %v2141 = vpack.c.b16 %v1831, %v1821
        %v2142 = vpack.c.b16 %v1832, %v1822
        %v2143 = vpack.c.b16 %v1833, %v1823
        %v2144 = vpack.c.b16 %v1844, %v1834
        %v2145 = vpack.c.b16 %v1845, %v1835
        %v2146 = vpack.c.b16 %v1846, %v1836
        %v2147 = vpack.c.b16 %v1847, %v1837
        %v2148 = vpack.c.b16 %v1848, %v1838
        %v2149 = vpack.c.b16 %v1849, %v1839
        %v2150 = vpack.c.b16 %v1850, %v1840
        %v2151 = vpack.c.b16 %v1851, %v1841
        %v2152 = vpack.c.b16 %v1852, %v1842
        %v2153 = vpack.c.b16 %v1853, %v1843
        %v2154 = vpack.c.b16 %v1864, %v1854
        %v2155 = vpack.c.b16 %v1865, %v1855
        %v2156 = vpack.c.b16 %v1866, %v1856
        %v2157 = vpack.c.b16 %v1867, %v1857
        %v2158 = vpack.c.b16 %v1868, %v1858
        %v2159 = vpack.c.b16 %v1869, %v1859
        %v2160 = vpack.c.b16 %v1870, %v1860
        %v2161 = vpack.c.b16 %v1871, %v1861
        %v2162 = vpack.c.b16 %v1872, %v1862
        %v2163 = vpack.c.b16 %v1873, %v1863
        %v2164 = vpack.c.b16 %v1884, %v1874
        %v2165 = vpack.c.b16 %v1885, %v1875
        %v2166 = vpack.c.b16 %v1886, %v1876
        %v2167 = vpack.c.b16 %v1887, %v1877
        %v2168 = vpack.c.b16 %v1888, %v1878
        %v2169 = vpack.c.b16 %v1889, %v1879
        %v2170 = vpack.c.b16 %v1890, %v1880
        %v2171 = vpack.c.b16 %v1891, %v1881
        %v2172 = vpack.c.b16 %v1892, %v1882
        %v2173 = vpack.c.b16 %v1893, %v1883
        %v2174 = vpack.c.b16 %v1904, %v1894
        %v2175 = vpack.c.b16 %v1905, %v1895
        %v2176 = vpack.c.b16 %v1906, %v1896
        %v2177 = vpack.c.b16 %v1907, %v1897
        %v2178 = vpack.c.b16 %v1908, %v1898
        %v2179 = vpack.c.b16 %v1909, %v1899
        %v2180 = vpack.c.b16 %v1910, %v1900
        %v2181 = vpack.c.b16 %v1911, %v1901
        %v2182 = vpack.c.b16 %v1912, %v1902
        %v2183 = vpack.c.b16 %v1913, %v1903
        %v2184 = vpack.c.b16 %v1924, %v1914
        %v2185 = vpack.c.b16 %v1925, %v1915
        %v2186 = vpack.c.b16 %v1926, %v1916
        %v2187 = vpack.c.b16 %v1927, %v1917
        %v2188 = vpack.c.b16 %v1928, %v1918
        %v2189 = vpack.c.b16 %v1929, %v1919
        %v2190 = vpack.c.b16 %v1930, %v1920
        %v2191 = vpack.c.b16 %v1931, %v1921
        %v2192 = vpack.c.b16 %v1932, %v1922
        %v2193 = vpack.c.b16 %v1933, %v1923
        %v2194 = vpack.c.b16 %v1944, %v1934
        %v2195 = vpack.c.b16 %v1945, %v1935
        %v2196 = vpack.c.b16 %v1946, %v1936
        %v2197 = vpack.c.b16 %v1947, %v1937
        %v2198 = vpack.c.b16 %v1948, %v1938
        %v2199 = vpack.c.b16 %v1949, %v1939
        %v2200 = vpack.c.b16 %v1950, %v1940
        %v2201 = vpack.c.b16 %v1951, %v1941
        %v2202 = vpack.c.b16 %v1952, %v1942
        %v2203 = vpack.c.b16 %v1953, %v1943
        %v2204 = vpack.c.b16 %v1964, %v1954
        %v2205 = vpack.c.b16 %v1965, %v1955
        %v2206 = vpack.c.b16 %v1966, %v1956
        %v2207 = vpack.c.b16 %v1967, %v1957
        %v2208 = vpack.c.b16 %v1968, %v1958
        %v2209 = vpack.c.b16 %v1969, %v1959
        %v2210 = vpack.c.b16 %v1970, %v1960
        %v2211 = vpack.c.b16 %v1971, %v1961
        %v2212 = vpack.c.b16 %v1972, %v1962
        %v2213 = vpack.c.b16 %v1973, %v1963
        %v2214 = vpack.c.b16 %v1984, %v1974
        %v2215 = vpack.c.b16 %v1985, %v1975
        %v2216 = vpack.c.b16 %v1986, %v1976
        %v2217 = vpack.c.b16 %v1987, %v1977
        %v2218 = vpack.c.b16 %v1988, %v1978
        %v2219 = vpack.c.b16 %v1989, %v1979
        %v2220 = vpack.c.b16 %v1990, %v1980
        %v2221 = vpack.c.b16 %v1991, %v1981
        %v2222 = vpack.c.b16 %v1992, %v1982
        %v2223 = vpack.c.b16 %v1993, %v1983
        %v2224 = vpack.c.b16 %v2004, %v1994
        %v2225 = vpack.c.b16 %v2005, %v1995
        %v2226 = vpack.c.b16 %v2006, %v1996
        %v2227 = vpack.c.b16 %v2007, %v1997
        %v2228 = vpack.c.b16 %v2008, %v1998
        %v2229 = vpack.c.b16 %v2009, %v1999
        %v2230 = vpack.c.b16 %v2010, %v2000
        %v2231 = vpack.c.b16 %v2011, %v2001
        %v2232 = vpack.c.b16 %v2012, %v2002
        %v2233 = vpack.c.b16 %v2013, %v2003
        %v2234 = vpack.c.b16 %v2024, %v2014
        %v2235 = vpack.c.b16 %v2025, %v2015
        %v2236 = vpack.c.b16 %v2026, %v2016
        %v2237 = vpack.c.b16 %v2027, %v2017
        %v2238 = vpack.c.b16 %v2028, %v2018
        %v2239 = vpack.c.b16 %v2029, %v2019
        %v2240 = vpack.c.b16 %v2030, %v2020
        %v2241 = vpack.c.b16 %v2031, %v2021
        %v2242 = vpack.c.b16 %v2032, %v2022
        %v2243 = vpack.c.b16 %v2033, %v2023
        %v2244 = vpack.c.b16 %v2044, %v2034
        %v2245 = vpack.c.b16 %v2045, %v2035
        %v2246 = vpack.c.b16 %v2046, %v2036
        %v2247 = vpack.c.b16 %v2047, %v2037
        %v2248 = vpack.c.b16 %v2048, %v2038
        %v2249 = vpack.c.b16 %v2049, %v2039
        %v2250 = vpack.c.b16 %v2050, %v2040
        %v2251 = vpack.c.b16 %v2051, %v2041
        %v2252 = vpack.c.b16 %v2052, %v2042
        %v2253 = vpack.c.b16 %v2053, %v2043
        %v2456 = vlaneseq
        %v2457 = vshrl.u32 %v2456, 7
        %v2458 = vsub.s32 0, %v2457
        %v2459 = vrot.slane %v1452, %v2458
        %v2460 = vlaneseq
        %v2461 = vshrl.u32 %v2460, 7
        %v2462 = vsub.s32 1, %v2461
        %v2463 = vrot.slane %v1452, %v2462
        %v2464 = vlaneseq
        %v2465 = vshrl.u32 %v2464, 7
        %v2466 = vsub.s32 2, %v2465
        %v2467 = vrot.slane %v1452, %v2466
        %v2468 = vlaneseq
        %v2469 = vshrl.u32 %v2468, 7
        %v2470 = vsub.s32 3, %v2469
        %v2471 = vrot.slane %v1452, %v2470
        %v2472 = vlaneseq
        %v2473 = vshrl.u32 %v2472, 7
        %v2474 = vsub.s32 4, %v2473
        %v2475 = vrot.slane %v1452, %v2474
        %v2476 = vlaneseq
        %v2477 = vshrl.u32 %v2476, 7
        %v2478 = vsub.s32 5, %v2477
        %v2479 = vrot.slane %v1452, %v2478
        %v2480 = vlaneseq
        %v2481 = vshrl.u32 %v2480, 7
        %v2482 = vsub.s32 6, %v2481
        %v2483 = vrot.slane %v1452, %v2482
        %v2484 = vlaneseq
        %v2485 = vshrl.u32 %v2484, 7
        %v2486 = vsub.s32 7, %v2485
        %v2487 = vrot.slane %v1452, %v2486
        %v2488 = vlaneseq
        %v2489 = vshrl.u32 %v2488, 7
        %v2490 = vsub.s32 0, %v2489
        %v2491 = vrot.slane %v1453, %v2490
        %v2492 = vlaneseq
        %v2493 = vshrl.u32 %v2492, 7
        %v2494 = vsub.s32 1, %v2493
        %v2495 = vrot.slane %v1453, %v2494
        %vm2506 = vcmask 523264
        %v2508 = vsel %vm2506, %v1251, 0
        %2510 = vmatprep.subr.bf16.mxu0 %v2055
        %2511 = vmatpush1.bf16.msra.mxu0 %v2054
        %2512 = vmatprep.subr.bf16.mxu0 %v2065
        %2513 = vmatpush1.bf16.msra.mxu0 %v2064
        %2514 = vmatprep.subr.bf16.mxu0 %v2075
        %2515 = vmatpush1.bf16.msra.mxu0 %v2074
        %2516 = vmatprep.subr.bf16.mxu0 %v2085
        %2517 = vmatpush1.bf16.msra.mxu0 %v2084
        %2518 = vmatprep.subr.bf16.mxu0 %v2095
        %2519 = vmatpush1.bf16.msra.mxu0 %v2094
        %2520 = vmatprep.subr.bf16.mxu0 %v2105
        %2521 = vmatpush1.bf16.msra.mxu0 %v2104
        %2522 = vmatprep.subr.bf16.mxu0 %v2115
        %2523 = vmatpush1.bf16.msra.mxu0 %v2114
        %2524 = vmatprep.subr.bf16.mxu0 %v2125
        %2525 = vmatpush1.bf16.msra.mxu0 %v2124
        %2526 = vmatprep.subr.bf16.mxu0 %v2135
        %2527 = vmatpush1.bf16.msra.mxu0 %v2134
        %2528 = vmatprep.subr.bf16.mxu0 %v2145
        %2529 = vmatpush1.bf16.msra.mxu0 %v2144
        %2530 = vmatprep.subr.bf16.mxu0 %v2155
        %2531 = vmatpush1.bf16.msra.mxu0 %v2154
        %2532 = vmatprep.subr.bf16.mxu0 %v2165
        %2533 = vmatpush1.bf16.msra.mxu0 %v2164
        %2534 = vmatprep.subr.bf16.mxu0 %v2175
        %2535 = vmatpush1.bf16.msra.mxu0 %v2174
        %2536 = vmatprep.subr.bf16.mxu0 %v2185
        %2537 = vmatpush1.bf16.msra.mxu0 %v2184
        %2538 = vmatprep.subr.bf16.mxu0 %v2195
        %2539 = vmatpush1.bf16.msra.mxu0 %v2194
        %2540 = vmatprep.subr.bf16.mxu0 %v2205
        %2541 = vmatpush1.bf16.msra.mxu0 %v2204
        %2542 = vmatprep.mubr.bf16.mxu0 %v1250
        %2543 = vmatmul.mubr.bf16.gmra.mrb[0].mxu0 %v1249
        %v2544 = vpop.f32.mrb[0].mxu0
        %v2545 = vadd.f32 %v2459, %v2544
        %v2546 = vpop.f32.mrb[0].mxu0
        %v2547 = vadd.f32 %v2463, %v2546
        %v2548 = vpop.f32.mrb[0].mxu0
        %v2549 = vpop.f32.mrb[0].mxu0
        %2550 = vdwg.mxu0
        %2551 = vmatprep.subr.bf16.mxu0 %v2215
        %2552 = vmatpush1.bf16.msra.mxu0 %v2214
        %2553 = vmatprep.subr.bf16.mxu0 %v2225
        %2554 = vmatpush1.bf16.msra.mxu0 %v2224
        %2555 = vmatprep.subr.bf16.mxu0 %v2235
        %2556 = vmatpush1.bf16.msra.mxu0 %v2234
        %2557 = vmatprep.subr.bf16.mxu0 %v2245
        %2558 = vmatpush1.bf16.msra.mxu0 %v2244
        %2559 = vmatprep.subr.bf16.mxu0 0
        %2560 = vmatpush1.bf16.msra.mxu0 0
        %2561 = vmatprep.subr.bf16.mxu0 0
        %2562 = vmatpush1.bf16.msra.mxu0 0
        %2563 = vmatprep.subr.bf16.mxu0 0
        %2564 = vmatpush1.bf16.msra.mxu0 0
        %2565 = vmatprep.subr.bf16.mxu0 0
        %2566 = vmatpush1.bf16.msra.mxu0 0
        %2567 = vmatprep.subr.bf16.mxu0 0
        %2568 = vmatpush1.bf16.msra.mxu0 0
        %2569 = vmatprep.subr.bf16.mxu0 0
        %2570 = vmatpush1.bf16.msra.mxu0 0
        %2571 = vmatprep.subr.bf16.mxu0 0
        %2572 = vmatpush1.bf16.msra.mxu0 0
        %2573 = vmatprep.subr.bf16.mxu0 0
        %2574 = vmatpush1.bf16.msra.mxu0 0
        %2575 = vmatprep.subr.bf16.mxu0 0
        %2576 = vmatpush1.bf16.msra.mxu0 0
        %2577 = vmatprep.subr.bf16.mxu0 0
        %2578 = vmatpush1.bf16.msra.mxu0 0
        %2579 = vmatprep.subr.bf16.mxu0 0
        %2580 = vmatpush1.bf16.msra.mxu0 0
        %2581 = vmatprep.subr.bf16.mxu0 0
        %2582 = vmatpush1.bf16.msra.mxu0 0
        %2583 = vmatprep.mubr.bf16.mxu0 0
        %2584 = vmatmul.mubr.bf16.gmra.mrb[0].mxu0 %v2508
        %v2585 = vpop.f32.mrb[0].mxu0
        %v2586 = vadd.f32 %v2545, %v2585
        %v2587 = vpop.f32.mrb[0].mxu0
        %v2588 = vadd.f32 %v2547, %v2587
        %v2589 = vpop.f32.mrb[0].mxu0
        %v2590 = vpop.f32.mrb[0].mxu0
        %2591 = vdwg.mxu0
        %2592 = vmatprep.subr.bf16.mxu0 %v2057
        %2593 = vmatpush1.bf16.msra.mxu0 %v2056
        %2594 = vmatprep.subr.bf16.mxu0 %v2067
        %2595 = vmatpush1.bf16.msra.mxu0 %v2066
        %2596 = vmatprep.subr.bf16.mxu0 %v2077
        %2597 = vmatpush1.bf16.msra.mxu0 %v2076
        %2598 = vmatprep.subr.bf16.mxu0 %v2087
        %2599 = vmatpush1.bf16.msra.mxu0 %v2086
        %2600 = vmatprep.subr.bf16.mxu0 %v2097
        %2601 = vmatpush1.bf16.msra.mxu0 %v2096
        %2602 = vmatprep.subr.bf16.mxu0 %v2107
        %2603 = vmatpush1.bf16.msra.mxu0 %v2106
        %2604 = vmatprep.subr.bf16.mxu0 %v2117
        %2605 = vmatpush1.bf16.msra.mxu0 %v2116
        %2606 = vmatprep.subr.bf16.mxu0 %v2127
        %2607 = vmatpush1.bf16.msra.mxu0 %v2126
        %2608 = vmatprep.subr.bf16.mxu0 %v2137
        %2609 = vmatpush1.bf16.msra.mxu0 %v2136
        %2610 = vmatprep.subr.bf16.mxu0 %v2147
        %2611 = vmatpush1.bf16.msra.mxu0 %v2146
        %2612 = vmatprep.subr.bf16.mxu0 %v2157
        %2613 = vmatpush1.bf16.msra.mxu0 %v2156
        %2614 = vmatprep.subr.bf16.mxu0 %v2167
        %2615 = vmatpush1.bf16.msra.mxu0 %v2166
        %2616 = vmatprep.subr.bf16.mxu0 %v2177
        %2617 = vmatpush1.bf16.msra.mxu0 %v2176
        %2618 = vmatprep.subr.bf16.mxu0 %v2187
        %2619 = vmatpush1.bf16.msra.mxu0 %v2186
        %2620 = vmatprep.subr.bf16.mxu0 %v2197
        %2621 = vmatpush1.bf16.msra.mxu0 %v2196
        %2622 = vmatprep.subr.bf16.mxu0 %v2207
        %2623 = vmatpush1.bf16.msra.mxu0 %v2206
        %2624 = vmatprep.mubr.bf16.mxu0 %v1250
        %2625 = vmatmul.mubr.bf16.gmra.mrb[0].mxu0 %v1249
        %v2626 = vpop.f32.mrb[0].mxu0
        %v2627 = vadd.f32 %v2467, %v2626
        %v2628 = vpop.f32.mrb[0].mxu0
        %v2629 = vadd.f32 %v2471, %v2628
        %v2630 = vpop.f32.mrb[0].mxu0
        %v2631 = vpop.f32.mrb[0].mxu0
        %2632 = vdwg.mxu0
        %2633 = vmatprep.subr.bf16.mxu0 %v2217
        %2634 = vmatpush1.bf16.msra.mxu0 %v2216
        %2635 = vmatprep.subr.bf16.mxu0 %v2227
        %2636 = vmatpush1.bf16.msra.mxu0 %v2226
        %2637 = vmatprep.subr.bf16.mxu0 %v2237
        %2638 = vmatpush1.bf16.msra.mxu0 %v2236
        %2639 = vmatprep.subr.bf16.mxu0 %v2247
        %2640 = vmatpush1.bf16.msra.mxu0 %v2246
        %2641 = vmatprep.subr.bf16.mxu0 0
        %2642 = vmatpush1.bf16.msra.mxu0 0
        %2643 = vmatprep.subr.bf16.mxu0 0
        %2644 = vmatpush1.bf16.msra.mxu0 0
        %2645 = vmatprep.subr.bf16.mxu0 0
        %2646 = vmatpush1.bf16.msra.mxu0 0
        %2647 = vmatprep.subr.bf16.mxu0 0
        %2648 = vmatpush1.bf16.msra.mxu0 0
        %2649 = vmatprep.subr.bf16.mxu0 0
        %2650 = vmatpush1.bf16.msra.mxu0 0
        %2651 = vmatprep.subr.bf16.mxu0 0
        %2652 = vmatpush1.bf16.msra.mxu0 0
        %2653 = vmatprep.subr.bf16.mxu0 0
        %2654 = vmatpush1.bf16.msra.mxu0 0
        %2655 = vmatprep.subr.bf16.mxu0 0
        %2656 = vmatpush1.bf16.msra.mxu0 0
        %2657 = vmatprep.subr.bf16.mxu0 0
        %2658 = vmatpush1.bf16.msra.mxu0 0
        %2659 = vmatprep.subr.bf16.mxu0 0
        %2660 = vmatpush1.bf16.msra.mxu0 0
        %2661 = vmatprep.subr.bf16.mxu0 0
        %2662 = vmatpush1.bf16.msra.mxu0 0
        %2663 = vmatprep.subr.bf16.mxu0 0
        %2664 = vmatpush1.bf16.msra.mxu0 0
        %2665 = vmatprep.mubr.bf16.mxu0 0
        %2666 = vmatmul.mubr.bf16.gmra.mrb[0].mxu0 %v2508
        %v2667 = vpop.f32.mrb[0].mxu0
        %v2668 = vadd.f32 %v2627, %v2667
        %v2669 = vpop.f32.mrb[0].mxu0
        %v2670 = vadd.f32 %v2629, %v2669
        %v2671 = vpop.f32.mrb[0].mxu0
        %v2672 = vpop.f32.mrb[0].mxu0
        %2673 = vdwg.mxu0
        %2674 = vmatprep.subr.bf16.mxu0 %v2059
        %2675 = vmatpush1.bf16.msra.mxu0 %v2058
        %2676 = vmatprep.subr.bf16.mxu0 %v2069
        %2677 = vmatpush1.bf16.msra.mxu0 %v2068
        %2678 = vmatprep.subr.bf16.mxu0 %v2079
        %2679 = vmatpush1.bf16.msra.mxu0 %v2078
        %2680 = vmatprep.subr.bf16.mxu0 %v2089
        %2681 = vmatpush1.bf16.msra.mxu0 %v2088
        %2682 = vmatprep.subr.bf16.mxu0 %v2099
        %2683 = vmatpush1.bf16.msra.mxu0 %v2098
        %2684 = vmatprep.subr.bf16.mxu0 %v2109
        %2685 = vmatpush1.bf16.msra.mxu0 %v2108
        %2686 = vmatprep.subr.bf16.mxu0 %v2119
        %2687 = vmatpush1.bf16.msra.mxu0 %v2118
        %2688 = vmatprep.subr.bf16.mxu0 %v2129
        %2689 = vmatpush1.bf16.msra.mxu0 %v2128
        %2690 = vmatprep.subr.bf16.mxu0 %v2139
        %2691 = vmatpush1.bf16.msra.mxu0 %v2138
        %2692 = vmatprep.subr.bf16.mxu0 %v2149
        %2693 = vmatpush1.bf16.msra.mxu0 %v2148
        %2694 = vmatprep.subr.bf16.mxu0 %v2159
        %2695 = vmatpush1.bf16.msra.mxu0 %v2158
        %2696 = vmatprep.subr.bf16.mxu0 %v2169
        %2697 = vmatpush1.bf16.msra.mxu0 %v2168
        %2698 = vmatprep.subr.bf16.mxu0 %v2179
        %2699 = vmatpush1.bf16.msra.mxu0 %v2178
        %2700 = vmatprep.subr.bf16.mxu0 %v2189
        %2701 = vmatpush1.bf16.msra.mxu0 %v2188
        %2702 = vmatprep.subr.bf16.mxu0 %v2199
        %2703 = vmatpush1.bf16.msra.mxu0 %v2198
        %2704 = vmatprep.subr.bf16.mxu0 %v2209
        %2705 = vmatpush1.bf16.msra.mxu0 %v2208
        %2706 = vmatprep.mubr.bf16.mxu0 %v1250
        %2707 = vmatmul.mubr.bf16.gmra.mrb[0].mxu0 %v1249
        %v2708 = vpop.f32.mrb[0].mxu0
        %v2709 = vadd.f32 %v2475, %v2708
        %v2710 = vpop.f32.mrb[0].mxu0
        %v2711 = vadd.f32 %v2479, %v2710
        %v2712 = vpop.f32.mrb[0].mxu0
        %v2713 = vpop.f32.mrb[0].mxu0
        %2714 = vdwg.mxu0
        %2715 = vmatprep.subr.bf16.mxu0 %v2219
        %2716 = vmatpush1.bf16.msra.mxu0 %v2218
        %2717 = vmatprep.subr.bf16.mxu0 %v2229
        %2718 = vmatpush1.bf16.msra.mxu0 %v2228
        %2719 = vmatprep.subr.bf16.mxu0 %v2239
        %2720 = vmatpush1.bf16.msra.mxu0 %v2238
        %2721 = vmatprep.subr.bf16.mxu0 %v2249
        %2722 = vmatpush1.bf16.msra.mxu0 %v2248
        %2723 = vmatprep.subr.bf16.mxu0 0
        %2724 = vmatpush1.bf16.msra.mxu0 0
        %2725 = vmatprep.subr.bf16.mxu0 0
        %2726 = vmatpush1.bf16.msra.mxu0 0
        %2727 = vmatprep.subr.bf16.mxu0 0
        %2728 = vmatpush1.bf16.msra.mxu0 0
        %2729 = vmatprep.subr.bf16.mxu0 0
        %2730 = vmatpush1.bf16.msra.mxu0 0
        %2731 = vmatprep.subr.bf16.mxu0 0
        %2732 = vmatpush1.bf16.msra.mxu0 0
        %2733 = vmatprep.subr.bf16.mxu0 0
        %2734 = vmatpush1.bf16.msra.mxu0 0
        %2735 = vmatprep.subr.bf16.mxu0 0
        %2736 = vmatpush1.bf16.msra.mxu0 0
        %2737 = vmatprep.subr.bf16.mxu0 0
        %2738 = vmatpush1.bf16.msra.mxu0 0
        %2739 = vmatprep.subr.bf16.mxu0 0
        %2740 = vmatpush1.bf16.msra.mxu0 0
        %2741 = vmatprep.subr.bf16.mxu0 0
        %2742 = vmatpush1.bf16.msra.mxu0 0
        %2743 = vmatprep.subr.bf16.mxu0 0
        %2744 = vmatpush1.bf16.msra.mxu0 0
        %2745 = vmatprep.subr.bf16.mxu0 0
        %2746 = vmatpush1.bf16.msra.mxu0 0
        %2747 = vmatprep.mubr.bf16.mxu0 0
        %2748 = vmatmul.mubr.bf16.gmra.mrb[0].mxu0 %v2508
        %v2749 = vpop.f32.mrb[0].mxu0
        %v2750 = vadd.f32 %v2709, %v2749
        %v2751 = vpop.f32.mrb[0].mxu0
        %v2752 = vadd.f32 %v2711, %v2751
        %v2753 = vpop.f32.mrb[0].mxu0
        %v2754 = vpop.f32.mrb[0].mxu0
        %2755 = vdwg.mxu0
        %2756 = vmatprep.subr.bf16.mxu0 %v2061
        %2757 = vmatpush1.bf16.msra.mxu0 %v2060
        %2758 = vmatprep.subr.bf16.mxu0 %v2071
        %2759 = vmatpush1.bf16.msra.mxu0 %v2070
        %2760 = vmatprep.subr.bf16.mxu0 %v2081
        %2761 = vmatpush1.bf16.msra.mxu0 %v2080
        %2762 = vmatprep.subr.bf16.mxu0 %v2091
        %2763 = vmatpush1.bf16.msra.mxu0 %v2090
        %2764 = vmatprep.subr.bf16.mxu0 %v2101
        %2765 = vmatpush1.bf16.msra.mxu0 %v2100
        %2766 = vmatprep.subr.bf16.mxu0 %v2111
        %2767 = vmatpush1.bf16.msra.mxu0 %v2110
        %2768 = vmatprep.subr.bf16.mxu0 %v2121
        %2769 = vmatpush1.bf16.msra.mxu0 %v2120
        %2770 = vmatprep.subr.bf16.mxu0 %v2131
        %2771 = vmatpush1.bf16.msra.mxu0 %v2130
        %2772 = vmatprep.subr.bf16.mxu0 %v2141
        %2773 = vmatpush1.bf16.msra.mxu0 %v2140
        %2774 = vmatprep.subr.bf16.mxu0 %v2151
        %2775 = vmatpush1.bf16.msra.mxu0 %v2150
        %2776 = vmatprep.subr.bf16.mxu0 %v2161
        %2777 = vmatpush1.bf16.msra.mxu0 %v2160
        %2778 = vmatprep.subr.bf16.mxu0 %v2171
        %2779 = vmatpush1.bf16.msra.mxu0 %v2170
        %2780 = vmatprep.subr.bf16.mxu0 %v2181
        %2781 = vmatpush1.bf16.msra.mxu0 %v2180
        %2782 = vmatprep.subr.bf16.mxu0 %v2191
        %2783 = vmatpush1.bf16.msra.mxu0 %v2190
        %2784 = vmatprep.subr.bf16.mxu0 %v2201
        %2785 = vmatpush1.bf16.msra.mxu0 %v2200
        %2786 = vmatprep.subr.bf16.mxu0 %v2211
        %2787 = vmatpush1.bf16.msra.mxu0 %v2210
        %2788 = vmatprep.mubr.bf16.mxu0 %v1250
        %2789 = vmatmul.mubr.bf16.gmra.mrb[0].mxu0 %v1249
        %v2790 = vpop.f32.mrb[0].mxu0
        %v2791 = vadd.f32 %v2483, %v2790
        %v2792 = vpop.f32.mrb[0].mxu0
        %v2793 = vadd.f32 %v2487, %v2792
        %v2794 = vpop.f32.mrb[0].mxu0
        %v2795 = vpop.f32.mrb[0].mxu0
        %2796 = vdwg.mxu0
        %2797 = vmatprep.subr.bf16.mxu0 %v2221
        %2798 = vmatpush1.bf16.msra.mxu0 %v2220
        %2799 = vmatprep.subr.bf16.mxu0 %v2231
        %2800 = vmatpush1.bf16.msra.mxu0 %v2230
        %2801 = vmatprep.subr.bf16.mxu0 %v2241
        %2802 = vmatpush1.bf16.msra.mxu0 %v2240
        %2803 = vmatprep.subr.bf16.mxu0 %v2251
        %2804 = vmatpush1.bf16.msra.mxu0 %v2250
        %2805 = vmatprep.subr.bf16.mxu0 0
        %2806 = vmatpush1.bf16.msra.mxu0 0
        %2807 = vmatprep.subr.bf16.mxu0 0
        %2808 = vmatpush1.bf16.msra.mxu0 0
        %2809 = vmatprep.subr.bf16.mxu0 0
        %2810 = vmatpush1.bf16.msra.mxu0 0
        %2811 = vmatprep.subr.bf16.mxu0 0
        %2812 = vmatpush1.bf16.msra.mxu0 0
        %2813 = vmatprep.subr.bf16.mxu0 0
        %2814 = vmatpush1.bf16.msra.mxu0 0
        %2815 = vmatprep.subr.bf16.mxu0 0
        %2816 = vmatpush1.bf16.msra.mxu0 0
        %2817 = vmatprep.subr.bf16.mxu0 0
        %2818 = vmatpush1.bf16.msra.mxu0 0
        %2819 = vmatprep.subr.bf16.mxu0 0
        %2820 = vmatpush1.bf16.msra.mxu0 0
        %2821 = vmatprep.subr.bf16.mxu0 0
        %2822 = vmatpush1.bf16.msra.mxu0 0
        %2823 = vmatprep.subr.bf16.mxu0 0
        %2824 = vmatpush1.bf16.msra.mxu0 0
        %2825 = vmatprep.subr.bf16.mxu0 0
        %2826 = vmatpush1.bf16.msra.mxu0 0
        %2827 = vmatprep.subr.bf16.mxu0 0
        %2828 = vmatpush1.bf16.msra.mxu0 0
        %2829 = vmatprep.mubr.bf16.mxu0 0
        %2830 = vmatmul.mubr.bf16.gmra.mrb[0].mxu0 %v2508
        %v2831 = vpop.f32.mrb[0].mxu0
        %v2832 = vadd.f32 %v2791, %v2831
        %v2833 = vpop.f32.mrb[0].mxu0
        %v2834 = vadd.f32 %v2793, %v2833
        %v2835 = vpop.f32.mrb[0].mxu0
        %v2836 = vpop.f32.mrb[0].mxu0
        %2837 = vdwg.mxu0
        %2838 = vmatprep.subr.bf16.mxu0 %v2063
        %2839 = vmatpush1.bf16.msra.mxu0 %v2062
        %2840 = vmatprep.subr.bf16.mxu0 %v2073
        %2841 = vmatpush1.bf16.msra.mxu0 %v2072
        %2842 = vmatprep.subr.bf16.mxu0 %v2083
        %2843 = vmatpush1.bf16.msra.mxu0 %v2082
        %2844 = vmatprep.subr.bf16.mxu0 %v2093
        %2845 = vmatpush1.bf16.msra.mxu0 %v2092
        %2846 = vmatprep.subr.bf16.mxu0 %v2103
        %2847 = vmatpush1.bf16.msra.mxu0 %v2102
        %2848 = vmatprep.subr.bf16.mxu0 %v2113
        %2849 = vmatpush1.bf16.msra.mxu0 %v2112
        %2850 = vmatprep.subr.bf16.mxu0 %v2123
        %2851 = vmatpush1.bf16.msra.mxu0 %v2122
        %2852 = vmatprep.subr.bf16.mxu0 %v2133
        %2853 = vmatpush1.bf16.msra.mxu0 %v2132
        %2854 = vmatprep.subr.bf16.mxu0 %v2143
        %2855 = vmatpush1.bf16.msra.mxu0 %v2142
        %2856 = vmatprep.subr.bf16.mxu0 %v2153
        %2857 = vmatpush1.bf16.msra.mxu0 %v2152
        %2858 = vmatprep.subr.bf16.mxu0 %v2163
        %2859 = vmatpush1.bf16.msra.mxu0 %v2162
        %2860 = vmatprep.subr.bf16.mxu0 %v2173
        %2861 = vmatpush1.bf16.msra.mxu0 %v2172
        %2862 = vmatprep.subr.bf16.mxu0 %v2183
        %2863 = vmatpush1.bf16.msra.mxu0 %v2182
        %2864 = vmatprep.subr.bf16.mxu0 %v2193
        %2865 = vmatpush1.bf16.msra.mxu0 %v2192
        %2866 = vmatprep.subr.bf16.mxu0 %v2203
        %2867 = vmatpush1.bf16.msra.mxu0 %v2202
        %2868 = vmatprep.subr.bf16.mxu0 %v2213
        %2869 = vmatpush1.bf16.msra.mxu0 %v2212
        %2870 = vmatprep.mubr.bf16.mxu0 %v1250
        %2871 = vmatmul.mubr.bf16.gmra.mrb[0].mxu0 %v1249
        %v2872 = vpop.f32.mrb[0].mxu0
        %v2873 = vadd.f32 %v2491, %v2872
        %v2874 = vpop.f32.mrb[0].mxu0
        %v2875 = vadd.f32 %v2495, %v2874
        %v2876 = vpop.f32.mrb[0].mxu0
        %v2877 = vpop.f32.mrb[0].mxu0
        %2878 = vdwg.mxu0
        %2879 = vmatprep.subr.bf16.mxu0 %v2223
        %2880 = vmatpush1.bf16.msra.mxu0 %v2222
        %2881 = vmatprep.subr.bf16.mxu0 %v2233
        %2882 = vmatpush1.bf16.msra.mxu0 %v2232
        %2883 = vmatprep.subr.bf16.mxu0 %v2243
        %2884 = vmatpush1.bf16.msra.mxu0 %v2242
        %2885 = vmatprep.subr.bf16.mxu0 %v2253
        %2886 = vmatpush1.bf16.msra.mxu0 %v2252
        %2887 = vmatprep.subr.bf16.mxu0 0
        %2888 = vmatpush1.bf16.msra.mxu0 0
        %2889 = vmatprep.subr.bf16.mxu0 0
        %2890 = vmatpush1.bf16.msra.mxu0 0
        %2891 = vmatprep.subr.bf16.mxu0 0
        %2892 = vmatpush1.bf16.msra.mxu0 0
        %2893 = vmatprep.subr.bf16.mxu0 0
        %2894 = vmatpush1.bf16.msra.mxu0 0
        %2895 = vmatprep.subr.bf16.mxu0 0
        %2896 = vmatpush1.bf16.msra.mxu0 0
        %2897 = vmatprep.subr.bf16.mxu0 0
        %2898 = vmatpush1.bf16.msra.mxu0 0
        %2899 = vmatprep.subr.bf16.mxu0 0
        %2900 = vmatpush1.bf16.msra.mxu0 0
        %2901 = vmatprep.subr.bf16.mxu0 0
        %2902 = vmatpush1.bf16.msra.mxu0 0
        %2903 = vmatprep.subr.bf16.mxu0 0
        %2904 = vmatpush1.bf16.msra.mxu0 0
        %2905 = vmatprep.subr.bf16.mxu0 0
        %2906 = vmatpush1.bf16.msra.mxu0 0
        %2907 = vmatprep.subr.bf16.mxu0 0
        %2908 = vmatpush1.bf16.msra.mxu0 0
        %2909 = vmatprep.subr.bf16.mxu0 0
        %2910 = vmatpush1.bf16.msra.mxu0 0
        %2911 = vmatprep.mubr.bf16.mxu0 0
        %2912 = vmatmul.mubr.bf16.gmra.mrb[0].mxu0 %v2508
        %v2913 = vpop.f32.mrb[0].mxu0
        %v2914 = vadd.f32 %v2873, %v2913
        %v2915 = vpop.f32.mrb[0].mxu0
        %v2916 = vadd.f32 %v2875, %v2915
        %v2917 = vpop.f32.mrb[0].mxu0
        %v2918 = vpop.f32.mrb[0].mxu0
        %2919 = vdwg.mxu0
        %v2920 = vxor.u32 %v2586, 2147483648
        %v2921 = vxor.u32 %v2588, 2147483648
        %v2922 = vxor.u32 %v2668, 2147483648
        %v2923 = vxor.u32 %v2670, 2147483648
        %v2924 = vxor.u32 %v2750, 2147483648
        %v2925 = vxor.u32 %v2752, 2147483648
        %v2926 = vxor.u32 %v2832, 2147483648
        %v2927 = vxor.u32 %v2834, 2147483648
        %v2928 = vxor.u32 %v2914, 2147483648
        %v2929 = vxor.u32 %v2916, 2147483648
        %v2930 = vmul.f32 %v2920, 1.442695
        %v2931 = vpow.pop %v2930
        %v2932 = vmul.f32 %v2921, 1.442695
        %v2933 = vpow.pop %v2932
        %v2934 = vmul.f32 %v2922, 1.442695
        %v2935 = vpow.pop %v2934
        %v2936 = vmul.f32 %v2923, 1.442695
        %v2937 = vpow.pop %v2936
        %v2938 = vmul.f32 %v2924, 1.442695
        %v2939 = vpow.pop %v2938
        %v2940 = vmul.f32 %v2925, 1.442695
        %v2941 = vpow.pop %v2940
        %v2942 = vmul.f32 %v2926, 1.442695
        %v2943 = vpow.pop %v2942
        %v2944 = vmul.f32 %v2927, 1.442695
        %v2945 = vpow.pop %v2944
        %v2946 = vmul.f32 %v2928, 1.442695
        %v2947 = vpow.pop %v2946
        %v2948 = vmul.f32 %v2929, 1.442695
        %v2949 = vpow.pop %v2948
        %v2950 = vadd.f32 %v2931, 1.0
        %v2951 = vadd.f32 %v2933, 1.0
        %v2952 = vadd.f32 %v2935, 1.0
        %v2953 = vadd.f32 %v2937, 1.0
        %v2954 = vadd.f32 %v2939, 1.0
        %v2955 = vadd.f32 %v2941, 1.0
        %v2956 = vadd.f32 %v2943, 1.0
        %v2957 = vadd.f32 %v2945, 1.0
        %v2958 = vadd.f32 %v2947, 1.0
        %v2959 = vadd.f32 %v2949, 1.0
        %v2960 = vrcp.pop %v2950
        %v2961 = vmul.f32 1.0, %v2960
        %v2962 = vrcp.pop %v2951
        %v2963 = vmul.f32 1.0, %v2962
        %v2964 = vrcp.pop %v2952
        %v2965 = vmul.f32 1.0, %v2964
        %v2966 = vrcp.pop %v2953
        %v2967 = vmul.f32 1.0, %v2966
        %v2968 = vrcp.pop %v2954
        %v2969 = vmul.f32 1.0, %v2968
        %v2970 = vrcp.pop %v2955
        %v2971 = vmul.f32 1.0, %v2970
        %v2972 = vrcp.pop %v2956
        %v2973 = vmul.f32 1.0, %v2972
        %v2974 = vrcp.pop %v2957
        %v2975 = vmul.f32 1.0, %v2974
        %v2976 = vrcp.pop %v2958
        %v2977 = vmul.f32 1.0, %v2976
        %v2978 = vrcp.pop %v2959
        %v2979 = vmul.f32 1.0, %v2978
        %v2980 = vmul.f32 %v2586, %v2961
        %v2981 = vmul.f32 %v2588, %v2963
        %v2982 = vmul.f32 %v2668, %v2965
        %v2983 = vmul.f32 %v2670, %v2967
        %v2984 = vmul.f32 %v2750, %v2969
        %v2985 = vmul.f32 %v2752, %v2971
        %v2986 = vmul.f32 %v2832, %v2973
        %v2987 = vmul.f32 %v2834, %v2975
        %v2988 = vmul.f32 %v2914, %v2977
        %v2989 = vmul.f32 %v2916, %v2979
        %v2990 = vpack.c.bf16 %v2980, %v2980
        %v2991 = vpack.c.bf16 %v2981, %v2981
        %v2992 = vpack.c.bf16 %v2982, %v2982
        %v2993 = vpack.c.bf16 %v2983, %v2983
        %v2994 = vpack.c.bf16 %v2984, %v2984
        %v2995 = vpack.c.bf16 %v2985, %v2985
        %v2996 = vpack.c.bf16 %v2986, %v2986
        %v2997 = vpack.c.bf16 %v2987, %v2987
        %v2998 = vpack.c.bf16 %v2988, %v2988
        %v2999 = vpack.c.bf16 %v2989, %v2989
        %v3000 = vld [vmem:[%s1195] sm:$0xff]
        %v3001 = vld [vmem:[%s1195 + $0x8] sm:$0xff]
        %v3002 = vld [vmem:[%s1195 + $0x10] sm:$0xf]
        %v3003 = vld [vmem:[%s1195 + $0x14] sm:$0xff]
        %v3004 = vld [vmem:[%s1195 + $0x1c] sm:$0xff]
        %v3005 = vld [vmem:[%s1195 + $0x24] sm:$0xf]
        %v3006 = vld [vmem:[%s1195 + $0x28] sm:$0xff]
        %v3007 = vld [vmem:[%s1195 + $0x30] sm:$0xff]
        %v3008 = vld [vmem:[%s1195 + $0x38] sm:$0xf]
        %v3009 = vld [vmem:[%s1195 + $0x3c] sm:$0xff]
        %v3010 = vld [vmem:[%s1195 + $0x44] sm:$0xff]
        %v3011 = vld [vmem:[%s1195 + $0x4c] sm:$0xf]
        %v3012 = vld [vmem:[%s1195 + $0x50] sm:$0xff]
        %v3013 = vld [vmem:[%s1195 + $0x58] sm:$0xff]
        %v3014 = vld [vmem:[%s1195 + $0x60] sm:$0xf]
        %v3015 = vld [vmem:[%s1195 + $0x64] sm:$0xff]
        %v3016 = vld [vmem:[%s1195 + $0x6c] sm:$0xff]
        %v3017 = vld [vmem:[%s1195 + $0x74] sm:$0xf]
        %v3018 = vld [vmem:[%s1195 + $0x78] sm:$0xff]
        %v3019 = vld [vmem:[%s1195 + $0x80] sm:$0xff]
        %v3020 = vld [vmem:[%s1195 + $0x88] sm:$0xf]
        %v3021 = vld [vmem:[%s1195 + $0x8c] sm:$0xff]
        %v3022 = vld [vmem:[%s1195 + $0x94] sm:$0xff]
        %v3023 = vld [vmem:[%s1195 + $0x9c] sm:$0xf]
        %v3024 = vld [vmem:[%s1195 + $0xa0] sm:$0xff]
        %v3025 = vld [vmem:[%s1195 + $0xa8] sm:$0xff]
        %v3026 = vld [vmem:[%s1195 + $0xb0] sm:$0xf]
        %v3027 = vld [vmem:[%s1195 + $0xb4] sm:$0xff]
        %v3028 = vld [vmem:[%s1195 + $0xbc] sm:$0xff]
        %v3029 = vld [vmem:[%s1195 + $0xc4] sm:$0xf]
        %v3030 = vld [vmem:[%s1195 + $0xc8] sm:$0xff]
        %v3031 = vld [vmem:[%s1195 + $0xd0] sm:$0xff]
        %v3032 = vld [vmem:[%s1195 + $0xd8] sm:$0xf]
        %v3033 = vld [vmem:[%s1195 + $0xdc] sm:$0xff]
        %v3034 = vld [vmem:[%s1195 + $0xe4] sm:$0xff]
        %v3035 = vld [vmem:[%s1195 + $0xec] sm:$0xf]
        %v3036 = vld [vmem:[%s1195 + $0xf0] sm:$0xff]
        %v3037 = vld [vmem:[%s1195 + $0xf8] sm:$0xff]
        %v3038 = vld [vmem:[%s1195 + $0x100] sm:$0xf]
        %v3039 = vld [vmem:[%s1195 + $0x104] sm:$0xff]
        %v3040 = vld [vmem:[%s1195 + $0x10c] sm:$0xff]
        %v3041 = vld [vmem:[%s1195 + $0x114] sm:$0xf]
        %v3042 = vld [vmem:[%s1195 + $0x118] sm:$0xff]
        %v3043 = vld [vmem:[%s1195 + $0x120] sm:$0xff]
        %v3044 = vld [vmem:[%s1195 + $0x128] sm:$0xf]
        %v3045 = vld [vmem:[%s1195 + $0x12c] sm:$0xff]
        %v3046 = vld [vmem:[%s1195 + $0x134] sm:$0xff]
        %v3047 = vld [vmem:[%s1195 + $0x13c] sm:$0xf]
        %v3048 = vld [vmem:[%s1195 + $0x140] sm:$0xff]
        %v3049 = vld [vmem:[%s1195 + $0x148] sm:$0xff]
        %v3050 = vld [vmem:[%s1195 + $0x150] sm:$0xf]
        %v3051 = vld [vmem:[%s1195 + $0x154] sm:$0xff]
        %v3052 = vld [vmem:[%s1195 + $0x15c] sm:$0xff]
        %v3053 = vld [vmem:[%s1195 + $0x164] sm:$0xf]
        %v3054 = vld [vmem:[%s1195 + $0x168] sm:$0xff]
        %v3055 = vld [vmem:[%s1195 + $0x170] sm:$0xff]
        %v3056 = vld [vmem:[%s1195 + $0x178] sm:$0xf]
        %v3057 = vld [vmem:[%s1195 + $0x17c] sm:$0xff]
        %v3058 = vld [vmem:[%s1195 + $0x184] sm:$0xff]
        %v3059 = vld [vmem:[%s1195 + $0x18c] sm:$0xf]
        %v3060 = vld [vmem:[%s1195 + $0x190] sm:$0xff]
        %v3061 = vld [vmem:[%s1195 + $0x198] sm:$0xff]
        %v3062 = vld [vmem:[%s1195 + $0x1a0] sm:$0xf]
        %v3063 = vld [vmem:[%s1195 + $0x1a4] sm:$0xff]
        %v3064 = vld [vmem:[%s1195 + $0x1ac] sm:$0xff]
        %v3065 = vld [vmem:[%s1195 + $0x1b4] sm:$0xf]
        %v3066 = vld [vmem:[%s1195 + $0x1b8] sm:$0xff]
        %v3067 = vld [vmem:[%s1195 + $0x1c0] sm:$0xff]
        %v3068 = vld [vmem:[%s1195 + $0x1c8] sm:$0xf]
        %v3069 = vld [vmem:[%s1195 + $0x1cc] sm:$0xff]
        %v3070 = vld [vmem:[%s1195 + $0x1d4] sm:$0xff]
        %v3071 = vld [vmem:[%s1195 + $0x1dc] sm:$0xf]
        %v3072 = vld [vmem:[%s1195 + $0x1e0] sm:$0xff]
        %v3073 = vld [vmem:[%s1195 + $0x1e8] sm:$0xff]
        %v3074 = vld [vmem:[%s1195 + $0x1f0] sm:$0xf]
        %v3075 = vld [vmem:[%s1195 + $0x1f4] sm:$0xff]
        %v3076 = vld [vmem:[%s1195 + $0x1fc] sm:$0xff]
        %v3077 = vld [vmem:[%s1195 + $0x204] sm:$0xf]
        %v3078 = vld [vmem:[%s1195 + $0x208] sm:$0xff]
        %v3079 = vld [vmem:[%s1195 + $0x210] sm:$0xff]
        %v3080 = vld [vmem:[%s1195 + $0x218] sm:$0xf]
        %v3081 = vld [vmem:[%s1195 + $0x21c] sm:$0xff]
        %v3082 = vld [vmem:[%s1195 + $0x224] sm:$0xff]
        %v3083 = vld [vmem:[%s1195 + $0x22c] sm:$0xf]
        %v3084 = vld [vmem:[%s1195 + $0x230] sm:$0xff]
        %v3085 = vld [vmem:[%s1195 + $0x238] sm:$0xff]
        %v3086 = vld [vmem:[%s1195 + $0x240] sm:$0xf]
        %v3087 = vld [vmem:[%s1195 + $0x244] sm:$0xff]
        %v3088 = vld [vmem:[%s1195 + $0x24c] sm:$0xff]
        %v3089 = vld [vmem:[%s1195 + $0x254] sm:$0xf]
        %v3090 = vld [vmem:[%s1195 + $0x258] sm:$0xff]
        %v3091 = vld [vmem:[%s1195 + $0x260] sm:$0xff]
        %v3092 = vld [vmem:[%s1195 + $0x268] sm:$0xf]
        %v3093 = vld [vmem:[%s1195 + $0x26c] sm:$0xff]
        %v3094 = vld [vmem:[%s1195 + $0x274] sm:$0xff]
        %v3095 = vld [vmem:[%s1195 + $0x27c] sm:$0xf]
        %v3096 = vld [vmem:[%s1195 + $0x280] sm:$0xff]
        %v3097 = vld [vmem:[%s1195 + $0x288] sm:$0xff]
        %v3098 = vld [vmem:[%s1195 + $0x290] sm:$0xf]
        %v3099 = vld [vmem:[%s1195 + $0x294] sm:$0xff]
        %v3100 = vld [vmem:[%s1195 + $0x29c] sm:$0xff]
        %v3101 = vld [vmem:[%s1195 + $0x2a4] sm:$0xf]
        %v3102 = vld [vmem:[%s1195 + $0x2a8] sm:$0xff]
        %v3103 = vld [vmem:[%s1195 + $0x2b0] sm:$0xff]
        %v3104 = vld [vmem:[%s1195 + $0x2b8] sm:$0xf]
        %v3105 = vld [vmem:[%s1195 + $0x2bc] sm:$0xff]
        %v3106 = vld [vmem:[%s1195 + $0x2c4] sm:$0xff]
        %v3107 = vld [vmem:[%s1195 + $0x2cc] sm:$0xf]
        %v3108 = vld [vmem:[%s1195 + $0x2d0] sm:$0xff]
        %v3109 = vld [vmem:[%s1195 + $0x2d8] sm:$0xff]
        %v3110 = vld [vmem:[%s1195 + $0x2e0] sm:$0xf]
        %v3111 = vld [vmem:[%s1195 + $0x2e4] sm:$0xff]
        %v3112 = vld [vmem:[%s1195 + $0x2ec] sm:$0xff]
        %v3113 = vld [vmem:[%s1195 + $0x2f4] sm:$0xf]
        %v3114 = vld [vmem:[%s1195 + $0x2f8] sm:$0xff]
        %v3115 = vld [vmem:[%s1195 + $0x300] sm:$0xff]
        %v3116 = vld [vmem:[%s1195 + $0x308] sm:$0xf]
        %v3117 = vld [vmem:[%s1195 + $0x30c] sm:$0xff]
        %v3118 = vld [vmem:[%s1195 + $0x314] sm:$0xff]
        %v3119 = vld [vmem:[%s1195 + $0x31c] sm:$0xf]
        %v3120 = vld [vmem:[%s1195 + $0x320] sm:$0xff]
        %v3121 = vld [vmem:[%s1195 + $0x328] sm:$0xff]
        %v3122 = vld [vmem:[%s1195 + $0x330] sm:$0xf]
        %v3123 = vld [vmem:[%s1195 + $0x334] sm:$0xff]
        %v3124 = vld [vmem:[%s1195 + $0x33c] sm:$0xff]
        %v3125 = vld [vmem:[%s1195 + $0x344] sm:$0xf]
        %v3126 = vld [vmem:[%s1195 + $0x348] sm:$0xff]
        %v3127 = vld [vmem:[%s1195 + $0x350] sm:$0xff]
        %v3128 = vld [vmem:[%s1195 + $0x358] sm:$0xf]
        %v3129 = vld [vmem:[%s1195 + $0x35c] sm:$0xff]
        %v3130 = vld [vmem:[%s1195 + $0x364] sm:$0xff]
        %v3131 = vld [vmem:[%s1195 + $0x36c] sm:$0xf]
        %v3132 = vld [vmem:[%s1195 + $0x370] sm:$0xff]
        %v3133 = vld [vmem:[%s1195 + $0x378] sm:$0xff]
        %v3134 = vld [vmem:[%s1195 + $0x380] sm:$0xf]
        %v3135 = vld [vmem:[%s1195 + $0x384] sm:$0xff]
        %v3136 = vld [vmem:[%s1195 + $0x38c] sm:$0xff]
        %v3137 = vld [vmem:[%s1195 + $0x394] sm:$0xf]
        %v3138 = vld [vmem:[%s1195 + $0x398] sm:$0xff]
        %v3139 = vld [vmem:[%s1195 + $0x3a0] sm:$0xff]
        %v3140 = vld [vmem:[%s1195 + $0x3a8] sm:$0xf]
        %v3141 = vld [vmem:[%s1195 + $0x3ac] sm:$0xff]
        %v3142 = vld [vmem:[%s1195 + $0x3b4] sm:$0xff]
        %v3143 = vld [vmem:[%s1195 + $0x3bc] sm:$0xf]
        %v3144 = vld [vmem:[%s1195 + $0x3c0] sm:$0xff]
        %v3145 = vld [vmem:[%s1195 + $0x3c8] sm:$0xff]
        %v3146 = vld [vmem:[%s1195 + $0x3d0] sm:$0xf]
        %v3147 = vld [vmem:[%s1195 + $0x3d4] sm:$0xff]
        %v3148 = vld [vmem:[%s1195 + $0x3dc] sm:$0xff]
        %v3149 = vld [vmem:[%s1195 + $0x3e4] sm:$0xf]
        %v3150 = vld [vmem:[%s1195 + $0x3e8] sm:$0xff]
        %v3151 = vld [vmem:[%s1195 + $0x3f0] sm:$0xff]
        %v3152 = vld [vmem:[%s1195 + $0x3f8] sm:$0xf]
        %v3153 = vld [vmem:[%s1195 + $0x3fc] sm:$0xff]
        %v3154 = vld [vmem:[%s1195 + $0x404] sm:$0xff]
        %v3155 = vld [vmem:[%s1195 + $0x40c] sm:$0xf]
        %v3156 = vld [vmem:[%s1195 + $0x410] sm:$0xff]
        %v3157 = vld [vmem:[%s1195 + $0x418] sm:$0xff]
        %v3158 = vld [vmem:[%s1195 + $0x420] sm:$0xf]
        %v3159 = vld [vmem:[%s1195 + $0x424] sm:$0xff]
        %v3160 = vld [vmem:[%s1195 + $0x42c] sm:$0xff]
        %v3161 = vld [vmem:[%s1195 + $0x434] sm:$0xf]
        %v3162 = vld [vmem:[%s1195 + $0x438] sm:$0xff]
        %v3163 = vld [vmem:[%s1195 + $0x440] sm:$0xff]
        %v3164 = vld [vmem:[%s1195 + $0x448] sm:$0xf]
        %v3165 = vld [vmem:[%s1195 + $0x44c] sm:$0xff]
        %v3166 = vld [vmem:[%s1195 + $0x454] sm:$0xff]
        %v3167 = vld [vmem:[%s1195 + $0x45c] sm:$0xf]
        %v3168 = vld [vmem:[%s1195 + $0x460] sm:$0xff]
        %v3169 = vld [vmem:[%s1195 + $0x468] sm:$0xff]
        %v3170 = vld [vmem:[%s1195 + $0x470] sm:$0xf]
        %v3171 = vld [vmem:[%s1195 + $0x474] sm:$0xff]
        %v3172 = vld [vmem:[%s1195 + $0x47c] sm:$0xff]
        %v3173 = vld [vmem:[%s1195 + $0x484] sm:$0xf]
        %v3174 = vld [vmem:[%s1195 + $0x488] sm:$0xff]
        %v3175 = vld [vmem:[%s1195 + $0x490] sm:$0xff]
        %v3176 = vld [vmem:[%s1195 + $0x498] sm:$0xf]
        %v3177 = vld [vmem:[%s1195 + $0x49c] sm:$0xff]
        %v3178 = vld [vmem:[%s1195 + $0x4a4] sm:$0xff]
        %v3179 = vld [vmem:[%s1195 + $0x4ac] sm:$0xf]
        %v3180 = vld [vmem:[%s1195 + $0x4b0] sm:$0xff]
        %v3181 = vld [vmem:[%s1195 + $0x4b8] sm:$0xff]
        %v3182 = vld [vmem:[%s1195 + $0x4c0] sm:$0xf]
        %v3183 = vld [vmem:[%s1195 + $0x4c4] sm:$0xff]
        %v3184 = vld [vmem:[%s1195 + $0x4cc] sm:$0xff]
        %v3185 = vld [vmem:[%s1195 + $0x4d4] sm:$0xf]
        %v3186 = vld [vmem:[%s1195 + $0x4d8] sm:$0xff]
        %v3187 = vld [vmem:[%s1195 + $0x4e0] sm:$0xff]
        %v3188 = vld [vmem:[%s1195 + $0x4e8] sm:$0xf]
        %v3189 = vld [vmem:[%s1195 + $0x4ec] sm:$0xff]
        %v3190 = vld [vmem:[%s1195 + $0x4f4] sm:$0xff]
        %v3191 = vld [vmem:[%s1195 + $0x4fc] sm:$0xf]
        %v3192 = vld [vmem:[%s1195 + $0x500] sm:$0xff]
        %v3193 = vld [vmem:[%s1195 + $0x508] sm:$0xff]
        %v3194 = vld [vmem:[%s1195 + $0x510] sm:$0xf]
        %v3195 = vld [vmem:[%s1195 + $0x514] sm:$0xff]
        %v3196 = vld [vmem:[%s1195 + $0x51c] sm:$0xff]
        %v3197 = vld [vmem:[%s1195 + $0x524] sm:$0xf]
        %v3198 = vld [vmem:[%s1195 + $0x528] sm:$0xff]
        %v3199 = vld [vmem:[%s1195 + $0x530] sm:$0xff]
        %v3200 = vld [vmem:[%s1195 + $0x538] sm:$0xf]
        %v3201 = vld [vmem:[%s1195 + $0x53c] sm:$0xff]
        %v3202 = vld [vmem:[%s1195 + $0x544] sm:$0xff]
        %v3203 = vld [vmem:[%s1195 + $0x54c] sm:$0xf]
        %v3204 = vld [vmem:[%s1195 + $0x550] sm:$0xff]
        %v3205 = vld [vmem:[%s1195 + $0x558] sm:$0xff]
        %v3206 = vld [vmem:[%s1195 + $0x560] sm:$0xf]
        %v3207 = vld [vmem:[%s1195 + $0x564] sm:$0xff]
        %v3208 = vld [vmem:[%s1195 + $0x56c] sm:$0xff]
        %v3209 = vld [vmem:[%s1195 + $0x574] sm:$0xf]
        %v3210 = vld [vmem:[%s1195 + $0x578] sm:$0xff]
        %v3211 = vld [vmem:[%s1195 + $0x580] sm:$0xff]
        %v3212 = vld [vmem:[%s1195 + $0x588] sm:$0xf]
        %v3213 = vld [vmem:[%s1195 + $0x58c] sm:$0xff]
        %v3214 = vld [vmem:[%s1195 + $0x594] sm:$0xff]
        %v3215 = vld [vmem:[%s1195 + $0x59c] sm:$0xf]
        %v3216 = vld [vmem:[%s1195 + $0x5a0] sm:$0xff]
        %v3217 = vld [vmem:[%s1195 + $0x5a8] sm:$0xff]
        %v3218 = vld [vmem:[%s1195 + $0x5b0] sm:$0xf]
        %v3219 = vld [vmem:[%s1195 + $0x5b4] sm:$0xff]
        %v3220 = vld [vmem:[%s1195 + $0x5bc] sm:$0xff]
        %v3221 = vld [vmem:[%s1195 + $0x5c4] sm:$0xf]
        %v3222 = vld [vmem:[%s1195 + $0x5c8] sm:$0xff]
        %v3223 = vld [vmem:[%s1195 + $0x5d0] sm:$0xff]
        %v3224 = vld [vmem:[%s1195 + $0x5d8] sm:$0xf]
        %v3225 = vld [vmem:[%s1195 + $0x5dc] sm:$0xff]
        %v3226 = vld [vmem:[%s1195 + $0x5e4] sm:$0xff]
        %v3227 = vld [vmem:[%s1195 + $0x5ec] sm:$0xf]
        %v3228 = vld [vmem:[%s1195 + $0x5f0] sm:$0xff]
        %v3229 = vld [vmem:[%s1195 + $0x5f8] sm:$0xff]
        %v3230 = vld [vmem:[%s1195 + $0x600] sm:$0xf]
        %v3231 = vld [vmem:[%s1195 + $0x604] sm:$0xff]
        %v3232 = vld [vmem:[%s1195 + $0x60c] sm:$0xff]
        %v3233 = vld [vmem:[%s1195 + $0x614] sm:$0xf]
        %v3234 = vld [vmem:[%s1195 + $0x618] sm:$0xff]
        %v3235 = vld [vmem:[%s1195 + $0x620] sm:$0xff]
        %v3236 = vld [vmem:[%s1195 + $0x628] sm:$0xf]
        %v3237 = vld [vmem:[%s1195 + $0x62c] sm:$0xff]
        %v3238 = vld [vmem:[%s1195 + $0x634] sm:$0xff]
        %v3239 = vld [vmem:[%s1195 + $0x63c] sm:$0xf]
        %v3240 = vld [vmem:[%s1195 + $0x640] sm:$0xff]
        %v3241 = vld [vmem:[%s1195 + $0x648] sm:$0xff]
        %v3242 = vld [vmem:[%s1195 + $0x650] sm:$0xf]
        %v3243 = vld [vmem:[%s1195 + $0x654] sm:$0xff]
        %v3244 = vld [vmem:[%s1195 + $0x65c] sm:$0xff]
        %v3245 = vld [vmem:[%s1195 + $0x664] sm:$0xf]
        %v3246 = vld [vmem:[%s1195 + $0x668] sm:$0xff]
        %v3247 = vld [vmem:[%s1195 + $0x670] sm:$0xff]
        %v3248 = vld [vmem:[%s1195 + $0x678] sm:$0xf]
        %v3249 = vld [vmem:[%s1195 + $0x67c] sm:$0xff]
        %v3250 = vld [vmem:[%s1195 + $0x684] sm:$0xff]
        %v3251 = vld [vmem:[%s1195 + $0x68c] sm:$0xf]
        %v3252 = vld [vmem:[%s1195 + $0x690] sm:$0xff]
        %v3253 = vld [vmem:[%s1195 + $0x698] sm:$0xff]
        %v3254 = vld [vmem:[%s1195 + $0x6a0] sm:$0xf]
        %v3255 = vld [vmem:[%s1195 + $0x6a4] sm:$0xff]
        %v3256 = vld [vmem:[%s1195 + $0x6ac] sm:$0xff]
        %v3257 = vld [vmem:[%s1195 + $0x6b4] sm:$0xf]
        %v3258 = vld [vmem:[%s1195 + $0x6b8] sm:$0xff]
        %v3259 = vld [vmem:[%s1195 + $0x6c0] sm:$0xff]
        %v3260 = vld [vmem:[%s1195 + $0x6c8] sm:$0xf]
        %v3261 = vld [vmem:[%s1195 + $0x6cc] sm:$0xff]
        %v3262 = vld [vmem:[%s1195 + $0x6d4] sm:$0xff]
        %v3263 = vld [vmem:[%s1195 + $0x6dc] sm:$0xf]
        %v3264 = vld [vmem:[%s1195 + $0x6e0] sm:$0xff]
        %v3265 = vld [vmem:[%s1195 + $0x6e8] sm:$0xff]
        %v3266 = vld [vmem:[%s1195 + $0x6f0] sm:$0xf]
        %v3267 = vld [vmem:[%s1195 + $0x6f4] sm:$0xff]
        %v3268 = vld [vmem:[%s1195 + $0x6fc] sm:$0xff]
        %v3269 = vld [vmem:[%s1195 + $0x704] sm:$0xf]
        %v3270 = vld [vmem:[%s1195 + $0x708] sm:$0xff]
        %v3271 = vld [vmem:[%s1195 + $0x710] sm:$0xff]
        %v3272 = vld [vmem:[%s1195 + $0x718] sm:$0xf]
        %v3273 = vld [vmem:[%s1195 + $0x71c] sm:$0xff]
        %v3274 = vld [vmem:[%s1195 + $0x724] sm:$0xff]
        %v3275 = vld [vmem:[%s1195 + $0x72c] sm:$0xf]
        %v3276 = vld [vmem:[%s1195 + $0x730] sm:$0xff]
        %v3277 = vld [vmem:[%s1195 + $0x738] sm:$0xff]
        %v3278 = vld [vmem:[%s1195 + $0x740] sm:$0xf]
        %v3279 = vld [vmem:[%s1195 + $0x744] sm:$0xff]
        %v3280 = vld [vmem:[%s1195 + $0x74c] sm:$0xff]
        %v3281 = vld [vmem:[%s1195 + $0x754] sm:$0xf]
        %v3282 = vld [vmem:[%s1195 + $0x758] sm:$0xff]
        %v3283 = vld [vmem:[%s1195 + $0x760] sm:$0xff]
        %v3284 = vld [vmem:[%s1195 + $0x768] sm:$0xf]
        %v3285 = vld [vmem:[%s1195 + $0x76c] sm:$0xff]
        %v3286 = vld [vmem:[%s1195 + $0x774] sm:$0xff]
        %v3287 = vld [vmem:[%s1195 + $0x77c] sm:$0xf]
        %v3288 = vld [vmem:[%s1195 + $0x780] sm:$0xff]
        %v3289 = vld [vmem:[%s1195 + $0x788] sm:$0xff]
        %v3290 = vld [vmem:[%s1195 + $0x790] sm:$0xf]
        %v3291 = vld [vmem:[%s1195 + $0x794] sm:$0xff]
        %v3292 = vld [vmem:[%s1195 + $0x79c] sm:$0xff]
        %v3293 = vld [vmem:[%s1195 + $0x7a4] sm:$0xf]
        %v3294 = vld [vmem:[%s1195 + $0x7a8] sm:$0xff]
        %v3295 = vld [vmem:[%s1195 + $0x7b0] sm:$0xff]
        %v3296 = vld [vmem:[%s1195 + $0x7b8] sm:$0xf]
        %v3297 = vld [vmem:[%s1195 + $0x7bc] sm:$0xff]
        %v3298 = vld [vmem:[%s1195 + $0x7c4] sm:$0xff]
        %v3299 = vld [vmem:[%s1195 + $0x7cc] sm:$0xf]
        %v3300 = vld [vmem:[%s1195 + $0x7d0] sm:$0xff]
        %v3301 = vld [vmem:[%s1195 + $0x7d8] sm:$0xff]
        %v3302 = vld [vmem:[%s1195 + $0x7e0] sm:$0xf]
        %v3303 = vld [vmem:[%s1195 + $0x7e4] sm:$0xff]
        %v3304 = vld [vmem:[%s1195 + $0x7ec] sm:$0xff]
        %v3305 = vld [vmem:[%s1195 + $0x7f4] sm:$0xf]
        %v3306 = vld [vmem:[%s1195 + $0x7f8] sm:$0xff]
        %v3307 = vld [vmem:[%s1195 + $0x800] sm:$0xff]
        %v3308 = vld [vmem:[%s1195 + $0x808] sm:$0xf]
        %v3309 = vld [vmem:[%s1195 + $0x80c] sm:$0xff]
        %v3310 = vld [vmem:[%s1195 + $0x814] sm:$0xff]
        %v3311 = vld [vmem:[%s1195 + $0x81c] sm:$0xf]
        %v3312 = vld [vmem:[%s1195 + $0x820] sm:$0xff]
        %v3313 = vld [vmem:[%s1195 + $0x828] sm:$0xff]
        %v3314 = vld [vmem:[%s1195 + $0x830] sm:$0xf]
        %v3315 = vld [vmem:[%s1195 + $0x834] sm:$0xff]
        %v3316 = vld [vmem:[%s1195 + $0x83c] sm:$0xff]
        %v3317 = vld [vmem:[%s1195 + $0x844] sm:$0xf]
        %v3318 = vld [vmem:[%s1195 + $0x848] sm:$0xff]
        %v3319 = vld [vmem:[%s1195 + $0x850] sm:$0xff]
        %v3320 = vld [vmem:[%s1195 + $0x858] sm:$0xf]
        %v3321 = vld [vmem:[%s1195 + $0x85c] sm:$0xff]
        %v3322 = vld [vmem:[%s1195 + $0x864] sm:$0xff]
        %v3323 = vld [vmem:[%s1195 + $0x86c] sm:$0xf]
        %v3324 = vld [vmem:[%s1195 + $0x870] sm:$0xff]
        %v3325 = vld [vmem:[%s1195 + $0x878] sm:$0xff]
        %v3326 = vld [vmem:[%s1195 + $0x880] sm:$0xf]
        %v3327 = vld [vmem:[%s1195 + $0x884] sm:$0xff]
        %v3328 = vld [vmem:[%s1195 + $0x88c] sm:$0xff]
        %v3329 = vld [vmem:[%s1195 + $0x894] sm:$0xf]
        %v3330 = vld [vmem:[%s1195 + $0x898] sm:$0xff]
        %v3331 = vld [vmem:[%s1195 + $0x8a0] sm:$0xff]
        %v3332 = vld [vmem:[%s1195 + $0x8a8] sm:$0xf]
        %v3333 = vld [vmem:[%s1195 + $0x8ac] sm:$0xff]
        %v3334 = vld [vmem:[%s1195 + $0x8b4] sm:$0xff]
        %v3335 = vld [vmem:[%s1195 + $0x8bc] sm:$0xf]
        %v3336 = vld [vmem:[%s1195 + $0x8c0] sm:$0xff]
        %v3337 = vld [vmem:[%s1195 + $0x8c8] sm:$0xff]
        %v3338 = vld [vmem:[%s1195 + $0x8d0] sm:$0xf]
        %v3339 = vld [vmem:[%s1195 + $0x8d4] sm:$0xff]
        %v3340 = vld [vmem:[%s1195 + $0x8dc] sm:$0xff]
        %v3341 = vld [vmem:[%s1195 + $0x8e4] sm:$0xf]
        %v3342 = vld [vmem:[%s1195 + $0x8e8] sm:$0xff]
        %v3343 = vld [vmem:[%s1195 + $0x8f0] sm:$0xff]
        %v3344 = vld [vmem:[%s1195 + $0x8f8] sm:$0xf]
        %v3345 = vld [vmem:[%s1195 + $0x8fc] sm:$0xff]
        %v3346 = vld [vmem:[%s1195 + $0x904] sm:$0xff]
        %v3347 = vld [vmem:[%s1195 + $0x90c] sm:$0xf]
        %v3348 = vld [vmem:[%s1195 + $0x910] sm:$0xff]
        %v3349 = vld [vmem:[%s1195 + $0x918] sm:$0xff]
        %v3350 = vld [vmem:[%s1195 + $0x920] sm:$0xf]
        %v3351 = vld [vmem:[%s1195 + $0x924] sm:$0xff]
        %v3352 = vld [vmem:[%s1195 + $0x92c] sm:$0xff]
        %v3353 = vld [vmem:[%s1195 + $0x934] sm:$0xf]
        %v3354 = vld [vmem:[%s1195 + $0x938] sm:$0xff]
        %v3355 = vld [vmem:[%s1195 + $0x940] sm:$0xff]
        %v3356 = vld [vmem:[%s1195 + $0x948] sm:$0xf]
        %v3357 = vld [vmem:[%s1195 + $0x94c] sm:$0xff]
        %v3358 = vld [vmem:[%s1195 + $0x954] sm:$0xff]
        %v3359 = vld [vmem:[%s1195 + $0x95c] sm:$0xf]
        %v3360 = vld [vmem:[%s1195 + $0x960] sm:$0xff]
        %v3361 = vld [vmem:[%s1195 + $0x968] sm:$0xff]
        %v3362 = vld [vmem:[%s1195 + $0x970] sm:$0xf]
        %v3363 = vld [vmem:[%s1195 + $0x974] sm:$0xff]
        %v3364 = vld [vmem:[%s1195 + $0x97c] sm:$0xff]
        %v3365 = vld [vmem:[%s1195 + $0x984] sm:$0xf]
        %v3366 = vld [vmem:[%s1195 + $0x988] sm:$0xff]
        %v3367 = vld [vmem:[%s1195 + $0x990] sm:$0xff]
        %v3368 = vld [vmem:[%s1195 + $0x998] sm:$0xf]
        %v3369 = vld [vmem:[%s1195 + $0x99c] sm:$0xff]
        %v3370 = vld [vmem:[%s1195 + $0x9a4] sm:$0xff]
        %v3371 = vld [vmem:[%s1195 + $0x9ac] sm:$0xf]
        %v3372 = vld [vmem:[%s1195 + $0x9b0] sm:$0xff]
        %v3373 = vld [vmem:[%s1195 + $0x9b8] sm:$0xff]
        %v3374 = vld [vmem:[%s1195 + $0x9c0] sm:$0xf]
        %v3375 = vld [vmem:[%s1195 + $0x9c4] sm:$0xff]
        %v3376 = vld [vmem:[%s1195 + $0x9cc] sm:$0xff]
        %v3377 = vld [vmem:[%s1195 + $0x9d4] sm:$0xf]
        %v3378 = vld [vmem:[%s1195 + $0x9d8] sm:$0xff]
        %v3379 = vld [vmem:[%s1195 + $0x9e0] sm:$0xff]
        %v3380 = vld [vmem:[%s1195 + $0x9e8] sm:$0xf]
        %v3381 = vld [vmem:[%s1195 + $0x9ec] sm:$0xff]
        %v3382 = vld [vmem:[%s1195 + $0x9f4] sm:$0xff]
        %v3383 = vld [vmem:[%s1195 + $0x9fc] sm:$0xf]
        %v3384 = vld [vmem:[%s1195 + $0xa00] sm:$0xff]
        %v3385 = vld [vmem:[%s1195 + $0xa08] sm:$0xff]
        %v3386 = vld [vmem:[%s1195 + $0xa10] sm:$0xf]
        %v3387 = vld [vmem:[%s1195 + $0xa14] sm:$0xff]
        %v3388 = vld [vmem:[%s1195 + $0xa1c] sm:$0xff]
        %v3389 = vld [vmem:[%s1195 + $0xa24] sm:$0xf]
        %v3390 = vld [vmem:[%s1195 + $0xa28] sm:$0xff]
        %v3391 = vld [vmem:[%s1195 + $0xa30] sm:$0xff]
        %v3392 = vld [vmem:[%s1195 + $0xa38] sm:$0xf]
        %v3393 = vld [vmem:[%s1195 + $0xa3c] sm:$0xff]
        %v3394 = vld [vmem:[%s1195 + $0xa44] sm:$0xff]
        %v3395 = vld [vmem:[%s1195 + $0xa4c] sm:$0xf]
        %v3396 = vld [vmem:[%s1195 + $0xa50] sm:$0xff]
        %v3397 = vld [vmem:[%s1195 + $0xa58] sm:$0xff]
        %v3398 = vld [vmem:[%s1195 + $0xa60] sm:$0xf]
        %v3399 = vld [vmem:[%s1195 + $0xa64] sm:$0xff]
        %v3400 = vld [vmem:[%s1195 + $0xa6c] sm:$0xff]
        %v3401 = vld [vmem:[%s1195 + $0xa74] sm:$0xf]
        %v3402 = vld [vmem:[%s1195 + $0xa78] sm:$0xff]
        %v3403 = vld [vmem:[%s1195 + $0xa80] sm:$0xff]
        %v3404 = vld [vmem:[%s1195 + $0xa88] sm:$0xf]
        %v3405 = vld [vmem:[%s1195 + $0xa8c] sm:$0xff]
        %v3406 = vld [vmem:[%s1195 + $0xa94] sm:$0xff]
        %v3407 = vld [vmem:[%s1195 + $0xa9c] sm:$0xf]
        %v3408 = vld [vmem:[%s1195 + $0xaa0] sm:$0xff]
        %v3409 = vld [vmem:[%s1195 + $0xaa8] sm:$0xff]
        %v3410 = vld [vmem:[%s1195 + $0xab0] sm:$0xf]
        %v3411 = vld [vmem:[%s1195 + $0xab4] sm:$0xff]
        %v3412 = vld [vmem:[%s1195 + $0xabc] sm:$0xff]
        %v3413 = vld [vmem:[%s1195 + $0xac4] sm:$0xf]
        %v3414 = vld [vmem:[%s1195 + $0xac8] sm:$0xff]
        %v3415 = vld [vmem:[%s1195 + $0xad0] sm:$0xff]
        %v3416 = vld [vmem:[%s1195 + $0xad8] sm:$0xf]
        %v3417 = vld [vmem:[%s1195 + $0xadc] sm:$0xff]
        %v3418 = vld [vmem:[%s1195 + $0xae4] sm:$0xff]
        %v3419 = vld [vmem:[%s1195 + $0xaec] sm:$0xf]
        %v3420 = vld [vmem:[%s1195 + $0xaf0] sm:$0xff]
        %v3421 = vld [vmem:[%s1195 + $0xaf8] sm:$0xff]
        %v3422 = vld [vmem:[%s1195 + $0xb00] sm:$0xf]
        %v3423 = vld [vmem:[%s1195 + $0xb04] sm:$0xff]
        %v3424 = vld [vmem:[%s1195 + $0xb0c] sm:$0xff]
        %v3425 = vld [vmem:[%s1195 + $0xb14] sm:$0xf]
        %v3426 = vld [vmem:[%s1195 + $0xb18] sm:$0xff]
        %v3427 = vld [vmem:[%s1195 + $0xb20] sm:$0xff]
        %v3428 = vld [vmem:[%s1195 + $0xb28] sm:$0xf]
        %v3429 = vld [vmem:[%s1195 + $0xb2c] sm:$0xff]
        %v3430 = vld [vmem:[%s1195 + $0xb34] sm:$0xff]
        %v3431 = vld [vmem:[%s1195 + $0xb3c] sm:$0xf]
        %v3432 = vld [vmem:[%s1195 + $0xb40] sm:$0xff]
        %v3433 = vld [vmem:[%s1195 + $0xb48] sm:$0xff]
        %v3434 = vld [vmem:[%s1195 + $0xb50] sm:$0xf]
        %v3435 = vld [vmem:[%s1195 + $0xb54] sm:$0xff]
        %v3436 = vld [vmem:[%s1195 + $0xb5c] sm:$0xff]
        %v3437 = vld [vmem:[%s1195 + $0xb64] sm:$0xf]
        %v3438 = vld [vmem:[%s1195 + $0xb68] sm:$0xff]
        %v3439 = vld [vmem:[%s1195 + $0xb70] sm:$0xff]
        %v3440 = vld [vmem:[%s1195 + $0xb78] sm:$0xf]
        %v3441 = vld [vmem:[%s1195 + $0xb7c] sm:$0xff]
        %v3442 = vld [vmem:[%s1195 + $0xb84] sm:$0xff]
        %v3443 = vld [vmem:[%s1195 + $0xb8c] sm:$0xf]
        %v3444 = vld [vmem:[%s1195 + $0xb90] sm:$0xff]
        %v3445 = vld [vmem:[%s1195 + $0xb98] sm:$0xff]
        %v3446 = vld [vmem:[%s1195 + $0xba0] sm:$0xf]
        %v3447 = vld [vmem:[%s1195 + $0xba4] sm:$0xff]
        %v3448 = vld [vmem:[%s1195 + $0xbac] sm:$0xff]
        %v3449 = vld [vmem:[%s1195 + $0xbb4] sm:$0xf]
        %v3450 = vld [vmem:[%s1195 + $0xbb8] sm:$0xff]
        %v3451 = vld [vmem:[%s1195 + $0xbc0] sm:$0xff]
        %v3452 = vld [vmem:[%s1195 + $0xbc8] sm:$0xf]
        %v3453 = vld [vmem:[%s1195 + $0xbcc] sm:$0xff]
        %v3454 = vld [vmem:[%s1195 + $0xbd4] sm:$0xff]
        %v3455 = vld [vmem:[%s1195 + $0xbdc] sm:$0xf]
        %v3456 = vld [vmem:[%s1195 + $0xbe0] sm:$0xff]
        %v3457 = vld [vmem:[%s1195 + $0xbe8] sm:$0xff]
        %v3458 = vld [vmem:[%s1195 + $0xbf0] sm:$0xf]
        %v3459 = vld [vmem:[%s1195 + $0xbf4] sm:$0xff]
        %v3460 = vld [vmem:[%s1195 + $0xbfc] sm:$0xff]
        %v3461 = vld [vmem:[%s1195 + $0xc04] sm:$0xf]
        %v3462 = vld [vmem:[%s1195 + $0xc08] sm:$0xff]
        %v3463 = vld [vmem:[%s1195 + $0xc10] sm:$0xff]
        %v3464 = vld [vmem:[%s1195 + $0xc18] sm:$0xf]
        %v3465 = vld [vmem:[%s1195 + $0xc1c] sm:$0xff]
        %v3466 = vld [vmem:[%s1195 + $0xc24] sm:$0xff]
        %v3467 = vld [vmem:[%s1195 + $0xc2c] sm:$0xf]
        %v3468 = vld [vmem:[%s1195 + $0xc30] sm:$0xff]
        %v3469 = vld [vmem:[%s1195 + $0xc38] sm:$0xff]
        %v3470 = vld [vmem:[%s1195 + $0xc40] sm:$0xf]
        %v3471 = vld [vmem:[%s1195 + $0xc44] sm:$0xff]
        %v3472 = vld [vmem:[%s1195 + $0xc4c] sm:$0xff]
        %v3473 = vld [vmem:[%s1195 + $0xc54] sm:$0xf]
        %v3474 = vld [vmem:[%s1195 + $0xc58] sm:$0xff]
        %v3475 = vld [vmem:[%s1195 + $0xc60] sm:$0xff]
        %v3476 = vld [vmem:[%s1195 + $0xc68] sm:$0xf]
        %v3477 = vld [vmem:[%s1195 + $0xc6c] sm:$0xff]
        %v3478 = vld [vmem:[%s1195 + $0xc74] sm:$0xff]
        %v3479 = vld [vmem:[%s1195 + $0xc7c] sm:$0xf]
        %v3480 = vld [vmem:[%s1228] sm:$0x1f]
        %v3961 = vunpack.c.l.b16 %v3000
        %v3962 = vunpack.c.h.b16 %v3000
        %v3963 = vunpack.c.l.b16 %v3001
        %v3964 = vunpack.c.h.b16 %v3001
        %v3965 = vunpack.c.l.b16 %v3002
        %v3966 = vunpack.c.l.b16 %v3003
        %v3967 = vunpack.c.h.b16 %v3003
        %v3968 = vunpack.c.l.b16 %v3004
        %v3969 = vunpack.c.h.b16 %v3004
        %v3970 = vunpack.c.l.b16 %v3005
        %v3971 = vunpack.c.l.b16 %v3006
        %v3972 = vunpack.c.h.b16 %v3006
        %v3973 = vunpack.c.l.b16 %v3007
        %v3974 = vunpack.c.h.b16 %v3007
        %v3975 = vunpack.c.l.b16 %v3008
        %v3976 = vunpack.c.l.b16 %v3009
        %v3977 = vunpack.c.h.b16 %v3009
        %v3978 = vunpack.c.l.b16 %v3010
        %v3979 = vunpack.c.h.b16 %v3010
        %v3980 = vunpack.c.l.b16 %v3011
        %v3981 = vunpack.c.l.b16 %v3012
        %v3982 = vunpack.c.h.b16 %v3012
        %v3983 = vunpack.c.l.b16 %v3013
        %v3984 = vunpack.c.h.b16 %v3013
        %v3985 = vunpack.c.l.b16 %v3014
        %v3986 = vunpack.c.l.b16 %v3015
        %v3987 = vunpack.c.h.b16 %v3015
        %v3988 = vunpack.c.l.b16 %v3016
        %v3989 = vunpack.c.h.b16 %v3016
        %v3990 = vunpack.c.l.b16 %v3017
        %v3991 = vunpack.c.l.b16 %v3018
        %v3992 = vunpack.c.h.b16 %v3018
        %v3993 = vunpack.c.l.b16 %v3019
        %v3994 = vunpack.c.h.b16 %v3019
        %v3995 = vunpack.c.l.b16 %v3020
        %v3996 = vunpack.c.l.b16 %v3021
        %v3997 = vunpack.c.h.b16 %v3021
        %v3998 = vunpack.c.l.b16 %v3022
        %v3999 = vunpack.c.h.b16 %v3022
        %v4000 = vunpack.c.l.b16 %v3023
        %v4001 = vunpack.c.l.b16 %v3024
        %v4002 = vunpack.c.h.b16 %v3024
        %v4003 = vunpack.c.l.b16 %v3025
        %v4004 = vunpack.c.h.b16 %v3025
        %v4005 = vunpack.c.l.b16 %v3026
        %v4006 = vunpack.c.l.b16 %v3027
        %v4007 = vunpack.c.h.b16 %v3027
        %v4008 = vunpack.c.l.b16 %v3028
        %v4009 = vunpack.c.h.b16 %v3028
        %v4010 = vunpack.c.l.b16 %v3029
        %v4011 = vunpack.c.l.b16 %v3030
        %v4012 = vunpack.c.h.b16 %v3030
        %v4013 = vunpack.c.l.b16 %v3031
        %v4014 = vunpack.c.h.b16 %v3031
        %v4015 = vunpack.c.l.b16 %v3032
        %v4016 = vunpack.c.l.b16 %v3033
        %v4017 = vunpack.c.h.b16 %v3033
        %v4018 = vunpack.c.l.b16 %v3034
        %v4019 = vunpack.c.h.b16 %v3034
        %v4020 = vunpack.c.l.b16 %v3035
        %v4021 = vunpack.c.l.b16 %v3036
        %v4022 = vunpack.c.h.b16 %v3036
        %v4023 = vunpack.c.l.b16 %v3037
        %v4024 = vunpack.c.h.b16 %v3037
        %v4025 = vunpack.c.l.b16 %v3038
        %v4026 = vunpack.c.l.b16 %v3039
        %v4027 = vunpack.c.h.b16 %v3039
        %v4028 = vunpack.c.l.b16 %v3040
        %v4029 = vunpack.c.h.b16 %v3040
        %v4030 = vunpack.c.l.b16 %v3041
        %v4031 = vunpack.c.l.b16 %v3042
        %v4032 = vunpack.c.h.b16 %v3042
        %v4033 = vunpack.c.l.b16 %v3043
        %v4034 = vunpack.c.h.b16 %v3043
        %v4035 = vunpack.c.l.b16 %v3044
        %v4036 = vunpack.c.l.b16 %v3045
        %v4037 = vunpack.c.h.b16 %v3045
        %v4038 = vunpack.c.l.b16 %v3046
        %v4039 = vunpack.c.h.b16 %v3046
        %v4040 = vunpack.c.l.b16 %v3047
        %v4041 = vunpack.c.l.b16 %v3048
        %v4042 = vunpack.c.h.b16 %v3048
        %v4043 = vunpack.c.l.b16 %v3049
        %v4044 = vunpack.c.h.b16 %v3049
        %v4045 = vunpack.c.l.b16 %v3050
        %v4046 = vunpack.c.l.b16 %v3051
        %v4047 = vunpack.c.h.b16 %v3051
        %v4048 = vunpack.c.l.b16 %v3052
        %v4049 = vunpack.c.h.b16 %v3052
        %v4050 = vunpack.c.l.b16 %v3053
        %v4051 = vunpack.c.l.b16 %v3054
        %v4052 = vunpack.c.h.b16 %v3054
        %v4053 = vunpack.c.l.b16 %v3055
        %v4054 = vunpack.c.h.b16 %v3055
        %v4055 = vunpack.c.l.b16 %v3056
        %v4056 = vunpack.c.l.b16 %v3057
        %v4057 = vunpack.c.h.b16 %v3057
        %v4058 = vunpack.c.l.b16 %v3058
        %v4059 = vunpack.c.h.b16 %v3058
        %v4060 = vunpack.c.l.b16 %v3059
        %v4061 = vunpack.c.l.b16 %v3060
        %v4062 = vunpack.c.h.b16 %v3060
        %v4063 = vunpack.c.l.b16 %v3061
        %v4064 = vunpack.c.h.b16 %v3061
        %v4065 = vunpack.c.l.b16 %v3062
        %v4066 = vunpack.c.l.b16 %v3063
        %v4067 = vunpack.c.h.b16 %v3063
        %v4068 = vunpack.c.l.b16 %v3064
        %v4069 = vunpack.c.h.b16 %v3064
        %v4070 = vunpack.c.l.b16 %v3065
        %v4071 = vunpack.c.l.b16 %v3066
        %v4072 = vunpack.c.h.b16 %v3066
        %v4073 = vunpack.c.l.b16 %v3067
        %v4074 = vunpack.c.h.b16 %v3067
        %v4075 = vunpack.c.l.b16 %v3068
        %v4076 = vunpack.c.l.b16 %v3069
        %v4077 = vunpack.c.h.b16 %v3069
        %v4078 = vunpack.c.l.b16 %v3070
        %v4079 = vunpack.c.h.b16 %v3070
        %v4080 = vunpack.c.l.b16 %v3071
        %v4081 = vunpack.c.l.b16 %v3072
        %v4082 = vunpack.c.h.b16 %v3072
        %v4083 = vunpack.c.l.b16 %v3073
        %v4084 = vunpack.c.h.b16 %v3073
        %v4085 = vunpack.c.l.b16 %v3074
        %v4086 = vunpack.c.l.b16 %v3075
        %v4087 = vunpack.c.h.b16 %v3075
        %v4088 = vunpack.c.l.b16 %v3076
        %v4089 = vunpack.c.h.b16 %v3076
        %v4090 = vunpack.c.l.b16 %v3077
        %v4091 = vunpack.c.l.b16 %v3078
        %v4092 = vunpack.c.h.b16 %v3078
        %v4093 = vunpack.c.l.b16 %v3079
        %v4094 = vunpack.c.h.b16 %v3079
        %v4095 = vunpack.c.l.b16 %v3080
        %v4096 = vunpack.c.l.b16 %v3081
        %v4097 = vunpack.c.h.b16 %v3081
        %v4098 = vunpack.c.l.b16 %v3082
        %v4099 = vunpack.c.h.b16 %v3082
        %v4100 = vunpack.c.l.b16 %v3083
        %v4101 = vunpack.c.l.b16 %v3084
        %v4102 = vunpack.c.h.b16 %v3084
        %v4103 = vunpack.c.l.b16 %v3085
        %v4104 = vunpack.c.h.b16 %v3085
        %v4105 = vunpack.c.l.b16 %v3086
        %v4106 = vunpack.c.l.b16 %v3087
        %v4107 = vunpack.c.h.b16 %v3087
        %v4108 = vunpack.c.l.b16 %v3088
        %v4109 = vunpack.c.h.b16 %v3088
        %v4110 = vunpack.c.l.b16 %v3089
        %v4111 = vunpack.c.l.b16 %v3090
        %v4112 = vunpack.c.h.b16 %v3090
        %v4113 = vunpack.c.l.b16 %v3091
        %v4114 = vunpack.c.h.b16 %v3091
        %v4115 = vunpack.c.l.b16 %v3092
        %v4116 = vunpack.c.l.b16 %v3093
        %v4117 = vunpack.c.h.b16 %v3093
        %v4118 = vunpack.c.l.b16 %v3094
        %v4119 = vunpack.c.h.b16 %v3094
        %v4120 = vunpack.c.l.b16 %v3095
        %v4121 = vunpack.c.l.b16 %v3096
        %v4122 = vunpack.c.h.b16 %v3096
        %v4123 = vunpack.c.l.b16 %v3097
        %v4124 = vunpack.c.h.b16 %v3097
        %v4125 = vunpack.c.l.b16 %v3098
        %v4126 = vunpack.c.l.b16 %v3099
        %v4127 = vunpack.c.h.b16 %v3099
        %v4128 = vunpack.c.l.b16 %v3100
        %v4129 = vunpack.c.h.b16 %v3100
        %v4130 = vunpack.c.l.b16 %v3101
        %v4131 = vunpack.c.l.b16 %v3102
        %v4132 = vunpack.c.h.b16 %v3102
        %v4133 = vunpack.c.l.b16 %v3103
        %v4134 = vunpack.c.h.b16 %v3103
        %v4135 = vunpack.c.l.b16 %v3104
        %v4136 = vunpack.c.l.b16 %v3105
        %v4137 = vunpack.c.h.b16 %v3105
        %v4138 = vunpack.c.l.b16 %v3106
        %v4139 = vunpack.c.h.b16 %v3106
        %v4140 = vunpack.c.l.b16 %v3107
        %v4141 = vunpack.c.l.b16 %v3108
        %v4142 = vunpack.c.h.b16 %v3108
        %v4143 = vunpack.c.l.b16 %v3109
        %v4144 = vunpack.c.h.b16 %v3109
        %v4145 = vunpack.c.l.b16 %v3110
        %v4146 = vunpack.c.l.b16 %v3111
        %v4147 = vunpack.c.h.b16 %v3111
        %v4148 = vunpack.c.l.b16 %v3112
        %v4149 = vunpack.c.h.b16 %v3112
        %v4150 = vunpack.c.l.b16 %v3113
        %v4151 = vunpack.c.l.b16 %v3114
        %v4152 = vunpack.c.h.b16 %v3114
        %v4153 = vunpack.c.l.b16 %v3115
        %v4154 = vunpack.c.h.b16 %v3115
        %v4155 = vunpack.c.l.b16 %v3116
        %v4156 = vunpack.c.l.b16 %v3117
        %v4157 = vunpack.c.h.b16 %v3117
        %v4158 = vunpack.c.l.b16 %v3118
        %v4159 = vunpack.c.h.b16 %v3118
        %v4160 = vunpack.c.l.b16 %v3119
        %v4161 = vunpack.c.l.b16 %v3120
        %v4162 = vunpack.c.h.b16 %v3120
        %v4163 = vunpack.c.l.b16 %v3121
        %v4164 = vunpack.c.h.b16 %v3121
        %v4165 = vunpack.c.l.b16 %v3122
        %v4166 = vunpack.c.l.b16 %v3123
        %v4167 = vunpack.c.h.b16 %v3123
        %v4168 = vunpack.c.l.b16 %v3124
        %v4169 = vunpack.c.h.b16 %v3124
        %v4170 = vunpack.c.l.b16 %v3125
        %v4171 = vunpack.c.l.b16 %v3126
        %v4172 = vunpack.c.h.b16 %v3126
        %v4173 = vunpack.c.l.b16 %v3127
        %v4174 = vunpack.c.h.b16 %v3127
        %v4175 = vunpack.c.l.b16 %v3128
        %v4176 = vunpack.c.l.b16 %v3129
        %v4177 = vunpack.c.h.b16 %v3129
        %v4178 = vunpack.c.l.b16 %v3130
        %v4179 = vunpack.c.h.b16 %v3130
        %v4180 = vunpack.c.l.b16 %v3131
        %v4181 = vunpack.c.l.b16 %v3132
        %v4182 = vunpack.c.h.b16 %v3132
        %v4183 = vunpack.c.l.b16 %v3133
        %v4184 = vunpack.c.h.b16 %v3133
        %v4185 = vunpack.c.l.b16 %v3134
        %v4186 = vunpack.c.l.b16 %v3135
        %v4187 = vunpack.c.h.b16 %v3135
        %v4188 = vunpack.c.l.b16 %v3136
        %v4189 = vunpack.c.h.b16 %v3136
        %v4190 = vunpack.c.l.b16 %v3137
        %v4191 = vunpack.c.l.b16 %v3138
        %v4192 = vunpack.c.h.b16 %v3138
        %v4193 = vunpack.c.l.b16 %v3139
        %v4194 = vunpack.c.h.b16 %v3139
        %v4195 = vunpack.c.l.b16 %v3140
        %v4196 = vunpack.c.l.b16 %v3141
        %v4197 = vunpack.c.h.b16 %v3141
        %v4198 = vunpack.c.l.b16 %v3142
        %v4199 = vunpack.c.h.b16 %v3142
        %v4200 = vunpack.c.l.b16 %v3143
        %v4201 = vunpack.c.l.b16 %v3144
        %v4202 = vunpack.c.h.b16 %v3144
        %v4203 = vunpack.c.l.b16 %v3145
        %v4204 = vunpack.c.h.b16 %v3145
        %v4205 = vunpack.c.l.b16 %v3146
        %v4206 = vunpack.c.l.b16 %v3147
        %v4207 = vunpack.c.h.b16 %v3147
        %v4208 = vunpack.c.l.b16 %v3148
        %v4209 = vunpack.c.h.b16 %v3148
        %v4210 = vunpack.c.l.b16 %v3149
        %v4211 = vunpack.c.l.b16 %v3150
        %v4212 = vunpack.c.h.b16 %v3150
        %v4213 = vunpack.c.l.b16 %v3151
        %v4214 = vunpack.c.h.b16 %v3151
        %v4215 = vunpack.c.l.b16 %v3152
        %v4216 = vunpack.c.l.b16 %v3153
        %v4217 = vunpack.c.h.b16 %v3153
        %v4218 = vunpack.c.l.b16 %v3154
        %v4219 = vunpack.c.h.b16 %v3154
        %v4220 = vunpack.c.l.b16 %v3155
        %v4221 = vunpack.c.l.b16 %v3156
        %v4222 = vunpack.c.h.b16 %v3156
        %v4223 = vunpack.c.l.b16 %v3157
        %v4224 = vunpack.c.h.b16 %v3157
        %v4225 = vunpack.c.l.b16 %v3158
        %v4226 = vunpack.c.l.b16 %v3159
        %v4227 = vunpack.c.h.b16 %v3159
        %v4228 = vunpack.c.l.b16 %v3160
        %v4229 = vunpack.c.h.b16 %v3160
        %v4230 = vunpack.c.l.b16 %v3161
        %v4231 = vunpack.c.l.b16 %v3162
        %v4232 = vunpack.c.h.b16 %v3162
        %v4233 = vunpack.c.l.b16 %v3163
        %v4234 = vunpack.c.h.b16 %v3163
        %v4235 = vunpack.c.l.b16 %v3164
        %v4236 = vunpack.c.l.b16 %v3165
        %v4237 = vunpack.c.h.b16 %v3165
        %v4238 = vunpack.c.l.b16 %v3166
        %v4239 = vunpack.c.h.b16 %v3166
        %v4240 = vunpack.c.l.b16 %v3167
        %v4241 = vunpack.c.l.b16 %v3168
        %v4242 = vunpack.c.h.b16 %v3168
        %v4243 = vunpack.c.l.b16 %v3169
        %v4244 = vunpack.c.h.b16 %v3169
        %v4245 = vunpack.c.l.b16 %v3170
        %v4246 = vunpack.c.l.b16 %v3171
        %v4247 = vunpack.c.h.b16 %v3171
        %v4248 = vunpack.c.l.b16 %v3172
        %v4249 = vunpack.c.h.b16 %v3172
        %v4250 = vunpack.c.l.b16 %v3173
        %v4251 = vunpack.c.l.b16 %v3174
        %v4252 = vunpack.c.h.b16 %v3174
        %v4253 = vunpack.c.l.b16 %v3175
        %v4254 = vunpack.c.h.b16 %v3175
        %v4255 = vunpack.c.l.b16 %v3176
        %v4256 = vunpack.c.l.b16 %v3177
        %v4257 = vunpack.c.h.b16 %v3177
        %v4258 = vunpack.c.l.b16 %v3178
        %v4259 = vunpack.c.h.b16 %v3178
        %v4260 = vunpack.c.l.b16 %v3179
        %v4261 = vunpack.c.l.b16 %v3180
        %v4262 = vunpack.c.h.b16 %v3180
        %v4263 = vunpack.c.l.b16 %v3181
        %v4264 = vunpack.c.h.b16 %v3181
        %v4265 = vunpack.c.l.b16 %v3182
        %v4266 = vunpack.c.l.b16 %v3183
        %v4267 = vunpack.c.h.b16 %v3183
        %v4268 = vunpack.c.l.b16 %v3184
        %v4269 = vunpack.c.h.b16 %v3184
        %v4270 = vunpack.c.l.b16 %v3185
        %v4271 = vunpack.c.l.b16 %v3186
        %v4272 = vunpack.c.h.b16 %v3186
        %v4273 = vunpack.c.l.b16 %v3187
        %v4274 = vunpack.c.h.b16 %v3187
        %v4275 = vunpack.c.l.b16 %v3188
        %v4276 = vunpack.c.l.b16 %v3189
        %v4277 = vunpack.c.h.b16 %v3189
        %v4278 = vunpack.c.l.b16 %v3190
        %v4279 = vunpack.c.h.b16 %v3190
        %v4280 = vunpack.c.l.b16 %v3191
        %v4281 = vunpack.c.l.b16 %v3192
        %v4282 = vunpack.c.h.b16 %v3192
        %v4283 = vunpack.c.l.b16 %v3193
        %v4284 = vunpack.c.h.b16 %v3193
        %v4285 = vunpack.c.l.b16 %v3194
        %v4286 = vunpack.c.l.b16 %v3195
        %v4287 = vunpack.c.h.b16 %v3195
        %v4288 = vunpack.c.l.b16 %v3196
        %v4289 = vunpack.c.h.b16 %v3196
        %v4290 = vunpack.c.l.b16 %v3197
        %v4291 = vunpack.c.l.b16 %v3198
        %v4292 = vunpack.c.h.b16 %v3198
        %v4293 = vunpack.c.l.b16 %v3199
        %v4294 = vunpack.c.h.b16 %v3199
        %v4295 = vunpack.c.l.b16 %v3200
        %v4296 = vunpack.c.l.b16 %v3201
        %v4297 = vunpack.c.h.b16 %v3201
        %v4298 = vunpack.c.l.b16 %v3202
        %v4299 = vunpack.c.h.b16 %v3202
        %v4300 = vunpack.c.l.b16 %v3203
        %v4301 = vunpack.c.l.b16 %v3204
        %v4302 = vunpack.c.h.b16 %v3204
        %v4303 = vunpack.c.l.b16 %v3205
        %v4304 = vunpack.c.h.b16 %v3205
        %v4305 = vunpack.c.l.b16 %v3206
        %v4306 = vunpack.c.l.b16 %v3207
        %v4307 = vunpack.c.h.b16 %v3207
        %v4308 = vunpack.c.l.b16 %v3208
        %v4309 = vunpack.c.h.b16 %v3208
        %v4310 = vunpack.c.l.b16 %v3209
        %v4311 = vunpack.c.l.b16 %v3210
        %v4312 = vunpack.c.h.b16 %v3210
        %v4313 = vunpack.c.l.b16 %v3211
        %v4314 = vunpack.c.h.b16 %v3211
        %v4315 = vunpack.c.l.b16 %v3212
        %v4316 = vunpack.c.l.b16 %v3213
        %v4317 = vunpack.c.h.b16 %v3213
        %v4318 = vunpack.c.l.b16 %v3214
        %v4319 = vunpack.c.h.b16 %v3214
        %v4320 = vunpack.c.l.b16 %v3215
        %v4321 = vunpack.c.l.b16 %v3216
        %v4322 = vunpack.c.h.b16 %v3216
        %v4323 = vunpack.c.l.b16 %v3217
        %v4324 = vunpack.c.h.b16 %v3217
        %v4325 = vunpack.c.l.b16 %v3218
        %v4326 = vunpack.c.l.b16 %v3219
        %v4327 = vunpack.c.h.b16 %v3219
        %v4328 = vunpack.c.l.b16 %v3220
        %v4329 = vunpack.c.h.b16 %v3220
        %v4330 = vunpack.c.l.b16 %v3221
        %v4331 = vunpack.c.l.b16 %v3222
        %v4332 = vunpack.c.h.b16 %v3222
        %v4333 = vunpack.c.l.b16 %v3223
        %v4334 = vunpack.c.h.b16 %v3223
        %v4335 = vunpack.c.l.b16 %v3224
        %v4336 = vunpack.c.l.b16 %v3225
        %v4337 = vunpack.c.h.b16 %v3225
        %v4338 = vunpack.c.l.b16 %v3226
        %v4339 = vunpack.c.h.b16 %v3226
        %v4340 = vunpack.c.l.b16 %v3227
        %v4341 = vunpack.c.l.b16 %v3228
        %v4342 = vunpack.c.h.b16 %v3228
        %v4343 = vunpack.c.l.b16 %v3229
        %v4344 = vunpack.c.h.b16 %v3229
        %v4345 = vunpack.c.l.b16 %v3230
        %v4346 = vunpack.c.l.b16 %v3231
        %v4347 = vunpack.c.h.b16 %v3231
        %v4348 = vunpack.c.l.b16 %v3232
        %v4349 = vunpack.c.h.b16 %v3232
        %v4350 = vunpack.c.l.b16 %v3233
        %v4351 = vunpack.c.l.b16 %v3234
        %v4352 = vunpack.c.h.b16 %v3234
        %v4353 = vunpack.c.l.b16 %v3235
        %v4354 = vunpack.c.h.b16 %v3235
        %v4355 = vunpack.c.l.b16 %v3236
        %v4356 = vunpack.c.l.b16 %v3237
        %v4357 = vunpack.c.h.b16 %v3237
        %v4358 = vunpack.c.l.b16 %v3238
        %v4359 = vunpack.c.h.b16 %v3238
        %v4360 = vunpack.c.l.b16 %v3239
        %v4361 = vunpack.c.l.b16 %v3240
        %v4362 = vunpack.c.h.b16 %v3240
        %v4363 = vunpack.c.l.b16 %v3241
        %v4364 = vunpack.c.h.b16 %v3241
        %v4365 = vunpack.c.l.b16 %v3242
        %v4366 = vunpack.c.l.b16 %v3243
        %v4367 = vunpack.c.h.b16 %v3243
        %v4368 = vunpack.c.l.b16 %v3244
        %v4369 = vunpack.c.h.b16 %v3244
        %v4370 = vunpack.c.l.b16 %v3245
        %v4371 = vunpack.c.l.b16 %v3246
        %v4372 = vunpack.c.h.b16 %v3246
        %v4373 = vunpack.c.l.b16 %v3247
        %v4374 = vunpack.c.h.b16 %v3247
        %v4375 = vunpack.c.l.b16 %v3248
        %v4376 = vunpack.c.l.b16 %v3249
        %v4377 = vunpack.c.h.b16 %v3249
        %v4378 = vunpack.c.l.b16 %v3250
        %v4379 = vunpack.c.h.b16 %v3250
        %v4380 = vunpack.c.l.b16 %v3251
        %v4381 = vunpack.c.l.b16 %v3252
        %v4382 = vunpack.c.h.b16 %v3252
        %v4383 = vunpack.c.l.b16 %v3253
        %v4384 = vunpack.c.h.b16 %v3253
        %v4385 = vunpack.c.l.b16 %v3254
        %v4386 = vunpack.c.l.b16 %v3255
        %v4387 = vunpack.c.h.b16 %v3255
        %v4388 = vunpack.c.l.b16 %v3256
        %v4389 = vunpack.c.h.b16 %v3256
        %v4390 = vunpack.c.l.b16 %v3257
        %v4391 = vunpack.c.l.b16 %v3258
        %v4392 = vunpack.c.h.b16 %v3258
        %v4393 = vunpack.c.l.b16 %v3259
        %v4394 = vunpack.c.h.b16 %v3259
        %v4395 = vunpack.c.l.b16 %v3260
        %v4396 = vunpack.c.l.b16 %v3261
        %v4397 = vunpack.c.h.b16 %v3261
        %v4398 = vunpack.c.l.b16 %v3262
        %v4399 = vunpack.c.h.b16 %v3262
        %v4400 = vunpack.c.l.b16 %v3263
        %v4401 = vunpack.c.l.b16 %v3264
        %v4402 = vunpack.c.h.b16 %v3264
        %v4403 = vunpack.c.l.b16 %v3265
        %v4404 = vunpack.c.h.b16 %v3265
        %v4405 = vunpack.c.l.b16 %v3266
        %v4406 = vunpack.c.l.b16 %v3267
        %v4407 = vunpack.c.h.b16 %v3267
        %v4408 = vunpack.c.l.b16 %v3268
        %v4409 = vunpack.c.h.b16 %v3268
        %v4410 = vunpack.c.l.b16 %v3269
        %v4411 = vunpack.c.l.b16 %v3270
        %v4412 = vunpack.c.h.b16 %v3270
        %v4413 = vunpack.c.l.b16 %v3271
        %v4414 = vunpack.c.h.b16 %v3271
        %v4415 = vunpack.c.l.b16 %v3272
        %v4416 = vunpack.c.l.b16 %v3273
        %v4417 = vunpack.c.h.b16 %v3273
        %v4418 = vunpack.c.l.b16 %v3274
        %v4419 = vunpack.c.h.b16 %v3274
        %v4420 = vunpack.c.l.b16 %v3275
        %v4421 = vunpack.c.l.b16 %v3276
        %v4422 = vunpack.c.h.b16 %v3276
        %v4423 = vunpack.c.l.b16 %v3277
        %v4424 = vunpack.c.h.b16 %v3277
        %v4425 = vunpack.c.l.b16 %v3278
        %v4426 = vunpack.c.l.b16 %v3279
        %v4427 = vunpack.c.h.b16 %v3279
        %v4428 = vunpack.c.l.b16 %v3280
        %v4429 = vunpack.c.h.b16 %v3280
        %v4430 = vunpack.c.l.b16 %v3281
        %v4431 = vunpack.c.l.b16 %v3282
        %v4432 = vunpack.c.h.b16 %v3282
        %v4433 = vunpack.c.l.b16 %v3283
        %v4434 = vunpack.c.h.b16 %v3283
        %v4435 = vunpack.c.l.b16 %v3284
        %v4436 = vunpack.c.l.b16 %v3285
        %v4437 = vunpack.c.h.b16 %v3285
        %v4438 = vunpack.c.l.b16 %v3286
        %v4439 = vunpack.c.h.b16 %v3286
        %v4440 = vunpack.c.l.b16 %v3287
        %v4441 = vunpack.c.l.b16 %v3288
        %v4442 = vunpack.c.h.b16 %v3288
        %v4443 = vunpack.c.l.b16 %v3289
        %v4444 = vunpack.c.h.b16 %v3289
        %v4445 = vunpack.c.l.b16 %v3290
        %v4446 = vunpack.c.l.b16 %v3291
        %v4447 = vunpack.c.h.b16 %v3291
        %v4448 = vunpack.c.l.b16 %v3292
        %v4449 = vunpack.c.h.b16 %v3292
        %v4450 = vunpack.c.l.b16 %v3293
        %v4451 = vunpack.c.l.b16 %v3294
        %v4452 = vunpack.c.h.b16 %v3294
        %v4453 = vunpack.c.l.b16 %v3295
        %v4454 = vunpack.c.h.b16 %v3295
        %v4455 = vunpack.c.l.b16 %v3296
        %v4456 = vunpack.c.l.b16 %v3297
        %v4457 = vunpack.c.h.b16 %v3297
        %v4458 = vunpack.c.l.b16 %v3298
        %v4459 = vunpack.c.h.b16 %v3298
        %v4460 = vunpack.c.l.b16 %v3299
        %v4461 = vunpack.c.l.b16 %v3300
        %v4462 = vunpack.c.h.b16 %v3300
        %v4463 = vunpack.c.l.b16 %v3301
        %v4464 = vunpack.c.h.b16 %v3301
        %v4465 = vunpack.c.l.b16 %v3302
        %v4466 = vunpack.c.l.b16 %v3303
        %v4467 = vunpack.c.h.b16 %v3303
        %v4468 = vunpack.c.l.b16 %v3304
        %v4469 = vunpack.c.h.b16 %v3304
        %v4470 = vunpack.c.l.b16 %v3305
        %v4471 = vunpack.c.l.b16 %v3306
        %v4472 = vunpack.c.h.b16 %v3306
        %v4473 = vunpack.c.l.b16 %v3307
        %v4474 = vunpack.c.h.b16 %v3307
        %v4475 = vunpack.c.l.b16 %v3308
        %v4476 = vunpack.c.l.b16 %v3309
        %v4477 = vunpack.c.h.b16 %v3309
        %v4478 = vunpack.c.l.b16 %v3310
        %v4479 = vunpack.c.h.b16 %v3310
        %v4480 = vunpack.c.l.b16 %v3311
        %v4481 = vunpack.c.l.b16 %v3312
        %v4482 = vunpack.c.h.b16 %v3312
        %v4483 = vunpack.c.l.b16 %v3313
        %v4484 = vunpack.c.h.b16 %v3313
        %v4485 = vunpack.c.l.b16 %v3314
        %v4486 = vunpack.c.l.b16 %v3315
        %v4487 = vunpack.c.h.b16 %v3315
        %v4488 = vunpack.c.l.b16 %v3316
        %v4489 = vunpack.c.h.b16 %v3316
        %v4490 = vunpack.c.l.b16 %v3317
        %v4491 = vunpack.c.l.b16 %v3318
        %v4492 = vunpack.c.h.b16 %v3318
        %v4493 = vunpack.c.l.b16 %v3319
        %v4494 = vunpack.c.h.b16 %v3319
        %v4495 = vunpack.c.l.b16 %v3320
        %v4496 = vunpack.c.l.b16 %v3321
        %v4497 = vunpack.c.h.b16 %v3321
        %v4498 = vunpack.c.l.b16 %v3322
        %v4499 = vunpack.c.h.b16 %v3322
        %v4500 = vunpack.c.l.b16 %v3323
        %v4501 = vunpack.c.l.b16 %v3324
        %v4502 = vunpack.c.h.b16 %v3324
        %v4503 = vunpack.c.l.b16 %v3325
        %v4504 = vunpack.c.h.b16 %v3325
        %v4505 = vunpack.c.l.b16 %v3326
        %v4506 = vunpack.c.l.b16 %v3327
        %v4507 = vunpack.c.h.b16 %v3327
        %v4508 = vunpack.c.l.b16 %v3328
        %v4509 = vunpack.c.h.b16 %v3328
        %v4510 = vunpack.c.l.b16 %v3329
        %v4511 = vunpack.c.l.b16 %v3330
        %v4512 = vunpack.c.h.b16 %v3330
        %v4513 = vunpack.c.l.b16 %v3331
        %v4514 = vunpack.c.h.b16 %v3331
        %v4515 = vunpack.c.l.b16 %v3332
        %v4516 = vunpack.c.l.b16 %v3333
        %v4517 = vunpack.c.h.b16 %v3333
        %v4518 = vunpack.c.l.b16 %v3334
        %v4519 = vunpack.c.h.b16 %v3334
        %v4520 = vunpack.c.l.b16 %v3335
        %v4521 = vunpack.c.l.b16 %v3336
        %v4522 = vunpack.c.h.b16 %v3336
        %v4523 = vunpack.c.l.b16 %v3337
        %v4524 = vunpack.c.h.b16 %v3337
        %v4525 = vunpack.c.l.b16 %v3338
        %v4526 = vunpack.c.l.b16 %v3339
        %v4527 = vunpack.c.h.b16 %v3339
        %v4528 = vunpack.c.l.b16 %v3340
        %v4529 = vunpack.c.h.b16 %v3340
        %v4530 = vunpack.c.l.b16 %v3341
        %v4531 = vunpack.c.l.b16 %v3342
        %v4532 = vunpack.c.h.b16 %v3342
        %v4533 = vunpack.c.l.b16 %v3343
        %v4534 = vunpack.c.h.b16 %v3343
        %v4535 = vunpack.c.l.b16 %v3344
        %v4536 = vunpack.c.l.b16 %v3345
        %v4537 = vunpack.c.h.b16 %v3345
        %v4538 = vunpack.c.l.b16 %v3346
        %v4539 = vunpack.c.h.b16 %v3346
        %v4540 = vunpack.c.l.b16 %v3347
        %v4541 = vunpack.c.l.b16 %v3348
        %v4542 = vunpack.c.h.b16 %v3348
        %v4543 = vunpack.c.l.b16 %v3349
        %v4544 = vunpack.c.h.b16 %v3349
        %v4545 = vunpack.c.l.b16 %v3350
        %v4546 = vunpack.c.l.b16 %v3351
        %v4547 = vunpack.c.h.b16 %v3351
        %v4548 = vunpack.c.l.b16 %v3352
        %v4549 = vunpack.c.h.b16 %v3352
        %v4550 = vunpack.c.l.b16 %v3353
        %v4551 = vunpack.c.l.b16 %v3354
        %v4552 = vunpack.c.h.b16 %v3354
        %v4553 = vunpack.c.l.b16 %v3355
        %v4554 = vunpack.c.h.b16 %v3355
        %v4555 = vunpack.c.l.b16 %v3356
        %v4556 = vunpack.c.l.b16 %v3357
        %v4557 = vunpack.c.h.b16 %v3357
        %v4558 = vunpack.c.l.b16 %v3358
        %v4559 = vunpack.c.h.b16 %v3358
        %v4560 = vunpack.c.l.b16 %v3359
        %v4561 = vunpack.c.l.b16 %v3360
        %v4562 = vunpack.c.h.b16 %v3360
        %v4563 = vunpack.c.l.b16 %v3361
        %v4564 = vunpack.c.h.b16 %v3361
        %v4565 = vunpack.c.l.b16 %v3362
        %v4566 = vunpack.c.l.b16 %v3363
        %v4567 = vunpack.c.h.b16 %v3363
        %v4568 = vunpack.c.l.b16 %v3364
        %v4569 = vunpack.c.h.b16 %v3364
        %v4570 = vunpack.c.l.b16 %v3365
        %v4571 = vunpack.c.l.b16 %v3366
        %v4572 = vunpack.c.h.b16 %v3366
        %v4573 = vunpack.c.l.b16 %v3367
        %v4574 = vunpack.c.h.b16 %v3367
        %v4575 = vunpack.c.l.b16 %v3368
        %v4576 = vunpack.c.l.b16 %v3369
        %v4577 = vunpack.c.h.b16 %v3369
        %v4578 = vunpack.c.l.b16 %v3370
        %v4579 = vunpack.c.h.b16 %v3370
        %v4580 = vunpack.c.l.b16 %v3371
        %v4581 = vunpack.c.l.b16 %v3372
        %v4582 = vunpack.c.h.b16 %v3372
        %v4583 = vunpack.c.l.b16 %v3373
        %v4584 = vunpack.c.h.b16 %v3373
        %v4585 = vunpack.c.l.b16 %v3374
        %v4586 = vunpack.c.l.b16 %v3375
        %v4587 = vunpack.c.h.b16 %v3375
        %v4588 = vunpack.c.l.b16 %v3376
        %v4589 = vunpack.c.h.b16 %v3376
        %v4590 = vunpack.c.l.b16 %v3377
        %v4591 = vunpack.c.l.b16 %v3378
        %v4592 = vunpack.c.h.b16 %v3378
        %v4593 = vunpack.c.l.b16 %v3379
        %v4594 = vunpack.c.h.b16 %v3379
        %v4595 = vunpack.c.l.b16 %v3380
        %v4596 = vunpack.c.l.b16 %v3381
        %v4597 = vunpack.c.h.b16 %v3381
        %v4598 = vunpack.c.l.b16 %v3382
        %v4599 = vunpack.c.h.b16 %v3382
        %v4600 = vunpack.c.l.b16 %v3383
        %v4601 = vunpack.c.l.b16 %v3384
        %v4602 = vunpack.c.h.b16 %v3384
        %v4603 = vunpack.c.l.b16 %v3385
        %v4604 = vunpack.c.h.b16 %v3385
        %v4605 = vunpack.c.l.b16 %v3386
        %v4606 = vunpack.c.l.b16 %v3387
        %v4607 = vunpack.c.h.b16 %v3387
        %v4608 = vunpack.c.l.b16 %v3388
        %v4609 = vunpack.c.h.b16 %v3388
        %v4610 = vunpack.c.l.b16 %v3389
        %v4611 = vunpack.c.l.b16 %v3390
        %v4612 = vunpack.c.h.b16 %v3390
        %v4613 = vunpack.c.l.b16 %v3391
        %v4614 = vunpack.c.h.b16 %v3391
        %v4615 = vunpack.c.l.b16 %v3392
        %v4616 = vunpack.c.l.b16 %v3393
        %v4617 = vunpack.c.h.b16 %v3393
        %v4618 = vunpack.c.l.b16 %v3394
        %v4619 = vunpack.c.h.b16 %v3394
        %v4620 = vunpack.c.l.b16 %v3395
        %v4621 = vunpack.c.l.b16 %v3396
        %v4622 = vunpack.c.h.b16 %v3396
        %v4623 = vunpack.c.l.b16 %v3397
        %v4624 = vunpack.c.h.b16 %v3397
        %v4625 = vunpack.c.l.b16 %v3398
        %v4626 = vunpack.c.l.b16 %v3399
        %v4627 = vunpack.c.h.b16 %v3399
        %v4628 = vunpack.c.l.b16 %v3400
        %v4629 = vunpack.c.h.b16 %v3400
        %v4630 = vunpack.c.l.b16 %v3401
        %v4631 = vunpack.c.l.b16 %v3402
        %v4632 = vunpack.c.h.b16 %v3402
        %v4633 = vunpack.c.l.b16 %v3403
        %v4634 = vunpack.c.h.b16 %v3403
        %v4635 = vunpack.c.l.b16 %v3404
        %v4636 = vunpack.c.l.b16 %v3405
        %v4637 = vunpack.c.h.b16 %v3405
        %v4638 = vunpack.c.l.b16 %v3406
        %v4639 = vunpack.c.h.b16 %v3406
        %v4640 = vunpack.c.l.b16 %v3407
        %v4641 = vunpack.c.l.b16 %v3408
        %v4642 = vunpack.c.h.b16 %v3408
        %v4643 = vunpack.c.l.b16 %v3409
        %v4644 = vunpack.c.h.b16 %v3409
        %v4645 = vunpack.c.l.b16 %v3410
        %v4646 = vunpack.c.l.b16 %v3411
        %v4647 = vunpack.c.h.b16 %v3411
        %v4648 = vunpack.c.l.b16 %v3412
        %v4649 = vunpack.c.h.b16 %v3412
        %v4650 = vunpack.c.l.b16 %v3413
        %v4651 = vunpack.c.l.b16 %v3414
        %v4652 = vunpack.c.h.b16 %v3414
        %v4653 = vunpack.c.l.b16 %v3415
        %v4654 = vunpack.c.h.b16 %v3415
        %v4655 = vunpack.c.l.b16 %v3416
        %v4656 = vunpack.c.l.b16 %v3417
        %v4657 = vunpack.c.h.b16 %v3417
        %v4658 = vunpack.c.l.b16 %v3418
        %v4659 = vunpack.c.h.b16 %v3418
        %v4660 = vunpack.c.l.b16 %v3419
        %v4661 = vunpack.c.l.b16 %v3420
        %v4662 = vunpack.c.h.b16 %v3420
        %v4663 = vunpack.c.l.b16 %v3421
        %v4664 = vunpack.c.h.b16 %v3421
        %v4665 = vunpack.c.l.b16 %v3422
        %v4666 = vunpack.c.l.b16 %v3423
        %v4667 = vunpack.c.h.b16 %v3423
        %v4668 = vunpack.c.l.b16 %v3424
        %v4669 = vunpack.c.h.b16 %v3424
        %v4670 = vunpack.c.l.b16 %v3425
        %v4671 = vunpack.c.l.b16 %v3426
        %v4672 = vunpack.c.h.b16 %v3426
        %v4673 = vunpack.c.l.b16 %v3427
        %v4674 = vunpack.c.h.b16 %v3427
        %v4675 = vunpack.c.l.b16 %v3428
        %v4676 = vunpack.c.l.b16 %v3429
        %v4677 = vunpack.c.h.b16 %v3429
        %v4678 = vunpack.c.l.b16 %v3430
        %v4679 = vunpack.c.h.b16 %v3430
        %v4680 = vunpack.c.l.b16 %v3431
        %v4681 = vunpack.c.l.b16 %v3432
        %v4682 = vunpack.c.h.b16 %v3432
        %v4683 = vunpack.c.l.b16 %v3433
        %v4684 = vunpack.c.h.b16 %v3433
        %v4685 = vunpack.c.l.b16 %v3434
        %v4686 = vunpack.c.l.b16 %v3435
        %v4687 = vunpack.c.h.b16 %v3435
        %v4688 = vunpack.c.l.b16 %v3436
        %v4689 = vunpack.c.h.b16 %v3436
        %v4690 = vunpack.c.l.b16 %v3437
        %v4691 = vunpack.c.l.b16 %v3438
        %v4692 = vunpack.c.h.b16 %v3438
        %v4693 = vunpack.c.l.b16 %v3439
        %v4694 = vunpack.c.h.b16 %v3439
        %v4695 = vunpack.c.l.b16 %v3440
        %v4696 = vunpack.c.l.b16 %v3441
        %v4697 = vunpack.c.h.b16 %v3441
        %v4698 = vunpack.c.l.b16 %v3442
        %v4699 = vunpack.c.h.b16 %v3442
        %v4700 = vunpack.c.l.b16 %v3443
        %v4701 = vunpack.c.l.b16 %v3444
        %v4702 = vunpack.c.h.b16 %v3444
        %v4703 = vunpack.c.l.b16 %v3445
        %v4704 = vunpack.c.h.b16 %v3445
        %v4705 = vunpack.c.l.b16 %v3446
        %v4706 = vunpack.c.l.b16 %v3447
        %v4707 = vunpack.c.h.b16 %v3447
        %v4708 = vunpack.c.l.b16 %v3448
        %v4709 = vunpack.c.h.b16 %v3448
        %v4710 = vunpack.c.l.b16 %v3449
        %v4711 = vunpack.c.l.b16 %v3450
        %v4712 = vunpack.c.h.b16 %v3450
        %v4713 = vunpack.c.l.b16 %v3451
        %v4714 = vunpack.c.h.b16 %v3451
        %v4715 = vunpack.c.l.b16 %v3452
        %v4716 = vunpack.c.l.b16 %v3453
        %v4717 = vunpack.c.h.b16 %v3453
        %v4718 = vunpack.c.l.b16 %v3454
        %v4719 = vunpack.c.h.b16 %v3454
        %v4720 = vunpack.c.l.b16 %v3455
        %v4721 = vunpack.c.l.b16 %v3456
        %v4722 = vunpack.c.h.b16 %v3456
        %v4723 = vunpack.c.l.b16 %v3457
        %v4724 = vunpack.c.h.b16 %v3457
        %v4725 = vunpack.c.l.b16 %v3458
        %v4726 = vunpack.c.l.b16 %v3459
        %v4727 = vunpack.c.h.b16 %v3459
        %v4728 = vunpack.c.l.b16 %v3460
        %v4729 = vunpack.c.h.b16 %v3460
        %v4730 = vunpack.c.l.b16 %v3461
        %v4731 = vunpack.c.l.b16 %v3462
        %v4732 = vunpack.c.h.b16 %v3462
        %v4733 = vunpack.c.l.b16 %v3463
        %v4734 = vunpack.c.h.b16 %v3463
        %v4735 = vunpack.c.l.b16 %v3464
        %v4736 = vunpack.c.l.b16 %v3465
        %v4737 = vunpack.c.h.b16 %v3465
        %v4738 = vunpack.c.l.b16 %v3466
        %v4739 = vunpack.c.h.b16 %v3466
        %v4740 = vunpack.c.l.b16 %v3467
        %v4741 = vunpack.c.l.b16 %v3468
        %v4742 = vunpack.c.h.b16 %v3468
        %v4743 = vunpack.c.l.b16 %v3469
        %v4744 = vunpack.c.h.b16 %v3469
        %v4745 = vunpack.c.l.b16 %v3470
        %v4746 = vunpack.c.l.b16 %v3471
        %v4747 = vunpack.c.h.b16 %v3471
        %v4748 = vunpack.c.l.b16 %v3472
        %v4749 = vunpack.c.h.b16 %v3472
        %v4750 = vunpack.c.l.b16 %v3473
        %v4751 = vunpack.c.l.b16 %v3474
        %v4752 = vunpack.c.h.b16 %v3474
        %v4753 = vunpack.c.l.b16 %v3475
        %v4754 = vunpack.c.h.b16 %v3475
        %v4755 = vunpack.c.l.b16 %v3476
        %v4756 = vunpack.c.l.b16 %v3477
        %v4757 = vunpack.c.h.b16 %v3477
        %v4758 = vunpack.c.l.b16 %v3478
        %v4759 = vunpack.c.h.b16 %v3478
        %v4760 = vunpack.c.l.b16 %v3479
        %v4761 = vpack.c.b16 %v3966, %v3961
        %v4762 = vpack.c.b16 %v3967, %v3962
        %v4763 = vpack.c.b16 %v3968, %v3963
        %v4764 = vpack.c.b16 %v3969, %v3964
        %v4765 = vpack.c.b16 %v3970, %v3965
        %v4766 = vpack.c.b16 %v3976, %v3971
        %v4767 = vpack.c.b16 %v3977, %v3972
        %v4768 = vpack.c.b16 %v3978, %v3973
        %v4769 = vpack.c.b16 %v3979, %v3974
        %v4770 = vpack.c.b16 %v3980, %v3975
        %v4771 = vpack.c.b16 %v3986, %v3981
        %v4772 = vpack.c.b16 %v3987, %v3982
        %v4773 = vpack.c.b16 %v3988, %v3983
        %v4774 = vpack.c.b16 %v3989, %v3984
        %v4775 = vpack.c.b16 %v3990, %v3985
        %v4776 = vpack.c.b16 %v3996, %v3991
        %v4777 = vpack.c.b16 %v3997, %v3992
        %v4778 = vpack.c.b16 %v3998, %v3993
        %v4779 = vpack.c.b16 %v3999, %v3994
        %v4780 = vpack.c.b16 %v4000, %v3995
        %v4781 = vpack.c.b16 %v4006, %v4001
        %v4782 = vpack.c.b16 %v4007, %v4002
        %v4783 = vpack.c.b16 %v4008, %v4003
        %v4784 = vpack.c.b16 %v4009, %v4004
        %v4785 = vpack.c.b16 %v4010, %v4005
        %v4786 = vpack.c.b16 %v4016, %v4011
        %v4787 = vpack.c.b16 %v4017, %v4012
        %v4788 = vpack.c.b16 %v4018, %v4013
        %v4789 = vpack.c.b16 %v4019, %v4014
        %v4790 = vpack.c.b16 %v4020, %v4015
        %v4791 = vpack.c.b16 %v4026, %v4021
        %v4792 = vpack.c.b16 %v4027, %v4022
        %v4793 = vpack.c.b16 %v4028, %v4023
        %v4794 = vpack.c.b16 %v4029, %v4024
        %v4795 = vpack.c.b16 %v4030, %v4025
        %v4796 = vpack.c.b16 %v4036, %v4031
        %v4797 = vpack.c.b16 %v4037, %v4032
        %v4798 = vpack.c.b16 %v4038, %v4033
        %v4799 = vpack.c.b16 %v4039, %v4034
        %v4800 = vpack.c.b16 %v4040, %v4035
        %v4801 = vpack.c.b16 %v4046, %v4041
        %v4802 = vpack.c.b16 %v4047, %v4042
        %v4803 = vpack.c.b16 %v4048, %v4043
        %v4804 = vpack.c.b16 %v4049, %v4044
        %v4805 = vpack.c.b16 %v4050, %v4045
        %v4806 = vpack.c.b16 %v4056, %v4051
        %v4807 = vpack.c.b16 %v4057, %v4052
        %v4808 = vpack.c.b16 %v4058, %v4053
        %v4809 = vpack.c.b16 %v4059, %v4054
        %v4810 = vpack.c.b16 %v4060, %v4055
        %v4811 = vpack.c.b16 %v4066, %v4061
        %v4812 = vpack.c.b16 %v4067, %v4062
        %v4813 = vpack.c.b16 %v4068, %v4063
        %v4814 = vpack.c.b16 %v4069, %v4064
        %v4815 = vpack.c.b16 %v4070, %v4065
        %v4816 = vpack.c.b16 %v4076, %v4071
        %v4817 = vpack.c.b16 %v4077, %v4072
        %v4818 = vpack.c.b16 %v4078, %v4073
        %v4819 = vpack.c.b16 %v4079, %v4074
        %v4820 = vpack.c.b16 %v4080, %v4075
        %v4821 = vpack.c.b16 %v4086, %v4081
        %v4822 = vpack.c.b16 %v4087, %v4082
        %v4823 = vpack.c.b16 %v4088, %v4083
        %v4824 = vpack.c.b16 %v4089, %v4084
        %v4825 = vpack.c.b16 %v4090, %v4085
        %v4826 = vpack.c.b16 %v4096, %v4091
        %v4827 = vpack.c.b16 %v4097, %v4092
        %v4828 = vpack.c.b16 %v4098, %v4093
        %v4829 = vpack.c.b16 %v4099, %v4094
        %v4830 = vpack.c.b16 %v4100, %v4095
        %v4831 = vpack.c.b16 %v4106, %v4101
        %v4832 = vpack.c.b16 %v4107, %v4102
        %v4833 = vpack.c.b16 %v4108, %v4103
        %v4834 = vpack.c.b16 %v4109, %v4104
        %v4835 = vpack.c.b16 %v4110, %v4105
        %v4836 = vpack.c.b16 %v4116, %v4111
        %v4837 = vpack.c.b16 %v4117, %v4112
        %v4838 = vpack.c.b16 %v4118, %v4113
        %v4839 = vpack.c.b16 %v4119, %v4114
        %v4840 = vpack.c.b16 %v4120, %v4115
        %v4841 = vpack.c.b16 %v4126, %v4121
        %v4842 = vpack.c.b16 %v4127, %v4122
        %v4843 = vpack.c.b16 %v4128, %v4123
        %v4844 = vpack.c.b16 %v4129, %v4124
        %v4845 = vpack.c.b16 %v4130, %v4125
        %v4846 = vpack.c.b16 %v4136, %v4131
        %v4847 = vpack.c.b16 %v4137, %v4132
        %v4848 = vpack.c.b16 %v4138, %v4133
        %v4849 = vpack.c.b16 %v4139, %v4134
        %v4850 = vpack.c.b16 %v4140, %v4135
        %v4851 = vpack.c.b16 %v4146, %v4141
        %v4852 = vpack.c.b16 %v4147, %v4142
        %v4853 = vpack.c.b16 %v4148, %v4143
        %v4854 = vpack.c.b16 %v4149, %v4144
        %v4855 = vpack.c.b16 %v4150, %v4145
        %v4856 = vpack.c.b16 %v4156, %v4151
        %v4857 = vpack.c.b16 %v4157, %v4152
        %v4858 = vpack.c.b16 %v4158, %v4153
        %v4859 = vpack.c.b16 %v4159, %v4154
        %v4860 = vpack.c.b16 %v4160, %v4155
        %v4861 = vpack.c.b16 %v4166, %v4161
        %v4862 = vpack.c.b16 %v4167, %v4162
        %v4863 = vpack.c.b16 %v4168, %v4163
        %v4864 = vpack.c.b16 %v4169, %v4164
        %v4865 = vpack.c.b16 %v4170, %v4165
        %v4866 = vpack.c.b16 %v4176, %v4171
        %v4867 = vpack.c.b16 %v4177, %v4172
        %v4868 = vpack.c.b16 %v4178, %v4173
        %v4869 = vpack.c.b16 %v4179, %v4174
        %v4870 = vpack.c.b16 %v4180, %v4175
        %v4871 = vpack.c.b16 %v4186, %v4181
        %v4872 = vpack.c.b16 %v4187, %v4182
        %v4873 = vpack.c.b16 %v4188, %v4183
        %v4874 = vpack.c.b16 %v4189, %v4184
        %v4875 = vpack.c.b16 %v4190, %v4185
        %v4876 = vpack.c.b16 %v4196, %v4191
        %v4877 = vpack.c.b16 %v4197, %v4192
        %v4878 = vpack.c.b16 %v4198, %v4193
        %v4879 = vpack.c.b16 %v4199, %v4194
        %v4880 = vpack.c.b16 %v4200, %v4195
        %v4881 = vpack.c.b16 %v4206, %v4201
        %v4882 = vpack.c.b16 %v4207, %v4202
        %v4883 = vpack.c.b16 %v4208, %v4203
        %v4884 = vpack.c.b16 %v4209, %v4204
        %v4885 = vpack.c.b16 %v4210, %v4205
        %v4886 = vpack.c.b16 %v4216, %v4211
        %v4887 = vpack.c.b16 %v4217, %v4212
        %v4888 = vpack.c.b16 %v4218, %v4213
        %v4889 = vpack.c.b16 %v4219, %v4214
        %v4890 = vpack.c.b16 %v4220, %v4215
        %v4891 = vpack.c.b16 %v4226, %v4221
        %v4892 = vpack.c.b16 %v4227, %v4222
        %v4893 = vpack.c.b16 %v4228, %v4223
        %v4894 = vpack.c.b16 %v4229, %v4224
        %v4895 = vpack.c.b16 %v4230, %v4225
        %v4896 = vpack.c.b16 %v4236, %v4231
        %v4897 = vpack.c.b16 %v4237, %v4232
        %v4898 = vpack.c.b16 %v4238, %v4233
        %v4899 = vpack.c.b16 %v4239, %v4234
        %v4900 = vpack.c.b16 %v4240, %v4235
        %v4901 = vpack.c.b16 %v4246, %v4241
        %v4902 = vpack.c.b16 %v4247, %v4242
        %v4903 = vpack.c.b16 %v4248, %v4243
        %v4904 = vpack.c.b16 %v4249, %v4244
        %v4905 = vpack.c.b16 %v4250, %v4245
        %v4906 = vpack.c.b16 %v4256, %v4251
        %v4907 = vpack.c.b16 %v4257, %v4252
        %v4908 = vpack.c.b16 %v4258, %v4253
        %v4909 = vpack.c.b16 %v4259, %v4254
        %v4910 = vpack.c.b16 %v4260, %v4255
        %v4911 = vpack.c.b16 %v4266, %v4261
        %v4912 = vpack.c.b16 %v4267, %v4262
        %v4913 = vpack.c.b16 %v4268, %v4263
        %v4914 = vpack.c.b16 %v4269, %v4264
        %v4915 = vpack.c.b16 %v4270, %v4265
        %v4916 = vpack.c.b16 %v4276, %v4271
        %v4917 = vpack.c.b16 %v4277, %v4272
        %v4918 = vpack.c.b16 %v4278, %v4273
        %v4919 = vpack.c.b16 %v4279, %v4274
        %v4920 = vpack.c.b16 %v4280, %v4275
        %v4921 = vpack.c.b16 %v4286, %v4281
        %v4922 = vpack.c.b16 %v4287, %v4282
        %v4923 = vpack.c.b16 %v4288, %v4283
        %v4924 = vpack.c.b16 %v4289, %v4284
        %v4925 = vpack.c.b16 %v4290, %v4285
        %v4926 = vpack.c.b16 %v4296, %v4291
        %v4927 = vpack.c.b16 %v4297, %v4292
        %v4928 = vpack.c.b16 %v4298, %v4293
        %v4929 = vpack.c.b16 %v4299, %v4294
        %v4930 = vpack.c.b16 %v4300, %v4295
        %v4931 = vpack.c.b16 %v4306, %v4301
        %v4932 = vpack.c.b16 %v4307, %v4302
        %v4933 = vpack.c.b16 %v4308, %v4303
        %v4934 = vpack.c.b16 %v4309, %v4304
        %v4935 = vpack.c.b16 %v4310, %v4305
        %v4936 = vpack.c.b16 %v4316, %v4311
        %v4937 = vpack.c.b16 %v4317, %v4312
        %v4938 = vpack.c.b16 %v4318, %v4313
        %v4939 = vpack.c.b16 %v4319, %v4314
        %v4940 = vpack.c.b16 %v4320, %v4315
        %v4941 = vpack.c.b16 %v4326, %v4321
        %v4942 = vpack.c.b16 %v4327, %v4322
        %v4943 = vpack.c.b16 %v4328, %v4323
        %v4944 = vpack.c.b16 %v4329, %v4324
        %v4945 = vpack.c.b16 %v4330, %v4325
        %v4946 = vpack.c.b16 %v4336, %v4331
        %v4947 = vpack.c.b16 %v4337, %v4332
        %v4948 = vpack.c.b16 %v4338, %v4333
        %v4949 = vpack.c.b16 %v4339, %v4334
        %v4950 = vpack.c.b16 %v4340, %v4335
        %v4951 = vpack.c.b16 %v4346, %v4341
        %v4952 = vpack.c.b16 %v4347, %v4342
        %v4953 = vpack.c.b16 %v4348, %v4343
        %v4954 = vpack.c.b16 %v4349, %v4344
        %v4955 = vpack.c.b16 %v4350, %v4345
        %v4956 = vpack.c.b16 %v4356, %v4351
        %v4957 = vpack.c.b16 %v4357, %v4352
        %v4958 = vpack.c.b16 %v4358, %v4353
        %v4959 = vpack.c.b16 %v4359, %v4354
        %v4960 = vpack.c.b16 %v4360, %v4355
        %v4961 = vpack.c.b16 %v4366, %v4361
        %v4962 = vpack.c.b16 %v4367, %v4362
        %v4963 = vpack.c.b16 %v4368, %v4363
        %v4964 = vpack.c.b16 %v4369, %v4364
        %v4965 = vpack.c.b16 %v4370, %v4365
        %v4966 = vpack.c.b16 %v4376, %v4371
        %v4967 = vpack.c.b16 %v4377, %v4372
        %v4968 = vpack.c.b16 %v4378, %v4373
        %v4969 = vpack.c.b16 %v4379, %v4374
        %v4970 = vpack.c.b16 %v4380, %v4375
        %v4971 = vpack.c.b16 %v4386, %v4381
        %v4972 = vpack.c.b16 %v4387, %v4382
        %v4973 = vpack.c.b16 %v4388, %v4383
        %v4974 = vpack.c.b16 %v4389, %v4384
        %v4975 = vpack.c.b16 %v4390, %v4385
        %v4976 = vpack.c.b16 %v4396, %v4391
        %v4977 = vpack.c.b16 %v4397, %v4392
        %v4978 = vpack.c.b16 %v4398, %v4393
        %v4979 = vpack.c.b16 %v4399, %v4394
        %v4980 = vpack.c.b16 %v4400, %v4395
        %v4981 = vpack.c.b16 %v4406, %v4401
        %v4982 = vpack.c.b16 %v4407, %v4402
        %v4983 = vpack.c.b16 %v4408, %v4403
        %v4984 = vpack.c.b16 %v4409, %v4404
        %v4985 = vpack.c.b16 %v4410, %v4405
        %v4986 = vpack.c.b16 %v4416, %v4411
        %v4987 = vpack.c.b16 %v4417, %v4412
        %v4988 = vpack.c.b16 %v4418, %v4413
        %v4989 = vpack.c.b16 %v4419, %v4414
        %v4990 = vpack.c.b16 %v4420, %v4415
        %v4991 = vpack.c.b16 %v4426, %v4421
        %v4992 = vpack.c.b16 %v4427, %v4422
        %v4993 = vpack.c.b16 %v4428, %v4423
        %v4994 = vpack.c.b16 %v4429, %v4424
        %v4995 = vpack.c.b16 %v4430, %v4425
        %v4996 = vpack.c.b16 %v4436, %v4431
        %v4997 = vpack.c.b16 %v4437, %v4432
        %v4998 = vpack.c.b16 %v4438, %v4433
        %v4999 = vpack.c.b16 %v4439, %v4434
        %v5000 = vpack.c.b16 %v4440, %v4435
        %v5001 = vpack.c.b16 %v4446, %v4441
        %v5002 = vpack.c.b16 %v4447, %v4442
        %v5003 = vpack.c.b16 %v4448, %v4443
        %v5004 = vpack.c.b16 %v4449, %v4444
        %v5005 = vpack.c.b16 %v4450, %v4445
        %v5006 = vpack.c.b16 %v4456, %v4451
        %v5007 = vpack.c.b16 %v4457, %v4452
        %v5008 = vpack.c.b16 %v4458, %v4453
        %v5009 = vpack.c.b16 %v4459, %v4454
        %v5010 = vpack.c.b16 %v4460, %v4455
        %v5011 = vpack.c.b16 %v4466, %v4461
        %v5012 = vpack.c.b16 %v4467, %v4462
        %v5013 = vpack.c.b16 %v4468, %v4463
        %v5014 = vpack.c.b16 %v4469, %v4464
        %v5015 = vpack.c.b16 %v4470, %v4465
        %v5016 = vpack.c.b16 %v4476, %v4471
        %v5017 = vpack.c.b16 %v4477, %v4472
        %v5018 = vpack.c.b16 %v4478, %v4473
        %v5019 = vpack.c.b16 %v4479, %v4474
        %v5020 = vpack.c.b16 %v4480, %v4475
        %v5021 = vpack.c.b16 %v4486, %v4481
        %v5022 = vpack.c.b16 %v4487, %v4482
        %v5023 = vpack.c.b16 %v4488, %v4483
        %v5024 = vpack.c.b16 %v4489, %v4484
        %v5025 = vpack.c.b16 %v4490, %v4485
        %v5026 = vpack.c.b16 %v4496, %v4491
        %v5027 = vpack.c.b16 %v4497, %v4492
        %v5028 = vpack.c.b16 %v4498, %v4493
        %v5029 = vpack.c.b16 %v4499, %v4494
        %v5030 = vpack.c.b16 %v4500, %v4495
        %v5031 = vpack.c.b16 %v4506, %v4501
        %v5032 = vpack.c.b16 %v4507, %v4502
        %v5033 = vpack.c.b16 %v4508, %v4503
        %v5034 = vpack.c.b16 %v4509, %v4504
        %v5035 = vpack.c.b16 %v4510, %v4505
        %v5036 = vpack.c.b16 %v4516, %v4511
        %v5037 = vpack.c.b16 %v4517, %v4512
        %v5038 = vpack.c.b16 %v4518, %v4513
        %v5039 = vpack.c.b16 %v4519, %v4514
        %v5040 = vpack.c.b16 %v4520, %v4515
        %v5041 = vpack.c.b16 %v4526, %v4521
        %v5042 = vpack.c.b16 %v4527, %v4522
        %v5043 = vpack.c.b16 %v4528, %v4523
        %v5044 = vpack.c.b16 %v4529, %v4524
        %v5045 = vpack.c.b16 %v4530, %v4525
        %v5046 = vpack.c.b16 %v4536, %v4531
        %v5047 = vpack.c.b16 %v4537, %v4532
        %v5048 = vpack.c.b16 %v4538, %v4533
        %v5049 = vpack.c.b16 %v4539, %v4534
        %v5050 = vpack.c.b16 %v4540, %v4535
        %v5051 = vpack.c.b16 %v4546, %v4541
        %v5052 = vpack.c.b16 %v4547, %v4542
        %v5053 = vpack.c.b16 %v4548, %v4543
        %v5054 = vpack.c.b16 %v4549, %v4544
        %v5055 = vpack.c.b16 %v4550, %v4545
        %v5056 = vpack.c.b16 %v4556, %v4551
        %v5057 = vpack.c.b16 %v4557, %v4552
        %v5058 = vpack.c.b16 %v4558, %v4553
        %v5059 = vpack.c.b16 %v4559, %v4554
        %v5060 = vpack.c.b16 %v4560, %v4555
        %v5061 = vpack.c.b16 %v4566, %v4561
        %v5062 = vpack.c.b16 %v4567, %v4562
        %v5063 = vpack.c.b16 %v4568, %v4563
        %v5064 = vpack.c.b16 %v4569, %v4564
        %v5065 = vpack.c.b16 %v4570, %v4565
        %v5066 = vpack.c.b16 %v4576, %v4571
        %v5067 = vpack.c.b16 %v4577, %v4572
        %v5068 = vpack.c.b16 %v4578, %v4573
        %v5069 = vpack.c.b16 %v4579, %v4574
        %v5070 = vpack.c.b16 %v4580, %v4575
        %v5071 = vpack.c.b16 %v4586, %v4581
        %v5072 = vpack.c.b16 %v4587, %v4582
        %v5073 = vpack.c.b16 %v4588, %v4583
        %v5074 = vpack.c.b16 %v4589, %v4584
        %v5075 = vpack.c.b16 %v4590, %v4585
        %v5076 = vpack.c.b16 %v4596, %v4591
        %v5077 = vpack.c.b16 %v4597, %v4592
        %v5078 = vpack.c.b16 %v4598, %v4593
        %v5079 = vpack.c.b16 %v4599, %v4594
        %v5080 = vpack.c.b16 %v4600, %v4595
        %v5081 = vpack.c.b16 %v4606, %v4601
        %v5082 = vpack.c.b16 %v4607, %v4602
        %v5083 = vpack.c.b16 %v4608, %v4603
        %v5084 = vpack.c.b16 %v4609, %v4604
        %v5085 = vpack.c.b16 %v4610, %v4605
        %v5086 = vpack.c.b16 %v4616, %v4611
        %v5087 = vpack.c.b16 %v4617, %v4612
        %v5088 = vpack.c.b16 %v4618, %v4613
        %v5089 = vpack.c.b16 %v4619, %v4614
        %v5090 = vpack.c.b16 %v4620, %v4615
        %v5091 = vpack.c.b16 %v4626, %v4621
        %v5092 = vpack.c.b16 %v4627, %v4622
        %v5093 = vpack.c.b16 %v4628, %v4623
        %v5094 = vpack.c.b16 %v4629, %v4624
        %v5095 = vpack.c.b16 %v4630, %v4625
        %v5096 = vpack.c.b16 %v4636, %v4631
        %v5097 = vpack.c.b16 %v4637, %v4632
        %v5098 = vpack.c.b16 %v4638, %v4633
        %v5099 = vpack.c.b16 %v4639, %v4634
        %v5100 = vpack.c.b16 %v4640, %v4635
        %v5101 = vpack.c.b16 %v4646, %v4641
        %v5102 = vpack.c.b16 %v4647, %v4642
        %v5103 = vpack.c.b16 %v4648, %v4643
        %v5104 = vpack.c.b16 %v4649, %v4644
        %v5105 = vpack.c.b16 %v4650, %v4645
        %v5106 = vpack.c.b16 %v4656, %v4651
        %v5107 = vpack.c.b16 %v4657, %v4652
        %v5108 = vpack.c.b16 %v4658, %v4653
        %v5109 = vpack.c.b16 %v4659, %v4654
        %v5110 = vpack.c.b16 %v4660, %v4655
        %v5111 = vpack.c.b16 %v4666, %v4661
        %v5112 = vpack.c.b16 %v4667, %v4662
        %v5113 = vpack.c.b16 %v4668, %v4663
        %v5114 = vpack.c.b16 %v4669, %v4664
        %v5115 = vpack.c.b16 %v4670, %v4665
        %v5116 = vpack.c.b16 %v4676, %v4671
        %v5117 = vpack.c.b16 %v4677, %v4672
        %v5118 = vpack.c.b16 %v4678, %v4673
        %v5119 = vpack.c.b16 %v4679, %v4674
        %v5120 = vpack.c.b16 %v4680, %v4675
        %v5121 = vpack.c.b16 %v4686, %v4681
        %v5122 = vpack.c.b16 %v4687, %v4682
        %v5123 = vpack.c.b16 %v4688, %v4683
        %v5124 = vpack.c.b16 %v4689, %v4684
        %v5125 = vpack.c.b16 %v4690, %v4685
        %v5126 = vpack.c.b16 %v4696, %v4691
        %v5127 = vpack.c.b16 %v4697, %v4692
        %v5128 = vpack.c.b16 %v4698, %v4693
        %v5129 = vpack.c.b16 %v4699, %v4694
        %v5130 = vpack.c.b16 %v4700, %v4695
        %v5131 = vpack.c.b16 %v4706, %v4701
        %v5132 = vpack.c.b16 %v4707, %v4702
        %v5133 = vpack.c.b16 %v4708, %v4703
        %v5134 = vpack.c.b16 %v4709, %v4704
        %v5135 = vpack.c.b16 %v4710, %v4705
        %v5136 = vpack.c.b16 %v4716, %v4711
        %v5137 = vpack.c.b16 %v4717, %v4712
        %v5138 = vpack.c.b16 %v4718, %v4713
        %v5139 = vpack.c.b16 %v4719, %v4714
        %v5140 = vpack.c.b16 %v4720, %v4715
        %v5141 = vpack.c.b16 %v4726, %v4721
        %v5142 = vpack.c.b16 %v4727, %v4722
        %v5143 = vpack.c.b16 %v4728, %v4723
        %v5144 = vpack.c.b16 %v4729, %v4724
        %v5145 = vpack.c.b16 %v4730, %v4725
        %v5146 = vpack.c.b16 %v4736, %v4731
        %v5147 = vpack.c.b16 %v4737, %v4732
        %v5148 = vpack.c.b16 %v4738, %v4733
        %v5149 = vpack.c.b16 %v4739, %v4734
        %v5150 = vpack.c.b16 %v4740, %v4735
        %v5151 = vpack.c.b16 %v4746, %v4741
        %v5152 = vpack.c.b16 %v4747, %v4742
        %v5153 = vpack.c.b16 %v4748, %v4743
        %v5154 = vpack.c.b16 %v4749, %v4744
        %v5155 = vpack.c.b16 %v4750, %v4745
        %v5156 = vpack.c.b16 %v4756, %v4751
        %v5157 = vpack.c.b16 %v4757, %v4752
        %v5158 = vpack.c.b16 %v4758, %v4753
        %v5159 = vpack.c.b16 %v4759, %v4754
        %v5160 = vpack.c.b16 %v4760, %v4755
        %v5562 = vlaneseq
        %v5563 = vshrl.u32 %v5562, 7
        %v5564 = vsub.s32 0, %v5563
        %v5565 = vrot.slane %v3480, %v5564
        %v5566 = vlaneseq
        %v5567 = vshrl.u32 %v5566, 7
        %v5568 = vsub.s32 1, %v5567
        %v5569 = vrot.slane %v3480, %v5568
        %v5570 = vlaneseq
        %v5571 = vshrl.u32 %v5570, 7
        %v5572 = vsub.s32 2, %v5571
        %v5573 = vrot.slane %v3480, %v5572
        %v5574 = vlaneseq
        %v5575 = vshrl.u32 %v5574, 7
        %v5576 = vsub.s32 3, %v5575
        %v5577 = vrot.slane %v3480, %v5576
        %v5578 = vlaneseq
        %v5579 = vshrl.u32 %v5578, 7
        %v5580 = vsub.s32 4, %v5579
        %v5581 = vrot.slane %v3480, %v5580
        %5587 = vmatprep.subr.bf16.mxu0 %v4762
        %5588 = vmatpush1.bf16.msra.mxu0 %v4761
        %5589 = vmatprep.subr.bf16.mxu0 %v4767
        %5590 = vmatpush1.bf16.msra.mxu0 %v4766
        %5591 = vmatprep.subr.bf16.mxu0 %v4772
        %5592 = vmatpush1.bf16.msra.mxu0 %v4771
        %5593 = vmatprep.subr.bf16.mxu0 %v4777
        %5594 = vmatpush1.bf16.msra.mxu0 %v4776
        %5595 = vmatprep.subr.bf16.mxu0 %v4782
        %5596 = vmatpush1.bf16.msra.mxu0 %v4781
        %5597 = vmatprep.subr.bf16.mxu0 %v4787
        %5598 = vmatpush1.bf16.msra.mxu0 %v4786
        %5599 = vmatprep.subr.bf16.mxu0 %v4792
        %5600 = vmatpush1.bf16.msra.mxu0 %v4791
        %5601 = vmatprep.subr.bf16.mxu0 %v4797
        %5602 = vmatpush1.bf16.msra.mxu0 %v4796
        %5603 = vmatprep.subr.bf16.mxu0 %v4802
        %5604 = vmatpush1.bf16.msra.mxu0 %v4801
        %5605 = vmatprep.subr.bf16.mxu0 %v4807
        %5606 = vmatpush1.bf16.msra.mxu0 %v4806
        %5607 = vmatprep.subr.bf16.mxu0 %v4812
        %5608 = vmatpush1.bf16.msra.mxu0 %v4811
        %5609 = vmatprep.subr.bf16.mxu0 %v4817
        %5610 = vmatpush1.bf16.msra.mxu0 %v4816
        %5611 = vmatprep.subr.bf16.mxu0 %v4822
        %5612 = vmatpush1.bf16.msra.mxu0 %v4821
        %5613 = vmatprep.subr.bf16.mxu0 %v4827
        %5614 = vmatpush1.bf16.msra.mxu0 %v4826
        %5615 = vmatprep.subr.bf16.mxu0 %v4832
        %5616 = vmatpush1.bf16.msra.mxu0 %v4831
        %5617 = vmatprep.subr.bf16.mxu0 %v4837
        %5618 = vmatpush1.bf16.msra.mxu0 %v4836
        %5619 = vmatprep.mubr.bf16.mxu0 %v2991
        %5620 = vmatmul.mubr.bf16.gmra.mrb[0].mxu0 %v2990
        %v5621 = vpop.f32.mrb[0].mxu0
        %v5622 = vadd.f32 %v5565, %v5621
        %v5623 = vpop.f32.mrb[0].mxu0
        %v5624 = vadd.f32 %v5569, %v5623
        %v5625 = vpop.f32.mrb[0].mxu0
        %v5626 = vpop.f32.mrb[0].mxu0
        %5627 = vdwg.mxu0
        %5628 = vmatprep.subr.bf16.mxu0 %v4842
        %5629 = vmatpush1.bf16.msra.mxu0 %v4841
        %5630 = vmatprep.subr.bf16.mxu0 %v4847
        %5631 = vmatpush1.bf16.msra.mxu0 %v4846
        %5632 = vmatprep.subr.bf16.mxu0 %v4852
        %5633 = vmatpush1.bf16.msra.mxu0 %v4851
        %5634 = vmatprep.subr.bf16.mxu0 %v4857
        %5635 = vmatpush1.bf16.msra.mxu0 %v4856
        %5636 = vmatprep.subr.bf16.mxu0 %v4862
        %5637 = vmatpush1.bf16.msra.mxu0 %v4861
        %5638 = vmatprep.subr.bf16.mxu0 %v4867
        %5639 = vmatpush1.bf16.msra.mxu0 %v4866
        %5640 = vmatprep.subr.bf16.mxu0 %v4872
        %5641 = vmatpush1.bf16.msra.mxu0 %v4871
        %5642 = vmatprep.subr.bf16.mxu0 %v4877
        %5643 = vmatpush1.bf16.msra.mxu0 %v4876
        %5644 = vmatprep.subr.bf16.mxu0 %v4882
        %5645 = vmatpush1.bf16.msra.mxu0 %v4881
        %5646 = vmatprep.subr.bf16.mxu0 %v4887
        %5647 = vmatpush1.bf16.msra.mxu0 %v4886
        %5648 = vmatprep.subr.bf16.mxu0 %v4892
        %5649 = vmatpush1.bf16.msra.mxu0 %v4891
        %5650 = vmatprep.subr.bf16.mxu0 %v4897
        %5651 = vmatpush1.bf16.msra.mxu0 %v4896
        %5652 = vmatprep.subr.bf16.mxu0 %v4902
        %5653 = vmatpush1.bf16.msra.mxu0 %v4901
        %5654 = vmatprep.subr.bf16.mxu0 %v4907
        %5655 = vmatpush1.bf16.msra.mxu0 %v4906
        %5656 = vmatprep.subr.bf16.mxu0 %v4912
        %5657 = vmatpush1.bf16.msra.mxu0 %v4911
        %5658 = vmatprep.subr.bf16.mxu0 %v4917
        %5659 = vmatpush1.bf16.msra.mxu0 %v4916
        %5660 = vmatprep.mubr.bf16.mxu0 %v2993
        %5661 = vmatmul.mubr.bf16.gmra.mrb[0].mxu0 %v2992
        %v5662 = vpop.f32.mrb[0].mxu0
        %v5663 = vadd.f32 %v5622, %v5662
        %v5664 = vpop.f32.mrb[0].mxu0
        %v5665 = vadd.f32 %v5624, %v5664
        %v5666 = vpop.f32.mrb[0].mxu0
        %v5667 = vpop.f32.mrb[0].mxu0
        %5668 = vdwg.mxu0
        %5669 = vmatprep.subr.bf16.mxu0 %v4922
        %5670 = vmatpush1.bf16.msra.mxu0 %v4921
        %5671 = vmatprep.subr.bf16.mxu0 %v4927
        %5672 = vmatpush1.bf16.msra.mxu0 %v4926
        %5673 = vmatprep.subr.bf16.mxu0 %v4932
        %5674 = vmatpush1.bf16.msra.mxu0 %v4931
        %5675 = vmatprep.subr.bf16.mxu0 %v4937
        %5676 = vmatpush1.bf16.msra.mxu0 %v4936
        %5677 = vmatprep.subr.bf16.mxu0 %v4942
        %5678 = vmatpush1.bf16.msra.mxu0 %v4941
        %5679 = vmatprep.subr.bf16.mxu0 %v4947
        %5680 = vmatpush1.bf16.msra.mxu0 %v4946
        %5681 = vmatprep.subr.bf16.mxu0 %v4952
        %5682 = vmatpush1.bf16.msra.mxu0 %v4951
        %5683 = vmatprep.subr.bf16.mxu0 %v4957
        %5684 = vmatpush1.bf16.msra.mxu0 %v4956
        %5685 = vmatprep.subr.bf16.mxu0 %v4962
        %5686 = vmatpush1.bf16.msra.mxu0 %v4961
        %5687 = vmatprep.subr.bf16.mxu0 %v4967
        %5688 = vmatpush1.bf16.msra.mxu0 %v4966
        %5689 = vmatprep.subr.bf16.mxu0 %v4972
        %5690 = vmatpush1.bf16.msra.mxu0 %v4971
        %5691 = vmatprep.subr.bf16.mxu0 %v4977
        %5692 = vmatpush1.bf16.msra.mxu0 %v4976
        %5693 = vmatprep.subr.bf16.mxu0 %v4982
        %5694 = vmatpush1.bf16.msra.mxu0 %v4981
        %5695 = vmatprep.subr.bf16.mxu0 %v4987
        %5696 = vmatpush1.bf16.msra.mxu0 %v4986
        %5697 = vmatprep.subr.bf16.mxu0 %v4992
        %5698 = vmatpush1.bf16.msra.mxu0 %v4991
        %5699 = vmatprep.subr.bf16.mxu0 %v4997
        %5700 = vmatpush1.bf16.msra.mxu0 %v4996
        %5701 = vmatprep.mubr.bf16.mxu0 %v2995
        %5702 = vmatmul.mubr.bf16.gmra.mrb[0].mxu0 %v2994
        %v5703 = vpop.f32.mrb[0].mxu0
        %v5704 = vadd.f32 %v5663, %v5703
        %v5705 = vpop.f32.mrb[0].mxu0
        %v5706 = vadd.f32 %v5665, %v5705
        %v5707 = vpop.f32.mrb[0].mxu0
        %v5708 = vpop.f32.mrb[0].mxu0
        %5709 = vdwg.mxu0
        %5710 = vmatprep.subr.bf16.mxu0 %v5002
        %5711 = vmatpush1.bf16.msra.mxu0 %v5001
        %5712 = vmatprep.subr.bf16.mxu0 %v5007
        %5713 = vmatpush1.bf16.msra.mxu0 %v5006
        %5714 = vmatprep.subr.bf16.mxu0 %v5012
        %5715 = vmatpush1.bf16.msra.mxu0 %v5011
        %5716 = vmatprep.subr.bf16.mxu0 %v5017
        %5717 = vmatpush1.bf16.msra.mxu0 %v5016
        %5718 = vmatprep.subr.bf16.mxu0 %v5022
        %5719 = vmatpush1.bf16.msra.mxu0 %v5021
        %5720 = vmatprep.subr.bf16.mxu0 %v5027
        %5721 = vmatpush1.bf16.msra.mxu0 %v5026
        %5722 = vmatprep.subr.bf16.mxu0 %v5032
        %5723 = vmatpush1.bf16.msra.mxu0 %v5031
        %5724 = vmatprep.subr.bf16.mxu0 %v5037
        %5725 = vmatpush1.bf16.msra.mxu0 %v5036
        %5726 = vmatprep.subr.bf16.mxu0 %v5042
        %5727 = vmatpush1.bf16.msra.mxu0 %v5041
        %5728 = vmatprep.subr.bf16.mxu0 %v5047
        %5729 = vmatpush1.bf16.msra.mxu0 %v5046
        %5730 = vmatprep.subr.bf16.mxu0 %v5052
        %5731 = vmatpush1.bf16.msra.mxu0 %v5051
        %5732 = vmatprep.subr.bf16.mxu0 %v5057
        %5733 = vmatpush1.bf16.msra.mxu0 %v5056
        %5734 = vmatprep.subr.bf16.mxu0 %v5062
        %5735 = vmatpush1.bf16.msra.mxu0 %v5061
        %5736 = vmatprep.subr.bf16.mxu0 %v5067
        %5737 = vmatpush1.bf16.msra.mxu0 %v5066
        %5738 = vmatprep.subr.bf16.mxu0 %v5072
        %5739 = vmatpush1.bf16.msra.mxu0 %v5071
        %5740 = vmatprep.subr.bf16.mxu0 %v5077
        %5741 = vmatpush1.bf16.msra.mxu0 %v5076
        %5742 = vmatprep.mubr.bf16.mxu0 %v2997
        %5743 = vmatmul.mubr.bf16.gmra.mrb[0].mxu0 %v2996
        %v5744 = vpop.f32.mrb[0].mxu0
        %v5745 = vadd.f32 %v5704, %v5744
        %v5746 = vpop.f32.mrb[0].mxu0
        %v5747 = vadd.f32 %v5706, %v5746
        %v5748 = vpop.f32.mrb[0].mxu0
        %v5749 = vpop.f32.mrb[0].mxu0
        %5750 = vdwg.mxu0
        %5751 = vmatprep.subr.bf16.mxu0 %v5082
        %5752 = vmatpush1.bf16.msra.mxu0 %v5081
        %5753 = vmatprep.subr.bf16.mxu0 %v5087
        %5754 = vmatpush1.bf16.msra.mxu0 %v5086
        %5755 = vmatprep.subr.bf16.mxu0 %v5092
        %5756 = vmatpush1.bf16.msra.mxu0 %v5091
        %5757 = vmatprep.subr.bf16.mxu0 %v5097
        %5758 = vmatpush1.bf16.msra.mxu0 %v5096
        %5759 = vmatprep.subr.bf16.mxu0 %v5102
        %5760 = vmatpush1.bf16.msra.mxu0 %v5101
        %5761 = vmatprep.subr.bf16.mxu0 %v5107
        %5762 = vmatpush1.bf16.msra.mxu0 %v5106
        %5763 = vmatprep.subr.bf16.mxu0 %v5112
        %5764 = vmatpush1.bf16.msra.mxu0 %v5111
        %5765 = vmatprep.subr.bf16.mxu0 %v5117
        %5766 = vmatpush1.bf16.msra.mxu0 %v5116
        %5767 = vmatprep.subr.bf16.mxu0 %v5122
        %5768 = vmatpush1.bf16.msra.mxu0 %v5121
        %5769 = vmatprep.subr.bf16.mxu0 %v5127
        %5770 = vmatpush1.bf16.msra.mxu0 %v5126
        %5771 = vmatprep.subr.bf16.mxu0 %v5132
        %5772 = vmatpush1.bf16.msra.mxu0 %v5131
        %5773 = vmatprep.subr.bf16.mxu0 %v5137
        %5774 = vmatpush1.bf16.msra.mxu0 %v5136
        %5775 = vmatprep.subr.bf16.mxu0 %v5142
        %5776 = vmatpush1.bf16.msra.mxu0 %v5141
        %5777 = vmatprep.subr.bf16.mxu0 %v5147
        %5778 = vmatpush1.bf16.msra.mxu0 %v5146
        %5779 = vmatprep.subr.bf16.mxu0 %v5152
        %5780 = vmatpush1.bf16.msra.mxu0 %v5151
        %5781 = vmatprep.subr.bf16.mxu0 %v5157
        %5782 = vmatpush1.bf16.msra.mxu0 %v5156
        %5783 = vmatprep.mubr.bf16.mxu0 %v2999
        %5784 = vmatmul.mubr.bf16.gmra.mrb[0].mxu0 %v2998
        %v5785 = vpop.f32.mrb[0].mxu0
        %v5786 = vadd.f32 %v5745, %v5785
        %v5787 = vpop.f32.mrb[0].mxu0
        %v5788 = vadd.f32 %v5747, %v5787
        %v5789 = vpop.f32.mrb[0].mxu0
        %v5790 = vpop.f32.mrb[0].mxu0
        %5791 = vdwg.mxu0
        %5792 = vmatprep.subr.bf16.mxu0 %v4764
        %5793 = vmatpush1.bf16.msra.mxu0 %v4763
        %5794 = vmatprep.subr.bf16.mxu0 %v4769
        %5795 = vmatpush1.bf16.msra.mxu0 %v4768
        %5796 = vmatprep.subr.bf16.mxu0 %v4774
        %5797 = vmatpush1.bf16.msra.mxu0 %v4773
        %5798 = vmatprep.subr.bf16.mxu0 %v4779
        %5799 = vmatpush1.bf16.msra.mxu0 %v4778
        %5800 = vmatprep.subr.bf16.mxu0 %v4784
        %5801 = vmatpush1.bf16.msra.mxu0 %v4783
        %5802 = vmatprep.subr.bf16.mxu0 %v4789
        %5803 = vmatpush1.bf16.msra.mxu0 %v4788
        %5804 = vmatprep.subr.bf16.mxu0 %v4794
        %5805 = vmatpush1.bf16.msra.mxu0 %v4793
        %5806 = vmatprep.subr.bf16.mxu0 %v4799
        %5807 = vmatpush1.bf16.msra.mxu0 %v4798
        %5808 = vmatprep.subr.bf16.mxu0 %v4804
        %5809 = vmatpush1.bf16.msra.mxu0 %v4803
        %5810 = vmatprep.subr.bf16.mxu0 %v4809
        %5811 = vmatpush1.bf16.msra.mxu0 %v4808
        %5812 = vmatprep.subr.bf16.mxu0 %v4814
        %5813 = vmatpush1.bf16.msra.mxu0 %v4813
        %5814 = vmatprep.subr.bf16.mxu0 %v4819
        %5815 = vmatpush1.bf16.msra.mxu0 %v4818
        %5816 = vmatprep.subr.bf16.mxu0 %v4824
        %5817 = vmatpush1.bf16.msra.mxu0 %v4823
        %5818 = vmatprep.subr.bf16.mxu0 %v4829
        %5819 = vmatpush1.bf16.msra.mxu0 %v4828
        %5820 = vmatprep.subr.bf16.mxu0 %v4834
        %5821 = vmatpush1.bf16.msra.mxu0 %v4833
        %5822 = vmatprep.subr.bf16.mxu0 %v4839
        %5823 = vmatpush1.bf16.msra.mxu0 %v4838
        %5824 = vmatprep.mubr.bf16.mxu0 %v2991
        %5825 = vmatmul.mubr.bf16.gmra.mrb[0].mxu0 %v2990
        %v5826 = vpop.f32.mrb[0].mxu0
        %v5827 = vadd.f32 %v5573, %v5826
        %v5828 = vpop.f32.mrb[0].mxu0
        %v5829 = vadd.f32 %v5577, %v5828
        %v5830 = vpop.f32.mrb[0].mxu0
        %v5831 = vpop.f32.mrb[0].mxu0
        %5832 = vdwg.mxu0
        %5833 = vmatprep.subr.bf16.mxu0 %v4844
        %5834 = vmatpush1.bf16.msra.mxu0 %v4843
        %5835 = vmatprep.subr.bf16.mxu0 %v4849
        %5836 = vmatpush1.bf16.msra.mxu0 %v4848
        %5837 = vmatprep.subr.bf16.mxu0 %v4854
        %5838 = vmatpush1.bf16.msra.mxu0 %v4853
        %5839 = vmatprep.subr.bf16.mxu0 %v4859
        %5840 = vmatpush1.bf16.msra.mxu0 %v4858
        %5841 = vmatprep.subr.bf16.mxu0 %v4864
        %5842 = vmatpush1.bf16.msra.mxu0 %v4863
        %5843 = vmatprep.subr.bf16.mxu0 %v4869
        %5844 = vmatpush1.bf16.msra.mxu0 %v4868
        %5845 = vmatprep.subr.bf16.mxu0 %v4874
        %5846 = vmatpush1.bf16.msra.mxu0 %v4873
        %5847 = vmatprep.subr.bf16.mxu0 %v4879
        %5848 = vmatpush1.bf16.msra.mxu0 %v4878
        %5849 = vmatprep.subr.bf16.mxu0 %v4884
        %5850 = vmatpush1.bf16.msra.mxu0 %v4883
        %5851 = vmatprep.subr.bf16.mxu0 %v4889
        %5852 = vmatpush1.bf16.msra.mxu0 %v4888
        %5853 = vmatprep.subr.bf16.mxu0 %v4894
        %5854 = vmatpush1.bf16.msra.mxu0 %v4893
        %5855 = vmatprep.subr.bf16.mxu0 %v4899
        %5856 = vmatpush1.bf16.msra.mxu0 %v4898
        %5857 = vmatprep.subr.bf16.mxu0 %v4904
        %5858 = vmatpush1.bf16.msra.mxu0 %v4903
        %5859 = vmatprep.subr.bf16.mxu0 %v4909
        %5860 = vmatpush1.bf16.msra.mxu0 %v4908
        %5861 = vmatprep.subr.bf16.mxu0 %v4914
        %5862 = vmatpush1.bf16.msra.mxu0 %v4913
        %5863 = vmatprep.subr.bf16.mxu0 %v4919
        %5864 = vmatpush1.bf16.msra.mxu0 %v4918
        %5865 = vmatprep.mubr.bf16.mxu0 %v2993
        %5866 = vmatmul.mubr.bf16.gmra.mrb[0].mxu0 %v2992
        %v5867 = vpop.f32.mrb[0].mxu0
        %v5868 = vadd.f32 %v5827, %v5867
        %v5869 = vpop.f32.mrb[0].mxu0
        %v5870 = vadd.f32 %v5829, %v5869
        %v5871 = vpop.f32.mrb[0].mxu0
        %v5872 = vpop.f32.mrb[0].mxu0
        %5873 = vdwg.mxu0
        %5874 = vmatprep.subr.bf16.mxu0 %v4924
        %5875 = vmatpush1.bf16.msra.mxu0 %v4923
        %5876 = vmatprep.subr.bf16.mxu0 %v4929
        %5877 = vmatpush1.bf16.msra.mxu0 %v4928
        %5878 = vmatprep.subr.bf16.mxu0 %v4934
        %5879 = vmatpush1.bf16.msra.mxu0 %v4933
        %5880 = vmatprep.subr.bf16.mxu0 %v4939
        %5881 = vmatpush1.bf16.msra.mxu0 %v4938
        %5882 = vmatprep.subr.bf16.mxu0 %v4944
        %5883 = vmatpush1.bf16.msra.mxu0 %v4943
        %5884 = vmatprep.subr.bf16.mxu0 %v4949
        %5885 = vmatpush1.bf16.msra.mxu0 %v4948
        %5886 = vmatprep.subr.bf16.mxu0 %v4954
        %5887 = vmatpush1.bf16.msra.mxu0 %v4953
        %5888 = vmatprep.subr.bf16.mxu0 %v4959
        %5889 = vmatpush1.bf16.msra.mxu0 %v4958
        %5890 = vmatprep.subr.bf16.mxu0 %v4964
        %5891 = vmatpush1.bf16.msra.mxu0 %v4963
        %5892 = vmatprep.subr.bf16.mxu0 %v4969
        %5893 = vmatpush1.bf16.msra.mxu0 %v4968
        %5894 = vmatprep.subr.bf16.mxu0 %v4974
        %5895 = vmatpush1.bf16.msra.mxu0 %v4973
        %5896 = vmatprep.subr.bf16.mxu0 %v4979
        %5897 = vmatpush1.bf16.msra.mxu0 %v4978
        %5898 = vmatprep.subr.bf16.mxu0 %v4984
        %5899 = vmatpush1.bf16.msra.mxu0 %v4983
        %5900 = vmatprep.subr.bf16.mxu0 %v4989
        %5901 = vmatpush1.bf16.msra.mxu0 %v4988
        %5902 = vmatprep.subr.bf16.mxu0 %v4994
        %5903 = vmatpush1.bf16.msra.mxu0 %v4993
        %5904 = vmatprep.subr.bf16.mxu0 %v4999
        %5905 = vmatpush1.bf16.msra.mxu0 %v4998
        %5906 = vmatprep.mubr.bf16.mxu0 %v2995
        %5907 = vmatmul.mubr.bf16.gmra.mrb[0].mxu0 %v2994
        %v5908 = vpop.f32.mrb[0].mxu0
        %v5909 = vadd.f32 %v5868, %v5908
        %v5910 = vpop.f32.mrb[0].mxu0
        %v5911 = vadd.f32 %v5870, %v5910
        %v5912 = vpop.f32.mrb[0].mxu0
        %v5913 = vpop.f32.mrb[0].mxu0
        %5914 = vdwg.mxu0
        %5915 = vmatprep.subr.bf16.mxu0 %v5004
        %5916 = vmatpush1.bf16.msra.mxu0 %v5003
        %5917 = vmatprep.subr.bf16.mxu0 %v5009
        %5918 = vmatpush1.bf16.msra.mxu0 %v5008
        %5919 = vmatprep.subr.bf16.mxu0 %v5014
        %5920 = vmatpush1.bf16.msra.mxu0 %v5013
        %5921 = vmatprep.subr.bf16.mxu0 %v5019
        %5922 = vmatpush1.bf16.msra.mxu0 %v5018
        %5923 = vmatprep.subr.bf16.mxu0 %v5024
        %5924 = vmatpush1.bf16.msra.mxu0 %v5023
        %5925 = vmatprep.subr.bf16.mxu0 %v5029
        %5926 = vmatpush1.bf16.msra.mxu0 %v5028
        %5927 = vmatprep.subr.bf16.mxu0 %v5034
        %5928 = vmatpush1.bf16.msra.mxu0 %v5033
        %5929 = vmatprep.subr.bf16.mxu0 %v5039
        %5930 = vmatpush1.bf16.msra.mxu0 %v5038
        %5931 = vmatprep.subr.bf16.mxu0 %v5044
        %5932 = vmatpush1.bf16.msra.mxu0 %v5043
        %5933 = vmatprep.subr.bf16.mxu0 %v5049
        %5934 = vmatpush1.bf16.msra.mxu0 %v5048
        %5935 = vmatprep.subr.bf16.mxu0 %v5054
        %5936 = vmatpush1.bf16.msra.mxu0 %v5053
        %5937 = vmatprep.subr.bf16.mxu0 %v5059
        %5938 = vmatpush1.bf16.msra.mxu0 %v5058
        %5939 = vmatprep.subr.bf16.mxu0 %v5064
        %5940 = vmatpush1.bf16.msra.mxu0 %v5063
        %5941 = vmatprep.subr.bf16.mxu0 %v5069
        %5942 = vmatpush1.bf16.msra.mxu0 %v5068
        %5943 = vmatprep.subr.bf16.mxu0 %v5074
        %5944 = vmatpush1.bf16.msra.mxu0 %v5073
        %5945 = vmatprep.subr.bf16.mxu0 %v5079
        %5946 = vmatpush1.bf16.msra.mxu0 %v5078
        %5947 = vmatprep.mubr.bf16.mxu0 %v2997
        %5948 = vmatmul.mubr.bf16.gmra.mrb[0].mxu0 %v2996
        %v5949 = vpop.f32.mrb[0].mxu0
        %v5950 = vadd.f32 %v5909, %v5949
        %v5951 = vpop.f32.mrb[0].mxu0
        %v5952 = vadd.f32 %v5911, %v5951
        %v5953 = vpop.f32.mrb[0].mxu0
        %v5954 = vpop.f32.mrb[0].mxu0
        %5955 = vdwg.mxu0
        %5956 = vmatprep.subr.bf16.mxu0 %v5084
        %5957 = vmatpush1.bf16.msra.mxu0 %v5083
        %5958 = vmatprep.subr.bf16.mxu0 %v5089
        %5959 = vmatpush1.bf16.msra.mxu0 %v5088
        %5960 = vmatprep.subr.bf16.mxu0 %v5094
        %5961 = vmatpush1.bf16.msra.mxu0 %v5093
        %5962 = vmatprep.subr.bf16.mxu0 %v5099
        %5963 = vmatpush1.bf16.msra.mxu0 %v5098
        %5964 = vmatprep.subr.bf16.mxu0 %v5104
        %5965 = vmatpush1.bf16.msra.mxu0 %v5103
        %5966 = vmatprep.subr.bf16.mxu0 %v5109
        %5967 = vmatpush1.bf16.msra.mxu0 %v5108
        %5968 = vmatprep.subr.bf16.mxu0 %v5114
        %5969 = vmatpush1.bf16.msra.mxu0 %v5113
        %5970 = vmatprep.subr.bf16.mxu0 %v5119
        %5971 = vmatpush1.bf16.msra.mxu0 %v5118
        %5972 = vmatprep.subr.bf16.mxu0 %v5124
        %5973 = vmatpush1.bf16.msra.mxu0 %v5123
        %5974 = vmatprep.subr.bf16.mxu0 %v5129
        %5975 = vmatpush1.bf16.msra.mxu0 %v5128
        %5976 = vmatprep.subr.bf16.mxu0 %v5134
        %5977 = vmatpush1.bf16.msra.mxu0 %v5133
        %5978 = vmatprep.subr.bf16.mxu0 %v5139
        %5979 = vmatpush1.bf16.msra.mxu0 %v5138
        %5980 = vmatprep.subr.bf16.mxu0 %v5144
        %5981 = vmatpush1.bf16.msra.mxu0 %v5143
        %5982 = vmatprep.subr.bf16.mxu0 %v5149
        %5983 = vmatpush1.bf16.msra.mxu0 %v5148
        %5984 = vmatprep.subr.bf16.mxu0 %v5154
        %5985 = vmatpush1.bf16.msra.mxu0 %v5153
        %5986 = vmatprep.subr.bf16.mxu0 %v5159
        %5987 = vmatpush1.bf16.msra.mxu0 %v5158
        %5988 = vmatprep.mubr.bf16.mxu0 %v2999
        %5989 = vmatmul.mubr.bf16.gmra.mrb[0].mxu0 %v2998
        %v5990 = vpop.f32.mrb[0].mxu0
        %v5991 = vadd.f32 %v5950, %v5990
        %v5992 = vpop.f32.mrb[0].mxu0
        %v5993 = vadd.f32 %v5952, %v5992
        %v5994 = vpop.f32.mrb[0].mxu0
        %v5995 = vpop.f32.mrb[0].mxu0
        %5996 = vdwg.mxu0
        %5997 = vmatprep.subr.bf16.mxu0 0
        %5998 = vmatpush1.bf16.msra.mxu0 %v4765
        %5999 = vmatprep.subr.bf16.mxu0 0
        %6000 = vmatpush1.bf16.msra.mxu0 %v4770
        %6001 = vmatprep.subr.bf16.mxu0 0
        %6002 = vmatpush1.bf16.msra.mxu0 %v4775
        %6003 = vmatprep.subr.bf16.mxu0 0
        %6004 = vmatpush1.bf16.msra.mxu0 %v4780
        %6005 = vmatprep.subr.bf16.mxu0 0
        %6006 = vmatpush1.bf16.msra.mxu0 %v4785
        %6007 = vmatprep.subr.bf16.mxu0 0
        %6008 = vmatpush1.bf16.msra.mxu0 %v4790
        %6009 = vmatprep.subr.bf16.mxu0 0
        %6010 = vmatpush1.bf16.msra.mxu0 %v4795
        %6011 = vmatprep.subr.bf16.mxu0 0
        %6012 = vmatpush1.bf16.msra.mxu0 %v4800
        %6013 = vmatprep.subr.bf16.mxu0 0
        %6014 = vmatpush1.bf16.msra.mxu0 %v4805
        %6015 = vmatprep.subr.bf16.mxu0 0
        %6016 = vmatpush1.bf16.msra.mxu0 %v4810
        %6017 = vmatprep.subr.bf16.mxu0 0
        %6018 = vmatpush1.bf16.msra.mxu0 %v4815
        %6019 = vmatprep.subr.bf16.mxu0 0
        %6020 = vmatpush1.bf16.msra.mxu0 %v4820
        %6021 = vmatprep.subr.bf16.mxu0 0
        %6022 = vmatpush1.bf16.msra.mxu0 %v4825
        %6023 = vmatprep.subr.bf16.mxu0 0
        %6024 = vmatpush1.bf16.msra.mxu0 %v4830
        %6025 = vmatprep.subr.bf16.mxu0 0
        %6026 = vmatpush1.bf16.msra.mxu0 %v4835
        %6027 = vmatprep.subr.bf16.mxu0 0
        %6028 = vmatpush1.bf16.msra.mxu0 %v4840
        %6029 = vmatprep.mubr.bf16.mxu0 %v2991
        %6030 = vmatmul.mubr.bf16.gmra.mrb[0].mxu0 %v2990
        %v6031 = vpop.f32.mrb[0].mxu0
        %v6032 = vadd.f32 %v5581, %v6031
        %v6033 = vpop.f32.mrb[0].mxu0
        %v6034 = vpop.f32.mrb[0].mxu0
        %v6035 = vpop.f32.mrb[0].mxu0
        %6036 = vdwg.mxu0
        %6037 = vmatprep.subr.bf16.mxu0 0
        %6038 = vmatpush1.bf16.msra.mxu0 %v4845
        %6039 = vmatprep.subr.bf16.mxu0 0
        %6040 = vmatpush1.bf16.msra.mxu0 %v4850
        %6041 = vmatprep.subr.bf16.mxu0 0
        %6042 = vmatpush1.bf16.msra.mxu0 %v4855
        %6043 = vmatprep.subr.bf16.mxu0 0
        %6044 = vmatpush1.bf16.msra.mxu0 %v4860
        %6045 = vmatprep.subr.bf16.mxu0 0
        %6046 = vmatpush1.bf16.msra.mxu0 %v4865
        %6047 = vmatprep.subr.bf16.mxu0 0
        %6048 = vmatpush1.bf16.msra.mxu0 %v4870
        %6049 = vmatprep.subr.bf16.mxu0 0
        %6050 = vmatpush1.bf16.msra.mxu0 %v4875
        %6051 = vmatprep.subr.bf16.mxu0 0
        %6052 = vmatpush1.bf16.msra.mxu0 %v4880
        %6053 = vmatprep.subr.bf16.mxu0 0
        %6054 = vmatpush1.bf16.msra.mxu0 %v4885
        %6055 = vmatprep.subr.bf16.mxu0 0
        %6056 = vmatpush1.bf16.msra.mxu0 %v4890
        %6057 = vmatprep.subr.bf16.mxu0 0
        %6058 = vmatpush1.bf16.msra.mxu0 %v4895
        %6059 = vmatprep.subr.bf16.mxu0 0
        %6060 = vmatpush1.bf16.msra.mxu0 %v4900
        %6061 = vmatprep.subr.bf16.mxu0 0
        %6062 = vmatpush1.bf16.msra.mxu0 %v4905
        %6063 = vmatprep.subr.bf16.mxu0 0
        %6064 = vmatpush1.bf16.msra.mxu0 %v4910
        %6065 = vmatprep.subr.bf16.mxu0 0
        %6066 = vmatpush1.bf16.msra.mxu0 %v4915
        %6067 = vmatprep.subr.bf16.mxu0 0
        %6068 = vmatpush1.bf16.msra.mxu0 %v4920
        %6069 = vmatprep.mubr.bf16.mxu0 %v2993
        %6070 = vmatmul.mubr.bf16.gmra.mrb[0].mxu0 %v2992
        %v6071 = vpop.f32.mrb[0].mxu0
        %v6072 = vadd.f32 %v6032, %v6071
        %v6073 = vpop.f32.mrb[0].mxu0
        %v6074 = vpop.f32.mrb[0].mxu0
        %v6075 = vpop.f32.mrb[0].mxu0
        %6076 = vdwg.mxu0
        %6077 = vmatprep.subr.bf16.mxu0 0
        %6078 = vmatpush1.bf16.msra.mxu0 %v4925
        %6079 = vmatprep.subr.bf16.mxu0 0
        %6080 = vmatpush1.bf16.msra.mxu0 %v4930
        %6081 = vmatprep.subr.bf16.mxu0 0
        %6082 = vmatpush1.bf16.msra.mxu0 %v4935
        %6083 = vmatprep.subr.bf16.mxu0 0
        %6084 = vmatpush1.bf16.msra.mxu0 %v4940
        %6085 = vmatprep.subr.bf16.mxu0 0
        %6086 = vmatpush1.bf16.msra.mxu0 %v4945
        %6087 = vmatprep.subr.bf16.mxu0 0
        %6088 = vmatpush1.bf16.msra.mxu0 %v4950
        %6089 = vmatprep.subr.bf16.mxu0 0
        %6090 = vmatpush1.bf16.msra.mxu0 %v4955
        %6091 = vmatprep.subr.bf16.mxu0 0
        %6092 = vmatpush1.bf16.msra.mxu0 %v4960
        %6093 = vmatprep.subr.bf16.mxu0 0
        %6094 = vmatpush1.bf16.msra.mxu0 %v4965
        %6095 = vmatprep.subr.bf16.mxu0 0
        %6096 = vmatpush1.bf16.msra.mxu0 %v4970
        %6097 = vmatprep.subr.bf16.mxu0 0
        %6098 = vmatpush1.bf16.msra.mxu0 %v4975
        %6099 = vmatprep.subr.bf16.mxu0 0
        %6100 = vmatpush1.bf16.msra.mxu0 %v4980
        %6101 = vmatprep.subr.bf16.mxu0 0
        %6102 = vmatpush1.bf16.msra.mxu0 %v4985
        %6103 = vmatprep.subr.bf16.mxu0 0
        %6104 = vmatpush1.bf16.msra.mxu0 %v4990
        %6105 = vmatprep.subr.bf16.mxu0 0
        %6106 = vmatpush1.bf16.msra.mxu0 %v4995
        %6107 = vmatprep.subr.bf16.mxu0 0
        %6108 = vmatpush1.bf16.msra.mxu0 %v5000
        %6109 = vmatprep.mubr.bf16.mxu0 %v2995
        %6110 = vmatmul.mubr.bf16.gmra.mrb[0].mxu0 %v2994
        %v6111 = vpop.f32.mrb[0].mxu0
        %v6112 = vadd.f32 %v6072, %v6111
        %v6113 = vpop.f32.mrb[0].mxu0
        %v6114 = vpop.f32.mrb[0].mxu0
        %v6115 = vpop.f32.mrb[0].mxu0
        %6116 = vdwg.mxu0
        %6117 = vmatprep.subr.bf16.mxu0 0
        %6118 = vmatpush1.bf16.msra.mxu0 %v5005
        %6119 = vmatprep.subr.bf16.mxu0 0
        %6120 = vmatpush1.bf16.msra.mxu0 %v5010
        %6121 = vmatprep.subr.bf16.mxu0 0
        %6122 = vmatpush1.bf16.msra.mxu0 %v5015
        %6123 = vmatprep.subr.bf16.mxu0 0
        %6124 = vmatpush1.bf16.msra.mxu0 %v5020
        %6125 = vmatprep.subr.bf16.mxu0 0
        %6126 = vmatpush1.bf16.msra.mxu0 %v5025
        %6127 = vmatprep.subr.bf16.mxu0 0
        %6128 = vmatpush1.bf16.msra.mxu0 %v5030
        %6129 = vmatprep.subr.bf16.mxu0 0
        %6130 = vmatpush1.bf16.msra.mxu0 %v5035
        %6131 = vmatprep.subr.bf16.mxu0 0
        %6132 = vmatpush1.bf16.msra.mxu0 %v5040
        %6133 = vmatprep.subr.bf16.mxu0 0
        %6134 = vmatpush1.bf16.msra.mxu0 %v5045
        %6135 = vmatprep.subr.bf16.mxu0 0
        %6136 = vmatpush1.bf16.msra.mxu0 %v5050
        %6137 = vmatprep.subr.bf16.mxu0 0
        %6138 = vmatpush1.bf16.msra.mxu0 %v5055
        %6139 = vmatprep.subr.bf16.mxu0 0
        %6140 = vmatpush1.bf16.msra.mxu0 %v5060
        %6141 = vmatprep.subr.bf16.mxu0 0
        %6142 = vmatpush1.bf16.msra.mxu0 %v5065
        %6143 = vmatprep.subr.bf16.mxu0 0
        %6144 = vmatpush1.bf16.msra.mxu0 %v5070
        %6145 = vmatprep.subr.bf16.mxu0 0
        %6146 = vmatpush1.bf16.msra.mxu0 %v5075
        %6147 = vmatprep.subr.bf16.mxu0 0
        %6148 = vmatpush1.bf16.msra.mxu0 %v5080
        %6149 = vmatprep.mubr.bf16.mxu0 %v2997
        %6150 = vmatmul.mubr.bf16.gmra.mrb[0].mxu0 %v2996
        %v6151 = vpop.f32.mrb[0].mxu0
        %v6152 = vadd.f32 %v6112, %v6151
        %v6153 = vpop.f32.mrb[0].mxu0
        %v6154 = vpop.f32.mrb[0].mxu0
        %v6155 = vpop.f32.mrb[0].mxu0
        %6156 = vdwg.mxu0
        %6157 = vmatprep.subr.bf16.mxu0 0
        %6158 = vmatpush1.bf16.msra.mxu0 %v5085
        %6159 = vmatprep.subr.bf16.mxu0 0
        %6160 = vmatpush1.bf16.msra.mxu0 %v5090
        %6161 = vmatprep.subr.bf16.mxu0 0
        %6162 = vmatpush1.bf16.msra.mxu0 %v5095
        %6163 = vmatprep.subr.bf16.mxu0 0
        %6164 = vmatpush1.bf16.msra.mxu0 %v5100
        %6165 = vmatprep.subr.bf16.mxu0 0
        %6166 = vmatpush1.bf16.msra.mxu0 %v5105
        %6167 = vmatprep.subr.bf16.mxu0 0
        %6168 = vmatpush1.bf16.msra.mxu0 %v5110
        %6169 = vmatprep.subr.bf16.mxu0 0
        %6170 = vmatpush1.bf16.msra.mxu0 %v5115
        %6171 = vmatprep.subr.bf16.mxu0 0
        %6172 = vmatpush1.bf16.msra.mxu0 %v5120
        %6173 = vmatprep.subr.bf16.mxu0 0
        %6174 = vmatpush1.bf16.msra.mxu0 %v5125
        %6175 = vmatprep.subr.bf16.mxu0 0
        %6176 = vmatpush1.bf16.msra.mxu0 %v5130
        %6177 = vmatprep.subr.bf16.mxu0 0
        %6178 = vmatpush1.bf16.msra.mxu0 %v5135
        %6179 = vmatprep.subr.bf16.mxu0 0
        %6180 = vmatpush1.bf16.msra.mxu0 %v5140
        %6181 = vmatprep.subr.bf16.mxu0 0
        %6182 = vmatpush1.bf16.msra.mxu0 %v5145
        %6183 = vmatprep.subr.bf16.mxu0 0
        %6184 = vmatpush1.bf16.msra.mxu0 %v5150
        %6185 = vmatprep.subr.bf16.mxu0 0
        %6186 = vmatpush1.bf16.msra.mxu0 %v5155
        %6187 = vmatprep.subr.bf16.mxu0 0
        %6188 = vmatpush1.bf16.msra.mxu0 %v5160
        %6189 = vmatprep.mubr.bf16.mxu0 %v2999
        %6190 = vmatmul.mubr.bf16.gmra.mrb[0].mxu0 %v2998
        %v6191 = vpop.f32.mrb[0].mxu0
        %v6192 = vadd.f32 %v6152, %v6191
        %v6193 = vpop.f32.mrb[0].mxu0
        %v6194 = vpop.f32.mrb[0].mxu0
        %v6195 = vpop.f32.mrb[0].mxu0
        %6196 = vdwg.mxu0
        %v6202 = vcombine.low %v5786, %v5788
        %v6203 = vcombine.low %v5991, %v5993
        %v6205 = vunpack.c.l.s4 1966171168
        %v6206 = vunpack.c.0.s8 %v6205
        %v6207 = vlaneseq
        %v6208 = vshrl.u32 %v6207, 7
        %v6209 = vsub.s32 %v6206, %v6208
        %v6210 = vrot.slane %v6202, %v6209
        %v6212 = vunpack.c.l.s4 1966171168
        %v6213 = vunpack.c.0.s8 %v6212
        %v6214 = vlaneseq
        %v6215 = vshrl.u32 %v6214, 7
        %v6216 = vsub.s32 %v6213, %v6215
        %v6217 = vrot.slane %v6203, %v6216
        %v6219 = vunpack.c.l.s4 1966171168
        %v6220 = vunpack.c.0.s8 %v6219
        %v6221 = vlaneseq
        %v6222 = vshrl.u32 %v6221, 7
        %v6223 = vsub.s32 %v6220, %v6222
        %v6224 = vrot.slane %v6192, %v6223
        %v6225 = vcombine.low %v6210, %v6217
        %v6227 = vunpack.c.l.s4 1966171168
        %v6228 = vunpack.c.0.s8 %v6227
        %v6229 = vlaneseq
        %v6230 = vshrl.u32 %v6229, 7
        %v6231 = vsub.s32 %v6228, %v6230
        %v6232 = vrot.slane %v6225, %v6231
        %v6234 = vunpack.c.l.s4 1966171168
        %v6235 = vunpack.c.0.s8 %v6234
        %v6236 = vlaneseq
        %v6237 = vshrl.u32 %v6236, 7
        %v6238 = vsub.s32 %v6235, %v6237
        %v6239 = vrot.slane %v6224, %v6238
        %v6240 = vcombine.low %v6232, %v6239
        %v6242 = vlaneseq
        %vm6243 = vcmp.ge.s32.totalorder %v6242, 0
        %vm6244 = vcmp.lt.s32.totalorder %v6242, 640
        %vm6245 = vmand %vm6243, %vm6244
        %6246 = vst.msk [vmem:[%s1223] sm:$0x1f] %vm6245, %v6240
        %s6247 = sand.u32 %s142, 1
        %s6248 = scalar_lea.sflag [#allocation4], %s6247
        %s6249 = sand.u32 %s142, 1
        %s6250 = smul.addr %s6249, 5
        %s6251 = scalar_lea.vmem [#allocation3], %s6250
        // Predicated region
        $region67: #{diffusion_forward.3} parent=61 // pred_check
          %p6252 = pneg %p152
        $region68: #{diffusion_forward.3} parent=61 // pred_check_branch
          %6254 = sbr.rel (%p6252) target = $region70
        $region69: #{diffusion_forward.3} parent=61 // pred_region
          %s6255 = smul.u32 5, %s19
          %s6257 = ssub.s32 80, 80
          %6258 = vsyncadd %s6248, %s6257
          %s6259 = smul.addr %s6255, 16
          %s6260 = scalar_lea.hbm %s5, %s6259
          %s6262 = sshll.u32 %s6251, 4
          %s6263 = int_to_ptr.vmem [resolvable:$true] %s6262
          %6265 = dma.vmem_to_hbm [thread:$0]  %s6263, 80, %s6260, %s6248
        $region70: #{diffusion_forward.3} parent=61 // pred_fallthru
          _
      $region62: #{diffusion_forward.3} parent=5 // pred_fallthru
        _
      %p6266 = scmp.le.s32.totalorder 2, %s14
      // Predicated region
      $region71: #{diffusion_forward.3} parent=5 // pred_check
        %p6267 = pneg %p6266
      $region72: #{diffusion_forward.3} parent=5 // pred_check_branch
        %6269 = sbr.rel (%p6267) target = $region74
      $region73: #{diffusion_forward.3} parent=5 // pred_region
        %s6270 = ssub.s32 %s14, 2
        // Predicated region
        $region75: #{diffusion_forward.3} parent=73 // pred_check
          %p6271 = pneg %p158
        $region76: #{diffusion_forward.3} parent=73 // pred_check_branch
          %6273 = sbr.rel (%p6271) target = $region78
        $region77: #{diffusion_forward.3} parent=73 // pred_region
          %s6274 = sand.u32 %s143, 1
          %s6275 = scalar_lea.sflag [#allocation4], %s6274
          %s6276 = sand.u32 %s143, 1
          %s6277 = smul.addr %s6276, 5
          %s6278 = scalar_lea.vmem [#allocation3], %s6277
          %6279 = dma.done %s6275, 80
        $region78: #{diffusion_forward.3} parent=73 // pred_fallthru
          _
      $region74: #{diffusion_forward.3} parent=5 // pred_fallthru
        _
    $region6: #{diffusion_forward.3} parent=1 // loop_footer
      %s18 = sadd.s32 1, %s14
    $region7: #{diffusion_forward.3} parent=1 // loop_footer_branch
      %13 = sbr.rel target = $region3
    $region8: #{diffusion_forward.3} parent=1 // loop_exit
      _
    %6280 = vsyncpa [#allocation4], 1
    %s6281 = scalar_lea.sflag [#allocation4], 1
    %6282 = vsyncpa %s6281, 1

</llo_original>
